<compile_context>
chip_gen: v7x
topology: tpu7x:2x2x1
jax: 0.10.0
libtpu: 0.0.40
codegen_flags: <defaults>
</compile_context>

<pallas_src>
import functools

import numpy as np
import jax
import jax.numpy as jnp
from jax.experimental import pallas as pl
from jax.experimental.pallas import tpu as pltpu

G0 = 4                 # coarse grid: layer-1 output is 4x4
G0P = G0 + 2           # +1 halo cell on each side
RPB = G0P * G0P        # rows per batch element on the padded coarse grid (36)
PHYS = 8               # physical zero rows at both ends (for shifted-window reads)


# ---------------------------------------------------------------------------
# The fused generator kernel
# ---------------------------------------------------------------------------
def _generator_kernel(xaug_ref, w1_ref, w2_ref, w3_ref, w4_ref,
                      g1_ref, b1_ref, g2_ref, b2_ref, g3_ref, b3_ref,
                      fold2_ref, exp2_ref, fold3_ref, exp3_ref, mask_ref,
                      out_ref, t1_ref, t2_ref, t3_ref, *, n_spatial, eps):
    m = mask_ref.shape[0]                    # 36 * batch rows
    mask = mask_ref[...] != 0.0              # (m, 1) True on interior (non-halo) rows

    # Scratch holds the zero-padded coarse-grid feature maps (halo rows must be 0).
    t1_ref[...] = jnp.zeros_like(t1_ref)
    t2_ref[...] = jnp.zeros_like(t2_ref)
    t3_ref[...] = jnp.zeros_like(t3_ref)

    def conv(t_ref, w_ref):
        """Stride-2 ConvT as 9 shifted-window matmuls (bf16 in, f32 accumulate)."""
        acc = None
        for dp in (-1, 0, 1):
            for dq in (-1, 0, 1):
                win = t_ref[pl.ds(PHYS + dp * G0P + dq, m), :].astype(jnp.bfloat16)
                prod = jnp.dot(win, w_ref[(dp + 1) * 3 + (dq + 1)],
                               preferred_element_type=jnp.float32)
                acc = prod if acc is None else acc + prod
        return acc

    def bn_relu(raw, gamma, beta, fold, expand, count):
        """Training-mode BatchNorm (+ReLU) over interior rows and phase blocks."""
        masked = jnp.where(mask, raw, 0.0)
        s1 = jnp.sum(masked, axis=0, keepdims=True)
        s2 = jnp.sum(masked * masked, axis=0, keepdims=True)
        if fold is not None:                 # pool stats across phase lane-blocks
            s1 = jnp.dot(s1, fold, preferred_element_type=jnp.float32)
            s2 = jnp.dot(s2, fold, preferred_element_type=jnp.float32)
        mean = s1 / count
        var = jnp.maximum(s2 / count - mean * mean, 0.0)
        scale = gamma * jax.lax.rsqrt(var + eps)
        shift = beta - mean * scale
        if expand is not None:               # tile per-channel scale back to lanes
            scale = jnp.dot(scale, expand, preferred_element_type=jnp.float32)
            shift = jnp.dot(shift, expand, preferred_element_type=jnp.float32)
        act = jnp.maximum(raw * scale + shift, 0.0)
        return jnp.where(mask, act, 0.0)     # keep halo rows exactly zero

    # Layer 1: ConvT(z, C1, 4, 1, 0) on a 1x1 input == one matmul on the rows.
    raw1 = jnp.dot(xaug_ref[...], w1_ref[...], preferred_element_type=jnp.float32)
    t1_ref[pl.ds(PHYS, m), :] = bn_relu(raw1, g1_ref[...], b1_ref[...],
                                        None, None, n_spatial)

    # Layers 2-4: phase-packed stride-2 ConvT; lanes carry the sub-pixel grid.
    raw2 = conv(t1_ref, w2_ref)
    t2_ref[pl.ds(PHYS, m), :] = bn_relu(raw2, g2_ref[...], b2_ref[...],
                                        fold2_ref[...], exp2_ref[...], n_spatial * 4.0)
    raw3 = conv(t2_ref, w3_ref)
    t3_ref[pl.ds(PHYS, m), :] = bn_relu(raw3, g3_ref[...], b3_ref[...],
                                        fold3_ref[...], exp3_ref[...], n_spatial * 16.0)
    raw4 = conv(t3_ref, w4_ref)
    out_ref[...] = jnp.tanh(raw4)


# ---------------------------------------------------------------------------
# Weight / metadata repacking (XLA glue; pure layout transforms)
# ---------------------------------------------------------------------------
def _phase_selector(g_in):
    """S[dP+1, a_in, e_out, kh]: which kernel tap a shifted cell contributes."""
    g_out = 2 * g_in
    sel = np.zeros((3, g_in, g_out, 4), np.float32)
    for dp in (-1, 0, 1):
        for a_in in range(g_in):
            for e in range(g_out):
                a, r = e // 2, e % 2
                kh = r + 1 - 2 * (g_in * dp + a_in - a)
                if 0 <= kh < 4:
                    sel[dp + 1, a_in, e, kh] = 1.0
    return sel


def _build_weff(w, g_in):
    """PyTorch ConvT weight (Cin,Cout,4,4) -> 9 x (g_in^2*Cin, (2g_in)^2*Cout)."""
    cin, cout = w.shape[0], w.shape[1]
    g_out = 2 * g_in
    sel = jnp.asarray(_phase_selector(g_in))
    weff = jnp.einsum('Pyeh,Qxfw,cdhw->PQyxcefd', sel, sel, w)
    return weff.reshape(9, g_in * g_in * cin, g_out * g_out * cout)


def _row_meta(batch):
    """Interior-row mask and latent placement matrix for the padded coarse grid."""
    m = batch * RPB
    mask = np.zeros((m, 1), np.float32)
    place = np.zeros((m, batch, G0 * G0), np.float32)
    for b in range(batch):
        for p in range(G0P):
            for q in range(G0P):
                t = b * RPB + p * G0P + q
                if 1 <= p <= G0 and 1 <= q <= G0:
                    mask[t, 0] = 1.0
                    place[t, b, (p - 1) * G0 + (q - 1)] = 1.0
    return mask, place


# ---------------------------------------------------------------------------
# CombinedModel forward: index -> Z lookup -> fused generator -> (B,3,32,32)
# ---------------------------------------------------------------------------
def combined_model_forward(params, indices):
    code = params["Z"][indices]                                   # (B, z)
    batch, z = code.shape
    w1, w2, w3, w4 = params["w1"], params["w2"], params["w3"], params["w4"]
    c1, c2, c3, c4 = w1.shape[1], w2.shape[1], w3.shape[1], w4.shape[1]
    c4p = c4 if c4 % 2 == 0 else c4 + 1                           # lane-dense output
    m = batch * RPB
    nrow = m + 2 * PHYS

    mask_np, place_np = _row_meta(batch)
    mask = jnp.asarray(mask_np)
    # Layer-1 LHS: latent code scattered onto its own coarse-grid row (one-hot in K).
    xaug = jnp.einsum('tbs,bz->tsz', jnp.asarray(place_np), code)
    xaug = xaug.reshape(m, G0 * G0 * z).astype(jnp.bfloat16)
    w1aug = jnp.transpose(w1, (2, 3, 0, 1)).reshape(G0 * G0 * z, c1).astype(jnp.bfloat16)
    if c4p != c4:
        w4 = jnp.concatenate([w4, jnp.zeros((c3, c4p - c4, 4, 4), w4.dtype)], axis=1)
    w2e = _build_weff(w2, 1).astype(jnp.bfloat16)                 # (9,    c1,  4*c2)
    w3e = _build_weff(w3, 2).astype(jnp.bfloat16)                 # (9,  4*c2, 16*c3)
    w4e = _build_weff(w4, 4).astype(jnp.bfloat16)                 # (9, 16*c3, 64*c4p)
    fold2_np = np.tile(np.eye(c2, dtype=np.float32), (4, 1))      # (4*c2,  c2)
    fold3_np = np.tile(np.eye(c3, dtype=np.float32), (16, 1))     # (16*c3, c3)
    fold2, exp2 = jnp.asarray(fold2_np), jnp.asarray(fold2_np.T)
    fold3, exp3 = jnp.asarray(fold3_np), jnp.asarray(fold3_np.T)
    aff = lambda k: params[k].reshape(1, -1)

    kernel = functools.partial(_generator_kernel,
                               n_spatial=float(batch * G0 * G0), eps=1e-5)
    full = lambda shape: pl.BlockSpec(shape, lambda i: (0,) * len(shape))

    out = pl.pallas_call(
        kernel,
        out_shape=jax.ShapeDtypeStruct((m, 64 * c4p), jnp.float32),
        grid=(1,),
        in_specs=[
            full(xaug.shape), full(w1aug.shape),
            full(w2e.shape), full(w3e.shape), full(w4e.shape),
            full((1, c1)), full((1, c1)),
            full((1, c2)), full((1, c2)),
            full((1, c3)), full((1, c3)),
            full(fold2.shape), full(exp2.shape),
            full(fold3.shape), full(exp3.shape),
            full((m, 1)),
        ],
        out_specs=full((m, 64 * c4p)),
        scratch_shapes=[
            pltpu.VMEM((nrow, c1), jnp.float32),
            pltpu.VMEM((nrow, 4 * c2), jnp.float32),
            pltpu.VMEM((nrow, 16 * c3), jnp.float32),
        ],
    )(xaug, w1aug, w2e, w3e, w4e,
      aff("g1"), aff("b1"), aff("g2"), aff("b2"), aff("g3"), aff("b3"),
      fold2, exp2, fold3, exp3, mask)

    # Depth-to-space + NCHW transpose of the lane-dense result (XLA glue).
    out = out.reshape(batch, G0P, G0P, 8, 8, c4p)[:, 1:G0 + 1, 1:G0 + 1, :, :, :c4]
    return out.transpose(0, 5, 1, 3, 2, 4).reshape(batch, c4, 8 * G0, 8 * G0)


# ---------------------------------------------------------------------------
# Pure-JAX reference (validated dilate+pad+im2col formulation, same bf16 matmuls)
# ---------------------------------------------------------------------------
def _reference_forward(params, indices):
    code = params["Z"][indices]
    batch, z = code.shape

    def convt(x, wt, stride, pad):
        b, h, w, cin = x.shape
        cout = wt.shape[1]
        hd, wd = (h - 1) * stride + 1, (w - 1) * stride + 1
        xd = jnp.zeros((b, hd, wd, cin), x.dtype).at[:, ::stride, ::stride, :].set(x)
        p = 3 - pad
        xp = jnp.pad(xd, ((0, 0), (p, p), (p, p), (0, 0)))
        ho, wo = hd + 2 * p - 3, wd + 2 * p - 3
        patches = jnp.stack([xp[:, kh:kh + ho, kw:kw + wo, :]
                             for kh in range(4) for kw in range(4)], axis=-1)
        patches = patches.reshape(b * ho * wo, cin * 16).astype(jnp.bfloat16)
        wmat = jnp.transpose(wt[:, :, ::-1, ::-1], (0, 2, 3, 1)).reshape(cin * 16, cout)
        rows = jnp.dot(patches, wmat.astype(jnp.bfloat16),
                       preferred_element_type=jnp.float32)
        return rows, (b, ho, wo, cout)

    def bn_relu(rows, gamma, beta):
        mean = jnp.mean(rows, axis=0, keepdims=True)
        var = jnp.mean((rows - mean) ** 2, axis=0, keepdims=True)
        return jnp.maximum((rows - mean) * jax.lax.rsqrt(var + 1e-5) * gamma + beta, 0.0)

    x = code.reshape(batch, 1, 1, z)
    rows, (b, ho, wo, c) = convt(x, params["w1"], 1, 0)
    x = bn_relu(rows, params["g1"], params["b1"]).reshape(b, ho, wo, c)
    rows, (b, ho, wo, c) = convt(x, params["w2"], 2, 1)
    x = bn_relu(rows, params["g2"], params["b2"]).reshape(b, ho, wo, c)
    rows, (b, ho, wo, c) = convt(x, params["w3"], 2, 1)
    x = bn_relu(rows, params["g3"], params["b3"]).reshape(b, ho, wo, c)
    rows, (b, ho, wo, c) = convt(x, params["w4"], 2, 1)
    return jnp.transpose(jnp.tanh(rows).reshape(b, ho, wo, c), (0, 3, 1, 2))


def init_params(key, n_data=8, z_dim=32, n_filters=8, out_channels=3):
    ks = jax.random.split(key, 5)
    nf = n_filters
    # TODO(synk): PCA-based latent initialization (sklearn PCA over the dataset)
    # has no Pallas equivalent; replaced with a deterministic random latent table.
    return {
        "Z": jax.random.normal(ks[0], (n_data, z_dim), jnp.float32),
        "w1": 0.02 * jax.random.normal(ks[1], (z_dim, nf * 8, 4, 4), jnp.float32),
        "w2": 0.02 * jax.random.normal(ks[2], (nf * 8, nf * 4, 4, 4), jnp.float32),
        "w3": 0.02 * jax.random.normal(ks[3], (nf * 4, nf * 2, 4, 4), jnp.float32),
        "w4": 0.02 * jax.random.normal(ks[4], (nf * 2, out_channels, 4, 4), jnp.float32),
        "g1": jnp.ones((nf * 8,), jnp.float32), "b1": jnp.zeros((nf * 8,), jnp.float32),
        "g2": jnp.ones((nf * 4,), jnp.float32), "b2": jnp.zeros((nf * 4,), jnp.float32),
        "g3": jnp.ones((nf * 2,), jnp.float32), "b3": jnp.zeros((nf * 2,), jnp.float32),
    }


if __name__ == "__main__":
    key = jax.random.PRNGKey(0)
    params = init_params(key, n_data=8, z_dim=32, n_filters=8, out_channels=3)
    indices = jnp.array([0, 3], dtype=jnp.int32)      # batch=2 latent indices

    fwd = jax.jit(combined_model_forward)
    out = fwd(params, indices)
    jax.block_until_ready(out)

    assert out.shape == (2, 3, 32, 32), out.shape
    assert bool(jnp.all(jnp.isfinite(out)))

    # Self-check against a pure-JAX reference of the same module (same bf16 matmul
    # precision) to guard the phase-packed weight transformation.
    ref = jax.jit(_reference_forward)(params, indices)
    err = float(jnp.max(jnp.abs(out - ref)))
    assert err < 2e-2, err

    print("KERNEL_OK")
</pallas_src>

<mosaic_0001>
module attributes {stable_mosaic.version = 11 : i64} {
  func.func @_generator_kernel(%arg0: i32, %arg1: memref<72x512xbf16, #tpu.memory_space<vmem>>, %arg2: memref<512x64xbf16, #tpu.memory_space<vmem>>, %arg3: memref<9x64x128xbf16, #tpu.memory_space<vmem>>, %arg4: memref<9x128x256xbf16, #tpu.memory_space<vmem>>, %arg5: memref<9x256x256xbf16, #tpu.memory_space<vmem>>, %arg6: memref<1x64xf32, #tpu.memory_space<vmem>>, %arg7: memref<1x64xf32, #tpu.memory_space<vmem>>, %arg8: memref<1x32xf32, #tpu.memory_space<vmem>>, %arg9: memref<1x32xf32, #tpu.memory_space<vmem>>, %arg10: memref<1x16xf32, #tpu.memory_space<vmem>>, %arg11: memref<1x16xf32, #tpu.memory_space<vmem>>, %arg12: memref<128x32xf32, #tpu.memory_space<vmem>>, %arg13: memref<32x128xf32, #tpu.memory_space<vmem>>, %arg14: memref<256x16xf32, #tpu.memory_space<vmem>>, %arg15: memref<16x256xf32, #tpu.memory_space<vmem>>, %arg16: memref<72x1xf32, #tpu.memory_space<vmem>>, %arg17: memref<72x256xf32, #tpu.memory_space<vmem>>, %arg18: memref<88x64xf32, #tpu.memory_space<vmem>>, %arg19: memref<88x128xf32, #tpu.memory_space<vmem>>, %arg20: memref<88x256xf32, #tpu.memory_space<vmem>>) attributes {dimension_semantics = [#tpu.dimension_semantics<arbitrary>], iteration_bounds = array<i64: 1>, scalar_prefetch = 0 : i64, scratch_operands = 3 : i64, tpu.core_type = #tpu.core_type<tc>, window_params = [{pipeline_mode = #tpu.pipeline_mode<synchronous>, transform_indices = @transform_0, window_bounds = array<i64: 72, 512>}, {pipeline_mode = #tpu.pipeline_mode<synchronous>, transform_indices = @transform_1, window_bounds = array<i64: 512, 64>}, {pipeline_mode = #tpu.pipeline_mode<synchronous>, transform_indices = @transform_2, window_bounds = array<i64: 9, 64, 128>}, {pipeline_mode = #tpu.pipeline_mode<synchronous>, transform_indices = @transform_3, window_bounds = array<i64: 9, 128, 256>}, {pipeline_mode = #tpu.pipeline_mode<synchronous>, transform_indices = @transform_4, window_bounds = array<i64: 9, 256, 256>}, {pipeline_mode = #tpu.pipeline_mode<synchronous>, transform_indices = @transform_5, window_bounds = array<i64: 1, 64>}, {pipeline_mode = #tpu.pipeline_mode<synchronous>, transform_indices = @transform_6, window_bounds = array<i64: 1, 64>}, {pipeline_mode = #tpu.pipeline_mode<synchronous>, transform_indices = @transform_7, window_bounds = array<i64: 1, 32>}, {pipeline_mode = #tpu.pipeline_mode<synchronous>, transform_indices = @transform_8, window_bounds = array<i64: 1, 32>}, {pipeline_mode = #tpu.pipeline_mode<synchronous>, transform_indices = @transform_9, window_bounds = array<i64: 1, 16>}, {pipeline_mode = #tpu.pipeline_mode<synchronous>, transform_indices = @transform_10, window_bounds = array<i64: 1, 16>}, {pipeline_mode = #tpu.pipeline_mode<synchronous>, transform_indices = @transform_11, window_bounds = array<i64: 128, 32>}, {pipeline_mode = #tpu.pipeline_mode<synchronous>, transform_indices = @transform_12, window_bounds = array<i64: 32, 128>}, {pipeline_mode = #tpu.pipeline_mode<synchronous>, transform_indices = @transform_13, window_bounds = array<i64: 256, 16>}, {pipeline_mode = #tpu.pipeline_mode<synchronous>, transform_indices = @transform_14, window_bounds = array<i64: 16, 256>}, {pipeline_mode = #tpu.pipeline_mode<synchronous>, transform_indices = @transform_15, window_bounds = array<i64: 72, 1>}, {pipeline_mode = #tpu.pipeline_mode<synchronous>, transform_indices = @transform_16, window_bounds = array<i64: 72, 256>}]} {
    %c0 = arith.constant 0 : index
    %c0_0 = arith.constant 0 : index
    %0 = vector.load %arg16[%c0, %c0_0] : memref<72x1xf32, #tpu.memory_space<vmem>>, vector<72x1xf32>
    %cst = arith.constant 0.000000e+00 : f32
    %1 = vector.broadcast %cst : f32 to vector<72x1xf32>
    %2 = arith.cmpf one, %0, %1 : vector<72x1xf32>
    %cst_1 = arith.constant 0.000000e+00 : f32
    %3 = vector.broadcast %cst_1 : f32 to vector<88x64xf32>
    %c0_2 = arith.constant 0 : index
    %c0_3 = arith.constant 0 : index
    %4 = vector.load %arg18[%c0_2, %c0_3] : memref<88x64xf32, #tpu.memory_space<vmem>>, vector<88x64xf32>
    tpu.vector_store %arg18[%c0_2, %c0_3], %3 {strides = array<i32>} : memref<88x64xf32, #tpu.memory_space<vmem>>, vector<88x64xf32>,
    %cst_4 = arith.constant 0.000000e+00 : f32
    %5 = vector.broadcast %cst_4 : f32 to vector<88x128xf32>
    %c0_5 = arith.constant 0 : index
    %c0_6 = arith.constant 0 : index
    %6 = vector.load %arg19[%c0_5, %c0_6] : memref<88x128xf32, #tpu.memory_space<vmem>>, vector<88x128xf32>
    tpu.vector_store %arg19[%c0_5, %c0_6], %5 {strides = array<i32>} : memref<88x128xf32, #tpu.memory_space<vmem>>, vector<88x128xf32>,
    %cst_7 = arith.constant 0.000000e+00 : f32
    %7 = vector.broadcast %cst_7 : f32 to vector<88x256xf32>
    %c0_8 = arith.constant 0 : index
    %c0_9 = arith.constant 0 : index
    %8 = vector.load %arg20[%c0_8, %c0_9] : memref<88x256xf32, #tpu.memory_space<vmem>>, vector<88x256xf32>
    tpu.vector_store %arg20[%c0_8, %c0_9], %7 {strides = array<i32>} : memref<88x256xf32, #tpu.memory_space<vmem>>, vector<88x256xf32>,
    %c0_10 = arith.constant 0 : index
    %c0_11 = arith.constant 0 : index
    %9 = vector.load %arg1[%c0_10, %c0_11] : memref<72x512xbf16, #tpu.memory_space<vmem>>, vector<72x512xbf16>
    %c0_12 = arith.constant 0 : index
    %c0_13 = arith.constant 0 : index
    %10 = vector.load %arg2[%c0_12, %c0_13] : memref<512x64xbf16, #tpu.memory_space<vmem>>, vector<512x64xbf16>
    %cst_14 = arith.constant dense<0.000000e+00> : vector<72x64xf32>
    %11 = tpu.matmul %9, %10, %cst_14 {dimension_numbers = #tpu.dot_dimension_numbers<[1], [0], [0], [1], [0, 0, 1, 1], [], []>} : vector<72x512xbf16>, vector<512x64xbf16>, vector<72x64xf32> -> vector<72x64xf32>
    %c0_15 = arith.constant 0 : index
    %c0_16 = arith.constant 0 : index
    %12 = vector.load %arg6[%c0_15, %c0_16] : memref<1x64xf32, #tpu.memory_space<vmem>>, vector<1x64xf32>
    %c0_17 = arith.constant 0 : index
    %c0_18 = arith.constant 0 : index
    %13 = vector.load %arg7[%c0_17, %c0_18] : memref<1x64xf32, #tpu.memory_space<vmem>>, vector<1x64xf32>
    %cst_19 = arith.constant 0.000000e+00 : f32
    %14 = vector.shape_cast %2 : vector<72x1xi1> to vector<72x1xi1>
    %15 = vector.broadcast %14 : vector<72x1xi1> to vector<72x64xi1>
    %16 = vector.broadcast %cst_19 : f32 to vector<72x64xf32>
    %17 = arith.select %15, %11, %16 : vector<72x64xi1>, vector<72x64xf32>
    %cst_20 = arith.constant dense<0.000000e+00> : vector<64xf32>
    %18 = vector.multi_reduction <add>, %17, %cst_20 [0] : vector<72x64xf32> to vector<64xf32>
    %19 = vector.shape_cast %18 : vector<64xf32> to vector<1x64xf32>
    %20 = arith.mulf %17, %17 : vector<72x64xf32>
    %cst_21 = arith.constant dense<0.000000e+00> : vector<64xf32>
    %21 = vector.multi_reduction <add>, %20, %cst_21 [0] : vector<72x64xf32> to vector<64xf32>
    %22 = vector.shape_cast %21 : vector<64xf32> to vector<1x64xf32>
    %cst_22 = arith.constant 3.200000e+01 : f32
    %23 = vector.broadcast %cst_22 : f32 to vector<1x64xf32>
    %24 = arith.divf %19, %23 : vector<1x64xf32>
    %cst_23 = arith.constant 3.200000e+01 : f32
    %25 = vector.broadcast %cst_23 : f32 to vector<1x64xf32>
    %26 = arith.divf %22, %25 : vector<1x64xf32>
    %27 = arith.mulf %24, %24 : vector<1x64xf32>
    %28 = arith.subf %26, %27 : vector<1x64xf32>
    %cst_24 = arith.constant 0.000000e+00 : f32
    %29 = vector.broadcast %cst_24 : f32 to vector<1x64xf32>
    %30 = arith.maximumf %28, %29 : vector<1x64xf32>
    %cst_25 = arith.constant 9.99999974E-6 : f32
    %31 = vector.broadcast %cst_25 : f32 to vector<1x64xf32>
    %32 = arith.addf %30, %31 : vector<1x64xf32>
    %33 = math.rsqrt %32 : vector<1x64xf32>
    %34 = arith.mulf %12, %33 : vector<1x64xf32>
    %35 = arith.mulf %24, %34 : vector<1x64xf32>
    %36 = arith.subf %13, %35 : vector<1x64xf32>
    %37 = vector.broadcast %34 : vector<1x64xf32> to vector<72x64xf32>
    %38 = arith.mulf %11, %37 : vector<72x64xf32>
    %39 = vector.broadcast %36 : vector<1x64xf32> to vector<72x64xf32>
    %40 = arith.addf %38, %39 : vector<72x64xf32>
    %cst_26 = arith.constant 0.000000e+00 : f32
    %41 = vector.broadcast %cst_26 : f32 to vector<72x64xf32>
    %42 = arith.maximumf %40, %41 : vector<72x64xf32>
    %cst_27 = arith.constant 0.000000e+00 : f32
    %43 = vector.shape_cast %2 : vector<72x1xi1> to vector<72x1xi1>
    %44 = vector.broadcast %43 : vector<72x1xi1> to vector<72x64xi1>
    %45 = vector.broadcast %cst_27 : f32 to vector<72x64xf32>
    %46 = arith.select %44, %42, %45 : vector<72x64xi1>, vector<72x64xf32>
    %c8 = arith.constant 8 : index
    %c0_28 = arith.constant 0 : index
    %47 = vector.load %arg18[%c8, %c0_28] : memref<88x64xf32, #tpu.memory_space<vmem>>, vector<72x64xf32>
    tpu.vector_store %arg18[%c8, %c0_28], %46 {strides = array<i32>} : memref<88x64xf32, #tpu.memory_space<vmem>>, vector<72x64xf32>,
    %c1 = arith.constant 1 : index
    %c0_29 = arith.constant 0 : index
    %48 = vector.load %arg18[%c1, %c0_29] : memref<88x64xf32, #tpu.memory_space<vmem>>, vector<72x64xf32>
    %49 = arith.truncf %48 : vector<72x64xf32> to vector<72x64xbf16>
    %c0_30 = arith.constant 0 : index
    %c0_31 = arith.constant 0 : index
    %c0_32 = arith.constant 0 : index
    %50 = vector.load %arg3[%c0_30, %c0_31, %c0_32] : memref<9x64x128xbf16, #tpu.memory_space<vmem>>, vector<1x64x128xbf16>
    %51 = vector.shape_cast %50 : vector<1x64x128xbf16> to vector<64x128xbf16>
    %cst_33 = arith.constant dense<0.000000e+00> : vector<72x128xf32>
    %52 = tpu.matmul %49, %51, %cst_33 {dimension_numbers = #tpu.dot_dimension_numbers<[1], [0], [0], [1], [0, 0, 1, 1], [], []>} : vector<72x64xbf16>, vector<64x128xbf16>, vector<72x128xf32> -> vector<72x128xf32>
    %c2 = arith.constant 2 : index
    %c0_34 = arith.constant 0 : index
    %53 = vector.load %arg18[%c2, %c0_34] : memref<88x64xf32, #tpu.memory_space<vmem>>, vector<72x64xf32>
    %54 = arith.truncf %53 : vector<72x64xf32> to vector<72x64xbf16>
    %c1_35 = arith.constant 1 : index
    %c0_36 = arith.constant 0 : index
    %c0_37 = arith.constant 0 : index
    %55 = vector.load %arg3[%c1_35, %c0_36, %c0_37] : memref<9x64x128xbf16, #tpu.memory_space<vmem>>, vector<1x64x128xbf16>
    %56 = vector.shape_cast %55 : vector<1x64x128xbf16> to vector<64x128xbf16>
    %cst_38 = arith.constant dense<0.000000e+00> : vector<72x128xf32>
    %57 = tpu.matmul %54, %56, %cst_38 {dimension_numbers = #tpu.dot_dimension_numbers<[1], [0], [0], [1], [0, 0, 1, 1], [], []>} : vector<72x64xbf16>, vector<64x128xbf16>, vector<72x128xf32> -> vector<72x128xf32>
    %58 = arith.addf %52, %57 : vector<72x128xf32>
    %c3 = arith.constant 3 : index
    %c0_39 = arith.constant 0 : index
    %59 = vector.load %arg18[%c3, %c0_39] : memref<88x64xf32, #tpu.memory_space<vmem>>, vector<72x64xf32>
    %60 = arith.truncf %59 : vector<72x64xf32> to vector<72x64xbf16>
    %c2_40 = arith.constant 2 : index
    %c0_41 = arith.constant 0 : index
    %c0_42 = arith.constant 0 : index
    %61 = vector.load %arg3[%c2_40, %c0_41, %c0_42] : memref<9x64x128xbf16, #tpu.memory_space<vmem>>, vector<1x64x128xbf16>
    %62 = vector.shape_cast %61 : vector<1x64x128xbf16> to vector<64x128xbf16>
    %cst_43 = arith.constant dense<0.000000e+00> : vector<72x128xf32>
    %63 = tpu.matmul %60, %62, %cst_43 {dimension_numbers = #tpu.dot_dimension_numbers<[1], [0], [0], [1], [0, 0, 1, 1], [], []>} : vector<72x64xbf16>, vector<64x128xbf16>, vector<72x128xf32> -> vector<72x128xf32>
    %64 = arith.addf %58, %63 : vector<72x128xf32>
    %c7 = arith.constant 7 : index
    %c0_44 = arith.constant 0 : index
    %65 = vector.load %arg18[%c7, %c0_44] : memref<88x64xf32, #tpu.memory_space<vmem>>, vector<72x64xf32>
    %66 = arith.truncf %65 : vector<72x64xf32> to vector<72x64xbf16>
    %c3_45 = arith.constant 3 : index
    %c0_46 = arith.constant 0 : index
    %c0_47 = arith.constant 0 : index
    %67 = vector.load %arg3[%c3_45, %c0_46, %c0_47] : memref<9x64x128xbf16, #tpu.memory_space<vmem>>, vector<1x64x128xbf16>
    %68 = vector.shape_cast %67 : vector<1x64x128xbf16> to vector<64x128xbf16>
    %cst_48 = arith.constant dense<0.000000e+00> : vector<72x128xf32>
    %69 = tpu.matmul %66, %68, %cst_48 {dimension_numbers = #tpu.dot_dimension_numbers<[1], [0], [0], [1], [0, 0, 1, 1], [], []>} : vector<72x64xbf16>, vector<64x128xbf16>, vector<72x128xf32> -> vector<72x128xf32>
    %70 = arith.addf %64, %69 : vector<72x128xf32>
    %c8_49 = arith.constant 8 : index
    %c0_50 = arith.constant 0 : index
    %71 = vector.load %arg18[%c8_49, %c0_50] : memref<88x64xf32, #tpu.memory_space<vmem>>, vector<72x64xf32>
    %72 = arith.truncf %71 : vector<72x64xf32> to vector<72x64xbf16>
    %c4 = arith.constant 4 : index
    %c0_51 = arith.constant 0 : index
    %c0_52 = arith.constant 0 : index
    %73 = vector.load %arg3[%c4, %c0_51, %c0_52] : memref<9x64x128xbf16, #tpu.memory_space<vmem>>, vector<1x64x128xbf16>
    %74 = vector.shape_cast %73 : vector<1x64x128xbf16> to vector<64x128xbf16>
    %cst_53 = arith.constant dense<0.000000e+00> : vector<72x128xf32>
    %75 = tpu.matmul %72, %74, %cst_53 {dimension_numbers = #tpu.dot_dimension_numbers<[1], [0], [0], [1], [0, 0, 1, 1], [], []>} : vector<72x64xbf16>, vector<64x128xbf16>, vector<72x128xf32> -> vector<72x128xf32>
    %76 = arith.addf %70, %75 : vector<72x128xf32>
    %c9 = arith.constant 9 : index
    %c0_54 = arith.constant 0 : index
    %77 = vector.load %arg18[%c9, %c0_54] : memref<88x64xf32, #tpu.memory_space<vmem>>, vector<72x64xf32>
    %78 = arith.truncf %77 : vector<72x64xf32> to vector<72x64xbf16>
    %c5 = arith.constant 5 : index
    %c0_55 = arith.constant 0 : index
    %c0_56 = arith.constant 0 : index
    %79 = vector.load %arg3[%c5, %c0_55, %c0_56] : memref<9x64x128xbf16, #tpu.memory_space<vmem>>, vector<1x64x128xbf16>
    %80 = vector.shape_cast %79 : vector<1x64x128xbf16> to vector<64x128xbf16>
    %cst_57 = arith.constant dense<0.000000e+00> : vector<72x128xf32>
    %81 = tpu.matmul %78, %80, %cst_57 {dimension_numbers = #tpu.dot_dimension_numbers<[1], [0], [0], [1], [0, 0, 1, 1], [], []>} : vector<72x64xbf16>, vector<64x128xbf16>, vector<72x128xf32> -> vector<72x128xf32>
    %82 = arith.addf %76, %81 : vector<72x128xf32>
    %c13 = arith.constant 13 : index
    %c0_58 = arith.constant 0 : index
    %83 = vector.load %arg18[%c13, %c0_58] : memref<88x64xf32, #tpu.memory_space<vmem>>, vector<72x64xf32>
    %84 = arith.truncf %83 : vector<72x64xf32> to vector<72x64xbf16>
    %c6 = arith.constant 6 : index
    %c0_59 = arith.constant 0 : index
    %c0_60 = arith.constant 0 : index
    %85 = vector.load %arg3[%c6, %c0_59, %c0_60] : memref<9x64x128xbf16, #tpu.memory_space<vmem>>, vector<1x64x128xbf16>
    %86 = vector.shape_cast %85 : vector<1x64x128xbf16> to vector<64x128xbf16>
    %cst_61 = arith.constant dense<0.000000e+00> : vector<72x128xf32>
    %87 = tpu.matmul %84, %86, %cst_61 {dimension_numbers = #tpu.dot_dimension_numbers<[1], [0], [0], [1], [0, 0, 1, 1], [], []>} : vector<72x64xbf16>, vector<64x128xbf16>, vector<72x128xf32> -> vector<72x128xf32>
    %88 = arith.addf %82, %87 : vector<72x128xf32>
    %c14 = arith.constant 14 : index
    %c0_62 = arith.constant 0 : index
    %89 = vector.load %arg18[%c14, %c0_62] : memref<88x64xf32, #tpu.memory_space<vmem>>, vector<72x64xf32>
    %90 = arith.truncf %89 : vector<72x64xf32> to vector<72x64xbf16>
    %c7_63 = arith.constant 7 : index
    %c0_64 = arith.constant 0 : index
    %c0_65 = arith.constant 0 : index
    %91 = vector.load %arg3[%c7_63, %c0_64, %c0_65] : memref<9x64x128xbf16, #tpu.memory_space<vmem>>, vector<1x64x128xbf16>
    %92 = vector.shape_cast %91 : vector<1x64x128xbf16> to vector<64x128xbf16>
    %cst_66 = arith.constant dense<0.000000e+00> : vector<72x128xf32>
    %93 = tpu.matmul %90, %92, %cst_66 {dimension_numbers = #tpu.dot_dimension_numbers<[1], [0], [0], [1], [0, 0, 1, 1], [], []>} : vector<72x64xbf16>, vector<64x128xbf16>, vector<72x128xf32> -> vector<72x128xf32>
    %94 = arith.addf %88, %93 : vector<72x128xf32>
    %c15 = arith.constant 15 : index
    %c0_67 = arith.constant 0 : index
    %95 = vector.load %arg18[%c15, %c0_67] : memref<88x64xf32, #tpu.memory_space<vmem>>, vector<72x64xf32>
    %96 = arith.truncf %95 : vector<72x64xf32> to vector<72x64xbf16>
    %c8_68 = arith.constant 8 : index
    %c0_69 = arith.constant 0 : index
    %c0_70 = arith.constant 0 : index
    %97 = vector.load %arg3[%c8_68, %c0_69, %c0_70] : memref<9x64x128xbf16, #tpu.memory_space<vmem>>, vector<1x64x128xbf16>
    %98 = vector.shape_cast %97 : vector<1x64x128xbf16> to vector<64x128xbf16>
    %cst_71 = arith.constant dense<0.000000e+00> : vector<72x128xf32>
    %99 = tpu.matmul %96, %98, %cst_71 {dimension_numbers = #tpu.dot_dimension_numbers<[1], [0], [0], [1], [0, 0, 1, 1], [], []>} : vector<72x64xbf16>, vector<64x128xbf16>, vector<72x128xf32> -> vector<72x128xf32>
    %100 = arith.addf %94, %99 : vector<72x128xf32>
    %c0_72 = arith.constant 0 : index
    %c0_73 = arith.constant 0 : index
    %101 = vector.load %arg8[%c0_72, %c0_73] : memref<1x32xf32, #tpu.memory_space<vmem>>, vector<1x32xf32>
    %c0_74 = arith.constant 0 : index
    %c0_75 = arith.constant 0 : index
    %102 = vector.load %arg9[%c0_74, %c0_75] : memref<1x32xf32, #tpu.memory_space<vmem>>, vector<1x32xf32>
    %c0_76 = arith.constant 0 : index
    %c0_77 = arith.constant 0 : index
    %103 = vector.load %arg12[%c0_76, %c0_77] : memref<128x32xf32, #tpu.memory_space<vmem>>, vector<128x32xf32>
    %c0_78 = arith.constant 0 : index
    %c0_79 = arith.constant 0 : index
    %104 = vector.load %arg13[%c0_78, %c0_79] : memref<32x128xf32, #tpu.memory_space<vmem>>, vector<32x128xf32>
    %cst_80 = arith.constant 0.000000e+00 : f32
    %105 = vector.shape_cast %2 : vector<72x1xi1> to vector<72x1xi1>
    %106 = vector.broadcast %105 : vector<72x1xi1> to vector<72x128xi1>
    %107 = vector.broadcast %cst_80 : f32 to vector<72x128xf32>
    %108 = arith.select %106, %100, %107 : vector<72x128xi1>, vector<72x128xf32>
    %cst_81 = arith.constant dense<0.000000e+00> : vector<128xf32>
    %109 = vector.multi_reduction <add>, %108, %cst_81 [0] : vector<72x128xf32> to vector<128xf32>
    %110 = vector.shape_cast %109 : vector<128xf32> to vector<1x128xf32>
    %111 = arith.mulf %108, %108 : vector<72x128xf32>
    %cst_82 = arith.constant dense<0.000000e+00> : vector<128xf32>
    %112 = vector.multi_reduction <add>, %111, %cst_82 [0] : vector<72x128xf32> to vector<128xf32>
    %113 = vector.shape_cast %112 : vector<128xf32> to vector<1x128xf32>
    %cst_83 = arith.constant dense<0.000000e+00> : vector<1x32xf32>
    %114 = tpu.matmul %110, %103, %cst_83 {dimension_numbers = #tpu.dot_dimension_numbers<[1], [0], [0], [1], [0, 0, 1, 1], [], []>} : vector<1x128xf32>, vector<128x32xf32>, vector<1x32xf32> -> vector<1x32xf32>
    %cst_84 = arith.constant dense<0.000000e+00> : vector<1x32xf32>
    %115 = tpu.matmul %113, %103, %cst_84 {dimension_numbers = #tpu.dot_dimension_numbers<[1], [0], [0], [1], [0, 0, 1, 1], [], []>} : vector<1x128xf32>, vector<128x32xf32>, vector<1x32xf32> -> vector<1x32xf32>
    %cst_85 = arith.constant 1.280000e+02 : f32
    %116 = vector.broadcast %cst_85 : f32 to vector<1x32xf32>
    %117 = arith.divf %114, %116 : vector<1x32xf32>
    %cst_86 = arith.constant 1.280000e+02 : f32
    %118 = vector.broadcast %cst_86 : f32 to vector<1x32xf32>
    %119 = arith.divf %115, %118 : vector<1x32xf32>
    %120 = arith.mulf %117, %117 : vector<1x32xf32>
    %121 = arith.subf %119, %120 : vector<1x32xf32>
    %cst_87 = arith.constant 0.000000e+00 : f32
    %122 = vector.broadcast %cst_87 : f32 to vector<1x32xf32>
    %123 = arith.maximumf %121, %122 : vector<1x32xf32>
    %cst_88 = arith.constant 9.99999974E-6 : f32
    %124 = vector.broadcast %cst_88 : f32 to vector<1x32xf32>
    %125 = arith.addf %123, %124 : vector<1x32xf32>
    %126 = math.rsqrt %125 : vector<1x32xf32>
    %127 = arith.mulf %101, %126 : vector<1x32xf32>
    %128 = arith.mulf %117, %127 : vector<1x32xf32>
    %129 = arith.subf %102, %128 : vector<1x32xf32>
    %cst_89 = arith.constant dense<0.000000e+00> : vector<1x128xf32>
    %130 = tpu.matmul %127, %104, %cst_89 {dimension_numbers = #tpu.dot_dimension_numbers<[1], [0], [0], [1], [0, 0, 1, 1], [], []>} : vector<1x32xf32>, vector<32x128xf32>, vector<1x128xf32> -> vector<1x128xf32>
    %cst_90 = arith.constant dense<0.000000e+00> : vector<1x128xf32>
    %131 = tpu.matmul %129, %104, %cst_90 {dimension_numbers = #tpu.dot_dimension_numbers<[1], [0], [0], [1], [0, 0, 1, 1], [], []>} : vector<1x32xf32>, vector<32x128xf32>, vector<1x128xf32> -> vector<1x128xf32>
    %132 = vector.broadcast %130 : vector<1x128xf32> to vector<72x128xf32>
    %133 = arith.mulf %100, %132 : vector<72x128xf32>
    %134 = vector.broadcast %131 : vector<1x128xf32> to vector<72x128xf32>
    %135 = arith.addf %133, %134 : vector<72x128xf32>
    %cst_91 = arith.constant 0.000000e+00 : f32
    %136 = vector.broadcast %cst_91 : f32 to vector<72x128xf32>
    %137 = arith.maximumf %135, %136 : vector<72x128xf32>
    %cst_92 = arith.constant 0.000000e+00 : f32
    %138 = vector.shape_cast %2 : vector<72x1xi1> to vector<72x1xi1>
    %139 = vector.broadcast %138 : vector<72x1xi1> to vector<72x128xi1>
    %140 = vector.broadcast %cst_92 : f32 to vector<72x128xf32>
    %141 = arith.select %139, %137, %140 : vector<72x128xi1>, vector<72x128xf32>
    %c8_93 = arith.constant 8 : index
    %c0_94 = arith.constant 0 : index
    %142 = vector.load %arg19[%c8_93, %c0_94] : memref<88x128xf32, #tpu.memory_space<vmem>>, vector<72x128xf32>
    tpu.vector_store %arg19[%c8_93, %c0_94], %141 {strides = array<i32>} : memref<88x128xf32, #tpu.memory_space<vmem>>, vector<72x128xf32>,
    %c1_95 = arith.constant 1 : index
    %c0_96 = arith.constant 0 : index
    %143 = vector.load %arg19[%c1_95, %c0_96] : memref<88x128xf32, #tpu.memory_space<vmem>>, vector<72x128xf32>
    %144 = arith.truncf %143 : vector<72x128xf32> to vector<72x128xbf16>
    %c0_97 = arith.constant 0 : index
    %c0_98 = arith.constant 0 : index
    %c0_99 = arith.constant 0 : index
    %145 = vector.load %arg4[%c0_97, %c0_98, %c0_99] : memref<9x128x256xbf16, #tpu.memory_space<vmem>>, vector<1x128x256xbf16>
    %146 = vector.shape_cast %145 : vector<1x128x256xbf16> to vector<128x256xbf16>
    %cst_100 = arith.constant dense<0.000000e+00> : vector<72x256xf32>
    %147 = tpu.matmul %144, %146, %cst_100 {dimension_numbers = #tpu.dot_dimension_numbers<[1], [0], [0], [1], [0, 0, 1, 1], [], []>} : vector<72x128xbf16>, vector<128x256xbf16>, vector<72x256xf32> -> vector<72x256xf32>
    %c2_101 = arith.constant 2 : index
    %c0_102 = arith.constant 0 : index
    %148 = vector.load %arg19[%c2_101, %c0_102] : memref<88x128xf32, #tpu.memory_space<vmem>>, vector<72x128xf32>
    %149 = arith.truncf %148 : vector<72x128xf32> to vector<72x128xbf16>
    %c1_103 = arith.constant 1 : index
    %c0_104 = arith.constant 0 : index
    %c0_105 = arith.constant 0 : index
    %150 = vector.load %arg4[%c1_103, %c0_104, %c0_105] : memref<9x128x256xbf16, #tpu.memory_space<vmem>>, vector<1x128x256xbf16>
    %151 = vector.shape_cast %150 : vector<1x128x256xbf16> to vector<128x256xbf16>
    %cst_106 = arith.constant dense<0.000000e+00> : vector<72x256xf32>
    %152 = tpu.matmul %149, %151, %cst_106 {dimension_numbers = #tpu.dot_dimension_numbers<[1], [0], [0], [1], [0, 0, 1, 1], [], []>} : vector<72x128xbf16>, vector<128x256xbf16>, vector<72x256xf32> -> vector<72x256xf32>
    %153 = arith.addf %147, %152 : vector<72x256xf32>
    %c3_107 = arith.constant 3 : index
    %c0_108 = arith.constant 0 : index
    %154 = vector.load %arg19[%c3_107, %c0_108] : memref<88x128xf32, #tpu.memory_space<vmem>>, vector<72x128xf32>
    %155 = arith.truncf %154 : vector<72x128xf32> to vector<72x128xbf16>
    %c2_109 = arith.constant 2 : index
    %c0_110 = arith.constant 0 : index
    %c0_111 = arith.constant 0 : index
    %156 = vector.load %arg4[%c2_109, %c0_110, %c0_111] : memref<9x128x256xbf16, #tpu.memory_space<vmem>>, vector<1x128x256xbf16>
    %157 = vector.shape_cast %156 : vector<1x128x256xbf16> to vector<128x256xbf16>
    %cst_112 = arith.constant dense<0.000000e+00> : vector<72x256xf32>
    %158 = tpu.matmul %155, %157, %cst_112 {dimension_numbers = #tpu.dot_dimension_numbers<[1], [0], [0], [1], [0, 0, 1, 1], [], []>} : vector<72x128xbf16>, vector<128x256xbf16>, vector<72x256xf32> -> vector<72x256xf32>
    %159 = arith.addf %153, %158 : vector<72x256xf32>
    %c7_113 = arith.constant 7 : index
    %c0_114 = arith.constant 0 : index
    %160 = vector.load %arg19[%c7_113, %c0_114] : memref<88x128xf32, #tpu.memory_space<vmem>>, vector<72x128xf32>
    %161 = arith.truncf %160 : vector<72x128xf32> to vector<72x128xbf16>
    %c3_115 = arith.constant 3 : index
    %c0_116 = arith.constant 0 : index
    %c0_117 = arith.constant 0 : index
    %162 = vector.load %arg4[%c3_115, %c0_116, %c0_117] : memref<9x128x256xbf16, #tpu.memory_space<vmem>>, vector<1x128x256xbf16>
    %163 = vector.shape_cast %162 : vector<1x128x256xbf16> to vector<128x256xbf16>
    %cst_118 = arith.constant dense<0.000000e+00> : vector<72x256xf32>
    %164 = tpu.matmul %161, %163, %cst_118 {dimension_numbers = #tpu.dot_dimension_numbers<[1], [0], [0], [1], [0, 0, 1, 1], [], []>} : vector<72x128xbf16>, vector<128x256xbf16>, vector<72x256xf32> -> vector<72x256xf32>
    %165 = arith.addf %159, %164 : vector<72x256xf32>
    %c8_119 = arith.constant 8 : index
    %c0_120 = arith.constant 0 : index
    %166 = vector.load %arg19[%c8_119, %c0_120] : memref<88x128xf32, #tpu.memory_space<vmem>>, vector<72x128xf32>
    %167 = arith.truncf %166 : vector<72x128xf32> to vector<72x128xbf16>
    %c4_121 = arith.constant 4 : index
    %c0_122 = arith.constant 0 : index
    %c0_123 = arith.constant 0 : index
    %168 = vector.load %arg4[%c4_121, %c0_122, %c0_123] : memref<9x128x256xbf16, #tpu.memory_space<vmem>>, vector<1x128x256xbf16>
    %169 = vector.shape_cast %168 : vector<1x128x256xbf16> to vector<128x256xbf16>
    %cst_124 = arith.constant dense<0.000000e+00> : vector<72x256xf32>
    %170 = tpu.matmul %167, %169, %cst_124 {dimension_numbers = #tpu.dot_dimension_numbers<[1], [0], [0], [1], [0, 0, 1, 1], [], []>} : vector<72x128xbf16>, vector<128x256xbf16>, vector<72x256xf32> -> vector<72x256xf32>
    %171 = arith.addf %165, %170 : vector<72x256xf32>
    %c9_125 = arith.constant 9 : index
    %c0_126 = arith.constant 0 : index
    %172 = vector.load %arg19[%c9_125, %c0_126] : memref<88x128xf32, #tpu.memory_space<vmem>>, vector<72x128xf32>
    %173 = arith.truncf %172 : vector<72x128xf32> to vector<72x128xbf16>
    %c5_127 = arith.constant 5 : index
    %c0_128 = arith.constant 0 : index
    %c0_129 = arith.constant 0 : index
    %174 = vector.load %arg4[%c5_127, %c0_128, %c0_129] : memref<9x128x256xbf16, #tpu.memory_space<vmem>>, vector<1x128x256xbf16>
    %175 = vector.shape_cast %174 : vector<1x128x256xbf16> to vector<128x256xbf16>
    %cst_130 = arith.constant dense<0.000000e+00> : vector<72x256xf32>
    %176 = tpu.matmul %173, %175, %cst_130 {dimension_numbers = #tpu.dot_dimension_numbers<[1], [0], [0], [1], [0, 0, 1, 1], [], []>} : vector<72x128xbf16>, vector<128x256xbf16>, vector<72x256xf32> -> vector<72x256xf32>
    %177 = arith.addf %171, %176 : vector<72x256xf32>
    %c13_131 = arith.constant 13 : index
    %c0_132 = arith.constant 0 : index
    %178 = vector.load %arg19[%c13_131, %c0_132] : memref<88x128xf32, #tpu.memory_space<vmem>>, vector<72x128xf32>
    %179 = arith.truncf %178 : vector<72x128xf32> to vector<72x128xbf16>
    %c6_133 = arith.constant 6 : index
    %c0_134 = arith.constant 0 : index
    %c0_135 = arith.constant 0 : index
    %180 = vector.load %arg4[%c6_133, %c0_134, %c0_135] : memref<9x128x256xbf16, #tpu.memory_space<vmem>>, vector<1x128x256xbf16>
    %181 = vector.shape_cast %180 : vector<1x128x256xbf16> to vector<128x256xbf16>
    %cst_136 = arith.constant dense<0.000000e+00> : vector<72x256xf32>
    %182 = tpu.matmul %179, %181, %cst_136 {dimension_numbers = #tpu.dot_dimension_numbers<[1], [0], [0], [1], [0, 0, 1, 1], [], []>} : vector<72x128xbf16>, vector<128x256xbf16>, vector<72x256xf32> -> vector<72x256xf32>
    %183 = arith.addf %177, %182 : vector<72x256xf32>
    %c14_137 = arith.constant 14 : index
    %c0_138 = arith.constant 0 : index
    %184 = vector.load %arg19[%c14_137, %c0_138] : memref<88x128xf32, #tpu.memory_space<vmem>>, vector<72x128xf32>
    %185 = arith.truncf %184 : vector<72x128xf32> to vector<72x128xbf16>
    %c7_139 = arith.constant 7 : index
    %c0_140 = arith.constant 0 : index
    %c0_141 = arith.constant 0 : index
    %186 = vector.load %arg4[%c7_139, %c0_140, %c0_141] : memref<9x128x256xbf16, #tpu.memory_space<vmem>>, vector<1x128x256xbf16>
    %187 = vector.shape_cast %186 : vector<1x128x256xbf16> to vector<128x256xbf16>
    %cst_142 = arith.constant dense<0.000000e+00> : vector<72x256xf32>
    %188 = tpu.matmul %185, %187, %cst_142 {dimension_numbers = #tpu.dot_dimension_numbers<[1], [0], [0], [1], [0, 0, 1, 1], [], []>} : vector<72x128xbf16>, vector<128x256xbf16>, vector<72x256xf32> -> vector<72x256xf32>
    %189 = arith.addf %183, %188 : vector<72x256xf32>
    %c15_143 = arith.constant 15 : index
    %c0_144 = arith.constant 0 : index
    %190 = vector.load %arg19[%c15_143, %c0_144] : memref<88x128xf32, #tpu.memory_space<vmem>>, vector<72x128xf32>
    %191 = arith.truncf %190 : vector<72x128xf32> to vector<72x128xbf16>
    %c8_145 = arith.constant 8 : index
    %c0_146 = arith.constant 0 : index
    %c0_147 = arith.constant 0 : index
    %192 = vector.load %arg4[%c8_145, %c0_146, %c0_147] : memref<9x128x256xbf16, #tpu.memory_space<vmem>>, vector<1x128x256xbf16>
    %193 = vector.shape_cast %192 : vector<1x128x256xbf16> to vector<128x256xbf16>
    %cst_148 = arith.constant dense<0.000000e+00> : vector<72x256xf32>
    %194 = tpu.matmul %191, %193, %cst_148 {dimension_numbers = #tpu.dot_dimension_numbers<[1], [0], [0], [1], [0, 0, 1, 1], [], []>} : vector<72x128xbf16>, vector<128x256xbf16>, vector<72x256xf32> -> vector<72x256xf32>
    %195 = arith.addf %189, %194 : vector<72x256xf32>
    %c0_149 = arith.constant 0 : index
    %c0_150 = arith.constant 0 : index
    %196 = vector.load %arg10[%c0_149, %c0_150] : memref<1x16xf32, #tpu.memory_space<vmem>>, vector<1x16xf32>
    %c0_151 = arith.constant 0 : index
    %c0_152 = arith.constant 0 : index
    %197 = vector.load %arg11[%c0_151, %c0_152] : memref<1x16xf32, #tpu.memory_space<vmem>>, vector<1x16xf32>
    %c0_153 = arith.constant 0 : index
    %c0_154 = arith.constant 0 : index
    %198 = vector.load %arg14[%c0_153, %c0_154] : memref<256x16xf32, #tpu.memory_space<vmem>>, vector<256x16xf32>
    %c0_155 = arith.constant 0 : index
    %c0_156 = arith.constant 0 : index
    %199 = vector.load %arg15[%c0_155, %c0_156] : memref<16x256xf32, #tpu.memory_space<vmem>>, vector<16x256xf32>
    %cst_157 = arith.constant 0.000000e+00 : f32
    %200 = vector.shape_cast %2 : vector<72x1xi1> to vector<72x1xi1>
    %201 = vector.broadcast %200 : vector<72x1xi1> to vector<72x256xi1>
    %202 = vector.broadcast %cst_157 : f32 to vector<72x256xf32>
    %203 = arith.select %201, %195, %202 : vector<72x256xi1>, vector<72x256xf32>
    %cst_158 = arith.constant dense<0.000000e+00> : vector<256xf32>
    %204 = vector.multi_reduction <add>, %203, %cst_158 [0] : vector<72x256xf32> to vector<256xf32>
    %205 = vector.shape_cast %204 : vector<256xf32> to vector<1x256xf32>
    %206 = arith.mulf %203, %203 : vector<72x256xf32>
    %cst_159 = arith.constant dense<0.000000e+00> : vector<256xf32>
    %207 = vector.multi_reduction <add>, %206, %cst_159 [0] : vector<72x256xf32> to vector<256xf32>
    %208 = vector.shape_cast %207 : vector<256xf32> to vector<1x256xf32>
    %cst_160 = arith.constant dense<0.000000e+00> : vector<1x16xf32>
    %209 = tpu.matmul %205, %198, %cst_160 {dimension_numbers = #tpu.dot_dimension_numbers<[1], [0], [0], [1], [0, 0, 1, 1], [], []>} : vector<1x256xf32>, vector<256x16xf32>, vector<1x16xf32> -> vector<1x16xf32>
    %cst_161 = arith.constant dense<0.000000e+00> : vector<1x16xf32>
    %210 = tpu.matmul %208, %198, %cst_161 {dimension_numbers = #tpu.dot_dimension_numbers<[1], [0], [0], [1], [0, 0, 1, 1], [], []>} : vector<1x256xf32>, vector<256x16xf32>, vector<1x16xf32> -> vector<1x16xf32>
    %cst_162 = arith.constant 5.120000e+02 : f32
    %211 = vector.broadcast %cst_162 : f32 to vector<1x16xf32>
    %212 = arith.divf %209, %211 : vector<1x16xf32>
    %cst_163 = arith.constant 5.120000e+02 : f32
    %213 = vector.broadcast %cst_163 : f32 to vector<1x16xf32>
    %214 = arith.divf %210, %213 : vector<1x16xf32>
    %215 = arith.mulf %212, %212 : vector<1x16xf32>
    %216 = arith.subf %214, %215 : vector<1x16xf32>
    %cst_164 = arith.constant 0.000000e+00 : f32
    %217 = vector.broadcast %cst_164 : f32 to vector<1x16xf32>
    %218 = arith.maximumf %216, %217 : vector<1x16xf32>
    %cst_165 = arith.constant 9.99999974E-6 : f32
    %219 = vector.broadcast %cst_165 : f32 to vector<1x16xf32>
    %220 = arith.addf %218, %219 : vector<1x16xf32>
    %221 = math.rsqrt %220 : vector<1x16xf32>
    %222 = arith.mulf %196, %221 : vector<1x16xf32>
    %223 = arith.mulf %212, %222 : vector<1x16xf32>
    %224 = arith.subf %197, %223 : vector<1x16xf32>
    %cst_166 = arith.constant dense<0.000000e+00> : vector<1x256xf32>
    %225 = tpu.matmul %222, %199, %cst_166 {dimension_numbers = #tpu.dot_dimension_numbers<[1], [0], [0], [1], [0, 0, 1, 1], [], []>} : vector<1x16xf32>, vector<16x256xf32>, vector<1x256xf32> -> vector<1x256xf32>
    %cst_167 = arith.constant dense<0.000000e+00> : vector<1x256xf32>
    %226 = tpu.matmul %224, %199, %cst_167 {dimension_numbers = #tpu.dot_dimension_numbers<[1], [0], [0], [1], [0, 0, 1, 1], [], []>} : vector<1x16xf32>, vector<16x256xf32>, vector<1x256xf32> -> vector<1x256xf32>
    %227 = vector.broadcast %225 : vector<1x256xf32> to vector<72x256xf32>
    %228 = arith.mulf %195, %227 : vector<72x256xf32>
    %229 = vector.broadcast %226 : vector<1x256xf32> to vector<72x256xf32>
    %230 = arith.addf %228, %229 : vector<72x256xf32>
    %cst_168 = arith.constant 0.000000e+00 : f32
    %231 = vector.broadcast %cst_168 : f32 to vector<72x256xf32>
    %232 = arith.maximumf %230, %231 : vector<72x256xf32>
    %cst_169 = arith.constant 0.000000e+00 : f32
    %233 = vector.shape_cast %2 : vector<72x1xi1> to vector<72x1xi1>
    %234 = vector.broadcast %233 : vector<72x1xi1> to vector<72x256xi1>
    %235 = vector.broadcast %cst_169 : f32 to vector<72x256xf32>
    %236 = arith.select %234, %232, %235 : vector<72x256xi1>, vector<72x256xf32>
    %c8_170 = arith.constant 8 : index
    %c0_171 = arith.constant 0 : index
    %237 = vector.load %arg20[%c8_170, %c0_171] : memref<88x256xf32, #tpu.memory_space<vmem>>, vector<72x256xf32>
    tpu.vector_store %arg20[%c8_170, %c0_171], %236 {strides = array<i32>} : memref<88x256xf32, #tpu.memory_space<vmem>>, vector<72x256xf32>,
    %c1_172 = arith.constant 1 : index
    %c0_173 = arith.constant 0 : index
    %238 = vector.load %arg20[%c1_172, %c0_173] : memref<88x256xf32, #tpu.memory_space<vmem>>, vector<72x256xf32>
    %239 = arith.truncf %238 : vector<72x256xf32> to vector<72x256xbf16>
    %c0_174 = arith.constant 0 : index
    %c0_175 = arith.constant 0 : index
    %c0_176 = arith.constant 0 : index
    %240 = vector.load %arg5[%c0_174, %c0_175, %c0_176] : memref<9x256x256xbf16, #tpu.memory_space<vmem>>, vector<1x256x256xbf16>
    %241 = vector.shape_cast %240 : vector<1x256x256xbf16> to vector<256x256xbf16>
    %cst_177 = arith.constant dense<0.000000e+00> : vector<72x256xf32>
    %242 = tpu.matmul %239, %241, %cst_177 {dimension_numbers = #tpu.dot_dimension_numbers<[1], [0], [0], [1], [0, 0, 1, 1], [], []>} : vector<72x256xbf16>, vector<256x256xbf16>, vector<72x256xf32> -> vector<72x256xf32>
    %c2_178 = arith.constant 2 : index
    %c0_179 = arith.constant 0 : index
    %243 = vector.load %arg20[%c2_178, %c0_179] : memref<88x256xf32, #tpu.memory_space<vmem>>, vector<72x256xf32>
    %244 = arith.truncf %243 : vector<72x256xf32> to vector<72x256xbf16>
    %c1_180 = arith.constant 1 : index
    %c0_181 = arith.constant 0 : index
    %c0_182 = arith.constant 0 : index
    %245 = vector.load %arg5[%c1_180, %c0_181, %c0_182] : memref<9x256x256xbf16, #tpu.memory_space<vmem>>, vector<1x256x256xbf16>
    %246 = vector.shape_cast %245 : vector<1x256x256xbf16> to vector<256x256xbf16>
    %cst_183 = arith.constant dense<0.000000e+00> : vector<72x256xf32>
    %247 = tpu.matmul %244, %246, %cst_183 {dimension_numbers = #tpu.dot_dimension_numbers<[1], [0], [0], [1], [0, 0, 1, 1], [], []>} : vector<72x256xbf16>, vector<256x256xbf16>, vector<72x256xf32> -> vector<72x256xf32>
    %248 = arith.addf %242, %247 : vector<72x256xf32>
    %c3_184 = arith.constant 3 : index
    %c0_185 = arith.constant 0 : index
    %249 = vector.load %arg20[%c3_184, %c0_185] : memref<88x256xf32, #tpu.memory_space<vmem>>, vector<72x256xf32>
    %250 = arith.truncf %249 : vector<72x256xf32> to vector<72x256xbf16>
    %c2_186 = arith.constant 2 : index
    %c0_187 = arith.constant 0 : index
    %c0_188 = arith.constant 0 : index
    %251 = vector.load %arg5[%c2_186, %c0_187, %c0_188] : memref<9x256x256xbf16, #tpu.memory_space<vmem>>, vector<1x256x256xbf16>
    %252 = vector.shape_cast %251 : vector<1x256x256xbf16> to vector<256x256xbf16>
    %cst_189 = arith.constant dense<0.000000e+00> : vector<72x256xf32>
    %253 = tpu.matmul %250, %252, %cst_189 {dimension_numbers = #tpu.dot_dimension_numbers<[1], [0], [0], [1], [0, 0, 1, 1], [], []>} : vector<72x256xbf16>, vector<256x256xbf16>, vector<72x256xf32> -> vector<72x256xf32>
    %254 = arith.addf %248, %253 : vector<72x256xf32>
    %c7_190 = arith.constant 7 : index
    %c0_191 = arith.constant 0 : index
    %255 = vector.load %arg20[%c7_190, %c0_191] : memref<88x256xf32, #tpu.memory_space<vmem>>, vector<72x256xf32>
    %256 = arith.truncf %255 : vector<72x256xf32> to vector<72x256xbf16>
    %c3_192 = arith.constant 3 : index
    %c0_193 = arith.constant 0 : index
    %c0_194 = arith.constant 0 : index
    %257 = vector.load %arg5[%c3_192, %c0_193, %c0_194] : memref<9x256x256xbf16, #tpu.memory_space<vmem>>, vector<1x256x256xbf16>
    %258 = vector.shape_cast %257 : vector<1x256x256xbf16> to vector<256x256xbf16>
    %cst_195 = arith.constant dense<0.000000e+00> : vector<72x256xf32>
    %259 = tpu.matmul %256, %258, %cst_195 {dimension_numbers = #tpu.dot_dimension_numbers<[1], [0], [0], [1], [0, 0, 1, 1], [], []>} : vector<72x256xbf16>, vector<256x256xbf16>, vector<72x256xf32> -> vector<72x256xf32>
    %260 = arith.addf %254, %259 : vector<72x256xf32>
    %c8_196 = arith.constant 8 : index
    %c0_197 = arith.constant 0 : index
    %261 = vector.load %arg20[%c8_196, %c0_197] : memref<88x256xf32, #tpu.memory_space<vmem>>, vector<72x256xf32>
    %262 = arith.truncf %261 : vector<72x256xf32> to vector<72x256xbf16>
    %c4_198 = arith.constant 4 : index
    %c0_199 = arith.constant 0 : index
    %c0_200 = arith.constant 0 : index
    %263 = vector.load %arg5[%c4_198, %c0_199, %c0_200] : memref<9x256x256xbf16, #tpu.memory_space<vmem>>, vector<1x256x256xbf16>
    %264 = vector.shape_cast %263 : vector<1x256x256xbf16> to vector<256x256xbf16>
    %cst_201 = arith.constant dense<0.000000e+00> : vector<72x256xf32>
    %265 = tpu.matmul %262, %264, %cst_201 {dimension_numbers = #tpu.dot_dimension_numbers<[1], [0], [0], [1], [0, 0, 1, 1], [], []>} : vector<72x256xbf16>, vector<256x256xbf16>, vector<72x256xf32> -> vector<72x256xf32>
    %266 = arith.addf %260, %265 : vector<72x256xf32>
    %c9_202 = arith.constant 9 : index
    %c0_203 = arith.constant 0 : index
    %267 = vector.load %arg20[%c9_202, %c0_203] : memref<88x256xf32, #tpu.memory_space<vmem>>, vector<72x256xf32>
    %268 = arith.truncf %267 : vector<72x256xf32> to vector<72x256xbf16>
    %c5_204 = arith.constant 5 : index
    %c0_205 = arith.constant 0 : index
    %c0_206 = arith.constant 0 : index
    %269 = vector.load %arg5[%c5_204, %c0_205, %c0_206] : memref<9x256x256xbf16, #tpu.memory_space<vmem>>, vector<1x256x256xbf16>
    %270 = vector.shape_cast %269 : vector<1x256x256xbf16> to vector<256x256xbf16>
    %cst_207 = arith.constant dense<0.000000e+00> : vector<72x256xf32>
    %271 = tpu.matmul %268, %270, %cst_207 {dimension_numbers = #tpu.dot_dimension_numbers<[1], [0], [0], [1], [0, 0, 1, 1], [], []>} : vector<72x256xbf16>, vector<256x256xbf16>, vector<72x256xf32> -> vector<72x256xf32>
    %272 = arith.addf %266, %271 : vector<72x256xf32>
    %c13_208 = arith.constant 13 : index
    %c0_209 = arith.constant 0 : index
    %273 = vector.load %arg20[%c13_208, %c0_209] : memref<88x256xf32, #tpu.memory_space<vmem>>, vector<72x256xf32>
    %274 = arith.truncf %273 : vector<72x256xf32> to vector<72x256xbf16>
    %c6_210 = arith.constant 6 : index
    %c0_211 = arith.constant 0 : index
    %c0_212 = arith.constant 0 : index
    %275 = vector.load %arg5[%c6_210, %c0_211, %c0_212] : memref<9x256x256xbf16, #tpu.memory_space<vmem>>, vector<1x256x256xbf16>
    %276 = vector.shape_cast %275 : vector<1x256x256xbf16> to vector<256x256xbf16>
    %cst_213 = arith.constant dense<0.000000e+00> : vector<72x256xf32>
    %277 = tpu.matmul %274, %276, %cst_213 {dimension_numbers = #tpu.dot_dimension_numbers<[1], [0], [0], [1], [0, 0, 1, 1], [], []>} : vector<72x256xbf16>, vector<256x256xbf16>, vector<72x256xf32> -> vector<72x256xf32>
    %278 = arith.addf %272, %277 : vector<72x256xf32>
    %c14_214 = arith.constant 14 : index
    %c0_215 = arith.constant 0 : index
    %279 = vector.load %arg20[%c14_214, %c0_215] : memref<88x256xf32, #tpu.memory_space<vmem>>, vector<72x256xf32>
    %280 = arith.truncf %279 : vector<72x256xf32> to vector<72x256xbf16>
    %c7_216 = arith.constant 7 : index
    %c0_217 = arith.constant 0 : index
    %c0_218 = arith.constant 0 : index
    %281 = vector.load %arg5[%c7_216, %c0_217, %c0_218] : memref<9x256x256xbf16, #tpu.memory_space<vmem>>, vector<1x256x256xbf16>
    %282 = vector.shape_cast %281 : vector<1x256x256xbf16> to vector<256x256xbf16>
    %cst_219 = arith.constant dense<0.000000e+00> : vector<72x256xf32>
    %283 = tpu.matmul %280, %282, %cst_219 {dimension_numbers = #tpu.dot_dimension_numbers<[1], [0], [0], [1], [0, 0, 1, 1], [], []>} : vector<72x256xbf16>, vector<256x256xbf16>, vector<72x256xf32> -> vector<72x256xf32>
    %284 = arith.addf %278, %283 : vector<72x256xf32>
    %c15_220 = arith.constant 15 : index
    %c0_221 = arith.constant 0 : index
    %285 = vector.load %arg20[%c15_220, %c0_221] : memref<88x256xf32, #tpu.memory_space<vmem>>, vector<72x256xf32>
    %286 = arith.truncf %285 : vector<72x256xf32> to vector<72x256xbf16>
    %c8_222 = arith.constant 8 : index
    %c0_223 = arith.constant 0 : index
    %c0_224 = arith.constant 0 : index
    %287 = vector.load %arg5[%c8_222, %c0_223, %c0_224] : memref<9x256x256xbf16, #tpu.memory_space<vmem>>, vector<1x256x256xbf16>
    %288 = vector.shape_cast %287 : vector<1x256x256xbf16> to vector<256x256xbf16>
    %cst_225 = arith.constant dense<0.000000e+00> : vector<72x256xf32>
    %289 = tpu.matmul %286, %288, %cst_225 {dimension_numbers = #tpu.dot_dimension_numbers<[1], [0], [0], [1], [0, 0, 1, 1], [], []>} : vector<72x256xbf16>, vector<256x256xbf16>, vector<72x256xf32> -> vector<72x256xf32>
    %290 = arith.addf %284, %289 : vector<72x256xf32>
    %291 = math.tanh %290 : vector<72x256xf32>
    %c0_226 = arith.constant 0 : index
    %c0_227 = arith.constant 0 : index
    %292 = vector.load %arg17[%c0_226, %c0_227] : memref<72x256xf32, #tpu.memory_space<vmem>>, vector<72x256xf32>
    tpu.vector_store %arg17[%c0_226, %c0_227], %291 {strides = array<i32>} : memref<72x256xf32, #tpu.memory_space<vmem>>, vector<72x256xf32>,
    return
  }
  func.func @transform_0(%arg0: i32) -> (i32, i32) {
    %c0_i32 = arith.constant 0 : i32
    %c0_i32_0 = arith.constant 0 : i32
    %c0_i32_1 = arith.constant 0 : i32
    return %c0_i32, %c0_i32_0 : i32, i32
  }
  func.func @transform_1(%arg0: i32) -> (i32, i32) {
    %c0_i32 = arith.constant 0 : i32
    %c0_i32_0 = arith.constant 0 : i32
    %c0_i32_1 = arith.constant 0 : i32
    return %c0_i32, %c0_i32_0 : i32, i32
  }
  func.func @transform_2(%arg0: i32) -> (i32, i32, i32) {
    %c0_i32 = arith.constant 0 : i32
    %c0_i32_0 = arith.constant 0 : i32
    %c0_i32_1 = arith.constant 0 : i32
    %c0_i32_2 = arith.constant 0 : i32
    return %c0_i32, %c0_i32_0, %c0_i32_1 : i32, i32, i32
  }
  func.func @transform_3(%arg0: i32) -> (i32, i32, i32) {
    %c0_i32 = arith.constant 0 : i32
    %c0_i32_0 = arith.constant 0 : i32
    %c0_i32_1 = arith.constant 0 : i32
    %c0_i32_2 = arith.constant 0 : i32
    return %c0_i32, %c0_i32_0, %c0_i32_1 : i32, i32, i32
  }
  func.func @transform_4(%arg0: i32) -> (i32, i32, i32) {
    %c0_i32 = arith.constant 0 : i32
    %c0_i32_0 = arith.constant 0 : i32
    %c0_i32_1 = arith.constant 0 : i32
    %c0_i32_2 = arith.constant 0 : i32
    return %c0_i32, %c0_i32_0, %c0_i32_1 : i32, i32, i32
  }
  func.func @transform_5(%arg0: i32) -> (i32, i32) {
    %c0_i32 = arith.constant 0 : i32
    %c0_i32_0 = arith.constant 0 : i32
    %c0_i32_1 = arith.constant 0 : i32
    return %c0_i32, %c0_i32_0 : i32, i32
  }
  func.func @transform_6(%arg0: i32) -> (i32, i32) {
    %c0_i32 = arith.constant 0 : i32
    %c0_i32_0 = arith.constant 0 : i32
    %c0_i32_1 = arith.constant 0 : i32
    return %c0_i32, %c0_i32_0 : i32, i32
  }
  func.func @transform_7(%arg0: i32) -> (i32, i32) {
    %c0_i32 = arith.constant 0 : i32
    %c0_i32_0 = arith.constant 0 : i32
    %c0_i32_1 = arith.constant 0 : i32
    return %c0_i32, %c0_i32_0 : i32, i32
  }
  func.func @transform_8(%arg0: i32) -> (i32, i32) {
    %c0_i32 = arith.constant 0 : i32
    %c0_i32_0 = arith.constant 0 : i32
    %c0_i32_1 = arith.constant 0 : i32
    return %c0_i32, %c0_i32_0 : i32, i32
  }
  func.func @transform_9(%arg0: i32) -> (i32, i32) {
    %c0_i32 = arith.constant 0 : i32
    %c0_i32_0 = arith.constant 0 : i32
    %c0_i32_1 = arith.constant 0 : i32
    return %c0_i32, %c0_i32_0 : i32, i32
  }
  func.func @transform_10(%arg0: i32) -> (i32, i32) {
    %c0_i32 = arith.constant 0 : i32
    %c0_i32_0 = arith.constant 0 : i32
    %c0_i32_1 = arith.constant 0 : i32
    return %c0_i32, %c0_i32_0 : i32, i32
  }
  func.func @transform_11(%arg0: i32) -> (i32, i32) {
    %c0_i32 = arith.constant 0 : i32
    %c0_i32_0 = arith.constant 0 : i32
    %c0_i32_1 = arith.constant 0 : i32
    return %c0_i32, %c0_i32_0 : i32, i32
  }
  func.func @transform_12(%arg0: i32) -> (i32, i32) {
    %c0_i32 = arith.constant 0 : i32
    %c0_i32_0 = arith.constant 0 : i32
    %c0_i32_1 = arith.constant 0 : i32
    return %c0_i32, %c0_i32_0 : i32, i32
  }
  func.func @transform_13(%arg0: i32) -> (i32, i32) {
    %c0_i32 = arith.constant 0 : i32
    %c0_i32_0 = arith.constant 0 : i32
    %c0_i32_1 = arith.constant 0 : i32
    return %c0_i32, %c0_i32_0 : i32, i32
  }
  func.func @transform_14(%arg0: i32) -> (i32, i32) {
    %c0_i32 = arith.constant 0 : i32
    %c0_i32_0 = arith.constant 0 : i32
    %c0_i32_1 = arith.constant 0 : i32
    return %c0_i32, %c0_i32_0 : i32, i32
  }
  func.func @transform_15(%arg0: i32) -> (i32, i32) {
    %c0_i32 = arith.constant 0 : i32
    %c0_i32_0 = arith.constant 0 : i32
    %c0_i32_1 = arith.constant 0 : i32
    return %c0_i32, %c0_i32_0 : i32, i32
  }
  func.func @transform_16(%arg0: i32) -> (i32, i32) {
    %c0_i32 = arith.constant 0 : i32
    %c0_i32_0 = arith.constant 0 : i32
    %c0_i32_1 = arith.constant 0 : i32
    return %c0_i32, %c0_i32_0 : i32, i32
  }
}

</mosaic_0001>

<llo_original>
// kernel: combined_model_forward.1
$region0: #{combined_model_forward.1}
  #allocation0 [shape = 'u32[]', space=smem, size = 0x4, offset = 0x4, fixed_abs, tag = 'smem constant byte address 0x4 - core index']
  #allocation1 [shape = 'u32[144,128]{1,0:T(1,128)}', space=vmem, size = 0x12000, scoped, tag = 'internal scratch']
  #allocation2 [shape = 'f32[88,64]{1,0:T(8,128)}', space=vmem, size = 0xb000, scoped, tag = 'scratch operand']
  #allocation3 [shape = 'f32[88,128]{1,0:T(8,128)}', space=vmem, size = 0xb000, scoped, tag = 'scratch operand']
  #allocation4 [shape = 'f32[88,256]{1,0:T(8,128)}', space=vmem, size = 0x16000, scoped, tag = 'scratch operand']
  %s0 = inlined_call_operand.vmem [shape: bf16[72,512], index: 0, kind: input, shape index: {}]
  %s1 = inlined_call_operand.vmem [shape: bf16[512,64], index: 1, kind: input, shape index: {}]
  %s2 = inlined_call_operand.vmem [shape: bf16[9,64,128], index: 2, kind: input, shape index: {}]
  %s3 = inlined_call_operand.vmem [shape: bf16[9,128,256], index: 3, kind: input, shape index: {}]
  %s4 = inlined_call_operand.vmem [shape: bf16[9,256,256], index: 4, kind: input, shape index: {}]
  %s5 = inlined_call_operand.vmem [shape: f32[1,64], index: 5, kind: input, shape index: {}]
  %s6 = inlined_call_operand.vmem [shape: f32[1,64], index: 6, kind: input, shape index: {}]
  %s7 = inlined_call_operand.vmem [shape: f32[1,32], index: 7, kind: input, shape index: {}]
  %s8 = inlined_call_operand.vmem [shape: f32[1,32], index: 8, kind: input, shape index: {}]
  %s9 = inlined_call_operand.vmem [shape: f32[1,16], index: 9, kind: input, shape index: {}]
  %s10 = inlined_call_operand.vmem [shape: f32[1,16], index: 10, kind: input, shape index: {}]
  %s11 = inlined_call_operand.vmem [shape: f32[128,32], index: 11, kind: input, shape index: {}]
  %s12 = inlined_call_operand.vmem [shape: f32[32,128], index: 12, kind: input, shape index: {}]
  %s13 = inlined_call_operand.vmem [shape: f32[256,16], index: 13, kind: input, shape index: {}]
  %s14 = inlined_call_operand.vmem [shape: f32[16,256], index: 14, kind: input, shape index: {}]
  %s15 = inlined_call_operand.vmem [shape: f32[72,1], index: 15, kind: input, shape index: {}]
  %s16 = inlined_call_operand.vmem [shape: f32[72,256], index: 16, kind: output, shape index: {}]
  %s17 = sld [smem:[#allocation0]]
  $region74: #{combined_model_forward.1} parent=0
    _
  %s19 = ssub.s32 1, %s17
  %s20 = scalar_select 0, %s19, %s17
  // Predicated region
  $region2: #{combined_model_forward.1} parent=0 // pred_check
    _
  $region3: #{combined_model_forward.1} parent=0 // pred_check_branch
    %22 = sbr.rel (0) target = $region5
  $region4: #{combined_model_forward.1} parent=0 // pred_region
    _
  $region5: #{combined_model_forward.1} parent=0 // pred_fallthru
    _
  // Predicated region
  $region6: #{combined_model_forward.1} parent=0 // pred_check
    _
  $region7: #{combined_model_forward.1} parent=0 // pred_check_branch
    %24 = sbr.rel (0) target = $region9
  $region8: #{combined_model_forward.1} parent=0 // pred_region
    _
  $region9: #{combined_model_forward.1} parent=0 // pred_fallthru
    _
  // Predicated region
  $region10: #{combined_model_forward.1} parent=0 // pred_check
    _
  $region11: #{combined_model_forward.1} parent=0 // pred_check_branch
    %26 = sbr.rel (0) target = $region13
  $region12: #{combined_model_forward.1} parent=0 // pred_region
    _
  $region13: #{combined_model_forward.1} parent=0 // pred_fallthru
    _
  // Predicated region
  $region14: #{combined_model_forward.1} parent=0 // pred_check
    _
  $region15: #{combined_model_forward.1} parent=0 // pred_check_branch
    %28 = sbr.rel (0) target = $region17
  $region16: #{combined_model_forward.1} parent=0 // pred_region
    _
  $region17: #{combined_model_forward.1} parent=0 // pred_fallthru
    _
  // Predicated region
  $region18: #{combined_model_forward.1} parent=0 // pred_check
    _
  $region19: #{combined_model_forward.1} parent=0 // pred_check_branch
    %30 = sbr.rel (0) target = $region21
  $region20: #{combined_model_forward.1} parent=0 // pred_region
    _
  $region21: #{combined_model_forward.1} parent=0 // pred_fallthru
    _
  // Predicated region
  $region22: #{combined_model_forward.1} parent=0 // pred_check
    _
  $region23: #{combined_model_forward.1} parent=0 // pred_check_branch
    %32 = sbr.rel (0) target = $region25
  $region24: #{combined_model_forward.1} parent=0 // pred_region
    _
  $region25: #{combined_model_forward.1} parent=0 // pred_fallthru
    _
  // Predicated region
  $region26: #{combined_model_forward.1} parent=0 // pred_check
    _
  $region27: #{combined_model_forward.1} parent=0 // pred_check_branch
    %34 = sbr.rel (0) target = $region29
  $region28: #{combined_model_forward.1} parent=0 // pred_region
    _
  $region29: #{combined_model_forward.1} parent=0 // pred_fallthru
    _
  // Predicated region
  $region30: #{combined_model_forward.1} parent=0 // pred_check
    _
  $region31: #{combined_model_forward.1} parent=0 // pred_check_branch
    %36 = sbr.rel (0) target = $region33
  $region32: #{combined_model_forward.1} parent=0 // pred_region
    _
  $region33: #{combined_model_forward.1} parent=0 // pred_fallthru
    _
  // Predicated region
  $region34: #{combined_model_forward.1} parent=0 // pred_check
    _
  $region35: #{combined_model_forward.1} parent=0 // pred_check_branch
    %38 = sbr.rel (0) target = $region37
  $region36: #{combined_model_forward.1} parent=0 // pred_region
    _
  $region37: #{combined_model_forward.1} parent=0 // pred_fallthru
    _
  // Predicated region
  $region38: #{combined_model_forward.1} parent=0 // pred_check
    _
  $region39: #{combined_model_forward.1} parent=0 // pred_check_branch
    %40 = sbr.rel (0) target = $region41
  $region40: #{combined_model_forward.1} parent=0 // pred_region
    _
  $region41: #{combined_model_forward.1} parent=0 // pred_fallthru
    _
  // Predicated region
  $region42: #{combined_model_forward.1} parent=0 // pred_check
    _
  $region43: #{combined_model_forward.1} parent=0 // pred_check_branch
    %42 = sbr.rel (0) target = $region45
  $region44: #{combined_model_forward.1} parent=0 // pred_region
    _
  $region45: #{combined_model_forward.1} parent=0 // pred_fallthru
    _
  // Predicated region
  $region46: #{combined_model_forward.1} parent=0 // pred_check
    _
  $region47: #{combined_model_forward.1} parent=0 // pred_check_branch
    %44 = sbr.rel (0) target = $region49
  $region48: #{combined_model_forward.1} parent=0 // pred_region
    _
  $region49: #{combined_model_forward.1} parent=0 // pred_fallthru
    _
  // Predicated region
  $region50: #{combined_model_forward.1} parent=0 // pred_check
    _
  $region51: #{combined_model_forward.1} parent=0 // pred_check_branch
    %46 = sbr.rel (0) target = $region53
  $region52: #{combined_model_forward.1} parent=0 // pred_region
    _
  $region53: #{combined_model_forward.1} parent=0 // pred_fallthru
    _
  // Predicated region
  $region54: #{combined_model_forward.1} parent=0 // pred_check
    _
  $region55: #{combined_model_forward.1} parent=0 // pred_check_branch
    %48 = sbr.rel (0) target = $region57
  $region56: #{combined_model_forward.1} parent=0 // pred_region
    _
  $region57: #{combined_model_forward.1} parent=0 // pred_fallthru
    _
  // Predicated region
  $region58: #{combined_model_forward.1} parent=0 // pred_check
    _
  $region59: #{combined_model_forward.1} parent=0 // pred_check_branch
    %50 = sbr.rel (0) target = $region61
  $region60: #{combined_model_forward.1} parent=0 // pred_region
    _
  $region61: #{combined_model_forward.1} parent=0 // pred_fallthru
    _
  // Predicated region
  $region62: #{combined_model_forward.1} parent=0 // pred_check
    _
  $region63: #{combined_model_forward.1} parent=0 // pred_check_branch
    %52 = sbr.rel (0) target = $region65
  $region64: #{combined_model_forward.1} parent=0 // pred_region
    _
  $region65: #{combined_model_forward.1} parent=0 // pred_fallthru
    _
  %v54 = vld [vmem:[%s15] sm:$0xff]
  %v55 = vld [vmem:[%s15 + $0x8] sm:$0xff]
  %v56 = vld [vmem:[%s15 + $0x10] sm:$0xff]
  %v57 = vld [vmem:[%s15 + $0x18] sm:$0xff]
  %v58 = vld [vmem:[%s15 + $0x20] sm:$0xff]
  %v59 = vld [vmem:[%s15 + $0x28] sm:$0xff]
  %v60 = vld [vmem:[%s15 + $0x30] sm:$0xff]
  %v61 = vld [vmem:[%s15 + $0x38] sm:$0xff]
  %v62 = vld [vmem:[%s15 + $0x40] sm:$0xff]
  %vm63 = vcmp.ne.f32.partialorder %v54, 0.0
  %vm64 = vcmp.ne.f32.partialorder %v55, 0.0
  %vm65 = vcmp.ne.f32.partialorder %v56, 0.0
  %vm66 = vcmp.ne.f32.partialorder %v57, 0.0
  %vm67 = vcmp.ne.f32.partialorder %v58, 0.0
  %vm68 = vcmp.ne.f32.partialorder %v59, 0.0
  %vm69 = vcmp.ne.f32.partialorder %v60, 0.0
  %vm70 = vcmp.ne.f32.partialorder %v61, 0.0
  %vm71 = vcmp.ne.f32.partialorder %v62, 0.0
  %vm72 = vcmask 523264
  %73 = vst.msk [vmem:[#allocation2] sm:$0xff] %vm72, 0.0
  %74 = vst.msk [vmem:[#allocation2 + $0x8] sm:$0xff] %vm72, 0.0
  %75 = vst.msk [vmem:[#allocation2 + $0x10] sm:$0xff] %vm72, 0.0
  %76 = vst.msk [vmem:[#allocation2 + $0x18] sm:$0xff] %vm72, 0.0
  %77 = vst.msk [vmem:[#allocation2 + $0x20] sm:$0xff] %vm72, 0.0
  %78 = vst.msk [vmem:[#allocation2 + $0x28] sm:$0xff] %vm72, 0.0
  %79 = vst.msk [vmem:[#allocation2 + $0x30] sm:$0xff] %vm72, 0.0
  %80 = vst.msk [vmem:[#allocation2 + $0x38] sm:$0xff] %vm72, 0.0
  %81 = vst.msk [vmem:[#allocation2 + $0x40] sm:$0xff] %vm72, 0.0
  %82 = vst.msk [vmem:[#allocation2 + $0x48] sm:$0xff] %vm72, 0.0
  %83 = vst.msk [vmem:[#allocation2 + $0x50] sm:$0xff] %vm72, 0.0
  %84 = vst [vmem:[#allocation3] sm:$0xff] 0.0
  %85 = vst [vmem:[#allocation3 + $0x8] sm:$0xff] 0.0
  %86 = vst [vmem:[#allocation3 + $0x10] sm:$0xff] 0.0
  %87 = vst [vmem:[#allocation3 + $0x18] sm:$0xff] 0.0
  %88 = vst [vmem:[#allocation3 + $0x20] sm:$0xff] 0.0
  %89 = vst [vmem:[#allocation3 + $0x28] sm:$0xff] 0.0
  %90 = vst [vmem:[#allocation3 + $0x30] sm:$0xff] 0.0
  %91 = vst [vmem:[#allocation3 + $0x38] sm:$0xff] 0.0
  %92 = vst [vmem:[#allocation3 + $0x40] sm:$0xff] 0.0
  %93 = vst [vmem:[#allocation3 + $0x48] sm:$0xff] 0.0
  %94 = vst [vmem:[#allocation3 + $0x50] sm:$0xff] 0.0
  %95 = vst [vmem:[#allocation4] sm:$0xff] 0.0
  %96 = vst [vmem:[#allocation4 + $0x8] sm:$0xff] 0.0
  %97 = vst [vmem:[#allocation4 + $0x10] sm:$0xff] 0.0
  %98 = vst [vmem:[#allocation4 + $0x18] sm:$0xff] 0.0
  %99 = vst [vmem:[#allocation4 + $0x20] sm:$0xff] 0.0
  %100 = vst [vmem:[#allocation4 + $0x28] sm:$0xff] 0.0
  %101 = vst [vmem:[#allocation4 + $0x30] sm:$0xff] 0.0
  %102 = vst [vmem:[#allocation4 + $0x38] sm:$0xff] 0.0
  %103 = vst [vmem:[#allocation4 + $0x40] sm:$0xff] 0.0
  %104 = vst [vmem:[#allocation4 + $0x48] sm:$0xff] 0.0
  %105 = vst [vmem:[#allocation4 + $0x50] sm:$0xff] 0.0
  %106 = vst [vmem:[#allocation4 + $0x58] sm:$0xff] 0.0
  %107 = vst [vmem:[#allocation4 + $0x60] sm:$0xff] 0.0
  %108 = vst [vmem:[#allocation4 + $0x68] sm:$0xff] 0.0
  %109 = vst [vmem:[#allocation4 + $0x70] sm:$0xff] 0.0
  %110 = vst [vmem:[#allocation4 + $0x78] sm:$0xff] 0.0
  %111 = vst [vmem:[#allocation4 + $0x80] sm:$0xff] 0.0
  %112 = vst [vmem:[#allocation4 + $0x88] sm:$0xff] 0.0
  %113 = vst [vmem:[#allocation4 + $0x90] sm:$0xff] 0.0
  %114 = vst [vmem:[#allocation4 + $0x98] sm:$0xff] 0.0
  %115 = vst [vmem:[#allocation4 + $0xa0] sm:$0xff] 0.0
  %116 = vst [vmem:[#allocation4 + $0xa8] sm:$0xff] 0.0
  %v117 = vld [vmem:[%s0] sm:$0xff]
  %v118 = vld [vmem:[%s0 + $0x8] sm:$0xff]
  %v119 = vld [vmem:[%s0 + $0x10] sm:$0xff]
  %v120 = vld [vmem:[%s0 + $0x18] sm:$0xff]
  %v121 = vld [vmem:[%s0 + $0x20] sm:$0xff]
  %v122 = vld [vmem:[%s0 + $0x28] sm:$0xff]
  %v123 = vld [vmem:[%s0 + $0x30] sm:$0xff]
  %v124 = vld [vmem:[%s0 + $0x38] sm:$0xff]
  %v125 = vld [vmem:[%s0 + $0x40] sm:$0xff]
  %v126 = vld [vmem:[%s0 + $0x48] sm:$0xff]
  %v127 = vld [vmem:[%s0 + $0x50] sm:$0xff]
  %v128 = vld [vmem:[%s0 + $0x58] sm:$0xff]
  %v129 = vld [vmem:[%s0 + $0x60] sm:$0xff]
  %v130 = vld [vmem:[%s0 + $0x68] sm:$0xff]
  %v131 = vld [vmem:[%s0 + $0x70] sm:$0xff]
  %v132 = vld [vmem:[%s0 + $0x78] sm:$0xff]
  %v133 = vld [vmem:[%s0 + $0x80] sm:$0xff]
  %v134 = vld [vmem:[%s0 + $0x88] sm:$0xff]
  %v135 = vld [vmem:[%s1] sm:$0xf]
  %v136 = vld [vmem:[%s1 + $0x4] sm:$0xf]
  %v137 = vld [vmem:[%s1 + $0x8] sm:$0xf]
  %v138 = vld [vmem:[%s1 + $0xc] sm:$0xf]
  %v139 = vld [vmem:[%s1 + $0x10] sm:$0xf]
  %v140 = vld [vmem:[%s1 + $0x14] sm:$0xf]
  %v141 = vld [vmem:[%s1 + $0x18] sm:$0xf]
  %v142 = vld [vmem:[%s1 + $0x1c] sm:$0xf]
  %v143 = vld [vmem:[%s1 + $0x20] sm:$0xf]
  %v144 = vld [vmem:[%s1 + $0x24] sm:$0xf]
  %v145 = vld [vmem:[%s1 + $0x28] sm:$0xf]
  %v146 = vld [vmem:[%s1 + $0x2c] sm:$0xf]
  %v147 = vld [vmem:[%s1 + $0x30] sm:$0xf]
  %v148 = vld [vmem:[%s1 + $0x34] sm:$0xf]
  %v149 = vld [vmem:[%s1 + $0x38] sm:$0xf]
  %v150 = vld [vmem:[%s1 + $0x3c] sm:$0xf]
  %v151 = vld [vmem:[%s1 + $0x40] sm:$0xf]
  %v152 = vld [vmem:[%s1 + $0x44] sm:$0xf]
  %v153 = vld [vmem:[%s1 + $0x48] sm:$0xf]
  %v154 = vld [vmem:[%s1 + $0x4c] sm:$0xf]
  %v155 = vld [vmem:[%s1 + $0x50] sm:$0xf]
  %v156 = vld [vmem:[%s1 + $0x54] sm:$0xf]
  %v157 = vld [vmem:[%s1 + $0x58] sm:$0xf]
  %v158 = vld [vmem:[%s1 + $0x5c] sm:$0xf]
  %v159 = vld [vmem:[%s1 + $0x60] sm:$0xf]
  %v160 = vld [vmem:[%s1 + $0x64] sm:$0xf]
  %v161 = vld [vmem:[%s1 + $0x68] sm:$0xf]
  %v162 = vld [vmem:[%s1 + $0x6c] sm:$0xf]
  %v163 = vld [vmem:[%s1 + $0x70] sm:$0xf]
  %v164 = vld [vmem:[%s1 + $0x74] sm:$0xf]
  %v165 = vld [vmem:[%s1 + $0x78] sm:$0xf]
  %v166 = vld [vmem:[%s1 + $0x7c] sm:$0xf]
  %v167 = vld [vmem:[%s1 + $0x80] sm:$0xf]
  %v168 = vld [vmem:[%s1 + $0x84] sm:$0xf]
  %v169 = vld [vmem:[%s1 + $0x88] sm:$0xf]
  %v170 = vld [vmem:[%s1 + $0x8c] sm:$0xf]
  %v171 = vld [vmem:[%s1 + $0x90] sm:$0xf]
  %v172 = vld [vmem:[%s1 + $0x94] sm:$0xf]
  %v173 = vld [vmem:[%s1 + $0x98] sm:$0xf]
  %v174 = vld [vmem:[%s1 + $0x9c] sm:$0xf]
  %v175 = vld [vmem:[%s1 + $0xa0] sm:$0xf]
  %v176 = vld [vmem:[%s1 + $0xa4] sm:$0xf]
  %v177 = vld [vmem:[%s1 + $0xa8] sm:$0xf]
  %v178 = vld [vmem:[%s1 + $0xac] sm:$0xf]
  %v179 = vld [vmem:[%s1 + $0xb0] sm:$0xf]
  %v180 = vld [vmem:[%s1 + $0xb4] sm:$0xf]
  %v181 = vld [vmem:[%s1 + $0xb8] sm:$0xf]
  %v182 = vld [vmem:[%s1 + $0xbc] sm:$0xf]
  %v183 = vld [vmem:[%s1 + $0xc0] sm:$0xf]
  %v184 = vld [vmem:[%s1 + $0xc4] sm:$0xf]
  %v185 = vld [vmem:[%s1 + $0xc8] sm:$0xf]
  %v186 = vld [vmem:[%s1 + $0xcc] sm:$0xf]
  %v187 = vld [vmem:[%s1 + $0xd0] sm:$0xf]
  %v188 = vld [vmem:[%s1 + $0xd4] sm:$0xf]
  %v189 = vld [vmem:[%s1 + $0xd8] sm:$0xf]
  %v190 = vld [vmem:[%s1 + $0xdc] sm:$0xf]
  %v191 = vld [vmem:[%s1 + $0xe0] sm:$0xf]
  %v192 = vld [vmem:[%s1 + $0xe4] sm:$0xf]
  %v193 = vld [vmem:[%s1 + $0xe8] sm:$0xf]
  %v194 = vld [vmem:[%s1 + $0xec] sm:$0xf]
  %v195 = vld [vmem:[%s1 + $0xf0] sm:$0xf]
  %v196 = vld [vmem:[%s1 + $0xf4] sm:$0xf]
  %v197 = vld [vmem:[%s1 + $0xf8] sm:$0xf]
  %v198 = vld [vmem:[%s1 + $0xfc] sm:$0xf]
  %v217 = vunpack.c.l.b16 %v117
  %v218 = vunpack.c.h.b16 %v117
  %v219 = vunpack.c.l.b16 %v118
  %v220 = vunpack.c.h.b16 %v118
  %v221 = vunpack.c.l.b16 %v119
  %v222 = vunpack.c.h.b16 %v119
  %v223 = vunpack.c.l.b16 %v120
  %v224 = vunpack.c.h.b16 %v120
  %v225 = vunpack.c.l.b16 %v121
  %v226 = vunpack.c.h.b16 %v121
  %v227 = vunpack.c.l.b16 %v122
  %v228 = vunpack.c.h.b16 %v122
  %v229 = vunpack.c.l.b16 %v123
  %v230 = vunpack.c.h.b16 %v123
  %v231 = vunpack.c.l.b16 %v124
  %v232 = vunpack.c.h.b16 %v124
  %v233 = vunpack.c.l.b16 %v125
  %v234 = vunpack.c.h.b16 %v125
  %v235 = vunpack.c.l.b16 %v126
  %v236 = vunpack.c.h.b16 %v126
  %v237 = vunpack.c.l.b16 %v127
  %v238 = vunpack.c.h.b16 %v127
  %v239 = vunpack.c.l.b16 %v128
  %v240 = vunpack.c.h.b16 %v128
  %v241 = vunpack.c.l.b16 %v129
  %v242 = vunpack.c.h.b16 %v129
  %v243 = vunpack.c.l.b16 %v130
  %v244 = vunpack.c.h.b16 %v130
  %v245 = vunpack.c.l.b16 %v131
  %v246 = vunpack.c.h.b16 %v131
  %v247 = vunpack.c.l.b16 %v132
  %v248 = vunpack.c.h.b16 %v132
  %v249 = vunpack.c.l.b16 %v133
  %v250 = vunpack.c.h.b16 %v133
  %v251 = vunpack.c.l.b16 %v134
  %v252 = vunpack.c.h.b16 %v134
  %v253 = vpack.c.b16 %v221, %v217
  %v254 = vpack.c.b16 %v222, %v218
  %v255 = vpack.c.b16 %v223, %v219
  %v256 = vpack.c.b16 %v224, %v220
  %v257 = vpack.c.b16 %v229, %v225
  %v258 = vpack.c.b16 %v230, %v226
  %v259 = vpack.c.b16 %v231, %v227
  %v260 = vpack.c.b16 %v232, %v228
  %v261 = vpack.c.b16 %v237, %v233
  %v262 = vpack.c.b16 %v238, %v234
  %v263 = vpack.c.b16 %v239, %v235
  %v264 = vpack.c.b16 %v240, %v236
  %v265 = vpack.c.b16 %v245, %v241
  %v266 = vpack.c.b16 %v246, %v242
  %v267 = vpack.c.b16 %v247, %v243
  %v268 = vpack.c.b16 %v248, %v244
  %v269 = vpack.c.b16 %v249, %v249
  %v270 = vpack.c.b16 %v250, %v250
  %v271 = vpack.c.b16 %v251, %v251
  %v272 = vpack.c.b16 %v252, %v252
  %v357 = vunpack.c.l.b16 %v135
  %v358 = vunpack.c.l.b16 %v136
  %v359 = vunpack.c.l.b16 %v137
  %v360 = vunpack.c.l.b16 %v138
  %v361 = vunpack.c.l.b16 %v139
  %v362 = vunpack.c.l.b16 %v140
  %v363 = vunpack.c.l.b16 %v141
  %v364 = vunpack.c.l.b16 %v142
  %v365 = vunpack.c.l.b16 %v143
  %v366 = vunpack.c.l.b16 %v144
  %v367 = vunpack.c.l.b16 %v145
  %v368 = vunpack.c.l.b16 %v146
  %v369 = vunpack.c.l.b16 %v147
  %v370 = vunpack.c.l.b16 %v148
  %v371 = vunpack.c.l.b16 %v149
  %v372 = vunpack.c.l.b16 %v150
  %v373 = vunpack.c.l.b16 %v151
  %v374 = vunpack.c.l.b16 %v152
  %v375 = vunpack.c.l.b16 %v153
  %v376 = vunpack.c.l.b16 %v154
  %v377 = vunpack.c.l.b16 %v155
  %v378 = vunpack.c.l.b16 %v156
  %v379 = vunpack.c.l.b16 %v157
  %v380 = vunpack.c.l.b16 %v158
  %v381 = vunpack.c.l.b16 %v159
  %v382 = vunpack.c.l.b16 %v160
  %v383 = vunpack.c.l.b16 %v161
  %v384 = vunpack.c.l.b16 %v162
  %v385 = vunpack.c.l.b16 %v163
  %v386 = vunpack.c.l.b16 %v164
  %v387 = vunpack.c.l.b16 %v165
  %v388 = vunpack.c.l.b16 %v166
  %v389 = vunpack.c.l.b16 %v167
  %v390 = vunpack.c.l.b16 %v168
  %v391 = vunpack.c.l.b16 %v169
  %v392 = vunpack.c.l.b16 %v170
  %v393 = vunpack.c.l.b16 %v171
  %v394 = vunpack.c.l.b16 %v172
  %v395 = vunpack.c.l.b16 %v173
  %v396 = vunpack.c.l.b16 %v174
  %v397 = vunpack.c.l.b16 %v175
  %v398 = vunpack.c.l.b16 %v176
  %v399 = vunpack.c.l.b16 %v177
  %v400 = vunpack.c.l.b16 %v178
  %v401 = vunpack.c.l.b16 %v179
  %v402 = vunpack.c.l.b16 %v180
  %v403 = vunpack.c.l.b16 %v181
  %v404 = vunpack.c.l.b16 %v182
  %v405 = vunpack.c.l.b16 %v183
  %v406 = vunpack.c.l.b16 %v184
  %v407 = vunpack.c.l.b16 %v185
  %v408 = vunpack.c.l.b16 %v186
  %v409 = vunpack.c.l.b16 %v187
  %v410 = vunpack.c.l.b16 %v188
  %v411 = vunpack.c.l.b16 %v189
  %v412 = vunpack.c.l.b16 %v190
  %v413 = vunpack.c.l.b16 %v191
  %v414 = vunpack.c.l.b16 %v192
  %v415 = vunpack.c.l.b16 %v193
  %v416 = vunpack.c.l.b16 %v194
  %v417 = vunpack.c.l.b16 %v195
  %v418 = vunpack.c.l.b16 %v196
  %v419 = vunpack.c.l.b16 %v197
  %v420 = vunpack.c.l.b16 %v198
  %v421 = vpack.c.b16 %v358, %v357
  %v422 = vpack.c.b16 %v360, %v359
  %v423 = vpack.c.b16 %v362, %v361
  %v424 = vpack.c.b16 %v364, %v363
  %v425 = vpack.c.b16 %v366, %v365
  %v426 = vpack.c.b16 %v368, %v367
  %v427 = vpack.c.b16 %v370, %v369
  %v428 = vpack.c.b16 %v372, %v371
  %v429 = vpack.c.b16 %v374, %v373
  %v430 = vpack.c.b16 %v376, %v375
  %v431 = vpack.c.b16 %v378, %v377
  %v432 = vpack.c.b16 %v380, %v379
  %v433 = vpack.c.b16 %v382, %v381
  %v434 = vpack.c.b16 %v384, %v383
  %v435 = vpack.c.b16 %v386, %v385
  %v436 = vpack.c.b16 %v388, %v387
  %v437 = vpack.c.b16 %v390, %v389
  %v438 = vpack.c.b16 %v392, %v391
  %v439 = vpack.c.b16 %v394, %v393
  %v440 = vpack.c.b16 %v396, %v395
  %v441 = vpack.c.b16 %v398, %v397
  %v442 = vpack.c.b16 %v400, %v399
  %v443 = vpack.c.b16 %v402, %v401
  %v444 = vpack.c.b16 %v404, %v403
  %v445 = vpack.c.b16 %v406, %v405
  %v446 = vpack.c.b16 %v408, %v407
  %v447 = vpack.c.b16 %v410, %v409
  %v448 = vpack.c.b16 %v412, %v411
  %v449 = vpack.c.b16 %v414, %v413
  %v450 = vpack.c.b16 %v416, %v415
  %v451 = vpack.c.b16 %v418, %v417
  %v452 = vpack.c.b16 %v420, %v419
  %485 = vmatprep.subr.bf16.mxu0 0
  %486 = vmatpush1.bf16.msra.mxu0 %v421
  %487 = vmatprep.subr.bf16.mxu0 0
  %488 = vmatpush1.bf16.msra.mxu0 %v422
  %489 = vmatprep.subr.bf16.mxu0 0
  %490 = vmatpush1.bf16.msra.mxu0 %v423
  %491 = vmatprep.subr.bf16.mxu0 0
  %492 = vmatpush1.bf16.msra.mxu0 %v424
  %493 = vmatprep.subr.bf16.mxu0 0
  %494 = vmatpush1.bf16.msra.mxu0 %v425
  %495 = vmatprep.subr.bf16.mxu0 0
  %496 = vmatpush1.bf16.msra.mxu0 %v426
  %497 = vmatprep.subr.bf16.mxu0 0
  %498 = vmatpush1.bf16.msra.mxu0 %v427
  %499 = vmatprep.subr.bf16.mxu0 0
  %500 = vmatpush1.bf16.msra.mxu0 %v428
  %501 = vmatprep.subr.bf16.mxu0 0
  %502 = vmatpush1.bf16.msra.mxu0 %v429
  %503 = vmatprep.subr.bf16.mxu0 0
  %504 = vmatpush1.bf16.msra.mxu0 %v430
  %505 = vmatprep.subr.bf16.mxu0 0
  %506 = vmatpush1.bf16.msra.mxu0 %v431
  %507 = vmatprep.subr.bf16.mxu0 0
  %508 = vmatpush1.bf16.msra.mxu0 %v432
  %509 = vmatprep.subr.bf16.mxu0 0
  %510 = vmatpush1.bf16.msra.mxu0 %v433
  %511 = vmatprep.subr.bf16.mxu0 0
  %512 = vmatpush1.bf16.msra.mxu0 %v434
  %513 = vmatprep.subr.bf16.mxu0 0
  %514 = vmatpush1.bf16.msra.mxu0 %v435
  %515 = vmatprep.subr.bf16.mxu0 0
  %516 = vmatpush1.bf16.msra.mxu0 %v436
  %517 = vmatprep.mubr.bf16.mxu0 %v254
  %518 = vmatmul.mubr.bf16.gmra.mrb[0].mxu0 %v253
  %v519 = vpop.f32.mrb[0].mxu0
  %v520 = vadd.f32 0.0, %v519
  %v521 = vpop.f32.mrb[0].mxu0
  %v522 = vpop.f32.mrb[0].mxu0
  %v523 = vadd.f32 0.0, %v522
  %v524 = vpop.f32.mrb[0].mxu0
  %525 = vmatprep.mubr.bf16.mxu0 %v258
  %526 = vmatmul.mubr.bf16.gmra.mrb[0].mxu0 %v257
  %v527 = vpop.f32.mrb[0].mxu0
  %v528 = vadd.f32 0.0, %v527
  %v529 = vpop.f32.mrb[0].mxu0
  %v530 = vpop.f32.mrb[0].mxu0
  %v531 = vadd.f32 0.0, %v530
  %v532 = vpop.f32.mrb[0].mxu0
  %533 = vmatprep.mubr.bf16.mxu0 %v262
  %534 = vmatmul.mubr.bf16.gmra.mrb[0].mxu0 %v261
  %v535 = vpop.f32.mrb[0].mxu0
  %v536 = vadd.f32 0.0, %v535
  %v537 = vpop.f32.mrb[0].mxu0
  %v538 = vpop.f32.mrb[0].mxu0
  %v539 = vadd.f32 0.0, %v538
  %v540 = vpop.f32.mrb[0].mxu0
  %541 = vmatprep.mubr.bf16.mxu0 %v266
  %542 = vmatmul.mubr.bf16.gmra.mrb[0].mxu0 %v265
  %v543 = vpop.f32.mrb[0].mxu0
  %v544 = vadd.f32 0.0, %v543
  %v545 = vpop.f32.mrb[0].mxu0
  %v546 = vpop.f32.mrb[0].mxu0
  %v547 = vadd.f32 0.0, %v546
  %v548 = vpop.f32.mrb[0].mxu0
  %549 = vmatprep.mubr.bf16.mxu0 %v270
  %550 = vmatmul.mubr.bf16.gmra.mrb[0].mxu0 %v269
  %v551 = vpop.f32.mrb[0].mxu0
  %v552 = vadd.f32 0.0, %v551
  %v553 = vpop.f32.mrb[0].mxu0
  %v554 = vpop.f32.mrb[0].mxu0
  %v555 = vpop.f32.mrb[0].mxu0
  %556 = vdwg.mxu0
  %557 = vmatprep.subr.bf16.mxu0 0
  %558 = vmatpush1.bf16.msra.mxu0 %v437
  %559 = vmatprep.subr.bf16.mxu0 0
  %560 = vmatpush1.bf16.msra.mxu0 %v438
  %561 = vmatprep.subr.bf16.mxu0 0
  %562 = vmatpush1.bf16.msra.mxu0 %v439
  %563 = vmatprep.subr.bf16.mxu0 0
  %564 = vmatpush1.bf16.msra.mxu0 %v440
  %565 = vmatprep.subr.bf16.mxu0 0
  %566 = vmatpush1.bf16.msra.mxu0 %v441
  %567 = vmatprep.subr.bf16.mxu0 0
  %568 = vmatpush1.bf16.msra.mxu0 %v442
  %569 = vmatprep.subr.bf16.mxu0 0
  %570 = vmatpush1.bf16.msra.mxu0 %v443
  %571 = vmatprep.subr.bf16.mxu0 0
  %572 = vmatpush1.bf16.msra.mxu0 %v444
  %573 = vmatprep.subr.bf16.mxu0 0
  %574 = vmatpush1.bf16.msra.mxu0 %v445
  %575 = vmatprep.subr.bf16.mxu0 0
  %576 = vmatpush1.bf16.msra.mxu0 %v446
  %577 = vmatprep.subr.bf16.mxu0 0
  %578 = vmatpush1.bf16.msra.mxu0 %v447
  %579 = vmatprep.subr.bf16.mxu0 0
  %580 = vmatpush1.bf16.msra.mxu0 %v448
  %581 = vmatprep.subr.bf16.mxu0 0
  %582 = vmatpush1.bf16.msra.mxu0 %v449
  %583 = vmatprep.subr.bf16.mxu0 0
  %584 = vmatpush1.bf16.msra.mxu0 %v450
  %585 = vmatprep.subr.bf16.mxu0 0
  %586 = vmatpush1.bf16.msra.mxu0 %v451
  %587 = vmatprep.subr.bf16.mxu0 0
  %588 = vmatpush1.bf16.msra.mxu0 %v452
  %589 = vmatprep.mubr.bf16.mxu0 %v256
  %590 = vmatmul.mubr.bf16.gmra.mrb[0].mxu0 %v255
  %v591 = vpop.f32.mrb[0].mxu0
  %v592 = vadd.f32 %v520, %v591
  %v593 = vpop.f32.mrb[0].mxu0
  %v594 = vpop.f32.mrb[0].mxu0
  %v595 = vadd.f32 %v523, %v594
  %v596 = vpop.f32.mrb[0].mxu0
  %597 = vmatprep.mubr.bf16.mxu0 %v260
  %598 = vmatmul.mubr.bf16.gmra.mrb[0].mxu0 %v259
  %v599 = vpop.f32.mrb[0].mxu0
  %v600 = vadd.f32 %v528, %v599
  %v601 = vpop.f32.mrb[0].mxu0
  %v602 = vpop.f32.mrb[0].mxu0
  %v603 = vadd.f32 %v531, %v602
  %v604 = vpop.f32.mrb[0].mxu0
  %605 = vmatprep.mubr.bf16.mxu0 %v264
  %606 = vmatmul.mubr.bf16.gmra.mrb[0].mxu0 %v263
  %v607 = vpop.f32.mrb[0].mxu0
  %v608 = vadd.f32 %v536, %v607
  %v609 = vpop.f32.mrb[0].mxu0
  %v610 = vpop.f32.mrb[0].mxu0
  %v611 = vadd.f32 %v539, %v610
  %v612 = vpop.f32.mrb[0].mxu0
  %613 = vmatprep.mubr.bf16.mxu0 %v268
  %614 = vmatmul.mubr.bf16.gmra.mrb[0].mxu0 %v267
  %v615 = vpop.f32.mrb[0].mxu0
  %v616 = vadd.f32 %v544, %v615
  %v617 = vpop.f32.mrb[0].mxu0
  %v618 = vpop.f32.mrb[0].mxu0
  %v619 = vadd.f32 %v547, %v618
  %v620 = vpop.f32.mrb[0].mxu0
  %621 = vmatprep.mubr.bf16.mxu0 %v272
  %622 = vmatmul.mubr.bf16.gmra.mrb[0].mxu0 %v271
  %v623 = vpop.f32.mrb[0].mxu0
  %v624 = vadd.f32 %v552, %v623
  %v625 = vpop.f32.mrb[0].mxu0
  %v626 = vpop.f32.mrb[0].mxu0
  %v627 = vpop.f32.mrb[0].mxu0
  %628 = vdwg.mxu0
  %v629 = vld [vmem:[%s5] sm:$0x1]
  %v630 = vld [vmem:[%s6] sm:$0x1]
  %v631 = vsel %vm63, 1, 0
  %v632 = vsel %vm64, 1, 0
  %v633 = vsel %vm65, 1, 0
  %v634 = vsel %vm66, 1, 0
  %v635 = vsel %vm67, 1, 0
  %v636 = vsel %vm68, 1, 0
  %v637 = vsel %vm69, 1, 0
  %v638 = vsel %vm70, 1, 0
  %v639 = vsel %vm71, 1, 0
  %640 = vset.pattern.permute.xlu0 0
  %641 = vperm.xlu0 %640, %v631
  %v642 = vpop.permute.xlu0 %641
  %643 = vset.pattern.permute.xlu0 0
  %644 = vperm.xlu0 %643, %v632
  %v645 = vpop.permute.xlu0 %644
  %646 = vset.pattern.permute.xlu0 0
  %647 = vperm.xlu0 %646, %v633
  %v648 = vpop.permute.xlu0 %647
  %649 = vset.pattern.permute.xlu0 0
  %650 = vperm.xlu0 %649, %v634
  %v651 = vpop.permute.xlu0 %650
  %652 = vset.pattern.permute.xlu0 0
  %653 = vperm.xlu0 %652, %v635
  %v654 = vpop.permute.xlu0 %653
  %655 = vset.pattern.permute.xlu0 0
  %656 = vperm.xlu0 %655, %v636
  %v657 = vpop.permute.xlu0 %656
  %658 = vset.pattern.permute.xlu0 0
  %659 = vperm.xlu0 %658, %v637
  %v660 = vpop.permute.xlu0 %659
  %661 = vset.pattern.permute.xlu0 0
  %662 = vperm.xlu0 %661, %v638
  %v663 = vpop.permute.xlu0 %662
  %664 = vset.pattern.permute.xlu0 0
  %665 = vperm.xlu0 %664, %v639
  %v666 = vpop.permute.xlu0 %665
  %vm667 = vcmp.eq.s32.totalorder %v642, 1
  %vm668 = vcmp.eq.s32.totalorder %v645, 1
  %vm669 = vcmp.eq.s32.totalorder %v648, 1
  %vm670 = vcmp.eq.s32.totalorder %v651, 1
  %vm671 = vcmp.eq.s32.totalorder %v654, 1
  %vm672 = vcmp.eq.s32.totalorder %v657, 1
  %vm673 = vcmp.eq.s32.totalorder %v660, 1
  %vm674 = vcmp.eq.s32.totalorder %v663, 1
  %vm675 = vcmp.eq.s32.totalorder %v666, 1
  %v676 = vsel %vm667, %v592, 0.0
  %v677 = vsel %vm668, %v595, 0.0
  %v678 = vsel %vm669, %v600, 0.0
  %v679 = vsel %vm670, %v603, 0.0
  %v680 = vsel %vm671, %v608, 0.0
  %v681 = vsel %vm672, %v611, 0.0
  %v682 = vsel %vm673, %v616, 0.0
  %v683 = vsel %vm674, %v619, 0.0
  %v684 = vsel %vm675, %v624, 0.0
  %v685 = vsel %vm72, %v676, 0.0
  %v686 = vsel %vm72, %v677, 0.0
  %v687 = vadd.f32 %v685, %v686
  %v688 = vsel %vm72, %v678, 0.0
  %v689 = vadd.f32 %v687, %v688
  %v690 = vsel %vm72, %v679, 0.0
  %v691 = vadd.f32 %v689, %v690
  %v692 = vsel %vm72, %v680, 0.0
  %v693 = vadd.f32 %v691, %v692
  %v694 = vsel %vm72, %v681, 0.0
  %v695 = vadd.f32 %v693, %v694
  %v696 = vsel %vm72, %v682, 0.0
  %v697 = vadd.f32 %v695, %v696
  %v698 = vsel %vm72, %v683, 0.0
  %v699 = vadd.f32 %v697, %v698
  %v700 = vsel %vm72, %v684, 0.0
  %v701 = vadd.f32 %v699, %v700
  %v702 = vrot.slane %v701, 4
  %v703 = vadd.f32 %v701, %v702
  %v704 = vrot.slane %v703, 2
  %v705 = vadd.f32 %v703, %v704
  %v706 = vrot.slane %v705, 1
  %v707 = vadd.f32 %v705, %v706
  %v708 = vmul.f32 %v676, %v676
  %v709 = vmul.f32 %v677, %v677
  %v710 = vmul.f32 %v678, %v678
  %v711 = vmul.f32 %v679, %v679
  %v712 = vmul.f32 %v680, %v680
  %v713 = vmul.f32 %v681, %v681
  %v714 = vmul.f32 %v682, %v682
  %v715 = vmul.f32 %v683, %v683
  %v716 = vmul.f32 %v684, %v684
  %v717 = vsel %vm72, %v708, 0.0
  %v718 = vsel %vm72, %v709, 0.0
  %v719 = vadd.f32 %v717, %v718
  %v720 = vsel %vm72, %v710, 0.0
  %v721 = vadd.f32 %v719, %v720
  %v722 = vsel %vm72, %v711, 0.0
  %v723 = vadd.f32 %v721, %v722
  %v724 = vsel %vm72, %v712, 0.0
  %v725 = vadd.f32 %v723, %v724
  %v726 = vsel %vm72, %v713, 0.0
  %v727 = vadd.f32 %v725, %v726
  %v728 = vsel %vm72, %v714, 0.0
  %v729 = vadd.f32 %v727, %v728
  %v730 = vsel %vm72, %v715, 0.0
  %v731 = vadd.f32 %v729, %v730
  %v732 = vsel %vm72, %v716, 0.0
  %v733 = vadd.f32 %v731, %v732
  %v734 = vrot.slane %v733, 4
  %v735 = vadd.f32 %v733, %v734
  %v736 = vrot.slane %v735, 2
  %v737 = vadd.f32 %v735, %v736
  %v738 = vrot.slane %v737, 1
  %v739 = vadd.f32 %v737, %v738
  %v740 = vrcp.pop 32.0
  %v741 = vmul.f32 %v707, %v740
  %v742 = vmul.f32 %v739, %v740
  %v743 = vmul.f32 %v741, %v741
  %v744 = vsub.f32 %v742, %v743
  %v745 = vmax.f32 %v744, 0.0
  %v746 = vadd.f32 %v745, 1e-05
  %v747 = vrsqrt.pop %v746
  %v748 = vmul.f32 %v629, %v747
  %v749 = vmul.f32 %v741, %v748
  %v750 = vsub.f32 %v630, %v749
  %v752 = vlaneseq
  %v753 = vshrl.u32 %v752, 7
  %v754 = vsub.s32 0, %v753
  %v755 = vrot.slane %v748, %v754
  %v757 = vmul.f32 %v592, %v755
  %v758 = vmul.f32 %v595, %v755
  %v759 = vmul.f32 %v600, %v755
  %v760 = vmul.f32 %v603, %v755
  %v761 = vmul.f32 %v608, %v755
  %v762 = vmul.f32 %v611, %v755
  %v763 = vmul.f32 %v616, %v755
  %v764 = vmul.f32 %v619, %v755
  %v765 = vmul.f32 %v624, %v755
  %v767 = vlaneseq
  %v768 = vshrl.u32 %v767, 7
  %v769 = vsub.s32 0, %v768
  %v770 = vrot.slane %v750, %v769
  %v772 = vadd.f32 %v757, %v770
  %v773 = vadd.f32 %v758, %v770
  %v774 = vadd.f32 %v759, %v770
  %v775 = vadd.f32 %v760, %v770
  %v776 = vadd.f32 %v761, %v770
  %v777 = vadd.f32 %v762, %v770
  %v778 = vadd.f32 %v763, %v770
  %v779 = vadd.f32 %v764, %v770
  %v780 = vadd.f32 %v765, %v770
  %v781 = vmax.f32 %v772, 0.0
  %v782 = vmax.f32 %v773, 0.0
  %v783 = vmax.f32 %v774, 0.0
  %v784 = vmax.f32 %v775, 0.0
  %v785 = vmax.f32 %v776, 0.0
  %v786 = vmax.f32 %v777, 0.0
  %v787 = vmax.f32 %v778, 0.0
  %v788 = vmax.f32 %v779, 0.0
  %v789 = vmax.f32 %v780, 0.0
  %v790 = vsel %vm667, %v781, 0.0
  %v791 = vsel %vm668, %v782, 0.0
  %v792 = vsel %vm669, %v783, 0.0
  %v793 = vsel %vm670, %v784, 0.0
  %v794 = vsel %vm671, %v785, 0.0
  %v795 = vsel %vm672, %v786, 0.0
  %v796 = vsel %vm673, %v787, 0.0
  %v797 = vsel %vm674, %v788, 0.0
  %v798 = vsel %vm675, %v789, 0.0
  %799 = vst.msk [vmem:[#allocation2 + $0x8] sm:$0xff] %vm72, %v790
  %800 = vst.msk [vmem:[#allocation2 + $0x10] sm:$0xff] %vm72, %v791
  %801 = vst.msk [vmem:[#allocation2 + $0x18] sm:$0xff] %vm72, %v792
  %802 = vst.msk [vmem:[#allocation2 + $0x20] sm:$0xff] %vm72, %v793
  %803 = vst.msk [vmem:[#allocation2 + $0x28] sm:$0xff] %vm72, %v794
  %804 = vst.msk [vmem:[#allocation2 + $0x30] sm:$0xff] %vm72, %v795
  %805 = vst.msk [vmem:[#allocation2 + $0x38] sm:$0xff] %vm72, %v796
  %806 = vst.msk [vmem:[#allocation2 + $0x40] sm:$0xff] %vm72, %v797
  %807 = vst.msk [vmem:[#allocation2 + $0x48] sm:$0xff] %vm72, %v798
  %v808 = vld [vmem:[#allocation2 + $0x1] sm:$0xff]
  %v809 = vld [vmem:[#allocation2 + $0x9] sm:$0xff]
  %v810 = vld [vmem:[#allocation2 + $0x11] sm:$0xff]
  %v811 = vld [vmem:[#allocation2 + $0x19] sm:$0xff]
  %v812 = vld [vmem:[#allocation2 + $0x21] sm:$0xff]
  %v813 = vld [vmem:[#allocation2 + $0x29] sm:$0xff]
  %v814 = vld [vmem:[#allocation2 + $0x31] sm:$0xff]
  %v815 = vld [vmem:[#allocation2 + $0x39] sm:$0xff]
  %v816 = vld [vmem:[#allocation2 + $0x41] sm:$0xff]
  %v817 = vpack.c.bf16 %v809, %v808
  %v818 = vpack.c.bf16 %v811, %v810
  %v819 = vpack.c.bf16 %v813, %v812
  %v820 = vpack.c.bf16 %v815, %v814
  %v821 = vpack.c.bf16 %v816, %v816
  %v822 = vld [vmem:[%s2] sm:$0xf]
  %v823 = vld [vmem:[%s2 + $0x4] sm:$0xf]
  %v824 = vld [vmem:[%s2 + $0x8] sm:$0xf]
  %v825 = vld [vmem:[%s2 + $0xc] sm:$0xf]
  %v826 = vld [vmem:[%s2 + $0x10] sm:$0xf]
  %v827 = vld [vmem:[%s2 + $0x14] sm:$0xf]
  %v828 = vld [vmem:[%s2 + $0x18] sm:$0xf]
  %v829 = vld [vmem:[%s2 + $0x1c] sm:$0xf]
  %v830 = vld [vmem:[#allocation2 + $0x2] sm:$0xff]
  %v831 = vld [vmem:[#allocation2 + $0xa] sm:$0xff]
  %v832 = vld [vmem:[#allocation2 + $0x12] sm:$0xff]
  %v833 = vld [vmem:[#allocation2 + $0x1a] sm:$0xff]
  %v834 = vld [vmem:[#allocation2 + $0x22] sm:$0xff]
  %v835 = vld [vmem:[#allocation2 + $0x2a] sm:$0xff]
  %v836 = vld [vmem:[#allocation2 + $0x32] sm:$0xff]
  %v837 = vld [vmem:[#allocation2 + $0x3a] sm:$0xff]
  %v838 = vld [vmem:[#allocation2 + $0x42] sm:$0xff]
  %v839 = vpack.c.bf16 %v831, %v830
  %v840 = vpack.c.bf16 %v833, %v832
  %v841 = vpack.c.bf16 %v835, %v834
  %v842 = vpack.c.bf16 %v837, %v836
  %v843 = vpack.c.bf16 %v838, %v838
  %s844 = scalar_lea.vmem %s2, 32
  %v845 = vld [vmem:[%s844] sm:$0xf]
  %v846 = vld [vmem:[%s844 + $0x4] sm:$0xf]
  %v847 = vld [vmem:[%s844 + $0x8] sm:$0xf]
  %v848 = vld [vmem:[%s844 + $0xc] sm:$0xf]
  %v849 = vld [vmem:[%s844 + $0x10] sm:$0xf]
  %v850 = vld [vmem:[%s844 + $0x14] sm:$0xf]
  %v851 = vld [vmem:[%s844 + $0x18] sm:$0xf]
  %v852 = vld [vmem:[%s844 + $0x1c] sm:$0xf]
  %v861 = vunpack.c.l.b16 %v845
  %v862 = vunpack.c.l.b16 %v846
  %v863 = vunpack.c.l.b16 %v847
  %v864 = vunpack.c.l.b16 %v848
  %v865 = vunpack.c.l.b16 %v849
  %v866 = vunpack.c.l.b16 %v850
  %v867 = vunpack.c.l.b16 %v851
  %v868 = vunpack.c.l.b16 %v852
  %v869 = vpack.c.b16 %v862, %v861
  %v870 = vpack.c.b16 %v864, %v863
  %v871 = vpack.c.b16 %v866, %v865
  %v872 = vpack.c.b16 %v868, %v867
  %v878 = vsel %vm72, %v839, 0
  %v881 = vsel %vm72, %v840, 0
  %v884 = vsel %vm72, %v841, 0
  %v887 = vsel %vm72, %v842, 0
  %v890 = vsel %vm72, %v843, 0
  %892 = vmatprep.subr.bf16.mxu0 0
  %893 = vmatpush1.bf16.msra.mxu0 %v869
  %894 = vmatprep.subr.bf16.mxu0 0
  %895 = vmatpush1.bf16.msra.mxu0 %v870
  %896 = vmatprep.subr.bf16.mxu0 0
  %897 = vmatpush1.bf16.msra.mxu0 %v871
  %898 = vmatprep.subr.bf16.mxu0 0
  %899 = vmatpush1.bf16.msra.mxu0 %v872
  %900 = vmatprep.subr.bf16.mxu0 0
  %901 = vmatpush1.bf16.msra.mxu0 0
  %902 = vmatprep.subr.bf16.mxu0 0
  %903 = vmatpush1.bf16.msra.mxu0 0
  %904 = vmatprep.subr.bf16.mxu0 0
  %905 = vmatpush1.bf16.msra.mxu0 0
  %906 = vmatprep.subr.bf16.mxu0 0
  %907 = vmatpush1.bf16.msra.mxu0 0
  %908 = vmatprep.subr.bf16.mxu0 0
  %909 = vmatpush1.bf16.msra.mxu0 0
  %910 = vmatprep.subr.bf16.mxu0 0
  %911 = vmatpush1.bf16.msra.mxu0 0
  %912 = vmatprep.subr.bf16.mxu0 0
  %913 = vmatpush1.bf16.msra.mxu0 0
  %914 = vmatprep.subr.bf16.mxu0 0
  %915 = vmatpush1.bf16.msra.mxu0 0
  %916 = vmatprep.subr.bf16.mxu0 0
  %917 = vmatpush1.bf16.msra.mxu0 0
  %918 = vmatprep.subr.bf16.mxu0 0
  %919 = vmatpush1.bf16.msra.mxu0 0
  %920 = vmatprep.subr.bf16.mxu0 0
  %921 = vmatpush1.bf16.msra.mxu0 0
  %922 = vmatprep.subr.bf16.mxu0 0
  %923 = vmatpush1.bf16.msra.mxu0 0
  %924 = vmatprep.mubr.bf16.mxu0 0
  %925 = vmatmul.mubr.bf16.gmra.mrb[0].mxu0 %v878
  %v926 = vpop.f32.mrb[0].mxu0
  %v927 = vadd.f32 0.0, %v926
  %v928 = vpop.f32.mrb[0].mxu0
  %v929 = vpop.f32.mrb[0].mxu0
  %v930 = vadd.f32 0.0, %v929
  %v931 = vpop.f32.mrb[0].mxu0
  %932 = vmatprep.mubr.bf16.mxu0 0
  %933 = vmatmul.mubr.bf16.gmra.mrb[0].mxu0 %v881
  %v934 = vpop.f32.mrb[0].mxu0
  %v935 = vadd.f32 0.0, %v934
  %v936 = vpop.f32.mrb[0].mxu0
  %v937 = vpop.f32.mrb[0].mxu0
  %v938 = vadd.f32 0.0, %v937
  %v939 = vpop.f32.mrb[0].mxu0
  %940 = vmatprep.mubr.bf16.mxu0 0
  %941 = vmatmul.mubr.bf16.gmra.mrb[0].mxu0 %v884
  %v942 = vpop.f32.mrb[0].mxu0
  %v943 = vadd.f32 0.0, %v942
  %v944 = vpop.f32.mrb[0].mxu0
  %v945 = vpop.f32.mrb[0].mxu0
  %v946 = vadd.f32 0.0, %v945
  %v947 = vpop.f32.mrb[0].mxu0
  %948 = vmatprep.mubr.bf16.mxu0 0
  %949 = vmatmul.mubr.bf16.gmra.mrb[0].mxu0 %v887
  %v950 = vpop.f32.mrb[0].mxu0
  %v951 = vadd.f32 0.0, %v950
  %v952 = vpop.f32.mrb[0].mxu0
  %v953 = vpop.f32.mrb[0].mxu0
  %v954 = vadd.f32 0.0, %v953
  %v955 = vpop.f32.mrb[0].mxu0
  %956 = vmatprep.mubr.bf16.mxu0 0
  %957 = vmatmul.mubr.bf16.gmra.mrb[0].mxu0 %v890
  %v958 = vpop.f32.mrb[0].mxu0
  %v959 = vadd.f32 0.0, %v958
  %v960 = vpop.f32.mrb[0].mxu0
  %v961 = vpop.f32.mrb[0].mxu0
  %v962 = vpop.f32.mrb[0].mxu0
  %963 = vdwg.mxu0
  %v972 = vunpack.c.l.b16 %v822
  %v973 = vunpack.c.l.b16 %v823
  %v974 = vunpack.c.l.b16 %v824
  %v975 = vunpack.c.l.b16 %v825
  %v976 = vunpack.c.l.b16 %v826
  %v977 = vunpack.c.l.b16 %v827
  %v978 = vunpack.c.l.b16 %v828
  %v979 = vunpack.c.l.b16 %v829
  %v980 = vpack.c.b16 %v973, %v972
  %v981 = vpack.c.b16 %v975, %v974
  %v982 = vpack.c.b16 %v977, %v976
  %v983 = vpack.c.b16 %v979, %v978
  %v989 = vsel %vm72, %v817, 0
  %v992 = vsel %vm72, %v818, 0
  %v995 = vsel %vm72, %v819, 0
  %v998 = vsel %vm72, %v820, 0
  %v1001 = vsel %vm72, %v821, 0
  %1003 = vmatprep.subr.bf16.mxu0 0
  %1004 = vmatpush1.bf16.msra.mxu0 %v980
  %1005 = vmatprep.subr.bf16.mxu0 0
  %1006 = vmatpush1.bf16.msra.mxu0 %v981
  %1007 = vmatprep.subr.bf16.mxu0 0
  %1008 = vmatpush1.bf16.msra.mxu0 %v982
  %1009 = vmatprep.subr.bf16.mxu0 0
  %1010 = vmatpush1.bf16.msra.mxu0 %v983
  %1011 = vmatprep.subr.bf16.mxu0 0
  %1012 = vmatpush1.bf16.msra.mxu0 0
  %1013 = vmatprep.subr.bf16.mxu0 0
  %1014 = vmatpush1.bf16.msra.mxu0 0
  %1015 = vmatprep.subr.bf16.mxu0 0
  %1016 = vmatpush1.bf16.msra.mxu0 0
  %1017 = vmatprep.subr.bf16.mxu0 0
  %1018 = vmatpush1.bf16.msra.mxu0 0
  %1019 = vmatprep.subr.bf16.mxu0 0
  %1020 = vmatpush1.bf16.msra.mxu0 0
  %1021 = vmatprep.subr.bf16.mxu0 0
  %1022 = vmatpush1.bf16.msra.mxu0 0
  %1023 = vmatprep.subr.bf16.mxu0 0
  %1024 = vmatpush1.bf16.msra.mxu0 0
  %1025 = vmatprep.subr.bf16.mxu0 0
  %1026 = vmatpush1.bf16.msra.mxu0 0
  %1027 = vmatprep.subr.bf16.mxu0 0
  %1028 = vmatpush1.bf16.msra.mxu0 0
  %1029 = vmatprep.subr.bf16.mxu0 0
  %1030 = vmatpush1.bf16.msra.mxu0 0
  %1031 = vmatprep.subr.bf16.mxu0 0
  %1032 = vmatpush1.bf16.msra.mxu0 0
  %1033 = vmatprep.subr.bf16.mxu0 0
  %1034 = vmatpush1.bf16.msra.mxu0 0
  %1035 = vmatprep.mubr.bf16.mxu0 0
  %1036 = vmatmul.mubr.bf16.gmra.mrb[0].mxu0 %v989
  %v1037 = vpop.f32.mrb[0].mxu0
  %v1038 = vadd.f32 %v927, %v1037
  %v1039 = vpop.f32.mrb[0].mxu0
  %v1040 = vpop.f32.mrb[0].mxu0
  %v1041 = vadd.f32 %v930, %v1040
  %v1042 = vpop.f32.mrb[0].mxu0
  %1043 = vmatprep.mubr.bf16.mxu0 0
  %1044 = vmatmul.mubr.bf16.gmra.mrb[0].mxu0 %v992
  %v1045 = vpop.f32.mrb[0].mxu0
  %v1046 = vadd.f32 %v935, %v1045
  %v1047 = vpop.f32.mrb[0].mxu0
  %v1048 = vpop.f32.mrb[0].mxu0
  %v1049 = vadd.f32 %v938, %v1048
  %v1050 = vpop.f32.mrb[0].mxu0
  %1051 = vmatprep.mubr.bf16.mxu0 0
  %1052 = vmatmul.mubr.bf16.gmra.mrb[0].mxu0 %v995
  %v1053 = vpop.f32.mrb[0].mxu0
  %v1054 = vadd.f32 %v943, %v1053
  %v1055 = vpop.f32.mrb[0].mxu0
  %v1056 = vpop.f32.mrb[0].mxu0
  %v1057 = vadd.f32 %v946, %v1056
  %v1058 = vpop.f32.mrb[0].mxu0
  %1059 = vmatprep.mubr.bf16.mxu0 0
  %1060 = vmatmul.mubr.bf16.gmra.mrb[0].mxu0 %v998
  %v1061 = vpop.f32.mrb[0].mxu0
  %v1062 = vadd.f32 %v951, %v1061
  %v1063 = vpop.f32.mrb[0].mxu0
  %v1064 = vpop.f32.mrb[0].mxu0
  %v1065 = vadd.f32 %v954, %v1064
  %v1066 = vpop.f32.mrb[0].mxu0
  %1067 = vmatprep.mubr.bf16.mxu0 0
  %1068 = vmatmul.mubr.bf16.gmra.mrb[0].mxu0 %v1001
  %v1069 = vpop.f32.mrb[0].mxu0
  %v1070 = vadd.f32 %v959, %v1069
  %v1071 = vpop.f32.mrb[0].mxu0
  %v1072 = vpop.f32.mrb[0].mxu0
  %v1073 = vpop.f32.mrb[0].mxu0
  %1074 = vdwg.mxu0
  %v1075 = vld [vmem:[#allocation2 + $0x3] sm:$0xff]
  %v1076 = vld [vmem:[#allocation2 + $0xb] sm:$0xff]
  %v1077 = vld [vmem:[#allocation2 + $0x13] sm:$0xff]
  %v1078 = vld [vmem:[#allocation2 + $0x1b] sm:$0xff]
  %v1079 = vld [vmem:[#allocation2 + $0x23] sm:$0xff]
  %v1080 = vld [vmem:[#allocation2 + $0x2b] sm:$0xff]
  %v1081 = vld [vmem:[#allocation2 + $0x33] sm:$0xff]
  %v1082 = vld [vmem:[#allocation2 + $0x3b] sm:$0xff]
  %v1083 = vld [vmem:[#allocation2 + $0x43] sm:$0xff]
  %v1084 = vpack.c.bf16 %v1076, %v1075
  %v1085 = vpack.c.bf16 %v1078, %v1077
  %v1086 = vpack.c.bf16 %v1080, %v1079
  %v1087 = vpack.c.bf16 %v1082, %v1081
  %v1088 = vpack.c.bf16 %v1083, %v1083
  %s1089 = scalar_lea.vmem %s2, 64
  %v1090 = vld [vmem:[%s1089] sm:$0xf]
  %v1091 = vld [vmem:[%s1089 + $0x4] sm:$0xf]
  %v1092 = vld [vmem:[%s1089 + $0x8] sm:$0xf]
  %v1093 = vld [vmem:[%s1089 + $0xc] sm:$0xf]
  %v1094 = vld [vmem:[%s1089 + $0x10] sm:$0xf]
  %v1095 = vld [vmem:[%s1089 + $0x14] sm:$0xf]
  %v1096 = vld [vmem:[%s1089 + $0x18] sm:$0xf]
  %v1097 = vld [vmem:[%s1089 + $0x1c] sm:$0xf]
  %v1106 = vunpack.c.l.b16 %v1090
  %v1107 = vunpack.c.l.b16 %v1091
  %v1108 = vunpack.c.l.b16 %v1092
  %v1109 = vunpack.c.l.b16 %v1093
  %v1110 = vunpack.c.l.b16 %v1094
  %v1111 = vunpack.c.l.b16 %v1095
  %v1112 = vunpack.c.l.b16 %v1096
  %v1113 = vunpack.c.l.b16 %v1097
  %v1114 = vpack.c.b16 %v1107, %v1106
  %v1115 = vpack.c.b16 %v1109, %v1108
  %v1116 = vpack.c.b16 %v1111, %v1110
  %v1117 = vpack.c.b16 %v1113, %v1112
  %v1123 = vsel %vm72, %v1084, 0
  %v1126 = vsel %vm72, %v1085, 0
  %v1129 = vsel %vm72, %v1086, 0
  %v1132 = vsel %vm72, %v1087, 0
  %v1135 = vsel %vm72, %v1088, 0
  %1137 = vmatprep.subr.bf16.mxu0 0
  %1138 = vmatpush1.bf16.msra.mxu0 %v1114
  %1139 = vmatprep.subr.bf16.mxu0 0
  %1140 = vmatpush1.bf16.msra.mxu0 %v1115
  %1141 = vmatprep.subr.bf16.mxu0 0
  %1142 = vmatpush1.bf16.msra.mxu0 %v1116
  %1143 = vmatprep.subr.bf16.mxu0 0
  %1144 = vmatpush1.bf16.msra.mxu0 %v1117
  %1145 = vmatprep.subr.bf16.mxu0 0
  %1146 = vmatpush1.bf16.msra.mxu0 0
  %1147 = vmatprep.subr.bf16.mxu0 0
  %1148 = vmatpush1.bf16.msra.mxu0 0
  %1149 = vmatprep.subr.bf16.mxu0 0
  %1150 = vmatpush1.bf16.msra.mxu0 0
  %1151 = vmatprep.subr.bf16.mxu0 0
  %1152 = vmatpush1.bf16.msra.mxu0 0
  %1153 = vmatprep.subr.bf16.mxu0 0
  %1154 = vmatpush1.bf16.msra.mxu0 0
  %1155 = vmatprep.subr.bf16.mxu0 0
  %1156 = vmatpush1.bf16.msra.mxu0 0
  %1157 = vmatprep.subr.bf16.mxu0 0
  %1158 = vmatpush1.bf16.msra.mxu0 0
  %1159 = vmatprep.subr.bf16.mxu0 0
  %1160 = vmatpush1.bf16.msra.mxu0 0
  %1161 = vmatprep.subr.bf16.mxu0 0
  %1162 = vmatpush1.bf16.msra.mxu0 0
  %1163 = vmatprep.subr.bf16.mxu0 0
  %1164 = vmatpush1.bf16.msra.mxu0 0
  %1165 = vmatprep.subr.bf16.mxu0 0
  %1166 = vmatpush1.bf16.msra.mxu0 0
  %1167 = vmatprep.subr.bf16.mxu0 0
  %1168 = vmatpush1.bf16.msra.mxu0 0
  %1169 = vmatprep.mubr.bf16.mxu0 0
  %1170 = vmatmul.mubr.bf16.gmra.mrb[0].mxu0 %v1123
  %v1171 = vpop.f32.mrb[0].mxu0
  %v1172 = vadd.f32 0.0, %v1171
  %v1173 = vpop.f32.mrb[0].mxu0
  %v1174 = vpop.f32.mrb[0].mxu0
  %v1175 = vadd.f32 0.0, %v1174
  %v1176 = vpop.f32.mrb[0].mxu0
  %1177 = vmatprep.mubr.bf16.mxu0 0
  %1178 = vmatmul.mubr.bf16.gmra.mrb[0].mxu0 %v1126
  %v1179 = vpop.f32.mrb[0].mxu0
  %v1180 = vadd.f32 0.0, %v1179
  %v1181 = vpop.f32.mrb[0].mxu0
  %v1182 = vpop.f32.mrb[0].mxu0
  %v1183 = vadd.f32 0.0, %v1182
  %v1184 = vpop.f32.mrb[0].mxu0
  %1185 = vmatprep.mubr.bf16.mxu0 0
  %1186 = vmatmul.mubr.bf16.gmra.mrb[0].mxu0 %v1129
  %v1187 = vpop.f32.mrb[0].mxu0
  %v1188 = vadd.f32 0.0, %v1187
  %v1189 = vpop.f32.mrb[0].mxu0
  %v1190 = vpop.f32.mrb[0].mxu0
  %v1191 = vadd.f32 0.0, %v1190
  %v1192 = vpop.f32.mrb[0].mxu0
  %1193 = vmatprep.mubr.bf16.mxu0 0
  %1194 = vmatmul.mubr.bf16.gmra.mrb[0].mxu0 %v1132
  %v1195 = vpop.f32.mrb[0].mxu0
  %v1196 = vadd.f32 0.0, %v1195
  %v1197 = vpop.f32.mrb[0].mxu0
  %v1198 = vpop.f32.mrb[0].mxu0
  %v1199 = vadd.f32 0.0, %v1198
  %v1200 = vpop.f32.mrb[0].mxu0
  %1201 = vmatprep.mubr.bf16.mxu0 0
  %1202 = vmatmul.mubr.bf16.gmra.mrb[0].mxu0 %v1135
  %v1203 = vpop.f32.mrb[0].mxu0
  %v1204 = vadd.f32 0.0, %v1203
  %v1205 = vpop.f32.mrb[0].mxu0
  %v1206 = vpop.f32.mrb[0].mxu0
  %v1207 = vpop.f32.mrb[0].mxu0
  %1208 = vdwg.mxu0
  %v1209 = vadd.f32 %v1038, %v1172
  %v1210 = vadd.f32 %v1041, %v1175
  %v1211 = vadd.f32 %v1046, %v1180
  %v1212 = vadd.f32 %v1049, %v1183
  %v1213 = vadd.f32 %v1054, %v1188
  %v1214 = vadd.f32 %v1057, %v1191
  %v1215 = vadd.f32 %v1062, %v1196
  %v1216 = vadd.f32 %v1065, %v1199
  %v1217 = vadd.f32 %v1070, %v1204
  %v1218 = vld [vmem:[#allocation2 + $0x7] sm:$0xff]
  %v1219 = vld [vmem:[#allocation2 + $0xf] sm:$0xff]
  %v1220 = vld [vmem:[#allocation2 + $0x17] sm:$0xff]
  %v1221 = vld [vmem:[#allocation2 + $0x1f] sm:$0xff]
  %v1222 = vld [vmem:[#allocation2 + $0x27] sm:$0xff]
  %v1223 = vld [vmem:[#allocation2 + $0x2f] sm:$0xff]
  %v1224 = vld [vmem:[#allocation2 + $0x37] sm:$0xff]
  %v1225 = vld [vmem:[#allocation2 + $0x3f] sm:$0xff]
  %v1226 = vld [vmem:[#allocation2 + $0x47] sm:$0xff]
  %v1227 = vpack.c.bf16 %v1219, %v1218
  %v1228 = vpack.c.bf16 %v1221, %v1220
  %v1229 = vpack.c.bf16 %v1223, %v1222
  %v1230 = vpack.c.bf16 %v1225, %v1224
  %v1231 = vpack.c.bf16 %v1226, %v1226
  %s1232 = scalar_lea.vmem %s2, 96
  %v1233 = vld [vmem:[%s1232] sm:$0xf]
  %v1234 = vld [vmem:[%s1232 + $0x4] sm:$0xf]
  %v1235 = vld [vmem:[%s1232 + $0x8] sm:$0xf]
  %v1236 = vld [vmem:[%s1232 + $0xc] sm:$0xf]
  %v1237 = vld [vmem:[%s1232 + $0x10] sm:$0xf]
  %v1238 = vld [vmem:[%s1232 + $0x14] sm:$0xf]
  %v1239 = vld [vmem:[%s1232 + $0x18] sm:$0xf]
  %v1240 = vld [vmem:[%s1232 + $0x1c] sm:$0xf]
  %v1249 = vunpack.c.l.b16 %v1233
  %v1250 = vunpack.c.l.b16 %v1234
  %v1251 = vunpack.c.l.b16 %v1235
  %v1252 = vunpack.c.l.b16 %v1236
  %v1253 = vunpack.c.l.b16 %v1237
  %v1254 = vunpack.c.l.b16 %v1238
  %v1255 = vunpack.c.l.b16 %v1239
  %v1256 = vunpack.c.l.b16 %v1240
  %v1257 = vpack.c.b16 %v1250, %v1249
  %v1258 = vpack.c.b16 %v1252, %v1251
  %v1259 = vpack.c.b16 %v1254, %v1253
  %v1260 = vpack.c.b16 %v1256, %v1255
  %v1266 = vsel %vm72, %v1227, 0
  %v1269 = vsel %vm72, %v1228, 0
  %v1272 = vsel %vm72, %v1229, 0
  %v1275 = vsel %vm72, %v1230, 0
  %v1278 = vsel %vm72, %v1231, 0
  %1280 = vmatprep.subr.bf16.mxu0 0
  %1281 = vmatpush1.bf16.msra.mxu0 %v1257
  %1282 = vmatprep.subr.bf16.mxu0 0
  %1283 = vmatpush1.bf16.msra.mxu0 %v1258
  %1284 = vmatprep.subr.bf16.mxu0 0
  %1285 = vmatpush1.bf16.msra.mxu0 %v1259
  %1286 = vmatprep.subr.bf16.mxu0 0
  %1287 = vmatpush1.bf16.msra.mxu0 %v1260
  %1288 = vmatprep.subr.bf16.mxu0 0
  %1289 = vmatpush1.bf16.msra.mxu0 0
  %1290 = vmatprep.subr.bf16.mxu0 0
  %1291 = vmatpush1.bf16.msra.mxu0 0
  %1292 = vmatprep.subr.bf16.mxu0 0
  %1293 = vmatpush1.bf16.msra.mxu0 0
  %1294 = vmatprep.subr.bf16.mxu0 0
  %1295 = vmatpush1.bf16.msra.mxu0 0
  %1296 = vmatprep.subr.bf16.mxu0 0
  %1297 = vmatpush1.bf16.msra.mxu0 0
  %1298 = vmatprep.subr.bf16.mxu0 0
  %1299 = vmatpush1.bf16.msra.mxu0 0
  %1300 = vmatprep.subr.bf16.mxu0 0
  %1301 = vmatpush1.bf16.msra.mxu0 0
  %1302 = vmatprep.subr.bf16.mxu0 0
  %1303 = vmatpush1.bf16.msra.mxu0 0
  %1304 = vmatprep.subr.bf16.mxu0 0
  %1305 = vmatpush1.bf16.msra.mxu0 0
  %1306 = vmatprep.subr.bf16.mxu0 0
  %1307 = vmatpush1.bf16.msra.mxu0 0
  %1308 = vmatprep.subr.bf16.mxu0 0
  %1309 = vmatpush1.bf16.msra.mxu0 0
  %1310 = vmatprep.subr.bf16.mxu0 0
  %1311 = vmatpush1.bf16.msra.mxu0 0
  %1312 = vmatprep.mubr.bf16.mxu0 0
  %1313 = vmatmul.mubr.bf16.gmra.mrb[0].mxu0 %v1266
  %v1314 = vpop.f32.mrb[0].mxu0
  %v1315 = vadd.f32 0.0, %v1314
  %v1316 = vpop.f32.mrb[0].mxu0
  %v1317 = vpop.f32.mrb[0].mxu0
  %v1318 = vadd.f32 0.0, %v1317
  %v1319 = vpop.f32.mrb[0].mxu0
  %1320 = vmatprep.mubr.bf16.mxu0 0
  %1321 = vmatmul.mubr.bf16.gmra.mrb[0].mxu0 %v1269
  %v1322 = vpop.f32.mrb[0].mxu0
  %v1323 = vadd.f32 0.0, %v1322
  %v1324 = vpop.f32.mrb[0].mxu0
  %v1325 = vpop.f32.mrb[0].mxu0
  %v1326 = vadd.f32 0.0, %v1325
  %v1327 = vpop.f32.mrb[0].mxu0
  %1328 = vmatprep.mubr.bf16.mxu0 0
  %1329 = vmatmul.mubr.bf16.gmra.mrb[0].mxu0 %v1272
  %v1330 = vpop.f32.mrb[0].mxu0
  %v1331 = vadd.f32 0.0, %v1330
  %v1332 = vpop.f32.mrb[0].mxu0
  %v1333 = vpop.f32.mrb[0].mxu0
  %v1334 = vadd.f32 0.0, %v1333
  %v1335 = vpop.f32.mrb[0].mxu0
  %1336 = vmatprep.mubr.bf16.mxu0 0
  %1337 = vmatmul.mubr.bf16.gmra.mrb[0].mxu0 %v1275
  %v1338 = vpop.f32.mrb[0].mxu0
  %v1339 = vadd.f32 0.0, %v1338
  %v1340 = vpop.f32.mrb[0].mxu0
  %v1341 = vpop.f32.mrb[0].mxu0
  %v1342 = vadd.f32 0.0, %v1341
  %v1343 = vpop.f32.mrb[0].mxu0
  %1344 = vmatprep.mubr.bf16.mxu0 0
  %1345 = vmatmul.mubr.bf16.gmra.mrb[0].mxu0 %v1278
  %v1346 = vpop.f32.mrb[0].mxu0
  %v1347 = vadd.f32 0.0, %v1346
  %v1348 = vpop.f32.mrb[0].mxu0
  %v1349 = vpop.f32.mrb[0].mxu0
  %v1350 = vpop.f32.mrb[0].mxu0
  %1351 = vdwg.mxu0
  %v1352 = vadd.f32 %v1209, %v1315
  %v1353 = vadd.f32 %v1210, %v1318
  %v1354 = vadd.f32 %v1211, %v1323
  %v1355 = vadd.f32 %v1212, %v1326
  %v1356 = vadd.f32 %v1213, %v1331
  %v1357 = vadd.f32 %v1214, %v1334
  %v1358 = vadd.f32 %v1215, %v1339
  %v1359 = vadd.f32 %v1216, %v1342
  %v1360 = vadd.f32 %v1217, %v1347
  %v1361 = vld [vmem:[#allocation2 + $0x8] sm:$0xff]
  %v1362 = vld [vmem:[#allocation2 + $0x10] sm:$0xff]
  %v1363 = vld [vmem:[#allocation2 + $0x18] sm:$0xff]
  %v1364 = vld [vmem:[#allocation2 + $0x20] sm:$0xff]
  %v1365 = vld [vmem:[#allocation2 + $0x28] sm:$0xff]
  %v1366 = vld [vmem:[#allocation2 + $0x30] sm:$0xff]
  %v1367 = vld [vmem:[#allocation2 + $0x38] sm:$0xff]
  %v1368 = vld [vmem:[#allocation2 + $0x40] sm:$0xff]
  %v1369 = vld [vmem:[#allocation2 + $0x48] sm:$0xff]
  %v1370 = vpack.c.bf16 %v1362, %v1361
  %v1371 = vpack.c.bf16 %v1364, %v1363
  %v1372 = vpack.c.bf16 %v1366, %v1365
  %v1373 = vpack.c.bf16 %v1368, %v1367
  %v1374 = vpack.c.bf16 %v1369, %v1369
  %s1375 = scalar_lea.vmem %s2, 128
  %v1376 = vld [vmem:[%s1375] sm:$0xf]
  %v1377 = vld [vmem:[%s1375 + $0x4] sm:$0xf]
  %v1378 = vld [vmem:[%s1375 + $0x8] sm:$0xf]
  %v1379 = vld [vmem:[%s1375 + $0xc] sm:$0xf]
  %v1380 = vld [vmem:[%s1375 + $0x10] sm:$0xf]
  %v1381 = vld [vmem:[%s1375 + $0x14] sm:$0xf]
  %v1382 = vld [vmem:[%s1375 + $0x18] sm:$0xf]
  %v1383 = vld [vmem:[%s1375 + $0x1c] sm:$0xf]
  %v1392 = vunpack.c.l.b16 %v1376
  %v1393 = vunpack.c.l.b16 %v1377
  %v1394 = vunpack.c.l.b16 %v1378
  %v1395 = vunpack.c.l.b16 %v1379
  %v1396 = vunpack.c.l.b16 %v1380
  %v1397 = vunpack.c.l.b16 %v1381
  %v1398 = vunpack.c.l.b16 %v1382
  %v1399 = vunpack.c.l.b16 %v1383
  %v1400 = vpack.c.b16 %v1393, %v1392
  %v1401 = vpack.c.b16 %v1395, %v1394
  %v1402 = vpack.c.b16 %v1397, %v1396
  %v1403 = vpack.c.b16 %v1399, %v1398
  %v1409 = vsel %vm72, %v1370, 0
  %v1412 = vsel %vm72, %v1371, 0
  %v1415 = vsel %vm72, %v1372, 0
  %v1418 = vsel %vm72, %v1373, 0
  %v1421 = vsel %vm72, %v1374, 0
  %1423 = vmatprep.subr.bf16.mxu0 0
  %1424 = vmatpush1.bf16.msra.mxu0 %v1400
  %1425 = vmatprep.subr.bf16.mxu0 0
  %1426 = vmatpush1.bf16.msra.mxu0 %v1401
  %1427 = vmatprep.subr.bf16.mxu0 0
  %1428 = vmatpush1.bf16.msra.mxu0 %v1402
  %1429 = vmatprep.subr.bf16.mxu0 0
  %1430 = vmatpush1.bf16.msra.mxu0 %v1403
  %1431 = vmatprep.subr.bf16.mxu0 0
  %1432 = vmatpush1.bf16.msra.mxu0 0
  %1433 = vmatprep.subr.bf16.mxu0 0
  %1434 = vmatpush1.bf16.msra.mxu0 0
  %1435 = vmatprep.subr.bf16.mxu0 0
  %1436 = vmatpush1.bf16.msra.mxu0 0
  %1437 = vmatprep.subr.bf16.mxu0 0
  %1438 = vmatpush1.bf16.msra.mxu0 0
  %1439 = vmatprep.subr.bf16.mxu0 0
  %1440 = vmatpush1.bf16.msra.mxu0 0
  %1441 = vmatprep.subr.bf16.mxu0 0
  %1442 = vmatpush1.bf16.msra.mxu0 0
  %1443 = vmatprep.subr.bf16.mxu0 0
  %1444 = vmatpush1.bf16.msra.mxu0 0
  %1445 = vmatprep.subr.bf16.mxu0 0
  %1446 = vmatpush1.bf16.msra.mxu0 0
  %1447 = vmatprep.subr.bf16.mxu0 0
  %1448 = vmatpush1.bf16.msra.mxu0 0
  %1449 = vmatprep.subr.bf16.mxu0 0
  %1450 = vmatpush1.bf16.msra.mxu0 0
  %1451 = vmatprep.subr.bf16.mxu0 0
  %1452 = vmatpush1.bf16.msra.mxu0 0
  %1453 = vmatprep.subr.bf16.mxu0 0
  %1454 = vmatpush1.bf16.msra.mxu0 0
  %1455 = vmatprep.mubr.bf16.mxu0 0
  %1456 = vmatmul.mubr.bf16.gmra.mrb[0].mxu0 %v1409
  %v1457 = vpop.f32.mrb[0].mxu0
  %v1458 = vadd.f32 0.0, %v1457
  %v1459 = vpop.f32.mrb[0].mxu0
  %v1460 = vpop.f32.mrb[0].mxu0
  %v1461 = vadd.f32 0.0, %v1460
  %v1462 = vpop.f32.mrb[0].mxu0
  %1463 = vmatprep.mubr.bf16.mxu0 0
  %1464 = vmatmul.mubr.bf16.gmra.mrb[0].mxu0 %v1412
  %v1465 = vpop.f32.mrb[0].mxu0
  %v1466 = vadd.f32 0.0, %v1465
  %v1467 = vpop.f32.mrb[0].mxu0
  %v1468 = vpop.f32.mrb[0].mxu0
  %v1469 = vadd.f32 0.0, %v1468
  %v1470 = vpop.f32.mrb[0].mxu0
  %1471 = vmatprep.mubr.bf16.mxu0 0
  %1472 = vmatmul.mubr.bf16.gmra.mrb[0].mxu0 %v1415
  %v1473 = vpop.f32.mrb[0].mxu0
  %v1474 = vadd.f32 0.0, %v1473
  %v1475 = vpop.f32.mrb[0].mxu0
  %v1476 = vpop.f32.mrb[0].mxu0
  %v1477 = vadd.f32 0.0, %v1476
  %v1478 = vpop.f32.mrb[0].mxu0
  %1479 = vmatprep.mubr.bf16.mxu0 0
  %1480 = vmatmul.mubr.bf16.gmra.mrb[0].mxu0 %v1418
  %v1481 = vpop.f32.mrb[0].mxu0
  %v1482 = vadd.f32 0.0, %v1481
  %v1483 = vpop.f32.mrb[0].mxu0
  %v1484 = vpop.f32.mrb[0].mxu0
  %v1485 = vadd.f32 0.0, %v1484
  %v1486 = vpop.f32.mrb[0].mxu0
  %1487 = vmatprep.mubr.bf16.mxu0 0
  %1488 = vmatmul.mubr.bf16.gmra.mrb[0].mxu0 %v1421
  %v1489 = vpop.f32.mrb[0].mxu0
  %v1490 = vadd.f32 0.0, %v1489
  %v1491 = vpop.f32.mrb[0].mxu0
  %v1492 = vpop.f32.mrb[0].mxu0
  %v1493 = vpop.f32.mrb[0].mxu0
  %1494 = vdwg.mxu0
  %v1495 = vadd.f32 %v1352, %v1458
  %v1496 = vadd.f32 %v1353, %v1461
  %v1497 = vadd.f32 %v1354, %v1466
  %v1498 = vadd.f32 %v1355, %v1469
  %v1499 = vadd.f32 %v1356, %v1474
  %v1500 = vadd.f32 %v1357, %v1477
  %v1501 = vadd.f32 %v1358, %v1482
  %v1502 = vadd.f32 %v1359, %v1485
  %v1503 = vadd.f32 %v1360, %v1490
  %v1504 = vld [vmem:[#allocation2 + $0x9] sm:$0xff]
  %v1505 = vld [vmem:[#allocation2 + $0x11] sm:$0xff]
  %v1506 = vld [vmem:[#allocation2 + $0x19] sm:$0xff]
  %v1507 = vld [vmem:[#allocation2 + $0x21] sm:$0xff]
  %v1508 = vld [vmem:[#allocation2 + $0x29] sm:$0xff]
  %v1509 = vld [vmem:[#allocation2 + $0x31] sm:$0xff]
  %v1510 = vld [vmem:[#allocation2 + $0x39] sm:$0xff]
  %v1511 = vld [vmem:[#allocation2 + $0x41] sm:$0xff]
  %v1512 = vld [vmem:[#allocation2 + $0x49] sm:$0xff]
  %v1513 = vpack.c.bf16 %v1505, %v1504
  %v1514 = vpack.c.bf16 %v1507, %v1506
  %v1515 = vpack.c.bf16 %v1509, %v1508
  %v1516 = vpack.c.bf16 %v1511, %v1510
  %v1517 = vpack.c.bf16 %v1512, %v1512
  %s1518 = scalar_lea.vmem %s2, 160
  %v1519 = vld [vmem:[%s1518] sm:$0xf]
  %v1520 = vld [vmem:[%s1518 + $0x4] sm:$0xf]
  %v1521 = vld [vmem:[%s1518 + $0x8] sm:$0xf]
  %v1522 = vld [vmem:[%s1518 + $0xc] sm:$0xf]
  %v1523 = vld [vmem:[%s1518 + $0x10] sm:$0xf]
  %v1524 = vld [vmem:[%s1518 + $0x14] sm:$0xf]
  %v1525 = vld [vmem:[%s1518 + $0x18] sm:$0xf]
  %v1526 = vld [vmem:[%s1518 + $0x1c] sm:$0xf]
  %v1535 = vunpack.c.l.b16 %v1519
  %v1536 = vunpack.c.l.b16 %v1520
  %v1537 = vunpack.c.l.b16 %v1521
  %v1538 = vunpack.c.l.b16 %v1522
  %v1539 = vunpack.c.l.b16 %v1523
  %v1540 = vunpack.c.l.b16 %v1524
  %v1541 = vunpack.c.l.b16 %v1525
  %v1542 = vunpack.c.l.b16 %v1526
  %v1543 = vpack.c.b16 %v1536, %v1535
  %v1544 = vpack.c.b16 %v1538, %v1537
  %v1545 = vpack.c.b16 %v1540, %v1539
  %v1546 = vpack.c.b16 %v1542, %v1541
  %v1552 = vsel %vm72, %v1513, 0
  %v1555 = vsel %vm72, %v1514, 0
  %v1558 = vsel %vm72, %v1515, 0
  %v1561 = vsel %vm72, %v1516, 0
  %v1564 = vsel %vm72, %v1517, 0
  %1566 = vmatprep.subr.bf16.mxu0 0
  %1567 = vmatpush1.bf16.msra.mxu0 %v1543
  %1568 = vmatprep.subr.bf16.mxu0 0
  %1569 = vmatpush1.bf16.msra.mxu0 %v1544
  %1570 = vmatprep.subr.bf16.mxu0 0
  %1571 = vmatpush1.bf16.msra.mxu0 %v1545
  %1572 = vmatprep.subr.bf16.mxu0 0
  %1573 = vmatpush1.bf16.msra.mxu0 %v1546
  %1574 = vmatprep.subr.bf16.mxu0 0
  %1575 = vmatpush1.bf16.msra.mxu0 0
  %1576 = vmatprep.subr.bf16.mxu0 0
  %1577 = vmatpush1.bf16.msra.mxu0 0
  %1578 = vmatprep.subr.bf16.mxu0 0
  %1579 = vmatpush1.bf16.msra.mxu0 0
  %1580 = vmatprep.subr.bf16.mxu0 0
  %1581 = vmatpush1.bf16.msra.mxu0 0
  %1582 = vmatprep.subr.bf16.mxu0 0
  %1583 = vmatpush1.bf16.msra.mxu0 0
  %1584 = vmatprep.subr.bf16.mxu0 0
  %1585 = vmatpush1.bf16.msra.mxu0 0
  %1586 = vmatprep.subr.bf16.mxu0 0
  %1587 = vmatpush1.bf16.msra.mxu0 0
  %1588 = vmatprep.subr.bf16.mxu0 0
  %1589 = vmatpush1.bf16.msra.mxu0 0
  %1590 = vmatprep.subr.bf16.mxu0 0
  %1591 = vmatpush1.bf16.msra.mxu0 0
  %1592 = vmatprep.subr.bf16.mxu0 0
  %1593 = vmatpush1.bf16.msra.mxu0 0
  %1594 = vmatprep.subr.bf16.mxu0 0
  %1595 = vmatpush1.bf16.msra.mxu0 0
  %1596 = vmatprep.subr.bf16.mxu0 0
  %1597 = vmatpush1.bf16.msra.mxu0 0
  %1598 = vmatprep.mubr.bf16.mxu0 0
  %1599 = vmatmul.mubr.bf16.gmra.mrb[0].mxu0 %v1552
  %v1600 = vpop.f32.mrb[0].mxu0
  %v1601 = vadd.f32 0.0, %v1600
  %v1602 = vpop.f32.mrb[0].mxu0
  %v1603 = vpop.f32.mrb[0].mxu0
  %v1604 = vadd.f32 0.0, %v1603
  %v1605 = vpop.f32.mrb[0].mxu0
  %1606 = vmatprep.mubr.bf16.mxu0 0
  %1607 = vmatmul.mubr.bf16.gmra.mrb[0].mxu0 %v1555
  %v1608 = vpop.f32.mrb[0].mxu0
  %v1609 = vadd.f32 0.0, %v1608
  %v1610 = vpop.f32.mrb[0].mxu0
  %v1611 = vpop.f32.mrb[0].mxu0
  %v1612 = vadd.f32 0.0, %v1611
  %v1613 = vpop.f32.mrb[0].mxu0
  %1614 = vmatprep.mubr.bf16.mxu0 0
  %1615 = vmatmul.mubr.bf16.gmra.mrb[0].mxu0 %v1558
  %v1616 = vpop.f32.mrb[0].mxu0
  %v1617 = vadd.f32 0.0, %v1616
  %v1618 = vpop.f32.mrb[0].mxu0
  %v1619 = vpop.f32.mrb[0].mxu0
  %v1620 = vadd.f32 0.0, %v1619
  %v1621 = vpop.f32.mrb[0].mxu0
  %1622 = vmatprep.mubr.bf16.mxu0 0
  %1623 = vmatmul.mubr.bf16.gmra.mrb[0].mxu0 %v1561
  %v1624 = vpop.f32.mrb[0].mxu0
  %v1625 = vadd.f32 0.0, %v1624
  %v1626 = vpop.f32.mrb[0].mxu0
  %v1627 = vpop.f32.mrb[0].mxu0
  %v1628 = vadd.f32 0.0, %v1627
  %v1629 = vpop.f32.mrb[0].mxu0
  %1630 = vmatprep.mubr.bf16.mxu0 0
  %1631 = vmatmul.mubr.bf16.gmra.mrb[0].mxu0 %v1564
  %v1632 = vpop.f32.mrb[0].mxu0
  %v1633 = vadd.f32 0.0, %v1632
  %v1634 = vpop.f32.mrb[0].mxu0
  %v1635 = vpop.f32.mrb[0].mxu0
  %v1636 = vpop.f32.mrb[0].mxu0
  %1637 = vdwg.mxu0
  %v1638 = vadd.f32 %v1495, %v1601
  %v1639 = vadd.f32 %v1496, %v1604
  %v1640 = vadd.f32 %v1497, %v1609
  %v1641 = vadd.f32 %v1498, %v1612
  %v1642 = vadd.f32 %v1499, %v1617
  %v1643 = vadd.f32 %v1500, %v1620
  %v1644 = vadd.f32 %v1501, %v1625
  %v1645 = vadd.f32 %v1502, %v1628
  %v1646 = vadd.f32 %v1503, %v1633
  %v1647 = vld [vmem:[#allocation2 + $0xd] sm:$0xff]
  %v1648 = vld [vmem:[#allocation2 + $0x15] sm:$0xff]
  %v1649 = vld [vmem:[#allocation2 + $0x1d] sm:$0xff]
  %v1650 = vld [vmem:[#allocation2 + $0x25] sm:$0xff]
  %v1651 = vld [vmem:[#allocation2 + $0x2d] sm:$0xff]
  %v1652 = vld [vmem:[#allocation2 + $0x35] sm:$0xff]
  %v1653 = vld [vmem:[#allocation2 + $0x3d] sm:$0xff]
  %v1654 = vld [vmem:[#allocation2 + $0x45] sm:$0xff]
  %v1655 = vld [vmem:[#allocation2 + $0x4d] sm:$0xff]
  %v1656 = vpack.c.bf16 %v1648, %v1647
  %v1657 = vpack.c.bf16 %v1650, %v1649
  %v1658 = vpack.c.bf16 %v1652, %v1651
  %v1659 = vpack.c.bf16 %v1654, %v1653
  %v1660 = vpack.c.bf16 %v1655, %v1655
  %s1661 = scalar_lea.vmem %s2, 192
  %v1662 = vld [vmem:[%s1661] sm:$0xf]
  %v1663 = vld [vmem:[%s1661 + $0x4] sm:$0xf]
  %v1664 = vld [vmem:[%s1661 + $0x8] sm:$0xf]
  %v1665 = vld [vmem:[%s1661 + $0xc] sm:$0xf]
  %v1666 = vld [vmem:[%s1661 + $0x10] sm:$0xf]
  %v1667 = vld [vmem:[%s1661 + $0x14] sm:$0xf]
  %v1668 = vld [vmem:[%s1661 + $0x18] sm:$0xf]
  %v1669 = vld [vmem:[%s1661 + $0x1c] sm:$0xf]
  %v1678 = vunpack.c.l.b16 %v1662
  %v1679 = vunpack.c.l.b16 %v1663
  %v1680 = vunpack.c.l.b16 %v1664
  %v1681 = vunpack.c.l.b16 %v1665
  %v1682 = vunpack.c.l.b16 %v1666
  %v1683 = vunpack.c.l.b16 %v1667
  %v1684 = vunpack.c.l.b16 %v1668
  %v1685 = vunpack.c.l.b16 %v1669
  %v1686 = vpack.c.b16 %v1679, %v1678
  %v1687 = vpack.c.b16 %v1681, %v1680
  %v1688 = vpack.c.b16 %v1683, %v1682
  %v1689 = vpack.c.b16 %v1685, %v1684
  %v1695 = vsel %vm72, %v1656, 0
  %v1698 = vsel %vm72, %v1657, 0
  %v1701 = vsel %vm72, %v1658, 0
  %v1704 = vsel %vm72, %v1659, 0
  %v1707 = vsel %vm72, %v1660, 0
  %1709 = vmatprep.subr.bf16.mxu0 0
  %1710 = vmatpush1.bf16.msra.mxu0 %v1686
  %1711 = vmatprep.subr.bf16.mxu0 0
  %1712 = vmatpush1.bf16.msra.mxu0 %v1687
  %1713 = vmatprep.subr.bf16.mxu0 0
  %1714 = vmatpush1.bf16.msra.mxu0 %v1688
  %1715 = vmatprep.subr.bf16.mxu0 0
  %1716 = vmatpush1.bf16.msra.mxu0 %v1689
  %1717 = vmatprep.subr.bf16.mxu0 0
  %1718 = vmatpush1.bf16.msra.mxu0 0
  %1719 = vmatprep.subr.bf16.mxu0 0
  %1720 = vmatpush1.bf16.msra.mxu0 0
  %1721 = vmatprep.subr.bf16.mxu0 0
  %1722 = vmatpush1.bf16.msra.mxu0 0
  %1723 = vmatprep.subr.bf16.mxu0 0
  %1724 = vmatpush1.bf16.msra.mxu0 0
  %1725 = vmatprep.subr.bf16.mxu0 0
  %1726 = vmatpush1.bf16.msra.mxu0 0
  %1727 = vmatprep.subr.bf16.mxu0 0
  %1728 = vmatpush1.bf16.msra.mxu0 0
  %1729 = vmatprep.subr.bf16.mxu0 0
  %1730 = vmatpush1.bf16.msra.mxu0 0
  %1731 = vmatprep.subr.bf16.mxu0 0
  %1732 = vmatpush1.bf16.msra.mxu0 0
  %1733 = vmatprep.subr.bf16.mxu0 0
  %1734 = vmatpush1.bf16.msra.mxu0 0
  %1735 = vmatprep.subr.bf16.mxu0 0
  %1736 = vmatpush1.bf16.msra.mxu0 0
  %1737 = vmatprep.subr.bf16.mxu0 0
  %1738 = vmatpush1.bf16.msra.mxu0 0
  %1739 = vmatprep.subr.bf16.mxu0 0
  %1740 = vmatpush1.bf16.msra.mxu0 0
  %1741 = vmatprep.mubr.bf16.mxu0 0
  %1742 = vmatmul.mubr.bf16.gmra.mrb[0].mxu0 %v1695
  %v1743 = vpop.f32.mrb[0].mxu0
  %v1744 = vadd.f32 0.0, %v1743
  %v1745 = vpop.f32.mrb[0].mxu0
  %v1746 = vpop.f32.mrb[0].mxu0
  %v1747 = vadd.f32 0.0, %v1746
  %v1748 = vpop.f32.mrb[0].mxu0
  %1749 = vmatprep.mubr.bf16.mxu0 0
  %1750 = vmatmul.mubr.bf16.gmra.mrb[0].mxu0 %v1698
  %v1751 = vpop.f32.mrb[0].mxu0
  %v1752 = vadd.f32 0.0, %v1751
  %v1753 = vpop.f32.mrb[0].mxu0
  %v1754 = vpop.f32.mrb[0].mxu0
  %v1755 = vadd.f32 0.0, %v1754
  %v1756 = vpop.f32.mrb[0].mxu0
  %1757 = vmatprep.mubr.bf16.mxu0 0
  %1758 = vmatmul.mubr.bf16.gmra.mrb[0].mxu0 %v1701
  %v1759 = vpop.f32.mrb[0].mxu0
  %v1760 = vadd.f32 0.0, %v1759
  %v1761 = vpop.f32.mrb[0].mxu0
  %v1762 = vpop.f32.mrb[0].mxu0
  %v1763 = vadd.f32 0.0, %v1762
  %v1764 = vpop.f32.mrb[0].mxu0
  %1765 = vmatprep.mubr.bf16.mxu0 0
  %1766 = vmatmul.mubr.bf16.gmra.mrb[0].mxu0 %v1704
  %v1767 = vpop.f32.mrb[0].mxu0
  %v1768 = vadd.f32 0.0, %v1767
  %v1769 = vpop.f32.mrb[0].mxu0
  %v1770 = vpop.f32.mrb[0].mxu0
  %v1771 = vadd.f32 0.0, %v1770
  %v1772 = vpop.f32.mrb[0].mxu0
  %1773 = vmatprep.mubr.bf16.mxu0 0
  %1774 = vmatmul.mubr.bf16.gmra.mrb[0].mxu0 %v1707
  %v1775 = vpop.f32.mrb[0].mxu0
  %v1776 = vadd.f32 0.0, %v1775
  %v1777 = vpop.f32.mrb[0].mxu0
  %v1778 = vpop.f32.mrb[0].mxu0
  %v1779 = vpop.f32.mrb[0].mxu0
  %1780 = vdwg.mxu0
  %v1781 = vadd.f32 %v1638, %v1744
  %v1782 = vadd.f32 %v1639, %v1747
  %v1783 = vadd.f32 %v1640, %v1752
  %v1784 = vadd.f32 %v1641, %v1755
  %v1785 = vadd.f32 %v1642, %v1760
  %v1786 = vadd.f32 %v1643, %v1763
  %v1787 = vadd.f32 %v1644, %v1768
  %v1788 = vadd.f32 %v1645, %v1771
  %v1789 = vadd.f32 %v1646, %v1776
  %v1790 = vld [vmem:[#allocation2 + $0xe] sm:$0xff]
  %v1791 = vld [vmem:[#allocation2 + $0x16] sm:$0xff]
  %v1792 = vld [vmem:[#allocation2 + $0x1e] sm:$0xff]
  %v1793 = vld [vmem:[#allocation2 + $0x26] sm:$0xff]
  %v1794 = vld [vmem:[#allocation2 + $0x2e] sm:$0xff]
  %v1795 = vld [vmem:[#allocation2 + $0x36] sm:$0xff]
  %v1796 = vld [vmem:[#allocation2 + $0x3e] sm:$0xff]
  %v1797 = vld [vmem:[#allocation2 + $0x46] sm:$0xff]
  %v1798 = vld [vmem:[#allocation2 + $0x4e] sm:$0xff]
  %v1799 = vpack.c.bf16 %v1791, %v1790
  %v1800 = vpack.c.bf16 %v1793, %v1792
  %v1801 = vpack.c.bf16 %v1795, %v1794
  %v1802 = vpack.c.bf16 %v1797, %v1796
  %v1803 = vpack.c.bf16 %v1798, %v1798
  %s1804 = scalar_lea.vmem %s2, 224
  %v1805 = vld [vmem:[%s1804] sm:$0xf]
  %v1806 = vld [vmem:[%s1804 + $0x4] sm:$0xf]
  %v1807 = vld [vmem:[%s1804 + $0x8] sm:$0xf]
  %v1808 = vld [vmem:[%s1804 + $0xc] sm:$0xf]
  %v1809 = vld [vmem:[%s1804 + $0x10] sm:$0xf]
  %v1810 = vld [vmem:[%s1804 + $0x14] sm:$0xf]
  %v1811 = vld [vmem:[%s1804 + $0x18] sm:$0xf]
  %v1812 = vld [vmem:[%s1804 + $0x1c] sm:$0xf]
  %v1821 = vunpack.c.l.b16 %v1805
  %v1822 = vunpack.c.l.b16 %v1806
  %v1823 = vunpack.c.l.b16 %v1807
  %v1824 = vunpack.c.l.b16 %v1808
  %v1825 = vunpack.c.l.b16 %v1809
  %v1826 = vunpack.c.l.b16 %v1810
  %v1827 = vunpack.c.l.b16 %v1811
  %v1828 = vunpack.c.l.b16 %v1812
  %v1829 = vpack.c.b16 %v1822, %v1821
  %v1830 = vpack.c.b16 %v1824, %v1823
  %v1831 = vpack.c.b16 %v1826, %v1825
  %v1832 = vpack.c.b16 %v1828, %v1827
  %v1838 = vsel %vm72, %v1799, 0
  %v1841 = vsel %vm72, %v1800, 0
  %v1844 = vsel %vm72, %v1801, 0
  %v1847 = vsel %vm72, %v1802, 0
  %v1850 = vsel %vm72, %v1803, 0
  %1852 = vmatprep.subr.bf16.mxu0 0
  %1853 = vmatpush1.bf16.msra.mxu0 %v1829
  %1854 = vmatprep.subr.bf16.mxu0 0
  %1855 = vmatpush1.bf16.msra.mxu0 %v1830
  %1856 = vmatprep.subr.bf16.mxu0 0
  %1857 = vmatpush1.bf16.msra.mxu0 %v1831
  %1858 = vmatprep.subr.bf16.mxu0 0
  %1859 = vmatpush1.bf16.msra.mxu0 %v1832
  %1860 = vmatprep.subr.bf16.mxu0 0
  %1861 = vmatpush1.bf16.msra.mxu0 0
  %1862 = vmatprep.subr.bf16.mxu0 0
  %1863 = vmatpush1.bf16.msra.mxu0 0
  %1864 = vmatprep.subr.bf16.mxu0 0
  %1865 = vmatpush1.bf16.msra.mxu0 0
  %1866 = vmatprep.subr.bf16.mxu0 0
  %1867 = vmatpush1.bf16.msra.mxu0 0
  %1868 = vmatprep.subr.bf16.mxu0 0
  %1869 = vmatpush1.bf16.msra.mxu0 0
  %1870 = vmatprep.subr.bf16.mxu0 0
  %1871 = vmatpush1.bf16.msra.mxu0 0
  %1872 = vmatprep.subr.bf16.mxu0 0
  %1873 = vmatpush1.bf16.msra.mxu0 0
  %1874 = vmatprep.subr.bf16.mxu0 0
  %1875 = vmatpush1.bf16.msra.mxu0 0
  %1876 = vmatprep.subr.bf16.mxu0 0
  %1877 = vmatpush1.bf16.msra.mxu0 0
  %1878 = vmatprep.subr.bf16.mxu0 0
  %1879 = vmatpush1.bf16.msra.mxu0 0
  %1880 = vmatprep.subr.bf16.mxu0 0
  %1881 = vmatpush1.bf16.msra.mxu0 0
  %1882 = vmatprep.subr.bf16.mxu0 0
  %1883 = vmatpush1.bf16.msra.mxu0 0
  %1884 = vmatprep.mubr.bf16.mxu0 0
  %1885 = vmatmul.mubr.bf16.gmra.mrb[0].mxu0 %v1838
  %v1886 = vpop.f32.mrb[0].mxu0
  %v1887 = vadd.f32 0.0, %v1886
  %v1888 = vpop.f32.mrb[0].mxu0
  %v1889 = vpop.f32.mrb[0].mxu0
  %v1890 = vadd.f32 0.0, %v1889
  %v1891 = vpop.f32.mrb[0].mxu0
  %1892 = vmatprep.mubr.bf16.mxu0 0
  %1893 = vmatmul.mubr.bf16.gmra.mrb[0].mxu0 %v1841
  %v1894 = vpop.f32.mrb[0].mxu0
  %v1895 = vadd.f32 0.0, %v1894
  %v1896 = vpop.f32.mrb[0].mxu0
  %v1897 = vpop.f32.mrb[0].mxu0
  %v1898 = vadd.f32 0.0, %v1897
  %v1899 = vpop.f32.mrb[0].mxu0
  %1900 = vmatprep.mubr.bf16.mxu0 0
  %1901 = vmatmul.mubr.bf16.gmra.mrb[0].mxu0 %v1844
  %v1902 = vpop.f32.mrb[0].mxu0
  %v1903 = vadd.f32 0.0, %v1902
  %v1904 = vpop.f32.mrb[0].mxu0
  %v1905 = vpop.f32.mrb[0].mxu0
  %v1906 = vadd.f32 0.0, %v1905
  %v1907 = vpop.f32.mrb[0].mxu0
  %1908 = vmatprep.mubr.bf16.mxu0 0
  %1909 = vmatmul.mubr.bf16.gmra.mrb[0].mxu0 %v1847
  %v1910 = vpop.f32.mrb[0].mxu0
  %v1911 = vadd.f32 0.0, %v1910
  %v1912 = vpop.f32.mrb[0].mxu0
  %v1913 = vpop.f32.mrb[0].mxu0
  %v1914 = vadd.f32 0.0, %v1913
  %v1915 = vpop.f32.mrb[0].mxu0
  %1916 = vmatprep.mubr.bf16.mxu0 0
  %1917 = vmatmul.mubr.bf16.gmra.mrb[0].mxu0 %v1850
  %v1918 = vpop.f32.mrb[0].mxu0
  %v1919 = vadd.f32 0.0, %v1918
  %v1920 = vpop.f32.mrb[0].mxu0
  %v1921 = vpop.f32.mrb[0].mxu0
  %v1922 = vpop.f32.mrb[0].mxu0
  %1923 = vdwg.mxu0
  %v1924 = vadd.f32 %v1781, %v1887
  %v1925 = vadd.f32 %v1782, %v1890
  %v1926 = vadd.f32 %v1783, %v1895
  %v1927 = vadd.f32 %v1784, %v1898
  %v1928 = vadd.f32 %v1785, %v1903
  %v1929 = vadd.f32 %v1786, %v1906
  %v1930 = vadd.f32 %v1787, %v1911
  %v1931 = vadd.f32 %v1788, %v1914
  %v1932 = vadd.f32 %v1789, %v1919
  %v1933 = vld [vmem:[#allocation2 + $0xf] sm:$0xff]
  %v1934 = vld [vmem:[#allocation2 + $0x17] sm:$0xff]
  %v1935 = vld [vmem:[#allocation2 + $0x1f] sm:$0xff]
  %v1936 = vld [vmem:[#allocation2 + $0x27] sm:$0xff]
  %v1937 = vld [vmem:[#allocation2 + $0x2f] sm:$0xff]
  %v1938 = vld [vmem:[#allocation2 + $0x37] sm:$0xff]
  %v1939 = vld [vmem:[#allocation2 + $0x3f] sm:$0xff]
  %v1940 = vld [vmem:[#allocation2 + $0x47] sm:$0xff]
  %v1941 = vld [vmem:[#allocation2 + $0x4f] sm:$0xff]
  %v1942 = vpack.c.bf16 %v1934, %v1933
  %v1943 = vpack.c.bf16 %v1936, %v1935
  %v1944 = vpack.c.bf16 %v1938, %v1937
  %v1945 = vpack.c.bf16 %v1940, %v1939
  %v1946 = vpack.c.bf16 %v1941, %v1941
  %s1947 = scalar_lea.vmem %s2, 256
  %v1948 = vld [vmem:[%s1947] sm:$0xf]
  %v1949 = vld [vmem:[%s1947 + $0x4] sm:$0xf]
  %v1950 = vld [vmem:[%s1947 + $0x8] sm:$0xf]
  %v1951 = vld [vmem:[%s1947 + $0xc] sm:$0xf]
  %v1952 = vld [vmem:[%s1947 + $0x10] sm:$0xf]
  %v1953 = vld [vmem:[%s1947 + $0x14] sm:$0xf]
  %v1954 = vld [vmem:[%s1947 + $0x18] sm:$0xf]
  %v1955 = vld [vmem:[%s1947 + $0x1c] sm:$0xf]
  %v1964 = vunpack.c.l.b16 %v1948
  %v1965 = vunpack.c.l.b16 %v1949
  %v1966 = vunpack.c.l.b16 %v1950
  %v1967 = vunpack.c.l.b16 %v1951
  %v1968 = vunpack.c.l.b16 %v1952
  %v1969 = vunpack.c.l.b16 %v1953
  %v1970 = vunpack.c.l.b16 %v1954
  %v1971 = vunpack.c.l.b16 %v1955
  %v1972 = vpack.c.b16 %v1965, %v1964
  %v1973 = vpack.c.b16 %v1967, %v1966
  %v1974 = vpack.c.b16 %v1969, %v1968
  %v1975 = vpack.c.b16 %v1971, %v1970
  %v1981 = vsel %vm72, %v1942, 0
  %v1984 = vsel %vm72, %v1943, 0
  %v1987 = vsel %vm72, %v1944, 0
  %v1990 = vsel %vm72, %v1945, 0
  %v1993 = vsel %vm72, %v1946, 0
  %1995 = vmatprep.subr.bf16.mxu0 0
  %1996 = vmatpush1.bf16.msra.mxu0 %v1972
  %1997 = vmatprep.subr.bf16.mxu0 0
  %1998 = vmatpush1.bf16.msra.mxu0 %v1973
  %1999 = vmatprep.subr.bf16.mxu0 0
  %2000 = vmatpush1.bf16.msra.mxu0 %v1974
  %2001 = vmatprep.subr.bf16.mxu0 0
  %2002 = vmatpush1.bf16.msra.mxu0 %v1975
  %2003 = vmatprep.subr.bf16.mxu0 0
  %2004 = vmatpush1.bf16.msra.mxu0 0
  %2005 = vmatprep.subr.bf16.mxu0 0
  %2006 = vmatpush1.bf16.msra.mxu0 0
  %2007 = vmatprep.subr.bf16.mxu0 0
  %2008 = vmatpush1.bf16.msra.mxu0 0
  %2009 = vmatprep.subr.bf16.mxu0 0
  %2010 = vmatpush1.bf16.msra.mxu0 0
  %2011 = vmatprep.subr.bf16.mxu0 0
  %2012 = vmatpush1.bf16.msra.mxu0 0
  %2013 = vmatprep.subr.bf16.mxu0 0
  %2014 = vmatpush1.bf16.msra.mxu0 0
  %2015 = vmatprep.subr.bf16.mxu0 0
  %2016 = vmatpush1.bf16.msra.mxu0 0
  %2017 = vmatprep.subr.bf16.mxu0 0
  %2018 = vmatpush1.bf16.msra.mxu0 0
  %2019 = vmatprep.subr.bf16.mxu0 0
  %2020 = vmatpush1.bf16.msra.mxu0 0
  %2021 = vmatprep.subr.bf16.mxu0 0
  %2022 = vmatpush1.bf16.msra.mxu0 0
  %2023 = vmatprep.subr.bf16.mxu0 0
  %2024 = vmatpush1.bf16.msra.mxu0 0
  %2025 = vmatprep.subr.bf16.mxu0 0
  %2026 = vmatpush1.bf16.msra.mxu0 0
  %2027 = vmatprep.mubr.bf16.mxu0 0
  %2028 = vmatmul.mubr.bf16.gmra.mrb[0].mxu0 %v1981
  %v2029 = vpop.f32.mrb[0].mxu0
  %v2030 = vadd.f32 0.0, %v2029
  %v2031 = vpop.f32.mrb[0].mxu0
  %v2032 = vpop.f32.mrb[0].mxu0
  %v2033 = vadd.f32 0.0, %v2032
  %v2034 = vpop.f32.mrb[0].mxu0
  %2035 = vmatprep.mubr.bf16.mxu0 0
  %2036 = vmatmul.mubr.bf16.gmra.mrb[0].mxu0 %v1984
  %v2037 = vpop.f32.mrb[0].mxu0
  %v2038 = vadd.f32 0.0, %v2037
  %v2039 = vpop.f32.mrb[0].mxu0
  %v2040 = vpop.f32.mrb[0].mxu0
  %v2041 = vadd.f32 0.0, %v2040
  %v2042 = vpop.f32.mrb[0].mxu0
  %2043 = vmatprep.mubr.bf16.mxu0 0
  %2044 = vmatmul.mubr.bf16.gmra.mrb[0].mxu0 %v1987
  %v2045 = vpop.f32.mrb[0].mxu0
  %v2046 = vadd.f32 0.0, %v2045
  %v2047 = vpop.f32.mrb[0].mxu0
  %v2048 = vpop.f32.mrb[0].mxu0
  %v2049 = vadd.f32 0.0, %v2048
  %v2050 = vpop.f32.mrb[0].mxu0
  %2051 = vmatprep.mubr.bf16.mxu0 0
  %2052 = vmatmul.mubr.bf16.gmra.mrb[0].mxu0 %v1990
  %v2053 = vpop.f32.mrb[0].mxu0
  %v2054 = vadd.f32 0.0, %v2053
  %v2055 = vpop.f32.mrb[0].mxu0
  %v2056 = vpop.f32.mrb[0].mxu0
  %v2057 = vadd.f32 0.0, %v2056
  %v2058 = vpop.f32.mrb[0].mxu0
  %2059 = vmatprep.mubr.bf16.mxu0 0
  %2060 = vmatmul.mubr.bf16.gmra.mrb[0].mxu0 %v1993
  %v2061 = vpop.f32.mrb[0].mxu0
  %v2062 = vadd.f32 0.0, %v2061
  %v2063 = vpop.f32.mrb[0].mxu0
  %v2064 = vpop.f32.mrb[0].mxu0
  %v2065 = vpop.f32.mrb[0].mxu0
  %2066 = vdwg.mxu0
  %v2067 = vadd.f32 %v1924, %v2030
  %v2068 = vadd.f32 %v1925, %v2033
  %v2069 = vadd.f32 %v1926, %v2038
  %v2070 = vadd.f32 %v1927, %v2041
  %v2071 = vadd.f32 %v1928, %v2046
  %v2072 = vadd.f32 %v1929, %v2049
  %v2073 = vadd.f32 %v1930, %v2054
  %v2074 = vadd.f32 %v1931, %v2057
  %v2075 = vadd.f32 %v1932, %v2062
  %v2076 = vld [vmem:[%s7] sm:$0x1]
  %v2077 = vld [vmem:[%s8] sm:$0x1]
  %v2078 = vld [vmem:[%s11] sm:$0xff]
  %v2079 = vld [vmem:[%s11 + $0x8] sm:$0xff]
  %v2080 = vld [vmem:[%s11 + $0x10] sm:$0xff]
  %v2081 = vld [vmem:[%s11 + $0x18] sm:$0xff]
  %v2082 = vld [vmem:[%s11 + $0x20] sm:$0xff]
  %v2083 = vld [vmem:[%s11 + $0x28] sm:$0xff]
  %v2084 = vld [vmem:[%s11 + $0x30] sm:$0xff]
  %v2085 = vld [vmem:[%s11 + $0x38] sm:$0xff]
  %v2086 = vld [vmem:[%s11 + $0x40] sm:$0xff]
  %v2087 = vld [vmem:[%s11 + $0x48] sm:$0xff]
  %v2088 = vld [vmem:[%s11 + $0x50] sm:$0xff]
  %v2089 = vld [vmem:[%s11 + $0x58] sm:$0xff]
  %v2090 = vld [vmem:[%s11 + $0x60] sm:$0xff]
  %v2091 = vld [vmem:[%s11 + $0x68] sm:$0xff]
  %v2092 = vld [vmem:[%s11 + $0x70] sm:$0xff]
  %v2093 = vld [vmem:[%s11 + $0x78] sm:$0xff]
  %v2094 = vld [vmem:[%s12] sm:$0xff]
  %v2095 = vld [vmem:[%s12 + $0x8] sm:$0xff]
  %v2096 = vld [vmem:[%s12 + $0x10] sm:$0xff]
  %v2097 = vld [vmem:[%s12 + $0x18] sm:$0xff]
  %v2098 = vsel %vm667, %v2067, 0.0
  %v2099 = vsel %vm668, %v2068, 0.0
  %v2100 = vsel %vm669, %v2069, 0.0
  %v2101 = vsel %vm670, %v2070, 0.0
  %v2102 = vsel %vm671, %v2071, 0.0
  %v2103 = vsel %vm672, %v2072, 0.0
  %v2104 = vsel %vm673, %v2073, 0.0
  %v2105 = vsel %vm674, %v2074, 0.0
  %v2106 = vsel %vm675, %v2075, 0.0
  %v2107 = vadd.f32 %v2098, %v2099
  %v2108 = vadd.f32 %v2107, %v2100
  %v2109 = vadd.f32 %v2108, %v2101
  %v2110 = vadd.f32 %v2109, %v2102
  %v2111 = vadd.f32 %v2110, %v2103
  %v2112 = vadd.f32 %v2111, %v2104
  %v2113 = vadd.f32 %v2112, %v2105
  %v2114 = vadd.f32 %v2113, %v2106
  %v2115 = vrot.slane %v2114, 4
  %v2116 = vadd.f32 %v2114, %v2115
  %v2117 = vrot.slane %v2116, 2
  %v2118 = vadd.f32 %v2116, %v2117
  %v2119 = vrot.slane %v2118, 1
  %v2120 = vadd.f32 %v2118, %v2119
  %v2121 = vmul.f32 %v2098, %v2098
  %v2122 = vmul.f32 %v2099, %v2099
  %v2123 = vmul.f32 %v2100, %v2100
  %v2124 = vmul.f32 %v2101, %v2101
  %v2125 = vmul.f32 %v2102, %v2102
  %v2126 = vmul.f32 %v2103, %v2103
  %v2127 = vmul.f32 %v2104, %v2104
  %v2128 = vmul.f32 %v2105, %v2105
  %v2129 = vmul.f32 %v2106, %v2106
  %v2130 = vadd.f32 %v2121, %v2122
  %v2131 = vadd.f32 %v2130, %v2123
  %v2132 = vadd.f32 %v2131, %v2124
  %v2133 = vadd.f32 %v2132, %v2125
  %v2134 = vadd.f32 %v2133, %v2126
  %v2135 = vadd.f32 %v2134, %v2127
  %v2136 = vadd.f32 %v2135, %v2128
  %v2137 = vadd.f32 %v2136, %v2129
  %v2138 = vrot.slane %v2137, 4
  %v2139 = vadd.f32 %v2137, %v2138
  %v2140 = vrot.slane %v2139, 2
  %v2141 = vadd.f32 %v2139, %v2140
  %v2142 = vrot.slane %v2141, 1
  %v2143 = vadd.f32 %v2141, %v2142
  %2144 = vmatprep.subr.mxu0 0.0
  %2145 = vmatpush1.msra.mxu0 %v2078
  %2146 = vmatprep.subr.mxu0 0.0
  %2147 = vmatpush1.msra.mxu0 %v2079
  %2148 = vmatprep.subr.mxu0 0.0
  %2149 = vmatpush1.msra.mxu0 %v2080
  %2150 = vmatprep.subr.mxu0 0.0
  %2151 = vmatpush1.msra.mxu0 %v2081
  %2152 = vmatprep.subr.mxu0 0.0
  %2153 = vmatpush1.msra.mxu0 %v2082
  %2154 = vmatprep.subr.mxu0 0.0
  %2155 = vmatpush1.msra.mxu0 %v2083
  %2156 = vmatprep.subr.mxu0 0.0
  %2157 = vmatpush1.msra.mxu0 %v2084
  %2158 = vmatprep.subr.mxu0 0.0
  %2159 = vmatpush1.msra.mxu0 %v2085
  %2160 = vmatprep.subr.mxu0 0.0
  %2161 = vmatpush1.msra.mxu0 %v2086
  %2162 = vmatprep.subr.mxu0 0.0
  %2163 = vmatpush1.msra.mxu0 %v2087
  %2164 = vmatprep.subr.mxu0 0.0
  %2165 = vmatpush1.msra.mxu0 %v2088
  %2166 = vmatprep.subr.mxu0 0.0
  %2167 = vmatpush1.msra.mxu0 %v2089
  %2168 = vmatprep.subr.mxu0 0.0
  %2169 = vmatpush1.msra.mxu0 %v2090
  %2170 = vmatprep.subr.mxu0 0.0
  %2171 = vmatpush1.msra.mxu0 %v2091
  %2172 = vmatprep.subr.mxu0 0.0
  %2173 = vmatpush1.msra.mxu0 %v2092
  %2174 = vmatprep.subr.mxu0 0.0
  %2175 = vmatpush1.msra.mxu0 %v2093
  %2176 = vmatprep.subr.mxu0 0.0
  %2177 = vmatpush1.msra.mxu0 0.0
  %2178 = vmatprep.subr.mxu0 0.0
  %2179 = vmatpush1.msra.mxu0 0.0
  %2180 = vmatprep.subr.mxu0 0.0
  %2181 = vmatpush1.msra.mxu0 0.0
  %2182 = vmatprep.subr.mxu0 0.0
  %2183 = vmatpush1.msra.mxu0 0.0
  %2184 = vmatprep.subr.mxu0 0.0
  %2185 = vmatpush1.msra.mxu0 0.0
  %2186 = vmatprep.subr.mxu0 0.0
  %2187 = vmatpush1.msra.mxu0 0.0
  %2188 = vmatprep.subr.mxu0 0.0
  %2189 = vmatpush1.msra.mxu0 0.0
  %2190 = vmatprep.subr.mxu0 0.0
  %2191 = vmatpush1.msra.mxu0 0.0
  %2192 = vmatprep.subr.mxu0 0.0
  %2193 = vmatpush1.msra.mxu0 0.0
  %2194 = vmatprep.subr.mxu0 0.0
  %2195 = vmatpush1.msra.mxu0 0.0
  %2196 = vmatprep.subr.mxu0 0.0
  %2197 = vmatpush1.msra.mxu0 0.0
  %2198 = vmatprep.subr.mxu0 0.0
  %2199 = vmatpush1.msra.mxu0 0.0
  %2200 = vmatprep.subr.mxu0 0.0
  %2201 = vmatpush1.msra.mxu0 0.0
  %2202 = vmatprep.subr.mxu0 0.0
  %2203 = vmatpush1.msra.mxu0 0.0
  %2204 = vmatprep.subr.mxu0 0.0
  %2205 = vmatpush1.msra.mxu0 0.0
  %2206 = vmatprep.subr.mxu0 0.0
  %2207 = vmatpush1.msra.mxu0 0.0
  %2208 = vmatprep.mubr.f32.mxu0 0.0
  %2209 = vmatmul.mubr.f32.gmra.mrb[0].mxu0 %v2120
  %v2210 = vpop.f32.mrb[0].mxu0
  %v2211 = vadd.f32 0.0, %v2210
  %v2212 = vpop.f32.mrb[0].mxu0
  %2213 = vdwg.mxu0
  %2214 = vmatprep.subr.mxu0 0.0
  %2215 = vmatpush1.msra.mxu0 %v2078
  %2216 = vmatprep.subr.mxu0 0.0
  %2217 = vmatpush1.msra.mxu0 %v2079
  %2218 = vmatprep.subr.mxu0 0.0
  %2219 = vmatpush1.msra.mxu0 %v2080
  %2220 = vmatprep.subr.mxu0 0.0
  %2221 = vmatpush1.msra.mxu0 %v2081
  %2222 = vmatprep.subr.mxu0 0.0
  %2223 = vmatpush1.msra.mxu0 %v2082
  %2224 = vmatprep.subr.mxu0 0.0
  %2225 = vmatpush1.msra.mxu0 %v2083
  %2226 = vmatprep.subr.mxu0 0.0
  %2227 = vmatpush1.msra.mxu0 %v2084
  %2228 = vmatprep.subr.mxu0 0.0
  %2229 = vmatpush1.msra.mxu0 %v2085
  %2230 = vmatprep.subr.mxu0 0.0
  %2231 = vmatpush1.msra.mxu0 %v2086
  %2232 = vmatprep.subr.mxu0 0.0
  %2233 = vmatpush1.msra.mxu0 %v2087
  %2234 = vmatprep.subr.mxu0 0.0
  %2235 = vmatpush1.msra.mxu0 %v2088
  %2236 = vmatprep.subr.mxu0 0.0
  %2237 = vmatpush1.msra.mxu0 %v2089
  %2238 = vmatprep.subr.mxu0 0.0
  %2239 = vmatpush1.msra.mxu0 %v2090
  %2240 = vmatprep.subr.mxu0 0.0
  %2241 = vmatpush1.msra.mxu0 %v2091
  %2242 = vmatprep.subr.mxu0 0.0
  %2243 = vmatpush1.msra.mxu0 %v2092
  %2244 = vmatprep.subr.mxu0 0.0
  %2245 = vmatpush1.msra.mxu0 %v2093
  %2246 = vmatprep.subr.mxu0 0.0
  %2247 = vmatpush1.msra.mxu0 0.0
  %2248 = vmatprep.subr.mxu0 0.0
  %2249 = vmatpush1.msra.mxu0 0.0
  %2250 = vmatprep.subr.mxu0 0.0
  %2251 = vmatpush1.msra.mxu0 0.0
  %2252 = vmatprep.subr.mxu0 0.0
  %2253 = vmatpush1.msra.mxu0 0.0
  %2254 = vmatprep.subr.mxu0 0.0
  %2255 = vmatpush1.msra.mxu0 0.0
  %2256 = vmatprep.subr.mxu0 0.0
  %2257 = vmatpush1.msra.mxu0 0.0
  %2258 = vmatprep.subr.mxu0 0.0
  %2259 = vmatpush1.msra.mxu0 0.0
  %2260 = vmatprep.subr.mxu0 0.0
  %2261 = vmatpush1.msra.mxu0 0.0
  %2262 = vmatprep.subr.mxu0 0.0
  %2263 = vmatpush1.msra.mxu0 0.0
  %2264 = vmatprep.subr.mxu0 0.0
  %2265 = vmatpush1.msra.mxu0 0.0
  %2266 = vmatprep.subr.mxu0 0.0
  %2267 = vmatpush1.msra.mxu0 0.0
  %2268 = vmatprep.subr.mxu0 0.0
  %2269 = vmatpush1.msra.mxu0 0.0
  %2270 = vmatprep.subr.mxu0 0.0
  %2271 = vmatpush1.msra.mxu0 0.0
  %2272 = vmatprep.subr.mxu0 0.0
  %2273 = vmatpush1.msra.mxu0 0.0
  %2274 = vmatprep.subr.mxu0 0.0
  %2275 = vmatpush1.msra.mxu0 0.0
  %2276 = vmatprep.subr.mxu0 0.0
  %2277 = vmatpush1.msra.mxu0 0.0
  %2278 = vmatprep.mubr.f32.mxu0 0.0
  %2279 = vmatmul.mubr.f32.gmra.mrb[0].mxu0 %v2143
  %v2280 = vpop.f32.mrb[0].mxu0
  %v2281 = vadd.f32 0.0, %v2280
  %v2282 = vpop.f32.mrb[0].mxu0
  %2283 = vdwg.mxu0
  %v2284 = vrcp.pop 128.0
  %v2285 = vmul.f32 %v2211, %v2284
  %v2286 = vmul.f32 %v2281, %v2284
  %v2287 = vmul.f32 %v2285, %v2285
  %v2288 = vsub.f32 %v2286, %v2287
  %v2289 = vmax.f32 %v2288, 0.0
  %v2290 = vadd.f32 %v2289, 1e-05
  %v2291 = vrsqrt.pop %v2290
  %v2292 = vmul.f32 %v2076, %v2291
  %v2293 = vmul.f32 %v2285, %v2292
  %v2294 = vsub.f32 %v2077, %v2293
  %vm2295 = vcmask 261120
  %v2297 = vsel %vm2295, %v2292, 0
  %2299 = vmatprep.subr.mxu0 0.0
  %2300 = vmatpush1.msra.mxu0 %v2094
  %2301 = vmatprep.subr.mxu0 0.0
  %2302 = vmatpush1.msra.mxu0 %v2095
  %2303 = vmatprep.subr.mxu0 0.0
  %2304 = vmatpush1.msra.mxu0 %v2096
  %2305 = vmatprep.subr.mxu0 0.0
  %2306 = vmatpush1.msra.mxu0 %v2097
  %2307 = vmatprep.subr.mxu0 0.0
  %2308 = vmatpush1.msra.mxu0 0.0
  %2309 = vmatprep.subr.mxu0 0.0
  %2310 = vmatpush1.msra.mxu0 0.0
  %2311 = vmatprep.subr.mxu0 0.0
  %2312 = vmatpush1.msra.mxu0 0.0
  %2313 = vmatprep.subr.mxu0 0.0
  %2314 = vmatpush1.msra.mxu0 0.0
  %2315 = vmatprep.subr.mxu0 0.0
  %2316 = vmatpush1.msra.mxu0 0.0
  %2317 = vmatprep.subr.mxu0 0.0
  %2318 = vmatpush1.msra.mxu0 0.0
  %2319 = vmatprep.subr.mxu0 0.0
  %2320 = vmatpush1.msra.mxu0 0.0
  %2321 = vmatprep.subr.mxu0 0.0
  %2322 = vmatpush1.msra.mxu0 0.0
  %2323 = vmatprep.subr.mxu0 0.0
  %2324 = vmatpush1.msra.mxu0 0.0
  %2325 = vmatprep.subr.mxu0 0.0
  %2326 = vmatpush1.msra.mxu0 0.0
  %2327 = vmatprep.subr.mxu0 0.0
  %2328 = vmatpush1.msra.mxu0 0.0
  %2329 = vmatprep.subr.mxu0 0.0
  %2330 = vmatpush1.msra.mxu0 0.0
  %2331 = vmatprep.subr.mxu0 0.0
  %2332 = vmatpush1.msra.mxu0 0.0
  %2333 = vmatprep.subr.mxu0 0.0
  %2334 = vmatpush1.msra.mxu0 0.0
  %2335 = vmatprep.subr.mxu0 0.0
  %2336 = vmatpush1.msra.mxu0 0.0
  %2337 = vmatprep.subr.mxu0 0.0
  %2338 = vmatpush1.msra.mxu0 0.0
  %2339 = vmatprep.subr.mxu0 0.0
  %2340 = vmatpush1.msra.mxu0 0.0
  %2341 = vmatprep.subr.mxu0 0.0
  %2342 = vmatpush1.msra.mxu0 0.0
  %2343 = vmatprep.subr.mxu0 0.0
  %2344 = vmatpush1.msra.mxu0 0.0
  %2345 = vmatprep.subr.mxu0 0.0
  %2346 = vmatpush1.msra.mxu0 0.0
  %2347 = vmatprep.subr.mxu0 0.0
  %2348 = vmatpush1.msra.mxu0 0.0
  %2349 = vmatprep.subr.mxu0 0.0
  %2350 = vmatpush1.msra.mxu0 0.0
  %2351 = vmatprep.subr.mxu0 0.0
  %2352 = vmatpush1.msra.mxu0 0.0
  %2353 = vmatprep.subr.mxu0 0.0
  %2354 = vmatpush1.msra.mxu0 0.0
  %2355 = vmatprep.subr.mxu0 0.0
  %2356 = vmatpush1.msra.mxu0 0.0
  %2357 = vmatprep.subr.mxu0 0.0
  %2358 = vmatpush1.msra.mxu0 0.0
  %2359 = vmatprep.subr.mxu0 0.0
  %2360 = vmatpush1.msra.mxu0 0.0
  %2361 = vmatprep.subr.mxu0 0.0
  %2362 = vmatpush1.msra.mxu0 0.0
  %2363 = vmatprep.mubr.f32.mxu0 0.0
  %2364 = vmatmul.mubr.f32.gmra.mrb[0].mxu0 %v2297
  %v2365 = vpop.f32.mrb[0].mxu0
  %v2366 = vadd.f32 0.0, %v2365
  %v2367 = vpop.f32.mrb[0].mxu0
  %2368 = vdwg.mxu0
  %v2370 = vsel %vm2295, %v2294, 0
  %2372 = vmatprep.subr.mxu0 0.0
  %2373 = vmatpush1.msra.mxu0 %v2094
  %2374 = vmatprep.subr.mxu0 0.0
  %2375 = vmatpush1.msra.mxu0 %v2095
  %2376 = vmatprep.subr.mxu0 0.0
  %2377 = vmatpush1.msra.mxu0 %v2096
  %2378 = vmatprep.subr.mxu0 0.0
  %2379 = vmatpush1.msra.mxu0 %v2097
  %2380 = vmatprep.subr.mxu0 0.0
  %2381 = vmatpush1.msra.mxu0 0.0
  %2382 = vmatprep.subr.mxu0 0.0
  %2383 = vmatpush1.msra.mxu0 0.0
  %2384 = vmatprep.subr.mxu0 0.0
  %2385 = vmatpush1.msra.mxu0 0.0
  %2386 = vmatprep.subr.mxu0 0.0
  %2387 = vmatpush1.msra.mxu0 0.0
  %2388 = vmatprep.subr.mxu0 0.0
  %2389 = vmatpush1.msra.mxu0 0.0
  %2390 = vmatprep.subr.mxu0 0.0
  %2391 = vmatpush1.msra.mxu0 0.0
  %2392 = vmatprep.subr.mxu0 0.0
  %2393 = vmatpush1.msra.mxu0 0.0
  %2394 = vmatprep.subr.mxu0 0.0
  %2395 = vmatpush1.msra.mxu0 0.0
  %2396 = vmatprep.subr.mxu0 0.0
  %2397 = vmatpush1.msra.mxu0 0.0
  %2398 = vmatprep.subr.mxu0 0.0
  %2399 = vmatpush1.msra.mxu0 0.0
  %2400 = vmatprep.subr.mxu0 0.0
  %2401 = vmatpush1.msra.mxu0 0.0
  %2402 = vmatprep.subr.mxu0 0.0
  %2403 = vmatpush1.msra.mxu0 0.0
  %2404 = vmatprep.subr.mxu0 0.0
  %2405 = vmatpush1.msra.mxu0 0.0
  %2406 = vmatprep.subr.mxu0 0.0
  %2407 = vmatpush1.msra.mxu0 0.0
  %2408 = vmatprep.subr.mxu0 0.0
  %2409 = vmatpush1.msra.mxu0 0.0
  %2410 = vmatprep.subr.mxu0 0.0
  %2411 = vmatpush1.msra.mxu0 0.0
  %2412 = vmatprep.subr.mxu0 0.0
  %2413 = vmatpush1.msra.mxu0 0.0
  %2414 = vmatprep.subr.mxu0 0.0
  %2415 = vmatpush1.msra.mxu0 0.0
  %2416 = vmatprep.subr.mxu0 0.0
  %2417 = vmatpush1.msra.mxu0 0.0
  %2418 = vmatprep.subr.mxu0 0.0
  %2419 = vmatpush1.msra.mxu0 0.0
  %2420 = vmatprep.subr.mxu0 0.0
  %2421 = vmatpush1.msra.mxu0 0.0
  %2422 = vmatprep.subr.mxu0 0.0
  %2423 = vmatpush1.msra.mxu0 0.0
  %2424 = vmatprep.subr.mxu0 0.0
  %2425 = vmatpush1.msra.mxu0 0.0
  %2426 = vmatprep.subr.mxu0 0.0
  %2427 = vmatpush1.msra.mxu0 0.0
  %2428 = vmatprep.subr.mxu0 0.0
  %2429 = vmatpush1.msra.mxu0 0.0
  %2430 = vmatprep.subr.mxu0 0.0
  %2431 = vmatpush1.msra.mxu0 0.0
  %2432 = vmatprep.subr.mxu0 0.0
  %2433 = vmatpush1.msra.mxu0 0.0
  %2434 = vmatprep.subr.mxu0 0.0
  %2435 = vmatpush1.msra.mxu0 0.0
  %2436 = vmatprep.mubr.f32.mxu0 0.0
  %2437 = vmatmul.mubr.f32.gmra.mrb[0].mxu0 %v2370
  %v2438 = vpop.f32.mrb[0].mxu0
  %v2439 = vadd.f32 0.0, %v2438
  %v2440 = vpop.f32.mrb[0].mxu0
  %2441 = vdwg.mxu0
  %v2442 = vlaneseq
  %v2443 = vshrl.u32 %v2442, 7
  %v2444 = vsub.s32 0, %v2443
  %v2445 = vrot.slane %v2366, %v2444
  %v2446 = vmul.f32 %v2067, %v2445
  %v2447 = vmul.f32 %v2068, %v2445
  %v2448 = vmul.f32 %v2069, %v2445
  %v2449 = vmul.f32 %v2070, %v2445
  %v2450 = vmul.f32 %v2071, %v2445
  %v2451 = vmul.f32 %v2072, %v2445
  %v2452 = vmul.f32 %v2073, %v2445
  %v2453 = vmul.f32 %v2074, %v2445
  %v2454 = vmul.f32 %v2075, %v2445
  %v2455 = vlaneseq
  %v2456 = vshrl.u32 %v2455, 7
  %v2457 = vsub.s32 0, %v2456
  %v2458 = vrot.slane %v2439, %v2457
  %v2459 = vadd.f32 %v2446, %v2458
  %v2460 = vadd.f32 %v2447, %v2458
  %v2461 = vadd.f32 %v2448, %v2458
  %v2462 = vadd.f32 %v2449, %v2458
  %v2463 = vadd.f32 %v2450, %v2458
  %v2464 = vadd.f32 %v2451, %v2458
  %v2465 = vadd.f32 %v2452, %v2458
  %v2466 = vadd.f32 %v2453, %v2458
  %v2467 = vadd.f32 %v2454, %v2458
  %v2468 = vmax.f32 %v2459, 0.0
  %v2469 = vmax.f32 %v2460, 0.0
  %v2470 = vmax.f32 %v2461, 0.0
  %v2471 = vmax.f32 %v2462, 0.0
  %v2472 = vmax.f32 %v2463, 0.0
  %v2473 = vmax.f32 %v2464, 0.0
  %v2474 = vmax.f32 %v2465, 0.0
  %v2475 = vmax.f32 %v2466, 0.0
  %v2476 = vmax.f32 %v2467, 0.0
  %v2477 = vsel %vm667, %v2468, 0.0
  %v2478 = vsel %vm668, %v2469, 0.0
  %v2479 = vsel %vm669, %v2470, 0.0
  %v2480 = vsel %vm670, %v2471, 0.0
  %v2481 = vsel %vm671, %v2472, 0.0
  %v2482 = vsel %vm672, %v2473, 0.0
  %v2483 = vsel %vm673, %v2474, 0.0
  %v2484 = vsel %vm674, %v2475, 0.0
  %v2485 = vsel %vm675, %v2476, 0.0
  %2486 = vst [vmem:[#allocation3 + $0x8] sm:$0xff] %v2477
  %2487 = vst [vmem:[#allocation3 + $0x10] sm:$0xff] %v2478
  %2488 = vst [vmem:[#allocation3 + $0x18] sm:$0xff] %v2479
  %2489 = vst [vmem:[#allocation3 + $0x20] sm:$0xff] %v2480
  %2490 = vst [vmem:[#allocation3 + $0x28] sm:$0xff] %v2481
  %2491 = vst [vmem:[#allocation3 + $0x30] sm:$0xff] %v2482
  %2492 = vst [vmem:[#allocation3 + $0x38] sm:$0xff] %v2483
  %2493 = vst [vmem:[#allocation3 + $0x40] sm:$0xff] %v2484
  %2494 = vst [vmem:[#allocation3 + $0x48] sm:$0xff] %v2485
  %v2495 = vld [vmem:[#allocation3 + $0x1] sm:$0xff]
  %v2496 = vld [vmem:[#allocation3 + $0x9] sm:$0xff]
  %v2497 = vld [vmem:[#allocation3 + $0x11] sm:$0xff]
  %v2498 = vld [vmem:[#allocation3 + $0x19] sm:$0xff]
  %v2499 = vld [vmem:[#allocation3 + $0x21] sm:$0xff]
  %v2500 = vld [vmem:[#allocation3 + $0x29] sm:$0xff]
  %v2501 = vld [vmem:[#allocation3 + $0x31] sm:$0xff]
  %v2502 = vld [vmem:[#allocation3 + $0x39] sm:$0xff]
  %v2503 = vld [vmem:[#allocation3 + $0x41] sm:$0xff]
  %v2504 = vpack.c.bf16 %v2496, %v2495
  %v2505 = vpack.c.bf16 %v2498, %v2497
  %v2506 = vpack.c.bf16 %v2500, %v2499
  %v2507 = vpack.c.bf16 %v2502, %v2501
  %v2508 = vpack.c.bf16 %v2503, %v2503
  %v2509 = vld [vmem:[%s3] sm:$0xff]
  %v2510 = vld [vmem:[%s3 + $0x8] sm:$0xff]
  %v2511 = vld [vmem:[%s3 + $0x10] sm:$0xff]
  %v2512 = vld [vmem:[%s3 + $0x18] sm:$0xff]
  %v2513 = vld [vmem:[%s3 + $0x20] sm:$0xff]
  %v2514 = vld [vmem:[%s3 + $0x28] sm:$0xff]
  %v2515 = vld [vmem:[%s3 + $0x30] sm:$0xff]
  %v2516 = vld [vmem:[%s3 + $0x38] sm:$0xff]
  %v2517 = vld [vmem:[%s3 + $0x40] sm:$0xff]
  %v2518 = vld [vmem:[%s3 + $0x48] sm:$0xff]
  %v2519 = vld [vmem:[%s3 + $0x50] sm:$0xff]
  %v2520 = vld [vmem:[%s3 + $0x58] sm:$0xff]
  %v2521 = vld [vmem:[%s3 + $0x60] sm:$0xff]
  %v2522 = vld [vmem:[%s3 + $0x68] sm:$0xff]
  %v2523 = vld [vmem:[%s3 + $0x70] sm:$0xff]
  %v2524 = vld [vmem:[%s3 + $0x78] sm:$0xff]
  %v2525 = vld [vmem:[#allocation3 + $0x2] sm:$0xff]
  %v2526 = vld [vmem:[#allocation3 + $0xa] sm:$0xff]
  %v2527 = vld [vmem:[#allocation3 + $0x12] sm:$0xff]
  %v2528 = vld [vmem:[#allocation3 + $0x1a] sm:$0xff]
  %v2529 = vld [vmem:[#allocation3 + $0x22] sm:$0xff]
  %v2530 = vld [vmem:[#allocation3 + $0x2a] sm:$0xff]
  %v2531 = vld [vmem:[#allocation3 + $0x32] sm:$0xff]
  %v2532 = vld [vmem:[#allocation3 + $0x3a] sm:$0xff]
  %v2533 = vld [vmem:[#allocation3 + $0x42] sm:$0xff]
  %v2534 = vpack.c.bf16 %v2526, %v2525
  %v2535 = vpack.c.bf16 %v2528, %v2527
  %v2536 = vpack.c.bf16 %v2530, %v2529
  %v2537 = vpack.c.bf16 %v2532, %v2531
  %v2538 = vpack.c.bf16 %v2533, %v2533
  %s2539 = scalar_lea.vmem %s3, 128
  %v2540 = vld [vmem:[%s2539] sm:$0xff]
  %v2541 = vld [vmem:[%s2539 + $0x8] sm:$0xff]
  %v2542 = vld [vmem:[%s2539 + $0x10] sm:$0xff]
  %v2543 = vld [vmem:[%s2539 + $0x18] sm:$0xff]
  %v2544 = vld [vmem:[%s2539 + $0x20] sm:$0xff]
  %v2545 = vld [vmem:[%s2539 + $0x28] sm:$0xff]
  %v2546 = vld [vmem:[%s2539 + $0x30] sm:$0xff]
  %v2547 = vld [vmem:[%s2539 + $0x38] sm:$0xff]
  %v2548 = vld [vmem:[%s2539 + $0x40] sm:$0xff]
  %v2549 = vld [vmem:[%s2539 + $0x48] sm:$0xff]
  %v2550 = vld [vmem:[%s2539 + $0x50] sm:$0xff]
  %v2551 = vld [vmem:[%s2539 + $0x58] sm:$0xff]
  %v2552 = vld [vmem:[%s2539 + $0x60] sm:$0xff]
  %v2553 = vld [vmem:[%s2539 + $0x68] sm:$0xff]
  %v2554 = vld [vmem:[%s2539 + $0x70] sm:$0xff]
  %v2555 = vld [vmem:[%s2539 + $0x78] sm:$0xff]
  %v2572 = vunpack.c.l.b16 %v2540
  %v2573 = vunpack.c.h.b16 %v2540
  %v2574 = vunpack.c.l.b16 %v2541
  %v2575 = vunpack.c.h.b16 %v2541
  %v2576 = vunpack.c.l.b16 %v2542
  %v2577 = vunpack.c.h.b16 %v2542
  %v2578 = vunpack.c.l.b16 %v2543
  %v2579 = vunpack.c.h.b16 %v2543
  %v2580 = vunpack.c.l.b16 %v2544
  %v2581 = vunpack.c.h.b16 %v2544
  %v2582 = vunpack.c.l.b16 %v2545
  %v2583 = vunpack.c.h.b16 %v2545
  %v2584 = vunpack.c.l.b16 %v2546
  %v2585 = vunpack.c.h.b16 %v2546
  %v2586 = vunpack.c.l.b16 %v2547
  %v2587 = vunpack.c.h.b16 %v2547
  %v2588 = vunpack.c.l.b16 %v2548
  %v2589 = vunpack.c.h.b16 %v2548
  %v2590 = vunpack.c.l.b16 %v2549
  %v2591 = vunpack.c.h.b16 %v2549
  %v2592 = vunpack.c.l.b16 %v2550
  %v2593 = vunpack.c.h.b16 %v2550
  %v2594 = vunpack.c.l.b16 %v2551
  %v2595 = vunpack.c.h.b16 %v2551
  %v2596 = vunpack.c.l.b16 %v2552
  %v2597 = vunpack.c.h.b16 %v2552
  %v2598 = vunpack.c.l.b16 %v2553
  %v2599 = vunpack.c.h.b16 %v2553
  %v2600 = vunpack.c.l.b16 %v2554
  %v2601 = vunpack.c.h.b16 %v2554
  %v2602 = vunpack.c.l.b16 %v2555
  %v2603 = vunpack.c.h.b16 %v2555
  %v2604 = vpack.c.b16 %v2574, %v2572
  %v2605 = vpack.c.b16 %v2575, %v2573
  %v2606 = vpack.c.b16 %v2578, %v2576
  %v2607 = vpack.c.b16 %v2579, %v2577
  %v2608 = vpack.c.b16 %v2582, %v2580
  %v2609 = vpack.c.b16 %v2583, %v2581
  %v2610 = vpack.c.b16 %v2586, %v2584
  %v2611 = vpack.c.b16 %v2587, %v2585
  %v2612 = vpack.c.b16 %v2590, %v2588
  %v2613 = vpack.c.b16 %v2591, %v2589
  %v2614 = vpack.c.b16 %v2594, %v2592
  %v2615 = vpack.c.b16 %v2595, %v2593
  %v2616 = vpack.c.b16 %v2598, %v2596
  %v2617 = vpack.c.b16 %v2599, %v2597
  %v2618 = vpack.c.b16 %v2602, %v2600
  %v2619 = vpack.c.b16 %v2603, %v2601
  %2636 = vmatprep.subr.bf16.mxu0 %v2605
  %2637 = vmatpush1.bf16.msra.mxu0 %v2604
  %2638 = vmatprep.subr.bf16.mxu0 %v2607
  %2639 = vmatpush1.bf16.msra.mxu0 %v2606
  %2640 = vmatprep.subr.bf16.mxu0 %v2609
  %2641 = vmatpush1.bf16.msra.mxu0 %v2608
  %2642 = vmatprep.subr.bf16.mxu0 %v2611
  %2643 = vmatpush1.bf16.msra.mxu0 %v2610
  %2644 = vmatprep.subr.bf16.mxu0 %v2613
  %2645 = vmatpush1.bf16.msra.mxu0 %v2612
  %2646 = vmatprep.subr.bf16.mxu0 %v2615
  %2647 = vmatpush1.bf16.msra.mxu0 %v2614
  %2648 = vmatprep.subr.bf16.mxu0 %v2617
  %2649 = vmatpush1.bf16.msra.mxu0 %v2616
  %2650 = vmatprep.subr.bf16.mxu0 %v2619
  %2651 = vmatpush1.bf16.msra.mxu0 %v2618
  %2652 = vmatprep.subr.bf16.mxu0 0
  %2653 = vmatpush1.bf16.msra.mxu0 0
  %2654 = vmatprep.subr.bf16.mxu0 0
  %2655 = vmatpush1.bf16.msra.mxu0 0
  %2656 = vmatprep.subr.bf16.mxu0 0
  %2657 = vmatpush1.bf16.msra.mxu0 0
  %2658 = vmatprep.subr.bf16.mxu0 0
  %2659 = vmatpush1.bf16.msra.mxu0 0
  %2660 = vmatprep.subr.bf16.mxu0 0
  %2661 = vmatpush1.bf16.msra.mxu0 0
  %2662 = vmatprep.subr.bf16.mxu0 0
  %2663 = vmatpush1.bf16.msra.mxu0 0
  %2664 = vmatprep.subr.bf16.mxu0 0
  %2665 = vmatpush1.bf16.msra.mxu0 0
  %2666 = vmatprep.subr.bf16.mxu0 0
  %2667 = vmatpush1.bf16.msra.mxu0 0
  %2668 = vmatprep.mubr.bf16.mxu0 0
  %2669 = vmatmul.mubr.bf16.gmra.mrb[0].mxu0 %v2534
  %v2670 = vpop.f32.mrb[0].mxu0
  %v2671 = vadd.f32 0.0, %v2670
  %v2672 = vpop.f32.mrb[0].mxu0
  %v2673 = vadd.f32 0.0, %v2672
  %v2674 = vpop.f32.mrb[0].mxu0
  %v2675 = vadd.f32 0.0, %v2674
  %v2676 = vpop.f32.mrb[0].mxu0
  %v2677 = vadd.f32 0.0, %v2676
  %2678 = vmatprep.mubr.bf16.mxu0 0
  %2679 = vmatmul.mubr.bf16.gmra.mrb[0].mxu0 %v2535
  %v2680 = vpop.f32.mrb[0].mxu0
  %v2681 = vadd.f32 0.0, %v2680
  %v2682 = vpop.f32.mrb[0].mxu0
  %v2683 = vadd.f32 0.0, %v2682
  %v2684 = vpop.f32.mrb[0].mxu0
  %v2685 = vadd.f32 0.0, %v2684
  %v2686 = vpop.f32.mrb[0].mxu0
  %v2687 = vadd.f32 0.0, %v2686
  %2688 = vmatprep.mubr.bf16.mxu0 0
  %2689 = vmatmul.mubr.bf16.gmra.mrb[0].mxu0 %v2536
  %v2690 = vpop.f32.mrb[0].mxu0
  %v2691 = vadd.f32 0.0, %v2690
  %v2692 = vpop.f32.mrb[0].mxu0
  %v2693 = vadd.f32 0.0, %v2692
  %v2694 = vpop.f32.mrb[0].mxu0
  %v2695 = vadd.f32 0.0, %v2694
  %v2696 = vpop.f32.mrb[0].mxu0
  %v2697 = vadd.f32 0.0, %v2696
  %2698 = vmatprep.mubr.bf16.mxu0 0
  %2699 = vmatmul.mubr.bf16.gmra.mrb[0].mxu0 %v2537
  %v2700 = vpop.f32.mrb[0].mxu0
  %v2701 = vadd.f32 0.0, %v2700
  %v2702 = vpop.f32.mrb[0].mxu0
  %v2703 = vadd.f32 0.0, %v2702
  %v2704 = vpop.f32.mrb[0].mxu0
  %v2705 = vadd.f32 0.0, %v2704
  %v2706 = vpop.f32.mrb[0].mxu0
  %v2707 = vadd.f32 0.0, %v2706
  %2708 = vmatprep.mubr.bf16.mxu0 0
  %2709 = vmatmul.mubr.bf16.gmra.mrb[0].mxu0 %v2538
  %v2710 = vpop.f32.mrb[0].mxu0
  %v2711 = vadd.f32 0.0, %v2710
  %v2712 = vpop.f32.mrb[0].mxu0
  %v2713 = vadd.f32 0.0, %v2712
  %v2714 = vpop.f32.mrb[0].mxu0
  %v2715 = vpop.f32.mrb[0].mxu0
  %2716 = vdwg.mxu0
  %v2733 = vunpack.c.l.b16 %v2509
  %v2734 = vunpack.c.h.b16 %v2509
  %v2735 = vunpack.c.l.b16 %v2510
  %v2736 = vunpack.c.h.b16 %v2510
  %v2737 = vunpack.c.l.b16 %v2511
  %v2738 = vunpack.c.h.b16 %v2511
  %v2739 = vunpack.c.l.b16 %v2512
  %v2740 = vunpack.c.h.b16 %v2512
  %v2741 = vunpack.c.l.b16 %v2513
  %v2742 = vunpack.c.h.b16 %v2513
  %v2743 = vunpack.c.l.b16 %v2514
  %v2744 = vunpack.c.h.b16 %v2514
  %v2745 = vunpack.c.l.b16 %v2515
  %v2746 = vunpack.c.h.b16 %v2515
  %v2747 = vunpack.c.l.b16 %v2516
  %v2748 = vunpack.c.h.b16 %v2516
  %v2749 = vunpack.c.l.b16 %v2517
  %v2750 = vunpack.c.h.b16 %v2517
  %v2751 = vunpack.c.l.b16 %v2518
  %v2752 = vunpack.c.h.b16 %v2518
  %v2753 = vunpack.c.l.b16 %v2519
  %v2754 = vunpack.c.h.b16 %v2519
  %v2755 = vunpack.c.l.b16 %v2520
  %v2756 = vunpack.c.h.b16 %v2520
  %v2757 = vunpack.c.l.b16 %v2521
  %v2758 = vunpack.c.h.b16 %v2521
  %v2759 = vunpack.c.l.b16 %v2522
  %v2760 = vunpack.c.h.b16 %v2522
  %v2761 = vunpack.c.l.b16 %v2523
  %v2762 = vunpack.c.h.b16 %v2523
  %v2763 = vunpack.c.l.b16 %v2524
  %v2764 = vunpack.c.h.b16 %v2524
  %v2765 = vpack.c.b16 %v2735, %v2733
  %v2766 = vpack.c.b16 %v2736, %v2734
  %v2767 = vpack.c.b16 %v2739, %v2737
  %v2768 = vpack.c.b16 %v2740, %v2738
  %v2769 = vpack.c.b16 %v2743, %v2741
  %v2770 = vpack.c.b16 %v2744, %v2742
  %v2771 = vpack.c.b16 %v2747, %v2745
  %v2772 = vpack.c.b16 %v2748, %v2746
  %v2773 = vpack.c.b16 %v2751, %v2749
  %v2774 = vpack.c.b16 %v2752, %v2750
  %v2775 = vpack.c.b16 %v2755, %v2753
  %v2776 = vpack.c.b16 %v2756, %v2754
  %v2777 = vpack.c.b16 %v2759, %v2757
  %v2778 = vpack.c.b16 %v2760, %v2758
  %v2779 = vpack.c.b16 %v2763, %v2761
  %v2780 = vpack.c.b16 %v2764, %v2762
  %2797 = vmatprep.subr.bf16.mxu0 %v2766
  %2798 = vmatpush1.bf16.msra.mxu0 %v2765
  %2799 = vmatprep.subr.bf16.mxu0 %v2768
  %2800 = vmatpush1.bf16.msra.mxu0 %v2767
  %2801 = vmatprep.subr.bf16.mxu0 %v2770
  %2802 = vmatpush1.bf16.msra.mxu0 %v2769
  %2803 = vmatprep.subr.bf16.mxu0 %v2772
  %2804 = vmatpush1.bf16.msra.mxu0 %v2771
  %2805 = vmatprep.subr.bf16.mxu0 %v2774
  %2806 = vmatpush1.bf16.msra.mxu0 %v2773
  %2807 = vmatprep.subr.bf16.mxu0 %v2776
  %2808 = vmatpush1.bf16.msra.mxu0 %v2775
  %2809 = vmatprep.subr.bf16.mxu0 %v2778
  %2810 = vmatpush1.bf16.msra.mxu0 %v2777
  %2811 = vmatprep.subr.bf16.mxu0 %v2780
  %2812 = vmatpush1.bf16.msra.mxu0 %v2779
  %2813 = vmatprep.subr.bf16.mxu0 0
  %2814 = vmatpush1.bf16.msra.mxu0 0
  %2815 = vmatprep.subr.bf16.mxu0 0
  %2816 = vmatpush1.bf16.msra.mxu0 0
  %2817 = vmatprep.subr.bf16.mxu0 0
  %2818 = vmatpush1.bf16.msra.mxu0 0
  %2819 = vmatprep.subr.bf16.mxu0 0
  %2820 = vmatpush1.bf16.msra.mxu0 0
  %2821 = vmatprep.subr.bf16.mxu0 0
  %2822 = vmatpush1.bf16.msra.mxu0 0
  %2823 = vmatprep.subr.bf16.mxu0 0
  %2824 = vmatpush1.bf16.msra.mxu0 0
  %2825 = vmatprep.subr.bf16.mxu0 0
  %2826 = vmatpush1.bf16.msra.mxu0 0
  %2827 = vmatprep.subr.bf16.mxu0 0
  %2828 = vmatpush1.bf16.msra.mxu0 0
  %2829 = vmatprep.mubr.bf16.mxu0 0
  %2830 = vmatmul.mubr.bf16.gmra.mrb[0].mxu0 %v2504
  %v2831 = vpop.f32.mrb[0].mxu0
  %v2832 = vadd.f32 %v2671, %v2831
  %v2833 = vpop.f32.mrb[0].mxu0
  %v2834 = vadd.f32 %v2673, %v2833
  %v2835 = vpop.f32.mrb[0].mxu0
  %v2836 = vadd.f32 %v2675, %v2835
  %v2837 = vpop.f32.mrb[0].mxu0
  %v2838 = vadd.f32 %v2677, %v2837
  %2839 = vmatprep.mubr.bf16.mxu0 0
  %2840 = vmatmul.mubr.bf16.gmra.mrb[0].mxu0 %v2505
  %v2841 = vpop.f32.mrb[0].mxu0
  %v2842 = vadd.f32 %v2681, %v2841
  %v2843 = vpop.f32.mrb[0].mxu0
  %v2844 = vadd.f32 %v2683, %v2843
  %v2845 = vpop.f32.mrb[0].mxu0
  %v2846 = vadd.f32 %v2685, %v2845
  %v2847 = vpop.f32.mrb[0].mxu0
  %v2848 = vadd.f32 %v2687, %v2847
  %2849 = vmatprep.mubr.bf16.mxu0 0
  %2850 = vmatmul.mubr.bf16.gmra.mrb[0].mxu0 %v2506
  %v2851 = vpop.f32.mrb[0].mxu0
  %v2852 = vadd.f32 %v2691, %v2851
  %v2853 = vpop.f32.mrb[0].mxu0
  %v2854 = vadd.f32 %v2693, %v2853
  %v2855 = vpop.f32.mrb[0].mxu0
  %v2856 = vadd.f32 %v2695, %v2855
  %v2857 = vpop.f32.mrb[0].mxu0
  %v2858 = vadd.f32 %v2697, %v2857
  %2859 = vmatprep.mubr.bf16.mxu0 0
  %2860 = vmatmul.mubr.bf16.gmra.mrb[0].mxu0 %v2507
  %v2861 = vpop.f32.mrb[0].mxu0
  %v2862 = vadd.f32 %v2701, %v2861
  %v2863 = vpop.f32.mrb[0].mxu0
  %v2864 = vadd.f32 %v2703, %v2863
  %v2865 = vpop.f32.mrb[0].mxu0
  %v2866 = vadd.f32 %v2705, %v2865
  %v2867 = vpop.f32.mrb[0].mxu0
  %v2868 = vadd.f32 %v2707, %v2867
  %2869 = vmatprep.mubr.bf16.mxu0 0
  %2870 = vmatmul.mubr.bf16.gmra.mrb[0].mxu0 %v2508
  %v2871 = vpop.f32.mrb[0].mxu0
  %v2872 = vadd.f32 %v2711, %v2871
  %v2873 = vpop.f32.mrb[0].mxu0
  %v2874 = vadd.f32 %v2713, %v2873
  %v2875 = vpop.f32.mrb[0].mxu0
  %v2876 = vpop.f32.mrb[0].mxu0
  %2877 = vdwg.mxu0
  %v2878 = vld [vmem:[#allocation3 + $0x3] sm:$0xff]
  %v2879 = vld [vmem:[#allocation3 + $0xb] sm:$0xff]
  %v2880 = vld [vmem:[#allocation3 + $0x13] sm:$0xff]
  %v2881 = vld [vmem:[#allocation3 + $0x1b] sm:$0xff]
  %v2882 = vld [vmem:[#allocation3 + $0x23] sm:$0xff]
  %v2883 = vld [vmem:[#allocation3 + $0x2b] sm:$0xff]
  %v2884 = vld [vmem:[#allocation3 + $0x33] sm:$0xff]
  %v2885 = vld [vmem:[#allocation3 + $0x3b] sm:$0xff]
  %v2886 = vld [vmem:[#allocation3 + $0x43] sm:$0xff]
  %v2887 = vpack.c.bf16 %v2879, %v2878
  %v2888 = vpack.c.bf16 %v2881, %v2880
  %v2889 = vpack.c.bf16 %v2883, %v2882
  %v2890 = vpack.c.bf16 %v2885, %v2884
  %v2891 = vpack.c.bf16 %v2886, %v2886
  %s2892 = scalar_lea.vmem %s3, 256
  %v2893 = vld [vmem:[%s2892] sm:$0xff]
  %v2894 = vld [vmem:[%s2892 + $0x8] sm:$0xff]
  %v2895 = vld [vmem:[%s2892 + $0x10] sm:$0xff]
  %v2896 = vld [vmem:[%s2892 + $0x18] sm:$0xff]
  %v2897 = vld [vmem:[%s2892 + $0x20] sm:$0xff]
  %v2898 = vld [vmem:[%s2892 + $0x28] sm:$0xff]
  %v2899 = vld [vmem:[%s2892 + $0x30] sm:$0xff]
  %v2900 = vld [vmem:[%s2892 + $0x38] sm:$0xff]
  %v2901 = vld [vmem:[%s2892 + $0x40] sm:$0xff]
  %v2902 = vld [vmem:[%s2892 + $0x48] sm:$0xff]
  %v2903 = vld [vmem:[%s2892 + $0x50] sm:$0xff]
  %v2904 = vld [vmem:[%s2892 + $0x58] sm:$0xff]
  %v2905 = vld [vmem:[%s2892 + $0x60] sm:$0xff]
  %v2906 = vld [vmem:[%s2892 + $0x68] sm:$0xff]
  %v2907 = vld [vmem:[%s2892 + $0x70] sm:$0xff]
  %v2908 = vld [vmem:[%s2892 + $0x78] sm:$0xff]
  %v2925 = vunpack.c.l.b16 %v2893
  %v2926 = vunpack.c.h.b16 %v2893
  %v2927 = vunpack.c.l.b16 %v2894
  %v2928 = vunpack.c.h.b16 %v2894
  %v2929 = vunpack.c.l.b16 %v2895
  %v2930 = vunpack.c.h.b16 %v2895
  %v2931 = vunpack.c.l.b16 %v2896
  %v2932 = vunpack.c.h.b16 %v2896
  %v2933 = vunpack.c.l.b16 %v2897
  %v2934 = vunpack.c.h.b16 %v2897
  %v2935 = vunpack.c.l.b16 %v2898
  %v2936 = vunpack.c.h.b16 %v2898
  %v2937 = vunpack.c.l.b16 %v2899
  %v2938 = vunpack.c.h.b16 %v2899
  %v2939 = vunpack.c.l.b16 %v2900
  %v2940 = vunpack.c.h.b16 %v2900
  %v2941 = vunpack.c.l.b16 %v2901
  %v2942 = vunpack.c.h.b16 %v2901
  %v2943 = vunpack.c.l.b16 %v2902
  %v2944 = vunpack.c.h.b16 %v2902
  %v2945 = vunpack.c.l.b16 %v2903
  %v2946 = vunpack.c.h.b16 %v2903
  %v2947 = vunpack.c.l.b16 %v2904
  %v2948 = vunpack.c.h.b16 %v2904
  %v2949 = vunpack.c.l.b16 %v2905
  %v2950 = vunpack.c.h.b16 %v2905
  %v2951 = vunpack.c.l.b16 %v2906
  %v2952 = vunpack.c.h.b16 %v2906
  %v2953 = vunpack.c.l.b16 %v2907
  %v2954 = vunpack.c.h.b16 %v2907
  %v2955 = vunpack.c.l.b16 %v2908
  %v2956 = vunpack.c.h.b16 %v2908
  %v2957 = vpack.c.b16 %v2927, %v2925
  %v2958 = vpack.c.b16 %v2928, %v2926
  %v2959 = vpack.c.b16 %v2931, %v2929
  %v2960 = vpack.c.b16 %v2932, %v2930
  %v2961 = vpack.c.b16 %v2935, %v2933
  %v2962 = vpack.c.b16 %v2936, %v2934
  %v2963 = vpack.c.b16 %v2939, %v2937
  %v2964 = vpack.c.b16 %v2940, %v2938
  %v2965 = vpack.c.b16 %v2943, %v2941
  %v2966 = vpack.c.b16 %v2944, %v2942
  %v2967 = vpack.c.b16 %v2947, %v2945
  %v2968 = vpack.c.b16 %v2948, %v2946
  %v2969 = vpack.c.b16 %v2951, %v2949
  %v2970 = vpack.c.b16 %v2952, %v2950
  %v2971 = vpack.c.b16 %v2955, %v2953
  %v2972 = vpack.c.b16 %v2956, %v2954
  %2989 = vmatprep.subr.bf16.mxu0 %v2958
  %2990 = vmatpush1.bf16.msra.mxu0 %v2957
  %2991 = vmatprep.subr.bf16.mxu0 %v2960
  %2992 = vmatpush1.bf16.msra.mxu0 %v2959
  %2993 = vmatprep.subr.bf16.mxu0 %v2962
  %2994 = vmatpush1.bf16.msra.mxu0 %v2961
  %2995 = vmatprep.subr.bf16.mxu0 %v2964
  %2996 = vmatpush1.bf16.msra.mxu0 %v2963
  %2997 = vmatprep.subr.bf16.mxu0 %v2966
  %2998 = vmatpush1.bf16.msra.mxu0 %v2965
  %2999 = vmatprep.subr.bf16.mxu0 %v2968
  %3000 = vmatpush1.bf16.msra.mxu0 %v2967
  %3001 = vmatprep.subr.bf16.mxu0 %v2970
  %3002 = vmatpush1.bf16.msra.mxu0 %v2969
  %3003 = vmatprep.subr.bf16.mxu0 %v2972
  %3004 = vmatpush1.bf16.msra.mxu0 %v2971
  %3005 = vmatprep.subr.bf16.mxu0 0
  %3006 = vmatpush1.bf16.msra.mxu0 0
  %3007 = vmatprep.subr.bf16.mxu0 0
  %3008 = vmatpush1.bf16.msra.mxu0 0
  %3009 = vmatprep.subr.bf16.mxu0 0
  %3010 = vmatpush1.bf16.msra.mxu0 0
  %3011 = vmatprep.subr.bf16.mxu0 0
  %3012 = vmatpush1.bf16.msra.mxu0 0
  %3013 = vmatprep.subr.bf16.mxu0 0
  %3014 = vmatpush1.bf16.msra.mxu0 0
  %3015 = vmatprep.subr.bf16.mxu0 0
  %3016 = vmatpush1.bf16.msra.mxu0 0
  %3017 = vmatprep.subr.bf16.mxu0 0
  %3018 = vmatpush1.bf16.msra.mxu0 0
  %3019 = vmatprep.subr.bf16.mxu0 0
  %3020 = vmatpush1.bf16.msra.mxu0 0
  %3021 = vmatprep.mubr.bf16.mxu0 0
  %3022 = vmatmul.mubr.bf16.gmra.mrb[0].mxu0 %v2887
  %v3023 = vpop.f32.mrb[0].mxu0
  %v3024 = vadd.f32 0.0, %v3023
  %v3025 = vpop.f32.mrb[0].mxu0
  %v3026 = vadd.f32 0.0, %v3025
  %v3027 = vpop.f32.mrb[0].mxu0
  %v3028 = vadd.f32 0.0, %v3027
  %v3029 = vpop.f32.mrb[0].mxu0
  %v3030 = vadd.f32 0.0, %v3029
  %3031 = vmatprep.mubr.bf16.mxu0 0
  %3032 = vmatmul.mubr.bf16.gmra.mrb[0].mxu0 %v2888
  %v3033 = vpop.f32.mrb[0].mxu0
  %v3034 = vadd.f32 0.0, %v3033
  %v3035 = vpop.f32.mrb[0].mxu0
  %v3036 = vadd.f32 0.0, %v3035
  %v3037 = vpop.f32.mrb[0].mxu0
  %v3038 = vadd.f32 0.0, %v3037
  %v3039 = vpop.f32.mrb[0].mxu0
  %v3040 = vadd.f32 0.0, %v3039
  %3041 = vmatprep.mubr.bf16.mxu0 0
  %3042 = vmatmul.mubr.bf16.gmra.mrb[0].mxu0 %v2889
  %v3043 = vpop.f32.mrb[0].mxu0
  %v3044 = vadd.f32 0.0, %v3043
  %v3045 = vpop.f32.mrb[0].mxu0
  %v3046 = vadd.f32 0.0, %v3045
  %v3047 = vpop.f32.mrb[0].mxu0
  %v3048 = vadd.f32 0.0, %v3047
  %v3049 = vpop.f32.mrb[0].mxu0
  %v3050 = vadd.f32 0.0, %v3049
  %3051 = vmatprep.mubr.bf16.mxu0 0
  %3052 = vmatmul.mubr.bf16.gmra.mrb[0].mxu0 %v2890
  %v3053 = vpop.f32.mrb[0].mxu0
  %v3054 = vadd.f32 0.0, %v3053
  %v3055 = vpop.f32.mrb[0].mxu0
  %v3056 = vadd.f32 0.0, %v3055
  %v3057 = vpop.f32.mrb[0].mxu0
  %v3058 = vadd.f32 0.0, %v3057
  %v3059 = vpop.f32.mrb[0].mxu0
  %v3060 = vadd.f32 0.0, %v3059
  %3061 = vmatprep.mubr.bf16.mxu0 0
  %3062 = vmatmul.mubr.bf16.gmra.mrb[0].mxu0 %v2891
  %v3063 = vpop.f32.mrb[0].mxu0
  %v3064 = vadd.f32 0.0, %v3063
  %v3065 = vpop.f32.mrb[0].mxu0
  %v3066 = vadd.f32 0.0, %v3065
  %v3067 = vpop.f32.mrb[0].mxu0
  %v3068 = vpop.f32.mrb[0].mxu0
  %3069 = vdwg.mxu0
  %v3070 = vadd.f32 %v2832, %v3024
  %v3071 = vadd.f32 %v2834, %v3026
  %v3072 = vadd.f32 %v2836, %v3028
  %v3073 = vadd.f32 %v2838, %v3030
  %v3074 = vadd.f32 %v2842, %v3034
  %v3075 = vadd.f32 %v2844, %v3036
  %v3076 = vadd.f32 %v2846, %v3038
  %v3077 = vadd.f32 %v2848, %v3040
  %v3078 = vadd.f32 %v2852, %v3044
  %v3079 = vadd.f32 %v2854, %v3046
  %v3080 = vadd.f32 %v2856, %v3048
  %v3081 = vadd.f32 %v2858, %v3050
  %v3082 = vadd.f32 %v2862, %v3054
  %v3083 = vadd.f32 %v2864, %v3056
  %v3084 = vadd.f32 %v2866, %v3058
  %v3085 = vadd.f32 %v2868, %v3060
  %v3086 = vadd.f32 %v2872, %v3064
  %v3087 = vadd.f32 %v2874, %v3066
  %v3088 = vld [vmem:[#allocation3 + $0x7] sm:$0xff]
  %v3089 = vld [vmem:[#allocation3 + $0xf] sm:$0xff]
  %v3090 = vld [vmem:[#allocation3 + $0x17] sm:$0xff]
  %v3091 = vld [vmem:[#allocation3 + $0x1f] sm:$0xff]
  %v3092 = vld [vmem:[#allocation3 + $0x27] sm:$0xff]
  %v3093 = vld [vmem:[#allocation3 + $0x2f] sm:$0xff]
  %v3094 = vld [vmem:[#allocation3 + $0x37] sm:$0xff]
  %v3095 = vld [vmem:[#allocation3 + $0x3f] sm:$0xff]
  %v3096 = vld [vmem:[#allocation3 + $0x47] sm:$0xff]
  %v3097 = vpack.c.bf16 %v3089, %v3088
  %v3098 = vpack.c.bf16 %v3091, %v3090
  %v3099 = vpack.c.bf16 %v3093, %v3092
  %v3100 = vpack.c.bf16 %v3095, %v3094
  %v3101 = vpack.c.bf16 %v3096, %v3096
  %s3102 = scalar_lea.vmem %s3, 384
  %v3103 = vld [vmem:[%s3102] sm:$0xff]
  %v3104 = vld [vmem:[%s3102 + $0x8] sm:$0xff]
  %v3105 = vld [vmem:[%s3102 + $0x10] sm:$0xff]
  %v3106 = vld [vmem:[%s3102 + $0x18] sm:$0xff]
  %v3107 = vld [vmem:[%s3102 + $0x20] sm:$0xff]
  %v3108 = vld [vmem:[%s3102 + $0x28] sm:$0xff]
  %v3109 = vld [vmem:[%s3102 + $0x30] sm:$0xff]
  %v3110 = vld [vmem:[%s3102 + $0x38] sm:$0xff]
  %v3111 = vld [vmem:[%s3102 + $0x40] sm:$0xff]
  %v3112 = vld [vmem:[%s3102 + $0x48] sm:$0xff]
  %v3113 = vld [vmem:[%s3102 + $0x50] sm:$0xff]
  %v3114 = vld [vmem:[%s3102 + $0x58] sm:$0xff]
  %v3115 = vld [vmem:[%s3102 + $0x60] sm:$0xff]
  %v3116 = vld [vmem:[%s3102 + $0x68] sm:$0xff]
  %v3117 = vld [vmem:[%s3102 + $0x70] sm:$0xff]
  %v3118 = vld [vmem:[%s3102 + $0x78] sm:$0xff]
  %v3135 = vunpack.c.l.b16 %v3103
  %v3136 = vunpack.c.h.b16 %v3103
  %v3137 = vunpack.c.l.b16 %v3104
  %v3138 = vunpack.c.h.b16 %v3104
  %v3139 = vunpack.c.l.b16 %v3105
  %v3140 = vunpack.c.h.b16 %v3105
  %v3141 = vunpack.c.l.b16 %v3106
  %v3142 = vunpack.c.h.b16 %v3106
  %v3143 = vunpack.c.l.b16 %v3107
  %v3144 = vunpack.c.h.b16 %v3107
  %v3145 = vunpack.c.l.b16 %v3108
  %v3146 = vunpack.c.h.b16 %v3108
  %v3147 = vunpack.c.l.b16 %v3109
  %v3148 = vunpack.c.h.b16 %v3109
  %v3149 = vunpack.c.l.b16 %v3110
  %v3150 = vunpack.c.h.b16 %v3110
  %v3151 = vunpack.c.l.b16 %v3111
  %v3152 = vunpack.c.h.b16 %v3111
  %v3153 = vunpack.c.l.b16 %v3112
  %v3154 = vunpack.c.h.b16 %v3112
  %v3155 = vunpack.c.l.b16 %v3113
  %v3156 = vunpack.c.h.b16 %v3113
  %v3157 = vunpack.c.l.b16 %v3114
  %v3158 = vunpack.c.h.b16 %v3114
  %v3159 = vunpack.c.l.b16 %v3115
  %v3160 = vunpack.c.h.b16 %v3115
  %v3161 = vunpack.c.l.b16 %v3116
  %v3162 = vunpack.c.h.b16 %v3116
  %v3163 = vunpack.c.l.b16 %v3117
  %v3164 = vunpack.c.h.b16 %v3117
  %v3165 = vunpack.c.l.b16 %v3118
  %v3166 = vunpack.c.h.b16 %v3118
  %v3167 = vpack.c.b16 %v3137, %v3135
  %v3168 = vpack.c.b16 %v3138, %v3136
  %v3169 = vpack.c.b16 %v3141, %v3139
  %v3170 = vpack.c.b16 %v3142, %v3140
  %v3171 = vpack.c.b16 %v3145, %v3143
  %v3172 = vpack.c.b16 %v3146, %v3144
  %v3173 = vpack.c.b16 %v3149, %v3147
  %v3174 = vpack.c.b16 %v3150, %v3148
  %v3175 = vpack.c.b16 %v3153, %v3151
  %v3176 = vpack.c.b16 %v3154, %v3152
  %v3177 = vpack.c.b16 %v3157, %v3155
  %v3178 = vpack.c.b16 %v3158, %v3156
  %v3179 = vpack.c.b16 %v3161, %v3159
  %v3180 = vpack.c.b16 %v3162, %v3160
  %v3181 = vpack.c.b16 %v3165, %v3163
  %v3182 = vpack.c.b16 %v3166, %v3164
  %3199 = vmatprep.subr.bf16.mxu0 %v3168
  %3200 = vmatpush1.bf16.msra.mxu0 %v3167
  %3201 = vmatprep.subr.bf16.mxu0 %v3170
  %3202 = vmatpush1.bf16.msra.mxu0 %v3169
  %3203 = vmatprep.subr.bf16.mxu0 %v3172
  %3204 = vmatpush1.bf16.msra.mxu0 %v3171
  %3205 = vmatprep.subr.bf16.mxu0 %v3174
  %3206 = vmatpush1.bf16.msra.mxu0 %v3173
  %3207 = vmatprep.subr.bf16.mxu0 %v3176
  %3208 = vmatpush1.bf16.msra.mxu0 %v3175
  %3209 = vmatprep.subr.bf16.mxu0 %v3178
  %3210 = vmatpush1.bf16.msra.mxu0 %v3177
  %3211 = vmatprep.subr.bf16.mxu0 %v3180
  %3212 = vmatpush1.bf16.msra.mxu0 %v3179
  %3213 = vmatprep.subr.bf16.mxu0 %v3182
  %3214 = vmatpush1.bf16.msra.mxu0 %v3181
  %3215 = vmatprep.subr.bf16.mxu0 0
  %3216 = vmatpush1.bf16.msra.mxu0 0
  %3217 = vmatprep.subr.bf16.mxu0 0
  %3218 = vmatpush1.bf16.msra.mxu0 0
  %3219 = vmatprep.subr.bf16.mxu0 0
  %3220 = vmatpush1.bf16.msra.mxu0 0
  %3221 = vmatprep.subr.bf16.mxu0 0
  %3222 = vmatpush1.bf16.msra.mxu0 0
  %3223 = vmatprep.subr.bf16.mxu0 0
  %3224 = vmatpush1.bf16.msra.mxu0 0
  %3225 = vmatprep.subr.bf16.mxu0 0
  %3226 = vmatpush1.bf16.msra.mxu0 0
  %3227 = vmatprep.subr.bf16.mxu0 0
  %3228 = vmatpush1.bf16.msra.mxu0 0
  %3229 = vmatprep.subr.bf16.mxu0 0
  %3230 = vmatpush1.bf16.msra.mxu0 0
  %3231 = vmatprep.mubr.bf16.mxu0 0
  %3232 = vmatmul.mubr.bf16.gmra.mrb[0].mxu0 %v3097
  %v3233 = vpop.f32.mrb[0].mxu0
  %v3234 = vadd.f32 0.0, %v3233
  %v3235 = vpop.f32.mrb[0].mxu0
  %v3236 = vadd.f32 0.0, %v3235
  %v3237 = vpop.f32.mrb[0].mxu0
  %v3238 = vadd.f32 0.0, %v3237
  %v3239 = vpop.f32.mrb[0].mxu0
  %v3240 = vadd.f32 0.0, %v3239
  %3241 = vmatprep.mubr.bf16.mxu0 0
  %3242 = vmatmul.mubr.bf16.gmra.mrb[0].mxu0 %v3098
  %v3243 = vpop.f32.mrb[0].mxu0
  %v3244 = vadd.f32 0.0, %v3243
  %v3245 = vpop.f32.mrb[0].mxu0
  %v3246 = vadd.f32 0.0, %v3245
  %v3247 = vpop.f32.mrb[0].mxu0
  %v3248 = vadd.f32 0.0, %v3247
  %v3249 = vpop.f32.mrb[0].mxu0
  %v3250 = vadd.f32 0.0, %v3249
  %3251 = vmatprep.mubr.bf16.mxu0 0
  %3252 = vmatmul.mubr.bf16.gmra.mrb[0].mxu0 %v3099
  %v3253 = vpop.f32.mrb[0].mxu0
  %v3254 = vadd.f32 0.0, %v3253
  %v3255 = vpop.f32.mrb[0].mxu0
  %v3256 = vadd.f32 0.0, %v3255
  %v3257 = vpop.f32.mrb[0].mxu0
  %v3258 = vadd.f32 0.0, %v3257
  %v3259 = vpop.f32.mrb[0].mxu0
  %v3260 = vadd.f32 0.0, %v3259
  %3261 = vmatprep.mubr.bf16.mxu0 0
  %3262 = vmatmul.mubr.bf16.gmra.mrb[0].mxu0 %v3100
  %v3263 = vpop.f32.mrb[0].mxu0
  %v3264 = vadd.f32 0.0, %v3263
  %v3265 = vpop.f32.mrb[0].mxu0
  %v3266 = vadd.f32 0.0, %v3265
  %v3267 = vpop.f32.mrb[0].mxu0
  %v3268 = vadd.f32 0.0, %v3267
  %v3269 = vpop.f32.mrb[0].mxu0
  %v3270 = vadd.f32 0.0, %v3269
  %3271 = vmatprep.mubr.bf16.mxu0 0
  %3272 = vmatmul.mubr.bf16.gmra.mrb[0].mxu0 %v3101
  %v3273 = vpop.f32.mrb[0].mxu0
  %v3274 = vadd.f32 0.0, %v3273
  %v3275 = vpop.f32.mrb[0].mxu0
  %v3276 = vadd.f32 0.0, %v3275
  %v3277 = vpop.f32.mrb[0].mxu0
  %v3278 = vpop.f32.mrb[0].mxu0
  %3279 = vdwg.mxu0
  %v3280 = vadd.f32 %v3070, %v3234
  %v3281 = vadd.f32 %v3071, %v3236
  %v3282 = vadd.f32 %v3072, %v3238
  %v3283 = vadd.f32 %v3073, %v3240
  %v3284 = vadd.f32 %v3074, %v3244
  %v3285 = vadd.f32 %v3075, %v3246
  %v3286 = vadd.f32 %v3076, %v3248
  %v3287 = vadd.f32 %v3077, %v3250
  %v3288 = vadd.f32 %v3078, %v3254
  %v3289 = vadd.f32 %v3079, %v3256
  %v3290 = vadd.f32 %v3080, %v3258
  %v3291 = vadd.f32 %v3081, %v3260
  %v3292 = vadd.f32 %v3082, %v3264
  %v3293 = vadd.f32 %v3083, %v3266
  %v3294 = vadd.f32 %v3084, %v3268
  %v3295 = vadd.f32 %v3085, %v3270
  %v3296 = vadd.f32 %v3086, %v3274
  %v3297 = vadd.f32 %v3087, %v3276
  %v3298 = vld [vmem:[#allocation3 + $0x8] sm:$0xff]
  %v3299 = vld [vmem:[#allocation3 + $0x10] sm:$0xff]
  %v3300 = vld [vmem:[#allocation3 + $0x18] sm:$0xff]
  %v3301 = vld [vmem:[#allocation3 + $0x20] sm:$0xff]
  %v3302 = vld [vmem:[#allocation3 + $0x28] sm:$0xff]
  %v3303 = vld [vmem:[#allocation3 + $0x30] sm:$0xff]
  %v3304 = vld [vmem:[#allocation3 + $0x38] sm:$0xff]
  %v3305 = vld [vmem:[#allocation3 + $0x40] sm:$0xff]
  %v3306 = vld [vmem:[#allocation3 + $0x48] sm:$0xff]
  %v3307 = vpack.c.bf16 %v3299, %v3298
  %v3308 = vpack.c.bf16 %v3301, %v3300
  %v3309 = vpack.c.bf16 %v3303, %v3302
  %v3310 = vpack.c.bf16 %v3305, %v3304
  %v3311 = vpack.c.bf16 %v3306, %v3306
  %s3312 = scalar_lea.vmem %s3, 512
  %v3313 = vld [vmem:[%s3312] sm:$0xff]
  %v3314 = vld [vmem:[%s3312 + $0x8] sm:$0xff]
  %v3315 = vld [vmem:[%s3312 + $0x10] sm:$0xff]
  %v3316 = vld [vmem:[%s3312 + $0x18] sm:$0xff]
  %v3317 = vld [vmem:[%s3312 + $0x20] sm:$0xff]
  %v3318 = vld [vmem:[%s3312 + $0x28] sm:$0xff]
  %v3319 = vld [vmem:[%s3312 + $0x30] sm:$0xff]
  %v3320 = vld [vmem:[%s3312 + $0x38] sm:$0xff]
  %v3321 = vld [vmem:[%s3312 + $0x40] sm:$0xff]
  %v3322 = vld [vmem:[%s3312 + $0x48] sm:$0xff]
  %v3323 = vld [vmem:[%s3312 + $0x50] sm:$0xff]
  %v3324 = vld [vmem:[%s3312 + $0x58] sm:$0xff]
  %v3325 = vld [vmem:[%s3312 + $0x60] sm:$0xff]
  %v3326 = vld [vmem:[%s3312 + $0x68] sm:$0xff]
  %v3327 = vld [vmem:[%s3312 + $0x70] sm:$0xff]
  %v3328 = vld [vmem:[%s3312 + $0x78] sm:$0xff]
  %v3345 = vunpack.c.l.b16 %v3313
  %v3346 = vunpack.c.h.b16 %v3313
  %v3347 = vunpack.c.l.b16 %v3314
  %v3348 = vunpack.c.h.b16 %v3314
  %v3349 = vunpack.c.l.b16 %v3315
  %v3350 = vunpack.c.h.b16 %v3315
  %v3351 = vunpack.c.l.b16 %v3316
  %v3352 = vunpack.c.h.b16 %v3316
  %v3353 = vunpack.c.l.b16 %v3317
  %v3354 = vunpack.c.h.b16 %v3317
  %v3355 = vunpack.c.l.b16 %v3318
  %v3356 = vunpack.c.h.b16 %v3318
  %v3357 = vunpack.c.l.b16 %v3319
  %v3358 = vunpack.c.h.b16 %v3319
  %v3359 = vunpack.c.l.b16 %v3320
  %v3360 = vunpack.c.h.b16 %v3320
  %v3361 = vunpack.c.l.b16 %v3321
  %v3362 = vunpack.c.h.b16 %v3321
  %v3363 = vunpack.c.l.b16 %v3322
  %v3364 = vunpack.c.h.b16 %v3322
  %v3365 = vunpack.c.l.b16 %v3323
  %v3366 = vunpack.c.h.b16 %v3323
  %v3367 = vunpack.c.l.b16 %v3324
  %v3368 = vunpack.c.h.b16 %v3324
  %v3369 = vunpack.c.l.b16 %v3325
  %v3370 = vunpack.c.h.b16 %v3325
  %v3371 = vunpack.c.l.b16 %v3326
  %v3372 = vunpack.c.h.b16 %v3326
  %v3373 = vunpack.c.l.b16 %v3327
  %v3374 = vunpack.c.h.b16 %v3327
  %v3375 = vunpack.c.l.b16 %v3328
  %v3376 = vunpack.c.h.b16 %v3328
  %v3377 = vpack.c.b16 %v3347, %v3345
  %v3378 = vpack.c.b16 %v3348, %v3346
  %v3379 = vpack.c.b16 %v3351, %v3349
  %v3380 = vpack.c.b16 %v3352, %v3350
  %v3381 = vpack.c.b16 %v3355, %v3353
  %v3382 = vpack.c.b16 %v3356, %v3354
  %v3383 = vpack.c.b16 %v3359, %v3357
  %v3384 = vpack.c.b16 %v3360, %v3358
  %v3385 = vpack.c.b16 %v3363, %v3361
  %v3386 = vpack.c.b16 %v3364, %v3362
  %v3387 = vpack.c.b16 %v3367, %v3365
  %v3388 = vpack.c.b16 %v3368, %v3366
  %v3389 = vpack.c.b16 %v3371, %v3369
  %v3390 = vpack.c.b16 %v3372, %v3370
  %v3391 = vpack.c.b16 %v3375, %v3373
  %v3392 = vpack.c.b16 %v3376, %v3374
  %3409 = vmatprep.subr.bf16.mxu0 %v3378
  %3410 = vmatpush1.bf16.msra.mxu0 %v3377
  %3411 = vmatprep.subr.bf16.mxu0 %v3380
  %3412 = vmatpush1.bf16.msra.mxu0 %v3379
  %3413 = vmatprep.subr.bf16.mxu0 %v3382
  %3414 = vmatpush1.bf16.msra.mxu0 %v3381
  %3415 = vmatprep.subr.bf16.mxu0 %v3384
  %3416 = vmatpush1.bf16.msra.mxu0 %v3383
  %3417 = vmatprep.subr.bf16.mxu0 %v3386
  %3418 = vmatpush1.bf16.msra.mxu0 %v3385
  %3419 = vmatprep.subr.bf16.mxu0 %v3388
  %3420 = vmatpush1.bf16.msra.mxu0 %v3387
  %3421 = vmatprep.subr.bf16.mxu0 %v3390
  %3422 = vmatpush1.bf16.msra.mxu0 %v3389
  %3423 = vmatprep.subr.bf16.mxu0 %v3392
  %3424 = vmatpush1.bf16.msra.mxu0 %v3391
  %3425 = vmatprep.subr.bf16.mxu0 0
  %3426 = vmatpush1.bf16.msra.mxu0 0
  %3427 = vmatprep.subr.bf16.mxu0 0
  %3428 = vmatpush1.bf16.msra.mxu0 0
  %3429 = vmatprep.subr.bf16.mxu0 0
  %3430 = vmatpush1.bf16.msra.mxu0 0
  %3431 = vmatprep.subr.bf16.mxu0 0
  %3432 = vmatpush1.bf16.msra.mxu0 0
  %3433 = vmatprep.subr.bf16.mxu0 0
  %3434 = vmatpush1.bf16.msra.mxu0 0
  %3435 = vmatprep.subr.bf16.mxu0 0
  %3436 = vmatpush1.bf16.msra.mxu0 0
  %3437 = vmatprep.subr.bf16.mxu0 0
  %3438 = vmatpush1.bf16.msra.mxu0 0
  %3439 = vmatprep.subr.bf16.mxu0 0
  %3440 = vmatpush1.bf16.msra.mxu0 0
  %3441 = vmatprep.mubr.bf16.mxu0 0
  %3442 = vmatmul.mubr.bf16.gmra.mrb[0].mxu0 %v3307
  %v3443 = vpop.f32.mrb[0].mxu0
  %v3444 = vadd.f32 0.0, %v3443
  %v3445 = vpop.f32.mrb[0].mxu0
  %v3446 = vadd.f32 0.0, %v3445
  %v3447 = vpop.f32.mrb[0].mxu0
  %v3448 = vadd.f32 0.0, %v3447
  %v3449 = vpop.f32.mrb[0].mxu0
  %v3450 = vadd.f32 0.0, %v3449
  %3451 = vmatprep.mubr.bf16.mxu0 0
  %3452 = vmatmul.mubr.bf16.gmra.mrb[0].mxu0 %v3308
  %v3453 = vpop.f32.mrb[0].mxu0
  %v3454 = vadd.f32 0.0, %v3453
  %v3455 = vpop.f32.mrb[0].mxu0
  %v3456 = vadd.f32 0.0, %v3455
  %v3457 = vpop.f32.mrb[0].mxu0
  %v3458 = vadd.f32 0.0, %v3457
  %v3459 = vpop.f32.mrb[0].mxu0
  %v3460 = vadd.f32 0.0, %v3459
  %3461 = vmatprep.mubr.bf16.mxu0 0
  %3462 = vmatmul.mubr.bf16.gmra.mrb[0].mxu0 %v3309
  %v3463 = vpop.f32.mrb[0].mxu0
  %v3464 = vadd.f32 0.0, %v3463
  %v3465 = vpop.f32.mrb[0].mxu0
  %v3466 = vadd.f32 0.0, %v3465
  %v3467 = vpop.f32.mrb[0].mxu0
  %v3468 = vadd.f32 0.0, %v3467
  %v3469 = vpop.f32.mrb[0].mxu0
  %v3470 = vadd.f32 0.0, %v3469
  %3471 = vmatprep.mubr.bf16.mxu0 0
  %3472 = vmatmul.mubr.bf16.gmra.mrb[0].mxu0 %v3310
  %v3473 = vpop.f32.mrb[0].mxu0
  %v3474 = vadd.f32 0.0, %v3473
  %v3475 = vpop.f32.mrb[0].mxu0
  %v3476 = vadd.f32 0.0, %v3475
  %v3477 = vpop.f32.mrb[0].mxu0
  %v3478 = vadd.f32 0.0, %v3477
  %v3479 = vpop.f32.mrb[0].mxu0
  %v3480 = vadd.f32 0.0, %v3479
  %3481 = vmatprep.mubr.bf16.mxu0 0
  %3482 = vmatmul.mubr.bf16.gmra.mrb[0].mxu0 %v3311
  %v3483 = vpop.f32.mrb[0].mxu0
  %v3484 = vadd.f32 0.0, %v3483
  %v3485 = vpop.f32.mrb[0].mxu0
  %v3486 = vadd.f32 0.0, %v3485
  %v3487 = vpop.f32.mrb[0].mxu0
  %v3488 = vpop.f32.mrb[0].mxu0
  %3489 = vdwg.mxu0
  %v3490 = vadd.f32 %v3280, %v3444
  %v3491 = vadd.f32 %v3281, %v3446
  %v3492 = vadd.f32 %v3282, %v3448
  %v3493 = vadd.f32 %v3283, %v3450
  %v3494 = vadd.f32 %v3284, %v3454
  %v3495 = vadd.f32 %v3285, %v3456
  %v3496 = vadd.f32 %v3286, %v3458
  %v3497 = vadd.f32 %v3287, %v3460
  %v3498 = vadd.f32 %v3288, %v3464
  %v3499 = vadd.f32 %v3289, %v3466
  %v3500 = vadd.f32 %v3290, %v3468
  %v3501 = vadd.f32 %v3291, %v3470
  %v3502 = vadd.f32 %v3292, %v3474
  %v3503 = vadd.f32 %v3293, %v3476
  %v3504 = vadd.f32 %v3294, %v3478
  %v3505 = vadd.f32 %v3295, %v3480
  %v3506 = vadd.f32 %v3296, %v3484
  %v3507 = vadd.f32 %v3297, %v3486
  %v3508 = vld [vmem:[#allocation3 + $0x9] sm:$0xff]
  %v3509 = vld [vmem:[#allocation3 + $0x11] sm:$0xff]
  %v3510 = vld [vmem:[#allocation3 + $0x19] sm:$0xff]
  %v3511 = vld [vmem:[#allocation3 + $0x21] sm:$0xff]
  %v3512 = vld [vmem:[#allocation3 + $0x29] sm:$0xff]
  %v3513 = vld [vmem:[#allocation3 + $0x31] sm:$0xff]
  %v3514 = vld [vmem:[#allocation3 + $0x39] sm:$0xff]
  %v3515 = vld [vmem:[#allocation3 + $0x41] sm:$0xff]
  %v3516 = vld [vmem:[#allocation3 + $0x49] sm:$0xff]
  %v3517 = vpack.c.bf16 %v3509, %v3508
  %v3518 = vpack.c.bf16 %v3511, %v3510
  %v3519 = vpack.c.bf16 %v3513, %v3512
  %v3520 = vpack.c.bf16 %v3515, %v3514
  %v3521 = vpack.c.bf16 %v3516, %v3516
  %s3522 = scalar_lea.vmem %s3, 640
  %v3523 = vld [vmem:[%s3522] sm:$0xff]
  %v3524 = vld [vmem:[%s3522 + $0x8] sm:$0xff]
  %v3525 = vld [vmem:[%s3522 + $0x10] sm:$0xff]
  %v3526 = vld [vmem:[%s3522 + $0x18] sm:$0xff]
  %v3527 = vld [vmem:[%s3522 + $0x20] sm:$0xff]
  %v3528 = vld [vmem:[%s3522 + $0x28] sm:$0xff]
  %v3529 = vld [vmem:[%s3522 + $0x30] sm:$0xff]
  %v3530 = vld [vmem:[%s3522 + $0x38] sm:$0xff]
  %v3531 = vld [vmem:[%s3522 + $0x40] sm:$0xff]
  %v3532 = vld [vmem:[%s3522 + $0x48] sm:$0xff]
  %v3533 = vld [vmem:[%s3522 + $0x50] sm:$0xff]
  %v3534 = vld [vmem:[%s3522 + $0x58] sm:$0xff]
  %v3535 = vld [vmem:[%s3522 + $0x60] sm:$0xff]
  %v3536 = vld [vmem:[%s3522 + $0x68] sm:$0xff]
  %v3537 = vld [vmem:[%s3522 + $0x70] sm:$0xff]
  %v3538 = vld [vmem:[%s3522 + $0x78] sm:$0xff]
  %v3555 = vunpack.c.l.b16 %v3523
  %v3556 = vunpack.c.h.b16 %v3523
  %v3557 = vunpack.c.l.b16 %v3524
  %v3558 = vunpack.c.h.b16 %v3524
  %v3559 = vunpack.c.l.b16 %v3525
  %v3560 = vunpack.c.h.b16 %v3525
  %v3561 = vunpack.c.l.b16 %v3526
  %v3562 = vunpack.c.h.b16 %v3526
  %v3563 = vunpack.c.l.b16 %v3527
  %v3564 = vunpack.c.h.b16 %v3527
  %v3565 = vunpack.c.l.b16 %v3528
  %v3566 = vunpack.c.h.b16 %v3528
  %v3567 = vunpack.c.l.b16 %v3529
  %v3568 = vunpack.c.h.b16 %v3529
  %v3569 = vunpack.c.l.b16 %v3530
  %v3570 = vunpack.c.h.b16 %v3530
  %v3571 = vunpack.c.l.b16 %v3531
  %v3572 = vunpack.c.h.b16 %v3531
  %v3573 = vunpack.c.l.b16 %v3532
  %v3574 = vunpack.c.h.b16 %v3532
  %v3575 = vunpack.c.l.b16 %v3533
  %v3576 = vunpack.c.h.b16 %v3533
  %v3577 = vunpack.c.l.b16 %v3534
  %v3578 = vunpack.c.h.b16 %v3534
  %v3579 = vunpack.c.l.b16 %v3535
  %v3580 = vunpack.c.h.b16 %v3535
  %v3581 = vunpack.c.l.b16 %v3536
  %v3582 = vunpack.c.h.b16 %v3536
  %v3583 = vunpack.c.l.b16 %v3537
  %v3584 = vunpack.c.h.b16 %v3537
  %v3585 = vunpack.c.l.b16 %v3538
  %v3586 = vunpack.c.h.b16 %v3538
  %v3587 = vpack.c.b16 %v3557, %v3555
  %v3588 = vpack.c.b16 %v3558, %v3556
  %v3589 = vpack.c.b16 %v3561, %v3559
  %v3590 = vpack.c.b16 %v3562, %v3560
  %v3591 = vpack.c.b16 %v3565, %v3563
  %v3592 = vpack.c.b16 %v3566, %v3564
  %v3593 = vpack.c.b16 %v3569, %v3567
  %v3594 = vpack.c.b16 %v3570, %v3568
  %v3595 = vpack.c.b16 %v3573, %v3571
  %v3596 = vpack.c.b16 %v3574, %v3572
  %v3597 = vpack.c.b16 %v3577, %v3575
  %v3598 = vpack.c.b16 %v3578, %v3576
  %v3599 = vpack.c.b16 %v3581, %v3579
  %v3600 = vpack.c.b16 %v3582, %v3580
  %v3601 = vpack.c.b16 %v3585, %v3583
  %v3602 = vpack.c.b16 %v3586, %v3584
  %3619 = vmatprep.subr.bf16.mxu0 %v3588
  %3620 = vmatpush1.bf16.msra.mxu0 %v3587
  %3621 = vmatprep.subr.bf16.mxu0 %v3590
  %3622 = vmatpush1.bf16.msra.mxu0 %v3589
  %3623 = vmatprep.subr.bf16.mxu0 %v3592
  %3624 = vmatpush1.bf16.msra.mxu0 %v3591
  %3625 = vmatprep.subr.bf16.mxu0 %v3594
  %3626 = vmatpush1.bf16.msra.mxu0 %v3593
  %3627 = vmatprep.subr.bf16.mxu0 %v3596
  %3628 = vmatpush1.bf16.msra.mxu0 %v3595
  %3629 = vmatprep.subr.bf16.mxu0 %v3598
  %3630 = vmatpush1.bf16.msra.mxu0 %v3597
  %3631 = vmatprep.subr.bf16.mxu0 %v3600
  %3632 = vmatpush1.bf16.msra.mxu0 %v3599
  %3633 = vmatprep.subr.bf16.mxu0 %v3602
  %3634 = vmatpush1.bf16.msra.mxu0 %v3601
  %3635 = vmatprep.subr.bf16.mxu0 0
  %3636 = vmatpush1.bf16.msra.mxu0 0
  %3637 = vmatprep.subr.bf16.mxu0 0
  %3638 = vmatpush1.bf16.msra.mxu0 0
  %3639 = vmatprep.subr.bf16.mxu0 0
  %3640 = vmatpush1.bf16.msra.mxu0 0
  %3641 = vmatprep.subr.bf16.mxu0 0
  %3642 = vmatpush1.bf16.msra.mxu0 0
  %3643 = vmatprep.subr.bf16.mxu0 0
  %3644 = vmatpush1.bf16.msra.mxu0 0
  %3645 = vmatprep.subr.bf16.mxu0 0
  %3646 = vmatpush1.bf16.msra.mxu0 0
  %3647 = vmatprep.subr.bf16.mxu0 0
  %3648 = vmatpush1.bf16.msra.mxu0 0
  %3649 = vmatprep.subr.bf16.mxu0 0
  %3650 = vmatpush1.bf16.msra.mxu0 0
  %3651 = vmatprep.mubr.bf16.mxu0 0
  %3652 = vmatmul.mubr.bf16.gmra.mrb[0].mxu0 %v3517
  %v3653 = vpop.f32.mrb[0].mxu0
  %v3654 = vadd.f32 0.0, %v3653
  %v3655 = vpop.f32.mrb[0].mxu0
  %v3656 = vadd.f32 0.0, %v3655
  %v3657 = vpop.f32.mrb[0].mxu0
  %v3658 = vadd.f32 0.0, %v3657
  %v3659 = vpop.f32.mrb[0].mxu0
  %v3660 = vadd.f32 0.0, %v3659
  %3661 = vmatprep.mubr.bf16.mxu0 0
  %3662 = vmatmul.mubr.bf16.gmra.mrb[0].mxu0 %v3518
  %v3663 = vpop.f32.mrb[0].mxu0
  %v3664 = vadd.f32 0.0, %v3663
  %v3665 = vpop.f32.mrb[0].mxu0
  %v3666 = vadd.f32 0.0, %v3665
  %v3667 = vpop.f32.mrb[0].mxu0
  %v3668 = vadd.f32 0.0, %v3667
  %v3669 = vpop.f32.mrb[0].mxu0
  %v3670 = vadd.f32 0.0, %v3669
  %3671 = vmatprep.mubr.bf16.mxu0 0
  %3672 = vmatmul.mubr.bf16.gmra.mrb[0].mxu0 %v3519
  %v3673 = vpop.f32.mrb[0].mxu0
  %v3674 = vadd.f32 0.0, %v3673
  %v3675 = vpop.f32.mrb[0].mxu0
  %v3676 = vadd.f32 0.0, %v3675
  %v3677 = vpop.f32.mrb[0].mxu0
  %v3678 = vadd.f32 0.0, %v3677
  %v3679 = vpop.f32.mrb[0].mxu0
  %v3680 = vadd.f32 0.0, %v3679
  %3681 = vmatprep.mubr.bf16.mxu0 0
  %3682 = vmatmul.mubr.bf16.gmra.mrb[0].mxu0 %v3520
  %v3683 = vpop.f32.mrb[0].mxu0
  %v3684 = vadd.f32 0.0, %v3683
  %v3685 = vpop.f32.mrb[0].mxu0
  %v3686 = vadd.f32 0.0, %v3685
  %v3687 = vpop.f32.mrb[0].mxu0
  %v3688 = vadd.f32 0.0, %v3687
  %v3689 = vpop.f32.mrb[0].mxu0
  %v3690 = vadd.f32 0.0, %v3689
  %3691 = vmatprep.mubr.bf16.mxu0 0
  %3692 = vmatmul.mubr.bf16.gmra.mrb[0].mxu0 %v3521
  %v3693 = vpop.f32.mrb[0].mxu0
  %v3694 = vadd.f32 0.0, %v3693
  %v3695 = vpop.f32.mrb[0].mxu0
  %v3696 = vadd.f32 0.0, %v3695
  %v3697 = vpop.f32.mrb[0].mxu0
  %v3698 = vpop.f32.mrb[0].mxu0
  %3699 = vdwg.mxu0
  %v3700 = vadd.f32 %v3490, %v3654
  %v3701 = vadd.f32 %v3491, %v3656
  %v3702 = vadd.f32 %v3492, %v3658
  %v3703 = vadd.f32 %v3493, %v3660
  %v3704 = vadd.f32 %v3494, %v3664
  %v3705 = vadd.f32 %v3495, %v3666
  %v3706 = vadd.f32 %v3496, %v3668
  %v3707 = vadd.f32 %v3497, %v3670
  %v3708 = vadd.f32 %v3498, %v3674
  %v3709 = vadd.f32 %v3499, %v3676
  %v3710 = vadd.f32 %v3500, %v3678
  %v3711 = vadd.f32 %v3501, %v3680
  %v3712 = vadd.f32 %v3502, %v3684
  %v3713 = vadd.f32 %v3503, %v3686
  %v3714 = vadd.f32 %v3504, %v3688
  %v3715 = vadd.f32 %v3505, %v3690
  %v3716 = vadd.f32 %v3506, %v3694
  %v3717 = vadd.f32 %v3507, %v3696
  %v3718 = vld [vmem:[#allocation3 + $0xd] sm:$0xff]
  %v3719 = vld [vmem:[#allocation3 + $0x15] sm:$0xff]
  %v3720 = vld [vmem:[#allocation3 + $0x1d] sm:$0xff]
  %v3721 = vld [vmem:[#allocation3 + $0x25] sm:$0xff]
  %v3722 = vld [vmem:[#allocation3 + $0x2d] sm:$0xff]
  %v3723 = vld [vmem:[#allocation3 + $0x35] sm:$0xff]
  %v3724 = vld [vmem:[#allocation3 + $0x3d] sm:$0xff]
  %v3725 = vld [vmem:[#allocation3 + $0x45] sm:$0xff]
  %v3726 = vld [vmem:[#allocation3 + $0x4d] sm:$0xff]
  %v3727 = vpack.c.bf16 %v3719, %v3718
  %v3728 = vpack.c.bf16 %v3721, %v3720
  %v3729 = vpack.c.bf16 %v3723, %v3722
  %v3730 = vpack.c.bf16 %v3725, %v3724
  %v3731 = vpack.c.bf16 %v3726, %v3726
  %s3732 = scalar_lea.vmem %s3, 768
  %v3733 = vld [vmem:[%s3732] sm:$0xff]
  %v3734 = vld [vmem:[%s3732 + $0x8] sm:$0xff]
  %v3735 = vld [vmem:[%s3732 + $0x10] sm:$0xff]
  %v3736 = vld [vmem:[%s3732 + $0x18] sm:$0xff]
  %v3737 = vld [vmem:[%s3732 + $0x20] sm:$0xff]
  %v3738 = vld [vmem:[%s3732 + $0x28] sm:$0xff]
  %v3739 = vld [vmem:[%s3732 + $0x30] sm:$0xff]
  %v3740 = vld [vmem:[%s3732 + $0x38] sm:$0xff]
  %v3741 = vld [vmem:[%s3732 + $0x40] sm:$0xff]
  %v3742 = vld [vmem:[%s3732 + $0x48] sm:$0xff]
  %v3743 = vld [vmem:[%s3732 + $0x50] sm:$0xff]
  %v3744 = vld [vmem:[%s3732 + $0x58] sm:$0xff]
  %v3745 = vld [vmem:[%s3732 + $0x60] sm:$0xff]
  %v3746 = vld [vmem:[%s3732 + $0x68] sm:$0xff]
  %v3747 = vld [vmem:[%s3732 + $0x70] sm:$0xff]
  %v3748 = vld [vmem:[%s3732 + $0x78] sm:$0xff]
  %v3765 = vunpack.c.l.b16 %v3733
  %v3766 = vunpack.c.h.b16 %v3733
  %v3767 = vunpack.c.l.b16 %v3734
  %v3768 = vunpack.c.h.b16 %v3734
  %v3769 = vunpack.c.l.b16 %v3735
  %v3770 = vunpack.c.h.b16 %v3735
  %v3771 = vunpack.c.l.b16 %v3736
  %v3772 = vunpack.c.h.b16 %v3736
  %v3773 = vunpack.c.l.b16 %v3737
  %v3774 = vunpack.c.h.b16 %v3737
  %v3775 = vunpack.c.l.b16 %v3738
  %v3776 = vunpack.c.h.b16 %v3738
  %v3777 = vunpack.c.l.b16 %v3739
  %v3778 = vunpack.c.h.b16 %v3739
  %v3779 = vunpack.c.l.b16 %v3740
  %v3780 = vunpack.c.h.b16 %v3740
  %v3781 = vunpack.c.l.b16 %v3741
  %v3782 = vunpack.c.h.b16 %v3741
  %v3783 = vunpack.c.l.b16 %v3742
  %v3784 = vunpack.c.h.b16 %v3742
  %v3785 = vunpack.c.l.b16 %v3743
  %v3786 = vunpack.c.h.b16 %v3743
  %v3787 = vunpack.c.l.b16 %v3744
  %v3788 = vunpack.c.h.b16 %v3744
  %v3789 = vunpack.c.l.b16 %v3745
  %v3790 = vunpack.c.h.b16 %v3745
  %v3791 = vunpack.c.l.b16 %v3746
  %v3792 = vunpack.c.h.b16 %v3746
  %v3793 = vunpack.c.l.b16 %v3747
  %v3794 = vunpack.c.h.b16 %v3747
  %v3795 = vunpack.c.l.b16 %v3748
  %v3796 = vunpack.c.h.b16 %v3748
  %v3797 = vpack.c.b16 %v3767, %v3765
  %v3798 = vpack.c.b16 %v3768, %v3766
  %v3799 = vpack.c.b16 %v3771, %v3769
  %v3800 = vpack.c.b16 %v3772, %v3770
  %v3801 = vpack.c.b16 %v3775, %v3773
  %v3802 = vpack.c.b16 %v3776, %v3774
  %v3803 = vpack.c.b16 %v3779, %v3777
  %v3804 = vpack.c.b16 %v3780, %v3778
  %v3805 = vpack.c.b16 %v3783, %v3781
  %v3806 = vpack.c.b16 %v3784, %v3782
  %v3807 = vpack.c.b16 %v3787, %v3785
  %v3808 = vpack.c.b16 %v3788, %v3786
  %v3809 = vpack.c.b16 %v3791, %v3789
  %v3810 = vpack.c.b16 %v3792, %v3790
  %v3811 = vpack.c.b16 %v3795, %v3793
  %v3812 = vpack.c.b16 %v3796, %v3794
  %3829 = vmatprep.subr.bf16.mxu0 %v3798
  %3830 = vmatpush1.bf16.msra.mxu0 %v3797
  %3831 = vmatprep.subr.bf16.mxu0 %v3800
  %3832 = vmatpush1.bf16.msra.mxu0 %v3799
  %3833 = vmatprep.subr.bf16.mxu0 %v3802
  %3834 = vmatpush1.bf16.msra.mxu0 %v3801
  %3835 = vmatprep.subr.bf16.mxu0 %v3804
  %3836 = vmatpush1.bf16.msra.mxu0 %v3803
  %3837 = vmatprep.subr.bf16.mxu0 %v3806
  %3838 = vmatpush1.bf16.msra.mxu0 %v3805
  %3839 = vmatprep.subr.bf16.mxu0 %v3808
  %3840 = vmatpush1.bf16.msra.mxu0 %v3807
  %3841 = vmatprep.subr.bf16.mxu0 %v3810
  %3842 = vmatpush1.bf16.msra.mxu0 %v3809
  %3843 = vmatprep.subr.bf16.mxu0 %v3812
  %3844 = vmatpush1.bf16.msra.mxu0 %v3811
  %3845 = vmatprep.subr.bf16.mxu0 0
  %3846 = vmatpush1.bf16.msra.mxu0 0
  %3847 = vmatprep.subr.bf16.mxu0 0
  %3848 = vmatpush1.bf16.msra.mxu0 0
  %3849 = vmatprep.subr.bf16.mxu0 0
  %3850 = vmatpush1.bf16.msra.mxu0 0
  %3851 = vmatprep.subr.bf16.mxu0 0
  %3852 = vmatpush1.bf16.msra.mxu0 0
  %3853 = vmatprep.subr.bf16.mxu0 0
  %3854 = vmatpush1.bf16.msra.mxu0 0
  %3855 = vmatprep.subr.bf16.mxu0 0
  %3856 = vmatpush1.bf16.msra.mxu0 0
  %3857 = vmatprep.subr.bf16.mxu0 0
  %3858 = vmatpush1.bf16.msra.mxu0 0
  %3859 = vmatprep.subr.bf16.mxu0 0
  %3860 = vmatpush1.bf16.msra.mxu0 0
  %3861 = vmatprep.mubr.bf16.mxu0 0
  %3862 = vmatmul.mubr.bf16.gmra.mrb[0].mxu0 %v3727
  %v3863 = vpop.f32.mrb[0].mxu0
  %v3864 = vadd.f32 0.0, %v3863
  %v3865 = vpop.f32.mrb[0].mxu0
  %v3866 = vadd.f32 0.0, %v3865
  %v3867 = vpop.f32.mrb[0].mxu0
  %v3868 = vadd.f32 0.0, %v3867
  %v3869 = vpop.f32.mrb[0].mxu0
  %v3870 = vadd.f32 0.0, %v3869
  %3871 = vmatprep.mubr.bf16.mxu0 0
  %3872 = vmatmul.mubr.bf16.gmra.mrb[0].mxu0 %v3728
  %v3873 = vpop.f32.mrb[0].mxu0
  %v3874 = vadd.f32 0.0, %v3873
  %v3875 = vpop.f32.mrb[0].mxu0
  %v3876 = vadd.f32 0.0, %v3875
  %v3877 = vpop.f32.mrb[0].mxu0
  %v3878 = vadd.f32 0.0, %v3877
  %v3879 = vpop.f32.mrb[0].mxu0
  %v3880 = vadd.f32 0.0, %v3879
  %3881 = vmatprep.mubr.bf16.mxu0 0
  %3882 = vmatmul.mubr.bf16.gmra.mrb[0].mxu0 %v3729
  %v3883 = vpop.f32.mrb[0].mxu0
  %v3884 = vadd.f32 0.0, %v3883
  %v3885 = vpop.f32.mrb[0].mxu0
  %v3886 = vadd.f32 0.0, %v3885
  %v3887 = vpop.f32.mrb[0].mxu0
  %v3888 = vadd.f32 0.0, %v3887
  %v3889 = vpop.f32.mrb[0].mxu0
  %v3890 = vadd.f32 0.0, %v3889
  %3891 = vmatprep.mubr.bf16.mxu0 0
  %3892 = vmatmul.mubr.bf16.gmra.mrb[0].mxu0 %v3730
  %v3893 = vpop.f32.mrb[0].mxu0
  %v3894 = vadd.f32 0.0, %v3893
  %v3895 = vpop.f32.mrb[0].mxu0
  %v3896 = vadd.f32 0.0, %v3895
  %v3897 = vpop.f32.mrb[0].mxu0
  %v3898 = vadd.f32 0.0, %v3897
  %v3899 = vpop.f32.mrb[0].mxu0
  %v3900 = vadd.f32 0.0, %v3899
  %3901 = vmatprep.mubr.bf16.mxu0 0
  %3902 = vmatmul.mubr.bf16.gmra.mrb[0].mxu0 %v3731
  %v3903 = vpop.f32.mrb[0].mxu0
  %v3904 = vadd.f32 0.0, %v3903
  %v3905 = vpop.f32.mrb[0].mxu0
  %v3906 = vadd.f32 0.0, %v3905
  %v3907 = vpop.f32.mrb[0].mxu0
  %v3908 = vpop.f32.mrb[0].mxu0
  %3909 = vdwg.mxu0
  %v3910 = vadd.f32 %v3700, %v3864
  %v3911 = vadd.f32 %v3701, %v3866
  %v3912 = vadd.f32 %v3702, %v3868
  %v3913 = vadd.f32 %v3703, %v3870
  %v3914 = vadd.f32 %v3704, %v3874
  %v3915 = vadd.f32 %v3705, %v3876
  %v3916 = vadd.f32 %v3706, %v3878
  %v3917 = vadd.f32 %v3707, %v3880
  %v3918 = vadd.f32 %v3708, %v3884
  %v3919 = vadd.f32 %v3709, %v3886
  %v3920 = vadd.f32 %v3710, %v3888
  %v3921 = vadd.f32 %v3711, %v3890
  %v3922 = vadd.f32 %v3712, %v3894
  %v3923 = vadd.f32 %v3713, %v3896
  %v3924 = vadd.f32 %v3714, %v3898
  %v3925 = vadd.f32 %v3715, %v3900
  %v3926 = vadd.f32 %v3716, %v3904
  %v3927 = vadd.f32 %v3717, %v3906
  %v3928 = vld [vmem:[#allocation3 + $0xe] sm:$0xff]
  %v3929 = vld [vmem:[#allocation3 + $0x16] sm:$0xff]
  %v3930 = vld [vmem:[#allocation3 + $0x1e] sm:$0xff]
  %v3931 = vld [vmem:[#allocation3 + $0x26] sm:$0xff]
  %v3932 = vld [vmem:[#allocation3 + $0x2e] sm:$0xff]
  %v3933 = vld [vmem:[#allocation3 + $0x36] sm:$0xff]
  %v3934 = vld [vmem:[#allocation3 + $0x3e] sm:$0xff]
  %v3935 = vld [vmem:[#allocation3 + $0x46] sm:$0xff]
  %v3936 = vld [vmem:[#allocation3 + $0x4e] sm:$0xff]
  %v3937 = vpack.c.bf16 %v3929, %v3928
  %v3938 = vpack.c.bf16 %v3931, %v3930
  %v3939 = vpack.c.bf16 %v3933, %v3932
  %v3940 = vpack.c.bf16 %v3935, %v3934
  %v3941 = vpack.c.bf16 %v3936, %v3936
  %s3942 = scalar_lea.vmem %s3, 896
  %v3943 = vld [vmem:[%s3942] sm:$0xff]
  %v3944 = vld [vmem:[%s3942 + $0x8] sm:$0xff]
  %v3945 = vld [vmem:[%s3942 + $0x10] sm:$0xff]
  %v3946 = vld [vmem:[%s3942 + $0x18] sm:$0xff]
  %v3947 = vld [vmem:[%s3942 + $0x20] sm:$0xff]
  %v3948 = vld [vmem:[%s3942 + $0x28] sm:$0xff]
  %v3949 = vld [vmem:[%s3942 + $0x30] sm:$0xff]
  %v3950 = vld [vmem:[%s3942 + $0x38] sm:$0xff]
  %v3951 = vld [vmem:[%s3942 + $0x40] sm:$0xff]
  %v3952 = vld [vmem:[%s3942 + $0x48] sm:$0xff]
  %v3953 = vld [vmem:[%s3942 + $0x50] sm:$0xff]
  %v3954 = vld [vmem:[%s3942 + $0x58] sm:$0xff]
  %v3955 = vld [vmem:[%s3942 + $0x60] sm:$0xff]
  %v3956 = vld [vmem:[%s3942 + $0x68] sm:$0xff]
  %v3957 = vld [vmem:[%s3942 + $0x70] sm:$0xff]
  %v3958 = vld [vmem:[%s3942 + $0x78] sm:$0xff]
  %v3975 = vunpack.c.l.b16 %v3943
  %v3976 = vunpack.c.h.b16 %v3943
  %v3977 = vunpack.c.l.b16 %v3944
  %v3978 = vunpack.c.h.b16 %v3944
  %v3979 = vunpack.c.l.b16 %v3945
  %v3980 = vunpack.c.h.b16 %v3945
  %v3981 = vunpack.c.l.b16 %v3946
  %v3982 = vunpack.c.h.b16 %v3946
  %v3983 = vunpack.c.l.b16 %v3947
  %v3984 = vunpack.c.h.b16 %v3947
  %v3985 = vunpack.c.l.b16 %v3948
  %v3986 = vunpack.c.h.b16 %v3948
  %v3987 = vunpack.c.l.b16 %v3949
  %v3988 = vunpack.c.h.b16 %v3949
  %v3989 = vunpack.c.l.b16 %v3950
  %v3990 = vunpack.c.h.b16 %v3950
  %v3991 = vunpack.c.l.b16 %v3951
  %v3992 = vunpack.c.h.b16 %v3951
  %v3993 = vunpack.c.l.b16 %v3952
  %v3994 = vunpack.c.h.b16 %v3952
  %v3995 = vunpack.c.l.b16 %v3953
  %v3996 = vunpack.c.h.b16 %v3953
  %v3997 = vunpack.c.l.b16 %v3954
  %v3998 = vunpack.c.h.b16 %v3954
  %v3999 = vunpack.c.l.b16 %v3955
  %v4000 = vunpack.c.h.b16 %v3955
  %v4001 = vunpack.c.l.b16 %v3956
  %v4002 = vunpack.c.h.b16 %v3956
  %v4003 = vunpack.c.l.b16 %v3957
  %v4004 = vunpack.c.h.b16 %v3957
  %v4005 = vunpack.c.l.b16 %v3958
  %v4006 = vunpack.c.h.b16 %v3958
  %v4007 = vpack.c.b16 %v3977, %v3975
  %v4008 = vpack.c.b16 %v3978, %v3976
  %v4009 = vpack.c.b16 %v3981, %v3979
  %v4010 = vpack.c.b16 %v3982, %v3980
  %v4011 = vpack.c.b16 %v3985, %v3983
  %v4012 = vpack.c.b16 %v3986, %v3984
  %v4013 = vpack.c.b16 %v3989, %v3987
  %v4014 = vpack.c.b16 %v3990, %v3988
  %v4015 = vpack.c.b16 %v3993, %v3991
  %v4016 = vpack.c.b16 %v3994, %v3992
  %v4017 = vpack.c.b16 %v3997, %v3995
  %v4018 = vpack.c.b16 %v3998, %v3996
  %v4019 = vpack.c.b16 %v4001, %v3999
  %v4020 = vpack.c.b16 %v4002, %v4000
  %v4021 = vpack.c.b16 %v4005, %v4003
  %v4022 = vpack.c.b16 %v4006, %v4004
  %4039 = vmatprep.subr.bf16.mxu0 %v4008
  %4040 = vmatpush1.bf16.msra.mxu0 %v4007
  %4041 = vmatprep.subr.bf16.mxu0 %v4010
  %4042 = vmatpush1.bf16.msra.mxu0 %v4009
  %4043 = vmatprep.subr.bf16.mxu0 %v4012
  %4044 = vmatpush1.bf16.msra.mxu0 %v4011
  %4045 = vmatprep.subr.bf16.mxu0 %v4014
  %4046 = vmatpush1.bf16.msra.mxu0 %v4013
  %4047 = vmatprep.subr.bf16.mxu0 %v4016
  %4048 = vmatpush1.bf16.msra.mxu0 %v4015
  %4049 = vmatprep.subr.bf16.mxu0 %v4018
  %4050 = vmatpush1.bf16.msra.mxu0 %v4017
  %4051 = vmatprep.subr.bf16.mxu0 %v4020
  %4052 = vmatpush1.bf16.msra.mxu0 %v4019
  %4053 = vmatprep.subr.bf16.mxu0 %v4022
  %4054 = vmatpush1.bf16.msra.mxu0 %v4021
  %4055 = vmatprep.subr.bf16.mxu0 0
  %4056 = vmatpush1.bf16.msra.mxu0 0
  %4057 = vmatprep.subr.bf16.mxu0 0
  %4058 = vmatpush1.bf16.msra.mxu0 0
  %4059 = vmatprep.subr.bf16.mxu0 0
  %4060 = vmatpush1.bf16.msra.mxu0 0
  %4061 = vmatprep.subr.bf16.mxu0 0
  %4062 = vmatpush1.bf16.msra.mxu0 0
  %4063 = vmatprep.subr.bf16.mxu0 0
  %4064 = vmatpush1.bf16.msra.mxu0 0
  %4065 = vmatprep.subr.bf16.mxu0 0
  %4066 = vmatpush1.bf16.msra.mxu0 0
  %4067 = vmatprep.subr.bf16.mxu0 0
  %4068 = vmatpush1.bf16.msra.mxu0 0
  %4069 = vmatprep.subr.bf16.mxu0 0
  %4070 = vmatpush1.bf16.msra.mxu0 0
  %4071 = vmatprep.mubr.bf16.mxu0 0
  %4072 = vmatmul.mubr.bf16.gmra.mrb[0].mxu0 %v3937
  %v4073 = vpop.f32.mrb[0].mxu0
  %v4074 = vadd.f32 0.0, %v4073
  %v4075 = vpop.f32.mrb[0].mxu0
  %v4076 = vadd.f32 0.0, %v4075
  %v4077 = vpop.f32.mrb[0].mxu0
  %v4078 = vadd.f32 0.0, %v4077
  %v4079 = vpop.f32.mrb[0].mxu0
  %v4080 = vadd.f32 0.0, %v4079
  %4081 = vmatprep.mubr.bf16.mxu0 0
  %4082 = vmatmul.mubr.bf16.gmra.mrb[0].mxu0 %v3938
  %v4083 = vpop.f32.mrb[0].mxu0
  %v4084 = vadd.f32 0.0, %v4083
  %v4085 = vpop.f32.mrb[0].mxu0
  %v4086 = vadd.f32 0.0, %v4085
  %v4087 = vpop.f32.mrb[0].mxu0
  %v4088 = vadd.f32 0.0, %v4087
  %v4089 = vpop.f32.mrb[0].mxu0
  %v4090 = vadd.f32 0.0, %v4089
  %4091 = vmatprep.mubr.bf16.mxu0 0
  %4092 = vmatmul.mubr.bf16.gmra.mrb[0].mxu0 %v3939
  %v4093 = vpop.f32.mrb[0].mxu0
  %v4094 = vadd.f32 0.0, %v4093
  %v4095 = vpop.f32.mrb[0].mxu0
  %v4096 = vadd.f32 0.0, %v4095
  %v4097 = vpop.f32.mrb[0].mxu0
  %v4098 = vadd.f32 0.0, %v4097
  %v4099 = vpop.f32.mrb[0].mxu0
  %v4100 = vadd.f32 0.0, %v4099
  %4101 = vmatprep.mubr.bf16.mxu0 0
  %4102 = vmatmul.mubr.bf16.gmra.mrb[0].mxu0 %v3940
  %v4103 = vpop.f32.mrb[0].mxu0
  %v4104 = vadd.f32 0.0, %v4103
  %v4105 = vpop.f32.mrb[0].mxu0
  %v4106 = vadd.f32 0.0, %v4105
  %v4107 = vpop.f32.mrb[0].mxu0
  %v4108 = vadd.f32 0.0, %v4107
  %v4109 = vpop.f32.mrb[0].mxu0
  %v4110 = vadd.f32 0.0, %v4109
  %4111 = vmatprep.mubr.bf16.mxu0 0
  %4112 = vmatmul.mubr.bf16.gmra.mrb[0].mxu0 %v3941
  %v4113 = vpop.f32.mrb[0].mxu0
  %v4114 = vadd.f32 0.0, %v4113
  %v4115 = vpop.f32.mrb[0].mxu0
  %v4116 = vadd.f32 0.0, %v4115
  %v4117 = vpop.f32.mrb[0].mxu0
  %v4118 = vpop.f32.mrb[0].mxu0
  %4119 = vdwg.mxu0
  %v4120 = vadd.f32 %v3910, %v4074
  %v4121 = vadd.f32 %v3911, %v4076
  %v4122 = vadd.f32 %v3912, %v4078
  %v4123 = vadd.f32 %v3913, %v4080
  %v4124 = vadd.f32 %v3914, %v4084
  %v4125 = vadd.f32 %v3915, %v4086
  %v4126 = vadd.f32 %v3916, %v4088
  %v4127 = vadd.f32 %v3917, %v4090
  %v4128 = vadd.f32 %v3918, %v4094
  %v4129 = vadd.f32 %v3919, %v4096
  %v4130 = vadd.f32 %v3920, %v4098
  %v4131 = vadd.f32 %v3921, %v4100
  %v4132 = vadd.f32 %v3922, %v4104
  %v4133 = vadd.f32 %v3923, %v4106
  %v4134 = vadd.f32 %v3924, %v4108
  %v4135 = vadd.f32 %v3925, %v4110
  %v4136 = vadd.f32 %v3926, %v4114
  %v4137 = vadd.f32 %v3927, %v4116
  %v4138 = vld [vmem:[#allocation3 + $0xf] sm:$0xff]
  %v4139 = vld [vmem:[#allocation3 + $0x17] sm:$0xff]
  %v4140 = vld [vmem:[#allocation3 + $0x1f] sm:$0xff]
  %v4141 = vld [vmem:[#allocation3 + $0x27] sm:$0xff]
  %v4142 = vld [vmem:[#allocation3 + $0x2f] sm:$0xff]
  %v4143 = vld [vmem:[#allocation3 + $0x37] sm:$0xff]
  %v4144 = vld [vmem:[#allocation3 + $0x3f] sm:$0xff]
  %v4145 = vld [vmem:[#allocation3 + $0x47] sm:$0xff]
  %v4146 = vld [vmem:[#allocation3 + $0x4f] sm:$0xff]
  %v4147 = vpack.c.bf16 %v4139, %v4138
  %v4148 = vpack.c.bf16 %v4141, %v4140
  %v4149 = vpack.c.bf16 %v4143, %v4142
  %v4150 = vpack.c.bf16 %v4145, %v4144
  %v4151 = vpack.c.bf16 %v4146, %v4146
  %s4152 = scalar_lea.vmem %s3, 1024
  %v4153 = vld [vmem:[%s4152] sm:$0xff]
  %v4154 = vld [vmem:[%s4152 + $0x8] sm:$0xff]
  %v4155 = vld [vmem:[%s4152 + $0x10] sm:$0xff]
  %v4156 = vld [vmem:[%s4152 + $0x18] sm:$0xff]
  %v4157 = vld [vmem:[%s4152 + $0x20] sm:$0xff]
  %v4158 = vld [vmem:[%s4152 + $0x28] sm:$0xff]
  %v4159 = vld [vmem:[%s4152 + $0x30] sm:$0xff]
  %v4160 = vld [vmem:[%s4152 + $0x38] sm:$0xff]
  %v4161 = vld [vmem:[%s4152 + $0x40] sm:$0xff]
  %v4162 = vld [vmem:[%s4152 + $0x48] sm:$0xff]
  %v4163 = vld [vmem:[%s4152 + $0x50] sm:$0xff]
  %v4164 = vld [vmem:[%s4152 + $0x58] sm:$0xff]
  %v4165 = vld [vmem:[%s4152 + $0x60] sm:$0xff]
  %v4166 = vld [vmem:[%s4152 + $0x68] sm:$0xff]
  %v4167 = vld [vmem:[%s4152 + $0x70] sm:$0xff]
  %v4168 = vld [vmem:[%s4152 + $0x78] sm:$0xff]
  %v4185 = vunpack.c.l.b16 %v4153
  %v4186 = vunpack.c.h.b16 %v4153
  %v4187 = vunpack.c.l.b16 %v4154
  %v4188 = vunpack.c.h.b16 %v4154
  %v4189 = vunpack.c.l.b16 %v4155
  %v4190 = vunpack.c.h.b16 %v4155
  %v4191 = vunpack.c.l.b16 %v4156
  %v4192 = vunpack.c.h.b16 %v4156
  %v4193 = vunpack.c.l.b16 %v4157
  %v4194 = vunpack.c.h.b16 %v4157
  %v4195 = vunpack.c.l.b16 %v4158
  %v4196 = vunpack.c.h.b16 %v4158
  %v4197 = vunpack.c.l.b16 %v4159
  %v4198 = vunpack.c.h.b16 %v4159
  %v4199 = vunpack.c.l.b16 %v4160
  %v4200 = vunpack.c.h.b16 %v4160
  %v4201 = vunpack.c.l.b16 %v4161
  %v4202 = vunpack.c.h.b16 %v4161
  %v4203 = vunpack.c.l.b16 %v4162
  %v4204 = vunpack.c.h.b16 %v4162
  %v4205 = vunpack.c.l.b16 %v4163
  %v4206 = vunpack.c.h.b16 %v4163
  %v4207 = vunpack.c.l.b16 %v4164
  %v4208 = vunpack.c.h.b16 %v4164
  %v4209 = vunpack.c.l.b16 %v4165
  %v4210 = vunpack.c.h.b16 %v4165
  %v4211 = vunpack.c.l.b16 %v4166
  %v4212 = vunpack.c.h.b16 %v4166
  %v4213 = vunpack.c.l.b16 %v4167
  %v4214 = vunpack.c.h.b16 %v4167
  %v4215 = vunpack.c.l.b16 %v4168
  %v4216 = vunpack.c.h.b16 %v4168
  %v4217 = vpack.c.b16 %v4187, %v4185
  %v4218 = vpack.c.b16 %v4188, %v4186
  %v4219 = vpack.c.b16 %v4191, %v4189
  %v4220 = vpack.c.b16 %v4192, %v4190
  %v4221 = vpack.c.b16 %v4195, %v4193
  %v4222 = vpack.c.b16 %v4196, %v4194
  %v4223 = vpack.c.b16 %v4199, %v4197
  %v4224 = vpack.c.b16 %v4200, %v4198
  %v4225 = vpack.c.b16 %v4203, %v4201
  %v4226 = vpack.c.b16 %v4204, %v4202
  %v4227 = vpack.c.b16 %v4207, %v4205
  %v4228 = vpack.c.b16 %v4208, %v4206
  %v4229 = vpack.c.b16 %v4211, %v4209
  %v4230 = vpack.c.b16 %v4212, %v4210
  %v4231 = vpack.c.b16 %v4215, %v4213
  %v4232 = vpack.c.b16 %v4216, %v4214
  %4249 = vmatprep.subr.bf16.mxu0 %v4218
  %4250 = vmatpush1.bf16.msra.mxu0 %v4217
  %4251 = vmatprep.subr.bf16.mxu0 %v4220
  %4252 = vmatpush1.bf16.msra.mxu0 %v4219
  %4253 = vmatprep.subr.bf16.mxu0 %v4222
  %4254 = vmatpush1.bf16.msra.mxu0 %v4221
  %4255 = vmatprep.subr.bf16.mxu0 %v4224
  %4256 = vmatpush1.bf16.msra.mxu0 %v4223
  %4257 = vmatprep.subr.bf16.mxu0 %v4226
  %4258 = vmatpush1.bf16.msra.mxu0 %v4225
  %4259 = vmatprep.subr.bf16.mxu0 %v4228
  %4260 = vmatpush1.bf16.msra.mxu0 %v4227
  %4261 = vmatprep.subr.bf16.mxu0 %v4230
  %4262 = vmatpush1.bf16.msra.mxu0 %v4229
  %4263 = vmatprep.subr.bf16.mxu0 %v4232
  %4264 = vmatpush1.bf16.msra.mxu0 %v4231
  %4265 = vmatprep.subr.bf16.mxu0 0
  %4266 = vmatpush1.bf16.msra.mxu0 0
  %4267 = vmatprep.subr.bf16.mxu0 0
  %4268 = vmatpush1.bf16.msra.mxu0 0
  %4269 = vmatprep.subr.bf16.mxu0 0
  %4270 = vmatpush1.bf16.msra.mxu0 0
  %4271 = vmatprep.subr.bf16.mxu0 0
  %4272 = vmatpush1.bf16.msra.mxu0 0
  %4273 = vmatprep.subr.bf16.mxu0 0
  %4274 = vmatpush1.bf16.msra.mxu0 0
  %4275 = vmatprep.subr.bf16.mxu0 0
  %4276 = vmatpush1.bf16.msra.mxu0 0
  %4277 = vmatprep.subr.bf16.mxu0 0
  %4278 = vmatpush1.bf16.msra.mxu0 0
  %4279 = vmatprep.subr.bf16.mxu0 0
  %4280 = vmatpush1.bf16.msra.mxu0 0
  %4281 = vmatprep.mubr.bf16.mxu0 0
  %4282 = vmatmul.mubr.bf16.gmra.mrb[0].mxu0 %v4147
  %v4283 = vpop.f32.mrb[0].mxu0
  %v4284 = vadd.f32 0.0, %v4283
  %v4285 = vpop.f32.mrb[0].mxu0
  %v4286 = vadd.f32 0.0, %v4285
  %v4287 = vpop.f32.mrb[0].mxu0
  %v4288 = vadd.f32 0.0, %v4287
  %v4289 = vpop.f32.mrb[0].mxu0
  %v4290 = vadd.f32 0.0, %v4289
  %4291 = vmatprep.mubr.bf16.mxu0 0
  %4292 = vmatmul.mubr.bf16.gmra.mrb[0].mxu0 %v4148
  %v4293 = vpop.f32.mrb[0].mxu0
  %v4294 = vadd.f32 0.0, %v4293
  %v4295 = vpop.f32.mrb[0].mxu0
  %v4296 = vadd.f32 0.0, %v4295
  %v4297 = vpop.f32.mrb[0].mxu0
  %v4298 = vadd.f32 0.0, %v4297
  %v4299 = vpop.f32.mrb[0].mxu0
  %v4300 = vadd.f32 0.0, %v4299
  %4301 = vmatprep.mubr.bf16.mxu0 0
  %4302 = vmatmul.mubr.bf16.gmra.mrb[0].mxu0 %v4149
  %v4303 = vpop.f32.mrb[0].mxu0
  %v4304 = vadd.f32 0.0, %v4303
  %v4305 = vpop.f32.mrb[0].mxu0
  %v4306 = vadd.f32 0.0, %v4305
  %v4307 = vpop.f32.mrb[0].mxu0
  %v4308 = vadd.f32 0.0, %v4307
  %v4309 = vpop.f32.mrb[0].mxu0
  %v4310 = vadd.f32 0.0, %v4309
  %4311 = vmatprep.mubr.bf16.mxu0 0
  %4312 = vmatmul.mubr.bf16.gmra.mrb[0].mxu0 %v4150
  %v4313 = vpop.f32.mrb[0].mxu0
  %v4314 = vadd.f32 0.0, %v4313
  %v4315 = vpop.f32.mrb[0].mxu0
  %v4316 = vadd.f32 0.0, %v4315
  %v4317 = vpop.f32.mrb[0].mxu0
  %v4318 = vadd.f32 0.0, %v4317
  %v4319 = vpop.f32.mrb[0].mxu0
  %v4320 = vadd.f32 0.0, %v4319
  %4321 = vmatprep.mubr.bf16.mxu0 0
  %4322 = vmatmul.mubr.bf16.gmra.mrb[0].mxu0 %v4151
  %v4323 = vpop.f32.mrb[0].mxu0
  %v4324 = vadd.f32 0.0, %v4323
  %v4325 = vpop.f32.mrb[0].mxu0
  %v4326 = vadd.f32 0.0, %v4325
  %v4327 = vpop.f32.mrb[0].mxu0
  %v4328 = vpop.f32.mrb[0].mxu0
  %4329 = vdwg.mxu0
  %v4330 = vadd.f32 %v4120, %v4284
  %v4331 = vadd.f32 %v4121, %v4286
  %v4332 = vadd.f32 %v4122, %v4288
  %v4333 = vadd.f32 %v4123, %v4290
  %v4334 = vadd.f32 %v4124, %v4294
  %v4335 = vadd.f32 %v4125, %v4296
  %v4336 = vadd.f32 %v4126, %v4298
  %v4337 = vadd.f32 %v4127, %v4300
  %v4338 = vadd.f32 %v4128, %v4304
  %v4339 = vadd.f32 %v4129, %v4306
  %v4340 = vadd.f32 %v4130, %v4308
  %v4341 = vadd.f32 %v4131, %v4310
  %v4342 = vadd.f32 %v4132, %v4314
  %v4343 = vadd.f32 %v4133, %v4316
  %v4344 = vadd.f32 %v4134, %v4318
  %v4345 = vadd.f32 %v4135, %v4320
  %v4346 = vadd.f32 %v4136, %v4324
  %v4347 = vadd.f32 %v4137, %v4326
  %v4348 = vld [vmem:[%s9] sm:$0x1]
  %v4349 = vld [vmem:[%s10] sm:$0x1]
  %v4350 = vld [vmem:[%s13] sm:$0xff]
  %v4351 = vld [vmem:[%s13 + $0x8] sm:$0xff]
  %v4352 = vld [vmem:[%s13 + $0x10] sm:$0xff]
  %v4353 = vld [vmem:[%s13 + $0x18] sm:$0xff]
  %v4354 = vld [vmem:[%s13 + $0x20] sm:$0xff]
  %v4355 = vld [vmem:[%s13 + $0x28] sm:$0xff]
  %v4356 = vld [vmem:[%s13 + $0x30] sm:$0xff]
  %v4357 = vld [vmem:[%s13 + $0x38] sm:$0xff]
  %v4358 = vld [vmem:[%s13 + $0x40] sm:$0xff]
  %v4359 = vld [vmem:[%s13 + $0x48] sm:$0xff]
  %v4360 = vld [vmem:[%s13 + $0x50] sm:$0xff]
  %v4361 = vld [vmem:[%s13 + $0x58] sm:$0xff]
  %v4362 = vld [vmem:[%s13 + $0x60] sm:$0xff]
  %v4363 = vld [vmem:[%s13 + $0x68] sm:$0xff]
  %v4364 = vld [vmem:[%s13 + $0x70] sm:$0xff]
  %v4365 = vld [vmem:[%s13 + $0x78] sm:$0xff]
  %v4366 = vld [vmem:[%s13 + $0x80] sm:$0xff]
  %v4367 = vld [vmem:[%s13 + $0x88] sm:$0xff]
  %v4368 = vld [vmem:[%s13 + $0x90] sm:$0xff]
  %v4369 = vld [vmem:[%s13 + $0x98] sm:$0xff]
  %v4370 = vld [vmem:[%s13 + $0xa0] sm:$0xff]
  %v4371 = vld [vmem:[%s13 + $0xa8] sm:$0xff]
  %v4372 = vld [vmem:[%s13 + $0xb0] sm:$0xff]
  %v4373 = vld [vmem:[%s13 + $0xb8] sm:$0xff]
  %v4374 = vld [vmem:[%s13 + $0xc0] sm:$0xff]
  %v4375 = vld [vmem:[%s13 + $0xc8] sm:$0xff]
  %v4376 = vld [vmem:[%s13 + $0xd0] sm:$0xff]
  %v4377 = vld [vmem:[%s13 + $0xd8] sm:$0xff]
  %v4378 = vld [vmem:[%s13 + $0xe0] sm:$0xff]
  %v4379 = vld [vmem:[%s13 + $0xe8] sm:$0xff]
  %v4380 = vld [vmem:[%s13 + $0xf0] sm:$0xff]
  %v4381 = vld [vmem:[%s13 + $0xf8] sm:$0xff]
  %v4382 = vld [vmem:[%s14] sm:$0xff]
  %v4383 = vld [vmem:[%s14 + $0x8] sm:$0xff]
  %v4384 = vld [vmem:[%s14 + $0x10] sm:$0xff]
  %v4385 = vld [vmem:[%s14 + $0x18] sm:$0xff]
  %v4386 = vsel %vm667, %v4330, 0.0
  %v4387 = vsel %vm667, %v4331, 0.0
  %v4388 = vsel %vm668, %v4332, 0.0
  %v4389 = vsel %vm668, %v4333, 0.0
  %v4390 = vsel %vm669, %v4334, 0.0
  %v4391 = vsel %vm669, %v4335, 0.0
  %v4392 = vsel %vm670, %v4336, 0.0
  %v4393 = vsel %vm670, %v4337, 0.0
  %v4394 = vsel %vm671, %v4338, 0.0
  %v4395 = vsel %vm671, %v4339, 0.0
  %v4396 = vsel %vm672, %v4340, 0.0
  %v4397 = vsel %vm672, %v4341, 0.0
  %v4398 = vsel %vm673, %v4342, 0.0
  %v4399 = vsel %vm673, %v4343, 0.0
  %v4400 = vsel %vm674, %v4344, 0.0
  %v4401 = vsel %vm674, %v4345, 0.0
  %v4402 = vsel %vm675, %v4346, 0.0
  %v4403 = vsel %vm675, %v4347, 0.0
  %v4404 = vadd.f32 %v4386, %v4388
  %v4405 = vadd.f32 %v4404, %v4390
  %v4406 = vadd.f32 %v4405, %v4392
  %v4407 = vadd.f32 %v4406, %v4394
  %v4408 = vadd.f32 %v4407, %v4396
  %v4409 = vadd.f32 %v4408, %v4398
  %v4410 = vadd.f32 %v4409, %v4400
  %v4411 = vadd.f32 %v4410, %v4402
  %v4412 = vrot.slane %v4411, 4
  %v4413 = vadd.f32 %v4411, %v4412
  %v4414 = vrot.slane %v4413, 2
  %v4415 = vadd.f32 %v4413, %v4414
  %v4416 = vrot.slane %v4415, 1
  %v4417 = vadd.f32 %v4415, %v4416
  %v4418 = vadd.f32 %v4387, %v4389
  %v4419 = vadd.f32 %v4418, %v4391
  %v4420 = vadd.f32 %v4419, %v4393
  %v4421 = vadd.f32 %v4420, %v4395
  %v4422 = vadd.f32 %v4421, %v4397
  %v4423 = vadd.f32 %v4422, %v4399
  %v4424 = vadd.f32 %v4423, %v4401
  %v4425 = vadd.f32 %v4424, %v4403
  %v4426 = vrot.slane %v4425, 4
  %v4427 = vadd.f32 %v4425, %v4426
  %v4428 = vrot.slane %v4427, 2
  %v4429 = vadd.f32 %v4427, %v4428
  %v4430 = vrot.slane %v4429, 1
  %v4431 = vadd.f32 %v4429, %v4430
  %v4432 = vmul.f32 %v4386, %v4386
  %v4433 = vmul.f32 %v4387, %v4387
  %v4434 = vmul.f32 %v4388, %v4388
  %v4435 = vmul.f32 %v4389, %v4389
  %v4436 = vmul.f32 %v4390, %v4390
  %v4437 = vmul.f32 %v4391, %v4391
  %v4438 = vmul.f32 %v4392, %v4392
  %v4439 = vmul.f32 %v4393, %v4393
  %v4440 = vmul.f32 %v4394, %v4394
  %v4441 = vmul.f32 %v4395, %v4395
  %v4442 = vmul.f32 %v4396, %v4396
  %v4443 = vmul.f32 %v4397, %v4397
  %v4444 = vmul.f32 %v4398, %v4398
  %v4445 = vmul.f32 %v4399, %v4399
  %v4446 = vmul.f32 %v4400, %v4400
  %v4447 = vmul.f32 %v4401, %v4401
  %v4448 = vmul.f32 %v4402, %v4402
  %v4449 = vmul.f32 %v4403, %v4403
  %v4450 = vadd.f32 %v4432, %v4434
  %v4451 = vadd.f32 %v4450, %v4436
  %v4452 = vadd.f32 %v4451, %v4438
  %v4453 = vadd.f32 %v4452, %v4440
  %v4454 = vadd.f32 %v4453, %v4442
  %v4455 = vadd.f32 %v4454, %v4444
  %v4456 = vadd.f32 %v4455, %v4446
  %v4457 = vadd.f32 %v4456, %v4448
  %v4458 = vrot.slane %v4457, 4
  %v4459 = vadd.f32 %v4457, %v4458
  %v4460 = vrot.slane %v4459, 2
  %v4461 = vadd.f32 %v4459, %v4460
  %v4462 = vrot.slane %v4461, 1
  %v4463 = vadd.f32 %v4461, %v4462
  %v4464 = vadd.f32 %v4433, %v4435
  %v4465 = vadd.f32 %v4464, %v4437
  %v4466 = vadd.f32 %v4465, %v4439
  %v4467 = vadd.f32 %v4466, %v4441
  %v4468 = vadd.f32 %v4467, %v4443
  %v4469 = vadd.f32 %v4468, %v4445
  %v4470 = vadd.f32 %v4469, %v4447
  %v4471 = vadd.f32 %v4470, %v4449
  %v4472 = vrot.slane %v4471, 4
  %v4473 = vadd.f32 %v4471, %v4472
  %v4474 = vrot.slane %v4473, 2
  %v4475 = vadd.f32 %v4473, %v4474
  %v4476 = vrot.slane %v4475, 1
  %v4477 = vadd.f32 %v4475, %v4476
  %4478 = vmatprep.subr.mxu0 0.0
  %4479 = vmatpush1.msra.mxu0 %v4350
  %4480 = vmatprep.subr.mxu0 0.0
  %4481 = vmatpush1.msra.mxu0 %v4351
  %4482 = vmatprep.subr.mxu0 0.0
  %4483 = vmatpush1.msra.mxu0 %v4352
  %4484 = vmatprep.subr.mxu0 0.0
  %4485 = vmatpush1.msra.mxu0 %v4353
  %4486 = vmatprep.subr.mxu0 0.0
  %4487 = vmatpush1.msra.mxu0 %v4354
  %4488 = vmatprep.subr.mxu0 0.0
  %4489 = vmatpush1.msra.mxu0 %v4355
  %4490 = vmatprep.subr.mxu0 0.0
  %4491 = vmatpush1.msra.mxu0 %v4356
  %4492 = vmatprep.subr.mxu0 0.0
  %4493 = vmatpush1.msra.mxu0 %v4357
  %4494 = vmatprep.subr.mxu0 0.0
  %4495 = vmatpush1.msra.mxu0 %v4358
  %4496 = vmatprep.subr.mxu0 0.0
  %4497 = vmatpush1.msra.mxu0 %v4359
  %4498 = vmatprep.subr.mxu0 0.0
  %4499 = vmatpush1.msra.mxu0 %v4360
  %4500 = vmatprep.subr.mxu0 0.0
  %4501 = vmatpush1.msra.mxu0 %v4361
  %4502 = vmatprep.subr.mxu0 0.0
  %4503 = vmatpush1.msra.mxu0 %v4362
  %4504 = vmatprep.subr.mxu0 0.0
  %4505 = vmatpush1.msra.mxu0 %v4363
  %4506 = vmatprep.subr.mxu0 0.0
  %4507 = vmatpush1.msra.mxu0 %v4364
  %4508 = vmatprep.subr.mxu0 0.0
  %4509 = vmatpush1.msra.mxu0 %v4365
  %4510 = vmatprep.subr.mxu0 0.0
  %4511 = vmatpush1.msra.mxu0 %v4366
  %4512 = vmatprep.subr.mxu0 0.0
  %4513 = vmatpush1.msra.mxu0 %v4367
  %4514 = vmatprep.subr.mxu0 0.0
  %4515 = vmatpush1.msra.mxu0 %v4368
  %4516 = vmatprep.subr.mxu0 0.0
  %4517 = vmatpush1.msra.mxu0 %v4369
  %4518 = vmatprep.subr.mxu0 0.0
  %4519 = vmatpush1.msra.mxu0 %v4370
  %4520 = vmatprep.subr.mxu0 0.0
  %4521 = vmatpush1.msra.mxu0 %v4371
  %4522 = vmatprep.subr.mxu0 0.0
  %4523 = vmatpush1.msra.mxu0 %v4372
  %4524 = vmatprep.subr.mxu0 0.0
  %4525 = vmatpush1.msra.mxu0 %v4373
  %4526 = vmatprep.subr.mxu0 0.0
  %4527 = vmatpush1.msra.mxu0 %v4374
  %4528 = vmatprep.subr.mxu0 0.0
  %4529 = vmatpush1.msra.mxu0 %v4375
  %4530 = vmatprep.subr.mxu0 0.0
  %4531 = vmatpush1.msra.mxu0 %v4376
  %4532 = vmatprep.subr.mxu0 0.0
  %4533 = vmatpush1.msra.mxu0 %v4377
  %4534 = vmatprep.subr.mxu0 0.0
  %4535 = vmatpush1.msra.mxu0 %v4378
  %4536 = vmatprep.subr.mxu0 0.0
  %4537 = vmatpush1.msra.mxu0 %v4379
  %4538 = vmatprep.subr.mxu0 0.0
  %4539 = vmatpush1.msra.mxu0 %v4380
  %4540 = vmatprep.subr.mxu0 0.0
  %4541 = vmatpush1.msra.mxu0 %v4381
  %4542 = vmatprep.mubr.f32.mxu0 %v4431
  %4543 = vmatmul.mubr.f32.gmra.mrb[0].mxu0 %v4417
  %v4544 = vpop.f32.mrb[0].mxu0
  %v4545 = vadd.f32 0.0, %v4544
  %v4546 = vpop.f32.mrb[0].mxu0
  %4547 = vdwg.mxu0
  %4548 = vmatprep.subr.mxu0 0.0
  %4549 = vmatpush1.msra.mxu0 %v4350
  %4550 = vmatprep.subr.mxu0 0.0
  %4551 = vmatpush1.msra.mxu0 %v4351
  %4552 = vmatprep.subr.mxu0 0.0
  %4553 = vmatpush1.msra.mxu0 %v4352
  %4554 = vmatprep.subr.mxu0 0.0
  %4555 = vmatpush1.msra.mxu0 %v4353
  %4556 = vmatprep.subr.mxu0 0.0
  %4557 = vmatpush1.msra.mxu0 %v4354
  %4558 = vmatprep.subr.mxu0 0.0
  %4559 = vmatpush1.msra.mxu0 %v4355
  %4560 = vmatprep.subr.mxu0 0.0
  %4561 = vmatpush1.msra.mxu0 %v4356
  %4562 = vmatprep.subr.mxu0 0.0
  %4563 = vmatpush1.msra.mxu0 %v4357
  %4564 = vmatprep.subr.mxu0 0.0
  %4565 = vmatpush1.msra.mxu0 %v4358
  %4566 = vmatprep.subr.mxu0 0.0
  %4567 = vmatpush1.msra.mxu0 %v4359
  %4568 = vmatprep.subr.mxu0 0.0
  %4569 = vmatpush1.msra.mxu0 %v4360
  %4570 = vmatprep.subr.mxu0 0.0
  %4571 = vmatpush1.msra.mxu0 %v4361
  %4572 = vmatprep.subr.mxu0 0.0
  %4573 = vmatpush1.msra.mxu0 %v4362
  %4574 = vmatprep.subr.mxu0 0.0
  %4575 = vmatpush1.msra.mxu0 %v4363
  %4576 = vmatprep.subr.mxu0 0.0
  %4577 = vmatpush1.msra.mxu0 %v4364
  %4578 = vmatprep.subr.mxu0 0.0
  %4579 = vmatpush1.msra.mxu0 %v4365
  %4580 = vmatprep.subr.mxu0 0.0
  %4581 = vmatpush1.msra.mxu0 %v4366
  %4582 = vmatprep.subr.mxu0 0.0
  %4583 = vmatpush1.msra.mxu0 %v4367
  %4584 = vmatprep.subr.mxu0 0.0
  %4585 = vmatpush1.msra.mxu0 %v4368
  %4586 = vmatprep.subr.mxu0 0.0
  %4587 = vmatpush1.msra.mxu0 %v4369
  %4588 = vmatprep.subr.mxu0 0.0
  %4589 = vmatpush1.msra.mxu0 %v4370
  %4590 = vmatprep.subr.mxu0 0.0
  %4591 = vmatpush1.msra.mxu0 %v4371
  %4592 = vmatprep.subr.mxu0 0.0
  %4593 = vmatpush1.msra.mxu0 %v4372
  %4594 = vmatprep.subr.mxu0 0.0
  %4595 = vmatpush1.msra.mxu0 %v4373
  %4596 = vmatprep.subr.mxu0 0.0
  %4597 = vmatpush1.msra.mxu0 %v4374
  %4598 = vmatprep.subr.mxu0 0.0
  %4599 = vmatpush1.msra.mxu0 %v4375
  %4600 = vmatprep.subr.mxu0 0.0
  %4601 = vmatpush1.msra.mxu0 %v4376
  %4602 = vmatprep.subr.mxu0 0.0
  %4603 = vmatpush1.msra.mxu0 %v4377
  %4604 = vmatprep.subr.mxu0 0.0
  %4605 = vmatpush1.msra.mxu0 %v4378
  %4606 = vmatprep.subr.mxu0 0.0
  %4607 = vmatpush1.msra.mxu0 %v4379
  %4608 = vmatprep.subr.mxu0 0.0
  %4609 = vmatpush1.msra.mxu0 %v4380
  %4610 = vmatprep.subr.mxu0 0.0
  %4611 = vmatpush1.msra.mxu0 %v4381
  %4612 = vmatprep.mubr.f32.mxu0 %v4477
  %4613 = vmatmul.mubr.f32.gmra.mrb[0].mxu0 %v4463
  %v4614 = vpop.f32.mrb[0].mxu0
  %v4615 = vadd.f32 0.0, %v4614
  %v4616 = vpop.f32.mrb[0].mxu0
  %4617 = vdwg.mxu0
  %v4618 = vrcp.pop 512.0
  %v4619 = vmul.f32 %v4545, %v4618
  %v4620 = vmul.f32 %v4615, %v4618
  %v4621 = vmul.f32 %v4619, %v4619
  %v4622 = vsub.f32 %v4620, %v4621
  %v4623 = vmax.f32 %v4622, 0.0
  %v4624 = vadd.f32 %v4623, 1e-05
  %v4625 = vrsqrt.pop %v4624
  %v4626 = vmul.f32 %v4348, %v4625
  %v4627 = vmul.f32 %v4619, %v4626
  %v4628 = vsub.f32 %v4349, %v4627
  %vm4629 = vcmask 130048
  %v4631 = vsel %vm4629, %v4626, 0
  %4633 = vmatprep.subr.mxu0 %v4383
  %4634 = vmatpush1.msra.mxu0 %v4382
  %4635 = vmatprep.subr.mxu0 %v4385
  %4636 = vmatpush1.msra.mxu0 %v4384
  %4637 = vmatprep.subr.mxu0 0.0
  %4638 = vmatpush1.msra.mxu0 0.0
  %4639 = vmatprep.subr.mxu0 0.0
  %4640 = vmatpush1.msra.mxu0 0.0
  %4641 = vmatprep.subr.mxu0 0.0
  %4642 = vmatpush1.msra.mxu0 0.0
  %4643 = vmatprep.subr.mxu0 0.0
  %4644 = vmatpush1.msra.mxu0 0.0
  %4645 = vmatprep.subr.mxu0 0.0
  %4646 = vmatpush1.msra.mxu0 0.0
  %4647 = vmatprep.subr.mxu0 0.0
  %4648 = vmatpush1.msra.mxu0 0.0
  %4649 = vmatprep.subr.mxu0 0.0
  %4650 = vmatpush1.msra.mxu0 0.0
  %4651 = vmatprep.subr.mxu0 0.0
  %4652 = vmatpush1.msra.mxu0 0.0
  %4653 = vmatprep.subr.mxu0 0.0
  %4654 = vmatpush1.msra.mxu0 0.0
  %4655 = vmatprep.subr.mxu0 0.0
  %4656 = vmatpush1.msra.mxu0 0.0
  %4657 = vmatprep.subr.mxu0 0.0
  %4658 = vmatpush1.msra.mxu0 0.0
  %4659 = vmatprep.subr.mxu0 0.0
  %4660 = vmatpush1.msra.mxu0 0.0
  %4661 = vmatprep.subr.mxu0 0.0
  %4662 = vmatpush1.msra.mxu0 0.0
  %4663 = vmatprep.subr.mxu0 0.0
  %4664 = vmatpush1.msra.mxu0 0.0
  %4665 = vmatprep.subr.mxu0 0.0
  %4666 = vmatpush1.msra.mxu0 0.0
  %4667 = vmatprep.subr.mxu0 0.0
  %4668 = vmatpush1.msra.mxu0 0.0
  %4669 = vmatprep.subr.mxu0 0.0
  %4670 = vmatpush1.msra.mxu0 0.0
  %4671 = vmatprep.subr.mxu0 0.0
  %4672 = vmatpush1.msra.mxu0 0.0
  %4673 = vmatprep.subr.mxu0 0.0
  %4674 = vmatpush1.msra.mxu0 0.0
  %4675 = vmatprep.subr.mxu0 0.0
  %4676 = vmatpush1.msra.mxu0 0.0
  %4677 = vmatprep.subr.mxu0 0.0
  %4678 = vmatpush1.msra.mxu0 0.0
  %4679 = vmatprep.subr.mxu0 0.0
  %4680 = vmatpush1.msra.mxu0 0.0
  %4681 = vmatprep.subr.mxu0 0.0
  %4682 = vmatpush1.msra.mxu0 0.0
  %4683 = vmatprep.subr.mxu0 0.0
  %4684 = vmatpush1.msra.mxu0 0.0
  %4685 = vmatprep.subr.mxu0 0.0
  %4686 = vmatpush1.msra.mxu0 0.0
  %4687 = vmatprep.subr.mxu0 0.0
  %4688 = vmatpush1.msra.mxu0 0.0
  %4689 = vmatprep.subr.mxu0 0.0
  %4690 = vmatpush1.msra.mxu0 0.0
  %4691 = vmatprep.subr.mxu0 0.0
  %4692 = vmatpush1.msra.mxu0 0.0
  %4693 = vmatprep.subr.mxu0 0.0
  %4694 = vmatpush1.msra.mxu0 0.0
  %4695 = vmatprep.subr.mxu0 0.0
  %4696 = vmatpush1.msra.mxu0 0.0
  %4697 = vmatprep.mubr.f32.mxu0 0.0
  %4698 = vmatmul.mubr.f32.gmra.mrb[0].mxu0 %v4631
  %v4699 = vpop.f32.mrb[0].mxu0
  %v4700 = vadd.f32 0.0, %v4699
  %v4701 = vpop.f32.mrb[0].mxu0
  %v4702 = vadd.f32 0.0, %v4701
  %4703 = vdwg.mxu0
  %v4705 = vsel %vm4629, %v4628, 0
  %4707 = vmatprep.subr.mxu0 %v4383
  %4708 = vmatpush1.msra.mxu0 %v4382
  %4709 = vmatprep.subr.mxu0 %v4385
  %4710 = vmatpush1.msra.mxu0 %v4384
  %4711 = vmatprep.subr.mxu0 0.0
  %4712 = vmatpush1.msra.mxu0 0.0
  %4713 = vmatprep.subr.mxu0 0.0
  %4714 = vmatpush1.msra.mxu0 0.0
  %4715 = vmatprep.subr.mxu0 0.0
  %4716 = vmatpush1.msra.mxu0 0.0
  %4717 = vmatprep.subr.mxu0 0.0
  %4718 = vmatpush1.msra.mxu0 0.0
  %4719 = vmatprep.subr.mxu0 0.0
  %4720 = vmatpush1.msra.mxu0 0.0
  %4721 = vmatprep.subr.mxu0 0.0
  %4722 = vmatpush1.msra.mxu0 0.0
  %4723 = vmatprep.subr.mxu0 0.0
  %4724 = vmatpush1.msra.mxu0 0.0
  %4725 = vmatprep.subr.mxu0 0.0
  %4726 = vmatpush1.msra.mxu0 0.0
  %4727 = vmatprep.subr.mxu0 0.0
  %4728 = vmatpush1.msra.mxu0 0.0
  %4729 = vmatprep.subr.mxu0 0.0
  %4730 = vmatpush1.msra.mxu0 0.0
  %4731 = vmatprep.subr.mxu0 0.0
  %4732 = vmatpush1.msra.mxu0 0.0
  %4733 = vmatprep.subr.mxu0 0.0
  %4734 = vmatpush1.msra.mxu0 0.0
  %4735 = vmatprep.subr.mxu0 0.0
  %4736 = vmatpush1.msra.mxu0 0.0
  %4737 = vmatprep.subr.mxu0 0.0
  %4738 = vmatpush1.msra.mxu0 0.0
  %4739 = vmatprep.subr.mxu0 0.0
  %4740 = vmatpush1.msra.mxu0 0.0
  %4741 = vmatprep.subr.mxu0 0.0
  %4742 = vmatpush1.msra.mxu0 0.0
  %4743 = vmatprep.subr.mxu0 0.0
  %4744 = vmatpush1.msra.mxu0 0.0
  %4745 = vmatprep.subr.mxu0 0.0
  %4746 = vmatpush1.msra.mxu0 0.0
  %4747 = vmatprep.subr.mxu0 0.0
  %4748 = vmatpush1.msra.mxu0 0.0
  %4749 = vmatprep.subr.mxu0 0.0
  %4750 = vmatpush1.msra.mxu0 0.0
  %4751 = vmatprep.subr.mxu0 0.0
  %4752 = vmatpush1.msra.mxu0 0.0
  %4753 = vmatprep.subr.mxu0 0.0
  %4754 = vmatpush1.msra.mxu0 0.0
  %4755 = vmatprep.subr.mxu0 0.0
  %4756 = vmatpush1.msra.mxu0 0.0
  %4757 = vmatprep.subr.mxu0 0.0
  %4758 = vmatpush1.msra.mxu0 0.0
  %4759 = vmatprep.subr.mxu0 0.0
  %4760 = vmatpush1.msra.mxu0 0.0
  %4761 = vmatprep.subr.mxu0 0.0
  %4762 = vmatpush1.msra.mxu0 0.0
  %4763 = vmatprep.subr.mxu0 0.0
  %4764 = vmatpush1.msra.mxu0 0.0
  %4765 = vmatprep.subr.mxu0 0.0
  %4766 = vmatpush1.msra.mxu0 0.0
  %4767 = vmatprep.subr.mxu0 0.0
  %4768 = vmatpush1.msra.mxu0 0.0
  %4769 = vmatprep.subr.mxu0 0.0
  %4770 = vmatpush1.msra.mxu0 0.0
  %4771 = vmatprep.mubr.f32.mxu0 0.0
  %4772 = vmatmul.mubr.f32.gmra.mrb[0].mxu0 %v4705
  %v4773 = vpop.f32.mrb[0].mxu0
  %v4774 = vadd.f32 0.0, %v4773
  %v4775 = vpop.f32.mrb[0].mxu0
  %v4776 = vadd.f32 0.0, %v4775
  %4777 = vdwg.mxu0
  %v4778 = vlaneseq
  %v4779 = vshrl.u32 %v4778, 7
  %v4780 = vsub.s32 0, %v4779
  %v4781 = vrot.slane %v4700, %v4780
  %v4782 = vlaneseq
  %v4783 = vshrl.u32 %v4782, 7
  %v4784 = vsub.s32 0, %v4783
  %v4785 = vrot.slane %v4702, %v4784
  %v4786 = vmul.f32 %v4330, %v4781
  %v4787 = vmul.f32 %v4331, %v4785
  %v4788 = vmul.f32 %v4332, %v4781
  %v4789 = vmul.f32 %v4333, %v4785
  %v4790 = vmul.f32 %v4334, %v4781
  %v4791 = vmul.f32 %v4335, %v4785
  %v4792 = vmul.f32 %v4336, %v4781
  %v4793 = vmul.f32 %v4337, %v4785
  %v4794 = vmul.f32 %v4338, %v4781
  %v4795 = vmul.f32 %v4339, %v4785
  %v4796 = vmul.f32 %v4340, %v4781
  %v4797 = vmul.f32 %v4341, %v4785
  %v4798 = vmul.f32 %v4342, %v4781
  %v4799 = vmul.f32 %v4343, %v4785
  %v4800 = vmul.f32 %v4344, %v4781
  %v4801 = vmul.f32 %v4345, %v4785
  %v4802 = vmul.f32 %v4346, %v4781
  %v4803 = vmul.f32 %v4347, %v4785
  %v4804 = vlaneseq
  %v4805 = vshrl.u32 %v4804, 7
  %v4806 = vsub.s32 0, %v4805
  %v4807 = vrot.slane %v4774, %v4806
  %v4808 = vlaneseq
  %v4809 = vshrl.u32 %v4808, 7
  %v4810 = vsub.s32 0, %v4809
  %v4811 = vrot.slane %v4776, %v4810
  %v4812 = vadd.f32 %v4786, %v4807
  %v4813 = vadd.f32 %v4787, %v4811
  %v4814 = vadd.f32 %v4788, %v4807
  %v4815 = vadd.f32 %v4789, %v4811
  %v4816 = vadd.f32 %v4790, %v4807
  %v4817 = vadd.f32 %v4791, %v4811
  %v4818 = vadd.f32 %v4792, %v4807
  %v4819 = vadd.f32 %v4793, %v4811
  %v4820 = vadd.f32 %v4794, %v4807
  %v4821 = vadd.f32 %v4795, %v4811
  %v4822 = vadd.f32 %v4796, %v4807
  %v4823 = vadd.f32 %v4797, %v4811
  %v4824 = vadd.f32 %v4798, %v4807
  %v4825 = vadd.f32 %v4799, %v4811
  %v4826 = vadd.f32 %v4800, %v4807
  %v4827 = vadd.f32 %v4801, %v4811
  %v4828 = vadd.f32 %v4802, %v4807
  %v4829 = vadd.f32 %v4803, %v4811
  %v4830 = vmax.f32 %v4812, 0.0
  %v4831 = vmax.f32 %v4813, 0.0
  %v4832 = vmax.f32 %v4814, 0.0
  %v4833 = vmax.f32 %v4815, 0.0
  %v4834 = vmax.f32 %v4816, 0.0
  %v4835 = vmax.f32 %v4817, 0.0
  %v4836 = vmax.f32 %v4818, 0.0
  %v4837 = vmax.f32 %v4819, 0.0
  %v4838 = vmax.f32 %v4820, 0.0
  %v4839 = vmax.f32 %v4821, 0.0
  %v4840 = vmax.f32 %v4822, 0.0
  %v4841 = vmax.f32 %v4823, 0.0
  %v4842 = vmax.f32 %v4824, 0.0
  %v4843 = vmax.f32 %v4825, 0.0
  %v4844 = vmax.f32 %v4826, 0.0
  %v4845 = vmax.f32 %v4827, 0.0
  %v4846 = vmax.f32 %v4828, 0.0
  %v4847 = vmax.f32 %v4829, 0.0
  %v4848 = vsel %vm667, %v4830, 0.0
  %v4849 = vsel %vm667, %v4831, 0.0
  %v4850 = vsel %vm668, %v4832, 0.0
  %v4851 = vsel %vm668, %v4833, 0.0
  %v4852 = vsel %vm669, %v4834, 0.0
  %v4853 = vsel %vm669, %v4835, 0.0
  %v4854 = vsel %vm670, %v4836, 0.0
  %v4855 = vsel %vm670, %v4837, 0.0
  %v4856 = vsel %vm671, %v4838, 0.0
  %v4857 = vsel %vm671, %v4839, 0.0
  %v4858 = vsel %vm672, %v4840, 0.0
  %v4859 = vsel %vm672, %v4841, 0.0
  %v4860 = vsel %vm673, %v4842, 0.0
  %v4861 = vsel %vm673, %v4843, 0.0
  %v4862 = vsel %vm674, %v4844, 0.0
  %v4863 = vsel %vm674, %v4845, 0.0
  %v4864 = vsel %vm675, %v4846, 0.0
  %v4865 = vsel %vm675, %v4847, 0.0
  %4866 = vst [vmem:[#allocation4 + $0x10] sm:$0xff] %v4848
  %4867 = vst [vmem:[#allocation4 + $0x18] sm:$0xff] %v4849
  %4868 = vst [vmem:[#allocation4 + $0x20] sm:$0xff] %v4850
  %4869 = vst [vmem:[#allocation4 + $0x28] sm:$0xff] %v4851
  %4870 = vst [vmem:[#allocation4 + $0x30] sm:$0xff] %v4852
  %4871 = vst [vmem:[#allocation4 + $0x38] sm:$0xff] %v4853
  %4872 = vst [vmem:[#allocation4 + $0x40] sm:$0xff] %v4854
  %4873 = vst [vmem:[#allocation4 + $0x48] sm:$0xff] %v4855
  %4874 = vst [vmem:[#allocation4 + $0x50] sm:$0xff] %v4856
  %4875 = vst [vmem:[#allocation4 + $0x58] sm:$0xff] %v4857
  %4876 = vst [vmem:[#allocation4 + $0x60] sm:$0xff] %v4858
  %4877 = vst [vmem:[#allocation4 + $0x68] sm:$0xff] %v4859
  %4878 = vst [vmem:[#allocation4 + $0x70] sm:$0xff] %v4860
  %4879 = vst [vmem:[#allocation4 + $0x78] sm:$0xff] %v4861
  %4880 = vst [vmem:[#allocation4 + $0x80] sm:$0xff] %v4862
  %4881 = vst [vmem:[#allocation4 + $0x88] sm:$0xff] %v4863
  %4882 = vst [vmem:[#allocation4 + $0x90] sm:$0xff] %v4864
  %4883 = vst [vmem:[#allocation4 + $0x98] sm:$0xff] %v4865
  %v4884 = vld [vmem:[#allocation4] sm:$0xfe]
  %v4885 = vld [vmem:[#allocation4 + $0x8] sm:$0xfe]
  %v4886 = vld [vmem:[#allocation4 + $0x10] sm:$0xff]
  %v4887 = vld [vmem:[#allocation4 + $0x18] sm:$0xff]
  %v4888 = vld [vmem:[#allocation4 + $0x20] sm:$0xff]
  %v4889 = vld [vmem:[#allocation4 + $0x28] sm:$0xff]
  %v4890 = vld [vmem:[#allocation4 + $0x30] sm:$0xff]
  %v4891 = vld [vmem:[#allocation4 + $0x38] sm:$0xff]
  %v4892 = vld [vmem:[#allocation4 + $0x40] sm:$0xff]
  %v4893 = vld [vmem:[#allocation4 + $0x48] sm:$0xff]
  %v4894 = vld [vmem:[#allocation4 + $0x50] sm:$0xff]
  %v4895 = vld [vmem:[#allocation4 + $0x58] sm:$0xff]
  %v4896 = vld [vmem:[#allocation4 + $0x60] sm:$0xff]
  %v4897 = vld [vmem:[#allocation4 + $0x68] sm:$0xff]
  %v4898 = vld [vmem:[#allocation4 + $0x70] sm:$0xff]
  %v4899 = vld [vmem:[#allocation4 + $0x78] sm:$0xff]
  %v4900 = vld [vmem:[#allocation4 + $0x80] sm:$0xff]
  %v4901 = vld [vmem:[#allocation4 + $0x88] sm:$0xff]
  %v4902 = vld [vmem:[#allocation4 + $0x90] sm:$0x1]
  %v4903 = vld [vmem:[#allocation4 + $0x98] sm:$0x1]
  %v4904 = vpack.c.bf16 %v4886, %v4884
  %v4905 = vpack.c.bf16 %v4887, %v4885
  %v4906 = vpack.c.bf16 %v4890, %v4888
  %v4907 = vpack.c.bf16 %v4891, %v4889
  %v4908 = vpack.c.bf16 %v4894, %v4892
  %v4909 = vpack.c.bf16 %v4895, %v4893
  %v4910 = vpack.c.bf16 %v4898, %v4896
  %v4911 = vpack.c.bf16 %v4899, %v4897
  %v4912 = vpack.c.bf16 %v4902, %v4900
  %v4913 = vpack.c.bf16 %v4903, %v4901
  %v4914 = vld [vmem:[%s4] sm:$0xff]
  %v4915 = vld [vmem:[%s4 + $0x8] sm:$0xff]
  %v4916 = vld [vmem:[%s4 + $0x10] sm:$0xff]
  %v4917 = vld [vmem:[%s4 + $0x18] sm:$0xff]
  %v4918 = vld [vmem:[%s4 + $0x20] sm:$0xff]
  %v4919 = vld [vmem:[%s4 + $0x28] sm:$0xff]
  %v4920 = vld [vmem:[%s4 + $0x30] sm:$0xff]
  %v4921 = vld [vmem:[%s4 + $0x38] sm:$0xff]
  %v4922 = vld [vmem:[%s4 + $0x40] sm:$0xff]
  %v4923 = vld [vmem:[%s4 + $0x48] sm:$0xff]
  %v4924 = vld [vmem:[%s4 + $0x50] sm:$0xff]
  %v4925 = vld [vmem:[%s4 + $0x58] sm:$0xff]
  %v4926 = vld [vmem:[%s4 + $0x60] sm:$0xff]
  %v4927 = vld [vmem:[%s4 + $0x68] sm:$0xff]
  %v4928 = vld [vmem:[%s4 + $0x70] sm:$0xff]
  %v4929 = vld [vmem:[%s4 + $0x78] sm:$0xff]
  %v4930 = vld [vmem:[%s4 + $0x80] sm:$0xff]
  %v4931 = vld [vmem:[%s4 + $0x88] sm:$0xff]
  %v4932 = vld [vmem:[%s4 + $0x90] sm:$0xff]
  %v4933 = vld [vmem:[%s4 + $0x98] sm:$0xff]
  %v4934 = vld [vmem:[%s4 + $0xa0] sm:$0xff]
  %v4935 = vld [vmem:[%s4 + $0xa8] sm:$0xff]
  %v4936 = vld [vmem:[%s4 + $0xb0] sm:$0xff]
  %v4937 = vld [vmem:[%s4 + $0xb8] sm:$0xff]
  %v4938 = vld [vmem:[%s4 + $0xc0] sm:$0xff]
  %v4939 = vld [vmem:[%s4 + $0xc8] sm:$0xff]
  %v4940 = vld [vmem:[%s4 + $0xd0] sm:$0xff]
  %v4941 = vld [vmem:[%s4 + $0xd8] sm:$0xff]
  %v4942 = vld [vmem:[%s4 + $0xe0] sm:$0xff]
  %v4943 = vld [vmem:[%s4 + $0xe8] sm:$0xff]
  %v4944 = vld [vmem:[%s4 + $0xf0] sm:$0xff]
  %v4945 = vld [vmem:[%s4 + $0xf8] sm:$0xff]
  %v4946 = vld [vmem:[#allocation4] sm:$0xfc]
  %v4947 = vld [vmem:[#allocation4 + $0x8] sm:$0xfc]
  %v4948 = vld [vmem:[#allocation4 + $0x90] sm:$0x3]
  %v4949 = vld [vmem:[#allocation4 + $0x98] sm:$0x3]
  %v4950 = vpack.c.bf16 %v4886, %v4946
  %v4951 = vpack.c.bf16 %v4887, %v4947
  %v4952 = vpack.c.bf16 %v4948, %v4900
  %v4953 = vpack.c.bf16 %v4949, %v4901
  %s4954 = scalar_lea.vmem %s4, 256
  %v4955 = vld [vmem:[%s4954] sm:$0xff]
  %v4956 = vld [vmem:[%s4954 + $0x8] sm:$0xff]
  %v4957 = vld [vmem:[%s4954 + $0x10] sm:$0xff]
  %v4958 = vld [vmem:[%s4954 + $0x18] sm:$0xff]
  %v4959 = vld [vmem:[%s4954 + $0x20] sm:$0xff]
  %v4960 = vld [vmem:[%s4954 + $0x28] sm:$0xff]
  %v4961 = vld [vmem:[%s4954 + $0x30] sm:$0xff]
  %v4962 = vld [vmem:[%s4954 + $0x38] sm:$0xff]
  %v4963 = vld [vmem:[%s4954 + $0x40] sm:$0xff]
  %v4964 = vld [vmem:[%s4954 + $0x48] sm:$0xff]
  %v4965 = vld [vmem:[%s4954 + $0x50] sm:$0xff]
  %v4966 = vld [vmem:[%s4954 + $0x58] sm:$0xff]
  %v4967 = vld [vmem:[%s4954 + $0x60] sm:$0xff]
  %v4968 = vld [vmem:[%s4954 + $0x68] sm:$0xff]
  %v4969 = vld [vmem:[%s4954 + $0x70] sm:$0xff]
  %v4970 = vld [vmem:[%s4954 + $0x78] sm:$0xff]
  %v4971 = vld [vmem:[%s4954 + $0x80] sm:$0xff]
  %v4972 = vld [vmem:[%s4954 + $0x88] sm:$0xff]
  %v4973 = vld [vmem:[%s4954 + $0x90] sm:$0xff]
  %v4974 = vld [vmem:[%s4954 + $0x98] sm:$0xff]
  %v4975 = vld [vmem:[%s4954 + $0xa0] sm:$0xff]
  %v4976 = vld [vmem:[%s4954 + $0xa8] sm:$0xff]
  %v4977 = vld [vmem:[%s4954 + $0xb0] sm:$0xff]
  %v4978 = vld [vmem:[%s4954 + $0xb8] sm:$0xff]
  %v4979 = vld [vmem:[%s4954 + $0xc0] sm:$0xff]
  %v4980 = vld [vmem:[%s4954 + $0xc8] sm:$0xff]
  %v4981 = vld [vmem:[%s4954 + $0xd0] sm:$0xff]
  %v4982 = vld [vmem:[%s4954 + $0xd8] sm:$0xff]
  %v4983 = vld [vmem:[%s4954 + $0xe0] sm:$0xff]
  %v4984 = vld [vmem:[%s4954 + $0xe8] sm:$0xff]
  %v4985 = vld [vmem:[%s4954 + $0xf0] sm:$0xff]
  %v4986 = vld [vmem:[%s4954 + $0xf8] sm:$0xff]
  %vm4997 = vcmask 1046528
  %v4998 = vrot.slane %v4950, 1
  %v4999 = vrot.slane %v4906, 1
  %v5000 = vsel %vm4997, %v4998, %v4999
  %v5001 = vrot.slane %v4951, 1
  %v5002 = vrot.slane %v4907, 1
  %v5003 = vsel %vm4997, %v5001, %v5002
  %v5004 = vrot.slane %v4908, 1
  %v5005 = vsel %vm4997, %v4999, %v5004
  %v5006 = vrot.slane %v4909, 1
  %v5007 = vsel %vm4997, %v5002, %v5006
  %v5008 = vrot.slane %v4910, 1
  %v5009 = vsel %vm4997, %v5004, %v5008
  %v5010 = vrot.slane %v4911, 1
  %v5011 = vsel %vm4997, %v5006, %v5010
  %v5012 = vrot.slane %v4952, 1
  %v5013 = vsel %vm4997, %v5008, %v5012
  %v5014 = vrot.slane %v4953, 1
  %v5015 = vsel %vm4997, %v5010, %v5014
  %v5058 = vunpack.c.l.b16 %v4955
  %v5059 = vunpack.c.h.b16 %v4955
  %v5060 = vunpack.c.l.b16 %v4956
  %v5061 = vunpack.c.h.b16 %v4956
  %v5062 = vunpack.c.l.b16 %v4957
  %v5063 = vunpack.c.h.b16 %v4957
  %v5064 = vunpack.c.l.b16 %v4958
  %v5065 = vunpack.c.h.b16 %v4958
  %v5066 = vunpack.c.l.b16 %v4959
  %v5067 = vunpack.c.h.b16 %v4959
  %v5068 = vunpack.c.l.b16 %v4960
  %v5069 = vunpack.c.h.b16 %v4960
  %v5070 = vunpack.c.l.b16 %v4961
  %v5071 = vunpack.c.h.b16 %v4961
  %v5072 = vunpack.c.l.b16 %v4962
  %v5073 = vunpack.c.h.b16 %v4962
  %v5074 = vunpack.c.l.b16 %v4963
  %v5075 = vunpack.c.h.b16 %v4963
  %v5076 = vunpack.c.l.b16 %v4964
  %v5077 = vunpack.c.h.b16 %v4964
  %v5078 = vunpack.c.l.b16 %v4965
  %v5079 = vunpack.c.h.b16 %v4965
  %v5080 = vunpack.c.l.b16 %v4966
  %v5081 = vunpack.c.h.b16 %v4966
  %v5082 = vunpack.c.l.b16 %v4967
  %v5083 = vunpack.c.h.b16 %v4967
  %v5084 = vunpack.c.l.b16 %v4968
  %v5085 = vunpack.c.h.b16 %v4968
  %v5086 = vunpack.c.l.b16 %v4969
  %v5087 = vunpack.c.h.b16 %v4969
  %v5088 = vunpack.c.l.b16 %v4970
  %v5089 = vunpack.c.h.b16 %v4970
  %v5090 = vunpack.c.l.b16 %v4971
  %v5091 = vunpack.c.h.b16 %v4971
  %v5092 = vunpack.c.l.b16 %v4972
  %v5093 = vunpack.c.h.b16 %v4972
  %v5094 = vunpack.c.l.b16 %v4973
  %v5095 = vunpack.c.h.b16 %v4973
  %v5096 = vunpack.c.l.b16 %v4974
  %v5097 = vunpack.c.h.b16 %v4974
  %v5098 = vunpack.c.l.b16 %v4975
  %v5099 = vunpack.c.h.b16 %v4975
  %v5100 = vunpack.c.l.b16 %v4976
  %v5101 = vunpack.c.h.b16 %v4976
  %v5102 = vunpack.c.l.b16 %v4977
  %v5103 = vunpack.c.h.b16 %v4977
  %v5104 = vunpack.c.l.b16 %v4978
  %v5105 = vunpack.c.h.b16 %v4978
  %v5106 = vunpack.c.l.b16 %v4979
  %v5107 = vunpack.c.h.b16 %v4979
  %v5108 = vunpack.c.l.b16 %v4980
  %v5109 = vunpack.c.h.b16 %v4980
  %v5110 = vunpack.c.l.b16 %v4981
  %v5111 = vunpack.c.h.b16 %v4981
  %v5112 = vunpack.c.l.b16 %v4982
  %v5113 = vunpack.c.h.b16 %v4982
  %v5114 = vunpack.c.l.b16 %v4983
  %v5115 = vunpack.c.h.b16 %v4983
  %v5116 = vunpack.c.l.b16 %v4984
  %v5117 = vunpack.c.h.b16 %v4984
  %v5118 = vunpack.c.l.b16 %v4985
  %v5119 = vunpack.c.h.b16 %v4985
  %v5120 = vunpack.c.l.b16 %v4986
  %v5121 = vunpack.c.h.b16 %v4986
  %v5122 = vpack.c.b16 %v5060, %v5058
  %v5123 = vpack.c.b16 %v5061, %v5059
  %v5124 = vpack.c.b16 %v5064, %v5062
  %v5125 = vpack.c.b16 %v5065, %v5063
  %v5126 = vpack.c.b16 %v5068, %v5066
  %v5127 = vpack.c.b16 %v5069, %v5067
  %v5128 = vpack.c.b16 %v5072, %v5070
  %v5129 = vpack.c.b16 %v5073, %v5071
  %v5130 = vpack.c.b16 %v5076, %v5074
  %v5131 = vpack.c.b16 %v5077, %v5075
  %v5132 = vpack.c.b16 %v5080, %v5078
  %v5133 = vpack.c.b16 %v5081, %v5079
  %v5134 = vpack.c.b16 %v5084, %v5082
  %v5135 = vpack.c.b16 %v5085, %v5083
  %v5136 = vpack.c.b16 %v5088, %v5086
  %v5137 = vpack.c.b16 %v5089, %v5087
  %v5138 = vpack.c.b16 %v5092, %v5090
  %v5139 = vpack.c.b16 %v5093, %v5091
  %v5140 = vpack.c.b16 %v5096, %v5094
  %v5141 = vpack.c.b16 %v5097, %v5095
  %v5142 = vpack.c.b16 %v5100, %v5098
  %v5143 = vpack.c.b16 %v5101, %v5099
  %v5144 = vpack.c.b16 %v5104, %v5102
  %v5145 = vpack.c.b16 %v5105, %v5103
  %v5146 = vpack.c.b16 %v5108, %v5106
  %v5147 = vpack.c.b16 %v5109, %v5107
  %v5148 = vpack.c.b16 %v5112, %v5110
  %v5149 = vpack.c.b16 %v5113, %v5111
  %v5150 = vpack.c.b16 %v5116, %v5114
  %v5151 = vpack.c.b16 %v5117, %v5115
  %v5152 = vpack.c.b16 %v5120, %v5118
  %v5153 = vpack.c.b16 %v5121, %v5119
  %5186 = vmatprep.subr.bf16.mxu0 %v5123
  %5187 = vmatpush1.bf16.msra.mxu0 %v5122
  %5188 = vmatprep.subr.bf16.mxu0 %v5125
  %5189 = vmatpush1.bf16.msra.mxu0 %v5124
  %5190 = vmatprep.subr.bf16.mxu0 %v5127
  %5191 = vmatpush1.bf16.msra.mxu0 %v5126
  %5192 = vmatprep.subr.bf16.mxu0 %v5129
  %5193 = vmatpush1.bf16.msra.mxu0 %v5128
  %5194 = vmatprep.subr.bf16.mxu0 %v5131
  %5195 = vmatpush1.bf16.msra.mxu0 %v5130
  %5196 = vmatprep.subr.bf16.mxu0 %v5133
  %5197 = vmatpush1.bf16.msra.mxu0 %v5132
  %5198 = vmatprep.subr.bf16.mxu0 %v5135
  %5199 = vmatpush1.bf16.msra.mxu0 %v5134
  %5200 = vmatprep.subr.bf16.mxu0 %v5137
  %5201 = vmatpush1.bf16.msra.mxu0 %v5136
  %5202 = vmatprep.subr.bf16.mxu0 %v5139
  %5203 = vmatpush1.bf16.msra.mxu0 %v5138
  %5204 = vmatprep.subr.bf16.mxu0 %v5141
  %5205 = vmatpush1.bf16.msra.mxu0 %v5140
  %5206 = vmatprep.subr.bf16.mxu0 %v5143
  %5207 = vmatpush1.bf16.msra.mxu0 %v5142
  %5208 = vmatprep.subr.bf16.mxu0 %v5145
  %5209 = vmatpush1.bf16.msra.mxu0 %v5144
  %5210 = vmatprep.subr.bf16.mxu0 %v5147
  %5211 = vmatpush1.bf16.msra.mxu0 %v5146
  %5212 = vmatprep.subr.bf16.mxu0 %v5149
  %5213 = vmatpush1.bf16.msra.mxu0 %v5148
  %5214 = vmatprep.subr.bf16.mxu0 %v5151
  %5215 = vmatpush1.bf16.msra.mxu0 %v5150
  %5216 = vmatprep.subr.bf16.mxu0 %v5153
  %5217 = vmatpush1.bf16.msra.mxu0 %v5152
  %5218 = vmatprep.mubr.bf16.mxu0 %v5003
  %5219 = vmatmul.mubr.bf16.gmra.mrb[0].mxu0 %v5000
  %v5220 = vpop.f32.mrb[0].mxu0
  %v5221 = vadd.f32 0.0, %v5220
  %v5222 = vpop.f32.mrb[0].mxu0
  %v5223 = vadd.f32 0.0, %v5222
  %v5224 = vpop.f32.mrb[0].mxu0
  %v5225 = vadd.f32 0.0, %v5224
  %v5226 = vpop.f32.mrb[0].mxu0
  %v5227 = vadd.f32 0.0, %v5226
  %5228 = vmatprep.mubr.bf16.mxu0 %v5007
  %5229 = vmatmul.mubr.bf16.gmra.mrb[0].mxu0 %v5005
  %v5230 = vpop.f32.mrb[0].mxu0
  %v5231 = vadd.f32 0.0, %v5230
  %v5232 = vpop.f32.mrb[0].mxu0
  %v5233 = vadd.f32 0.0, %v5232
  %v5234 = vpop.f32.mrb[0].mxu0
  %v5235 = vadd.f32 0.0, %v5234
  %v5236 = vpop.f32.mrb[0].mxu0
  %v5237 = vadd.f32 0.0, %v5236
  %5238 = vmatprep.mubr.bf16.mxu0 %v5011
  %5239 = vmatmul.mubr.bf16.gmra.mrb[0].mxu0 %v5009
  %v5240 = vpop.f32.mrb[0].mxu0
  %v5241 = vadd.f32 0.0, %v5240
  %v5242 = vpop.f32.mrb[0].mxu0
  %v5243 = vadd.f32 0.0, %v5242
  %v5244 = vpop.f32.mrb[0].mxu0
  %v5245 = vadd.f32 0.0, %v5244
  %v5246 = vpop.f32.mrb[0].mxu0
  %v5247 = vadd.f32 0.0, %v5246
  %5248 = vmatprep.mubr.bf16.mxu0 %v5015
  %5249 = vmatmul.mubr.bf16.gmra.mrb[0].mxu0 %v5013
  %v5250 = vpop.f32.mrb[0].mxu0
  %v5251 = vadd.f32 0.0, %v5250
  %v5252 = vpop.f32.mrb[0].mxu0
  %v5253 = vadd.f32 0.0, %v5252
  %v5254 = vpop.f32.mrb[0].mxu0
  %v5255 = vadd.f32 0.0, %v5254
  %v5256 = vpop.f32.mrb[0].mxu0
  %v5257 = vadd.f32 0.0, %v5256
  %5258 = vmatprep.mubr.bf16.mxu0 %v5014
  %5259 = vmatmul.mubr.bf16.gmra.mrb[0].mxu0 %v5012
  %v5260 = vpop.f32.mrb[0].mxu0
  %v5261 = vadd.f32 0.0, %v5260
  %v5262 = vpop.f32.mrb[0].mxu0
  %v5263 = vadd.f32 0.0, %v5262
  %v5264 = vpop.f32.mrb[0].mxu0
  %v5265 = vpop.f32.mrb[0].mxu0
  %5266 = vdwg.mxu0
  %vm5267 = vsmask.f32 7424
  %v5269 = vshrl.u32 %v4904, 16
  %v5271 = vshll.u32 %v4904, 16
  %v5273 = vrot.slane %v5271, 1
  %v5274 = vor.u32 %v5269, %v5273
  %v5276 = vshll.u32 %v4906, 16
  %v5278 = vrot.slane %v5276, 1
  %v5279 = vsel %vm5267, %v5274, %v5278
  %v5281 = vshrl.u32 %v4905, 16
  %v5283 = vshll.u32 %v4905, 16
  %v5285 = vrot.slane %v5283, 1
  %v5286 = vor.u32 %v5281, %v5285
  %v5288 = vshll.u32 %v4907, 16
  %v5290 = vrot.slane %v5288, 1
  %v5291 = vsel %vm5267, %v5286, %v5290
  %v5292 = vshrl.u32 %v4906, 16
  %v5294 = vor.u32 %v5292, %v5278
  %v5296 = vshll.u32 %v4908, 16
  %v5298 = vrot.slane %v5296, 1
  %v5299 = vsel %vm5267, %v5294, %v5298
  %v5300 = vshrl.u32 %v4907, 16
  %v5302 = vor.u32 %v5300, %v5290
  %v5304 = vshll.u32 %v4909, 16
  %v5306 = vrot.slane %v5304, 1
  %v5307 = vsel %vm5267, %v5302, %v5306
  %v5308 = vshrl.u32 %v4908, 16
  %v5310 = vor.u32 %v5308, %v5298
  %v5312 = vshll.u32 %v4910, 16
  %v5314 = vrot.slane %v5312, 1
  %v5315 = vsel %vm5267, %v5310, %v5314
  %v5316 = vshrl.u32 %v4909, 16
  %v5318 = vor.u32 %v5316, %v5306
  %v5320 = vshll.u32 %v4911, 16
  %v5322 = vrot.slane %v5320, 1
  %v5323 = vsel %vm5267, %v5318, %v5322
  %v5324 = vshrl.u32 %v4910, 16
  %v5326 = vor.u32 %v5324, %v5314
  %v5328 = vshll.u32 %v4912, 16
  %v5330 = vrot.slane %v5328, 1
  %v5331 = vsel %vm5267, %v5326, %v5330
  %v5332 = vshrl.u32 %v4911, 16
  %v5334 = vor.u32 %v5332, %v5322
  %v5336 = vshll.u32 %v4913, 16
  %v5338 = vrot.slane %v5336, 1
  %v5339 = vsel %vm5267, %v5334, %v5338
  %v5340 = vshrl.u32 %v4912, 16
  %v5342 = vor.u32 %v5340, %v5330
  %v5343 = vshrl.u32 %v4913, 16
  %v5345 = vor.u32 %v5343, %v5338
  %v5388 = vunpack.c.l.b16 %v4914
  %v5389 = vunpack.c.h.b16 %v4914
  %v5390 = vunpack.c.l.b16 %v4915
  %v5391 = vunpack.c.h.b16 %v4915
  %v5392 = vunpack.c.l.b16 %v4916
  %v5393 = vunpack.c.h.b16 %v4916
  %v5394 = vunpack.c.l.b16 %v4917
  %v5395 = vunpack.c.h.b16 %v4917
  %v5396 = vunpack.c.l.b16 %v4918
  %v5397 = vunpack.c.h.b16 %v4918
  %v5398 = vunpack.c.l.b16 %v4919
  %v5399 = vunpack.c.h.b16 %v4919
  %v5400 = vunpack.c.l.b16 %v4920
  %v5401 = vunpack.c.h.b16 %v4920
  %v5402 = vunpack.c.l.b16 %v4921
  %v5403 = vunpack.c.h.b16 %v4921
  %v5404 = vunpack.c.l.b16 %v4922
  %v5405 = vunpack.c.h.b16 %v4922
  %v5406 = vunpack.c.l.b16 %v4923
  %v5407 = vunpack.c.h.b16 %v4923
  %v5408 = vunpack.c.l.b16 %v4924
  %v5409 = vunpack.c.h.b16 %v4924
  %v5410 = vunpack.c.l.b16 %v4925
  %v5411 = vunpack.c.h.b16 %v4925
  %v5412 = vunpack.c.l.b16 %v4926
  %v5413 = vunpack.c.h.b16 %v4926
  %v5414 = vunpack.c.l.b16 %v4927
  %v5415 = vunpack.c.h.b16 %v4927
  %v5416 = vunpack.c.l.b16 %v4928
  %v5417 = vunpack.c.h.b16 %v4928
  %v5418 = vunpack.c.l.b16 %v4929
  %v5419 = vunpack.c.h.b16 %v4929
  %v5420 = vunpack.c.l.b16 %v4930
  %v5421 = vunpack.c.h.b16 %v4930
  %v5422 = vunpack.c.l.b16 %v4931
  %v5423 = vunpack.c.h.b16 %v4931
  %v5424 = vunpack.c.l.b16 %v4932
  %v5425 = vunpack.c.h.b16 %v4932
  %v5426 = vunpack.c.l.b16 %v4933
  %v5427 = vunpack.c.h.b16 %v4933
  %v5428 = vunpack.c.l.b16 %v4934
  %v5429 = vunpack.c.h.b16 %v4934
  %v5430 = vunpack.c.l.b16 %v4935
  %v5431 = vunpack.c.h.b16 %v4935
  %v5432 = vunpack.c.l.b16 %v4936
  %v5433 = vunpack.c.h.b16 %v4936
  %v5434 = vunpack.c.l.b16 %v4937
  %v5435 = vunpack.c.h.b16 %v4937
  %v5436 = vunpack.c.l.b16 %v4938
  %v5437 = vunpack.c.h.b16 %v4938
  %v5438 = vunpack.c.l.b16 %v4939
  %v5439 = vunpack.c.h.b16 %v4939
  %v5440 = vunpack.c.l.b16 %v4940
  %v5441 = vunpack.c.h.b16 %v4940
  %v5442 = vunpack.c.l.b16 %v4941
  %v5443 = vunpack.c.h.b16 %v4941
  %v5444 = vunpack.c.l.b16 %v4942
  %v5445 = vunpack.c.h.b16 %v4942
  %v5446 = vunpack.c.l.b16 %v4943
  %v5447 = vunpack.c.h.b16 %v4943
  %v5448 = vunpack.c.l.b16 %v4944
  %v5449 = vunpack.c.h.b16 %v4944
  %v5450 = vunpack.c.l.b16 %v4945
  %v5451 = vunpack.c.h.b16 %v4945
  %v5452 = vpack.c.b16 %v5390, %v5388
  %v5453 = vpack.c.b16 %v5391, %v5389
  %v5454 = vpack.c.b16 %v5394, %v5392
  %v5455 = vpack.c.b16 %v5395, %v5393
  %v5456 = vpack.c.b16 %v5398, %v5396
  %v5457 = vpack.c.b16 %v5399, %v5397
  %v5458 = vpack.c.b16 %v5402, %v5400
  %v5459 = vpack.c.b16 %v5403, %v5401
  %v5460 = vpack.c.b16 %v5406, %v5404
  %v5461 = vpack.c.b16 %v5407, %v5405
  %v5462 = vpack.c.b16 %v5410, %v5408
  %v5463 = vpack.c.b16 %v5411, %v5409
  %v5464 = vpack.c.b16 %v5414, %v5412
  %v5465 = vpack.c.b16 %v5415, %v5413
  %v5466 = vpack.c.b16 %v5418, %v5416
  %v5467 = vpack.c.b16 %v5419, %v5417
  %v5468 = vpack.c.b16 %v5422, %v5420
  %v5469 = vpack.c.b16 %v5423, %v5421
  %v5470 = vpack.c.b16 %v5426, %v5424
  %v5471 = vpack.c.b16 %v5427, %v5425
  %v5472 = vpack.c.b16 %v5430, %v5428
  %v5473 = vpack.c.b16 %v5431, %v5429
  %v5474 = vpack.c.b16 %v5434, %v5432
  %v5475 = vpack.c.b16 %v5435, %v5433
  %v5476 = vpack.c.b16 %v5438, %v5436
  %v5477 = vpack.c.b16 %v5439, %v5437
  %v5478 = vpack.c.b16 %v5442, %v5440
  %v5479 = vpack.c.b16 %v5443, %v5441
  %v5480 = vpack.c.b16 %v5446, %v5444
  %v5481 = vpack.c.b16 %v5447, %v5445
  %v5482 = vpack.c.b16 %v5450, %v5448
  %v5483 = vpack.c.b16 %v5451, %v5449
  %5516 = vmatprep.subr.bf16.mxu0 %v5453
  %5517 = vmatpush1.bf16.msra.mxu0 %v5452
  %5518 = vmatprep.subr.bf16.mxu0 %v5455
  %5519 = vmatpush1.bf16.msra.mxu0 %v5454
  %5520 = vmatprep.subr.bf16.mxu0 %v5457
  %5521 = vmatpush1.bf16.msra.mxu0 %v5456
  %5522 = vmatprep.subr.bf16.mxu0 %v5459
  %5523 = vmatpush1.bf16.msra.mxu0 %v5458
  %5524 = vmatprep.subr.bf16.mxu0 %v5461
  %5525 = vmatpush1.bf16.msra.mxu0 %v5460
  %5526 = vmatprep.subr.bf16.mxu0 %v5463
  %5527 = vmatpush1.bf16.msra.mxu0 %v5462
  %5528 = vmatprep.subr.bf16.mxu0 %v5465
  %5529 = vmatpush1.bf16.msra.mxu0 %v5464
  %5530 = vmatprep.subr.bf16.mxu0 %v5467
  %5531 = vmatpush1.bf16.msra.mxu0 %v5466
  %5532 = vmatprep.subr.bf16.mxu0 %v5469
  %5533 = vmatpush1.bf16.msra.mxu0 %v5468
  %5534 = vmatprep.subr.bf16.mxu0 %v5471
  %5535 = vmatpush1.bf16.msra.mxu0 %v5470
  %5536 = vmatprep.subr.bf16.mxu0 %v5473
  %5537 = vmatpush1.bf16.msra.mxu0 %v5472
  %5538 = vmatprep.subr.bf16.mxu0 %v5475
  %5539 = vmatpush1.bf16.msra.mxu0 %v5474
  %5540 = vmatprep.subr.bf16.mxu0 %v5477
  %5541 = vmatpush1.bf16.msra.mxu0 %v5476
  %5542 = vmatprep.subr.bf16.mxu0 %v5479
  %5543 = vmatpush1.bf16.msra.mxu0 %v5478
  %5544 = vmatprep.subr.bf16.mxu0 %v5481
  %5545 = vmatpush1.bf16.msra.mxu0 %v5480
  %5546 = vmatprep.subr.bf16.mxu0 %v5483
  %5547 = vmatpush1.bf16.msra.mxu0 %v5482
  %5548 = vmatprep.mubr.bf16.mxu0 %v5291
  %5549 = vmatmul.mubr.bf16.gmra.mrb[0].mxu0 %v5279
  %v5550 = vpop.f32.mrb[0].mxu0
  %v5551 = vadd.f32 %v5221, %v5550
  %v5552 = vpop.f32.mrb[0].mxu0
  %v5553 = vadd.f32 %v5223, %v5552
  %v5554 = vpop.f32.mrb[0].mxu0
  %v5555 = vadd.f32 %v5225, %v5554
  %v5556 = vpop.f32.mrb[0].mxu0
  %v5557 = vadd.f32 %v5227, %v5556
  %5558 = vmatprep.mubr.bf16.mxu0 %v5307
  %5559 = vmatmul.mubr.bf16.gmra.mrb[0].mxu0 %v5299
  %v5560 = vpop.f32.mrb[0].mxu0
  %v5561 = vadd.f32 %v5231, %v5560
  %v5562 = vpop.f32.mrb[0].mxu0
  %v5563 = vadd.f32 %v5233, %v5562
  %v5564 = vpop.f32.mrb[0].mxu0
  %v5565 = vadd.f32 %v5235, %v5564
  %v5566 = vpop.f32.mrb[0].mxu0
  %v5567 = vadd.f32 %v5237, %v5566
  %5568 = vmatprep.mubr.bf16.mxu0 %v5323
  %5569 = vmatmul.mubr.bf16.gmra.mrb[0].mxu0 %v5315
  %v5570 = vpop.f32.mrb[0].mxu0
  %v5571 = vadd.f32 %v5241, %v5570
  %v5572 = vpop.f32.mrb[0].mxu0
  %v5573 = vadd.f32 %v5243, %v5572
  %v5574 = vpop.f32.mrb[0].mxu0
  %v5575 = vadd.f32 %v5245, %v5574
  %v5576 = vpop.f32.mrb[0].mxu0
  %v5577 = vadd.f32 %v5247, %v5576
  %5578 = vmatprep.mubr.bf16.mxu0 %v5339
  %5579 = vmatmul.mubr.bf16.gmra.mrb[0].mxu0 %v5331
  %v5580 = vpop.f32.mrb[0].mxu0
  %v5581 = vadd.f32 %v5251, %v5580
  %v5582 = vpop.f32.mrb[0].mxu0
  %v5583 = vadd.f32 %v5253, %v5582
  %v5584 = vpop.f32.mrb[0].mxu0
  %v5585 = vadd.f32 %v5255, %v5584
  %v5586 = vpop.f32.mrb[0].mxu0
  %v5587 = vadd.f32 %v5257, %v5586
  %5588 = vmatprep.mubr.bf16.mxu0 %v5345
  %5589 = vmatmul.mubr.bf16.gmra.mrb[0].mxu0 %v5342
  %v5590 = vpop.f32.mrb[0].mxu0
  %v5591 = vadd.f32 %v5261, %v5590
  %v5592 = vpop.f32.mrb[0].mxu0
  %v5593 = vadd.f32 %v5263, %v5592
  %v5594 = vpop.f32.mrb[0].mxu0
  %v5595 = vpop.f32.mrb[0].mxu0
  %5596 = vdwg.mxu0
  %v5597 = vld [vmem:[#allocation4] sm:$0xf8]
  %v5598 = vld [vmem:[#allocation4 + $0x8] sm:$0xf8]
  %v5599 = vld [vmem:[#allocation4 + $0x90] sm:$0x7]
  %v5600 = vld [vmem:[#allocation4 + $0x98] sm:$0x7]
  %v5601 = vpack.c.bf16 %v4886, %v5597
  %v5602 = vpack.c.bf16 %v4887, %v5598
  %v5603 = vpack.c.bf16 %v5599, %v4900
  %v5604 = vpack.c.bf16 %v5600, %v4901
  %s5605 = scalar_lea.vmem %s4, 512
  %v5606 = vld [vmem:[%s5605] sm:$0xff]
  %v5607 = vld [vmem:[%s5605 + $0x8] sm:$0xff]
  %v5608 = vld [vmem:[%s5605 + $0x10] sm:$0xff]
  %v5609 = vld [vmem:[%s5605 + $0x18] sm:$0xff]
  %v5610 = vld [vmem:[%s5605 + $0x20] sm:$0xff]
  %v5611 = vld [vmem:[%s5605 + $0x28] sm:$0xff]
  %v5612 = vld [vmem:[%s5605 + $0x30] sm:$0xff]
  %v5613 = vld [vmem:[%s5605 + $0x38] sm:$0xff]
  %v5614 = vld [vmem:[%s5605 + $0x40] sm:$0xff]
  %v5615 = vld [vmem:[%s5605 + $0x48] sm:$0xff]
  %v5616 = vld [vmem:[%s5605 + $0x50] sm:$0xff]
  %v5617 = vld [vmem:[%s5605 + $0x58] sm:$0xff]
  %v5618 = vld [vmem:[%s5605 + $0x60] sm:$0xff]
  %v5619 = vld [vmem:[%s5605 + $0x68] sm:$0xff]
  %v5620 = vld [vmem:[%s5605 + $0x70] sm:$0xff]
  %v5621 = vld [vmem:[%s5605 + $0x78] sm:$0xff]
  %v5622 = vld [vmem:[%s5605 + $0x80] sm:$0xff]
  %v5623 = vld [vmem:[%s5605 + $0x88] sm:$0xff]
  %v5624 = vld [vmem:[%s5605 + $0x90] sm:$0xff]
  %v5625 = vld [vmem:[%s5605 + $0x98] sm:$0xff]
  %v5626 = vld [vmem:[%s5605 + $0xa0] sm:$0xff]
  %v5627 = vld [vmem:[%s5605 + $0xa8] sm:$0xff]
  %v5628 = vld [vmem:[%s5605 + $0xb0] sm:$0xff]
  %v5629 = vld [vmem:[%s5605 + $0xb8] sm:$0xff]
  %v5630 = vld [vmem:[%s5605 + $0xc0] sm:$0xff]
  %v5631 = vld [vmem:[%s5605 + $0xc8] sm:$0xff]
  %v5632 = vld [vmem:[%s5605 + $0xd0] sm:$0xff]
  %v5633 = vld [vmem:[%s5605 + $0xd8] sm:$0xff]
  %v5634 = vld [vmem:[%s5605 + $0xe0] sm:$0xff]
  %v5635 = vld [vmem:[%s5605 + $0xe8] sm:$0xff]
  %v5636 = vld [vmem:[%s5605 + $0xf0] sm:$0xff]
  %v5637 = vld [vmem:[%s5605 + $0xf8] sm:$0xff]
  %vm5638 = vsmask.f32 6400
  %v5640 = vshrl.u32 %v5601, 16
  %v5642 = vrot.slane %v5640, 1
  %v5643 = vshll.u32 %v5601, 16
  %v5645 = vrot.slane %v5643, 2
  %v5646 = vor.u32 %v5642, %v5645
  %v5647 = vrot.slane %v5292, 1
  %v5648 = vrot.slane %v5276, 2
  %v5649 = vor.u32 %v5647, %v5648
  %v5650 = vsel %vm5638, %v5646, %v5649
  %v5652 = vshrl.u32 %v5602, 16
  %v5654 = vrot.slane %v5652, 1
  %v5655 = vshll.u32 %v5602, 16
  %v5657 = vrot.slane %v5655, 2
  %v5658 = vor.u32 %v5654, %v5657
  %v5659 = vrot.slane %v5300, 1
  %v5660 = vrot.slane %v5288, 2
  %v5661 = vor.u32 %v5659, %v5660
  %v5662 = vsel %vm5638, %v5658, %v5661
  %v5663 = vrot.slane %v5308, 1
  %v5664 = vrot.slane %v5296, 2
  %v5665 = vor.u32 %v5663, %v5664
  %v5666 = vsel %vm5638, %v5649, %v5665
  %v5667 = vrot.slane %v5316, 1
  %v5668 = vrot.slane %v5304, 2
  %v5669 = vor.u32 %v5667, %v5668
  %v5670 = vsel %vm5638, %v5661, %v5669
  %v5671 = vrot.slane %v5324, 1
  %v5672 = vrot.slane %v5312, 2
  %v5673 = vor.u32 %v5671, %v5672
  %v5674 = vsel %vm5638, %v5665, %v5673
  %v5675 = vrot.slane %v5332, 1
  %v5676 = vrot.slane %v5320, 2
  %v5677 = vor.u32 %v5675, %v5676
  %v5678 = vsel %vm5638, %v5669, %v5677
  %v5680 = vshrl.u32 %v5603, 16
  %v5682 = vrot.slane %v5680, 1
  %v5683 = vshll.u32 %v5603, 16
  %v5685 = vrot.slane %v5683, 2
  %v5686 = vor.u32 %v5682, %v5685
  %v5687 = vsel %vm5638, %v5673, %v5686
  %v5689 = vshrl.u32 %v5604, 16
  %v5691 = vrot.slane %v5689, 1
  %v5692 = vshll.u32 %v5604, 16
  %v5694 = vrot.slane %v5692, 2
  %v5695 = vor.u32 %v5691, %v5694
  %v5696 = vsel %vm5638, %v5677, %v5695
  %v5739 = vunpack.c.l.b16 %v5606
  %v5740 = vunpack.c.h.b16 %v5606
  %v5741 = vunpack.c.l.b16 %v5607
  %v5742 = vunpack.c.h.b16 %v5607
  %v5743 = vunpack.c.l.b16 %v5608
  %v5744 = vunpack.c.h.b16 %v5608
  %v5745 = vunpack.c.l.b16 %v5609
  %v5746 = vunpack.c.h.b16 %v5609
  %v5747 = vunpack.c.l.b16 %v5610
  %v5748 = vunpack.c.h.b16 %v5610
  %v5749 = vunpack.c.l.b16 %v5611
  %v5750 = vunpack.c.h.b16 %v5611
  %v5751 = vunpack.c.l.b16 %v5612
  %v5752 = vunpack.c.h.b16 %v5612
  %v5753 = vunpack.c.l.b16 %v5613
  %v5754 = vunpack.c.h.b16 %v5613
  %v5755 = vunpack.c.l.b16 %v5614
  %v5756 = vunpack.c.h.b16 %v5614
  %v5757 = vunpack.c.l.b16 %v5615
  %v5758 = vunpack.c.h.b16 %v5615
  %v5759 = vunpack.c.l.b16 %v5616
  %v5760 = vunpack.c.h.b16 %v5616
  %v5761 = vunpack.c.l.b16 %v5617
  %v5762 = vunpack.c.h.b16 %v5617
  %v5763 = vunpack.c.l.b16 %v5618
  %v5764 = vunpack.c.h.b16 %v5618
  %v5765 = vunpack.c.l.b16 %v5619
  %v5766 = vunpack.c.h.b16 %v5619
  %v5767 = vunpack.c.l.b16 %v5620
  %v5768 = vunpack.c.h.b16 %v5620
  %v5769 = vunpack.c.l.b16 %v5621
  %v5770 = vunpack.c.h.b16 %v5621
  %v5771 = vunpack.c.l.b16 %v5622
  %v5772 = vunpack.c.h.b16 %v5622
  %v5773 = vunpack.c.l.b16 %v5623
  %v5774 = vunpack.c.h.b16 %v5623
  %v5775 = vunpack.c.l.b16 %v5624
  %v5776 = vunpack.c.h.b16 %v5624
  %v5777 = vunpack.c.l.b16 %v5625
  %v5778 = vunpack.c.h.b16 %v5625
  %v5779 = vunpack.c.l.b16 %v5626
  %v5780 = vunpack.c.h.b16 %v5626
  %v5781 = vunpack.c.l.b16 %v5627
  %v5782 = vunpack.c.h.b16 %v5627
  %v5783 = vunpack.c.l.b16 %v5628
  %v5784 = vunpack.c.h.b16 %v5628
  %v5785 = vunpack.c.l.b16 %v5629
  %v5786 = vunpack.c.h.b16 %v5629
  %v5787 = vunpack.c.l.b16 %v5630
  %v5788 = vunpack.c.h.b16 %v5630
  %v5789 = vunpack.c.l.b16 %v5631
  %v5790 = vunpack.c.h.b16 %v5631
  %v5791 = vunpack.c.l.b16 %v5632
  %v5792 = vunpack.c.h.b16 %v5632
  %v5793 = vunpack.c.l.b16 %v5633
  %v5794 = vunpack.c.h.b16 %v5633
  %v5795 = vunpack.c.l.b16 %v5634
  %v5796 = vunpack.c.h.b16 %v5634
  %v5797 = vunpack.c.l.b16 %v5635
  %v5798 = vunpack.c.h.b16 %v5635
  %v5799 = vunpack.c.l.b16 %v5636
  %v5800 = vunpack.c.h.b16 %v5636
  %v5801 = vunpack.c.l.b16 %v5637
  %v5802 = vunpack.c.h.b16 %v5637
  %v5803 = vpack.c.b16 %v5741, %v5739
  %v5804 = vpack.c.b16 %v5742, %v5740
  %v5805 = vpack.c.b16 %v5745, %v5743
  %v5806 = vpack.c.b16 %v5746, %v5744
  %v5807 = vpack.c.b16 %v5749, %v5747
  %v5808 = vpack.c.b16 %v5750, %v5748
  %v5809 = vpack.c.b16 %v5753, %v5751
  %v5810 = vpack.c.b16 %v5754, %v5752
  %v5811 = vpack.c.b16 %v5757, %v5755
  %v5812 = vpack.c.b16 %v5758, %v5756
  %v5813 = vpack.c.b16 %v5761, %v5759
  %v5814 = vpack.c.b16 %v5762, %v5760
  %v5815 = vpack.c.b16 %v5765, %v5763
  %v5816 = vpack.c.b16 %v5766, %v5764
  %v5817 = vpack.c.b16 %v5769, %v5767
  %v5818 = vpack.c.b16 %v5770, %v5768
  %v5819 = vpack.c.b16 %v5773, %v5771
  %v5820 = vpack.c.b16 %v5774, %v5772
  %v5821 = vpack.c.b16 %v5777, %v5775
  %v5822 = vpack.c.b16 %v5778, %v5776
  %v5823 = vpack.c.b16 %v5781, %v5779
  %v5824 = vpack.c.b16 %v5782, %v5780
  %v5825 = vpack.c.b16 %v5785, %v5783
  %v5826 = vpack.c.b16 %v5786, %v5784
  %v5827 = vpack.c.b16 %v5789, %v5787
  %v5828 = vpack.c.b16 %v5790, %v5788
  %v5829 = vpack.c.b16 %v5793, %v5791
  %v5830 = vpack.c.b16 %v5794, %v5792
  %v5831 = vpack.c.b16 %v5797, %v5795
  %v5832 = vpack.c.b16 %v5798, %v5796
  %v5833 = vpack.c.b16 %v5801, %v5799
  %v5834 = vpack.c.b16 %v5802, %v5800
  %5867 = vmatprep.subr.bf16.mxu0 %v5804
  %5868 = vmatpush1.bf16.msra.mxu0 %v5803
  %5869 = vmatprep.subr.bf16.mxu0 %v5806
  %5870 = vmatpush1.bf16.msra.mxu0 %v5805
  %5871 = vmatprep.subr.bf16.mxu0 %v5808
  %5872 = vmatpush1.bf16.msra.mxu0 %v5807
  %5873 = vmatprep.subr.bf16.mxu0 %v5810
  %5874 = vmatpush1.bf16.msra.mxu0 %v5809
  %5875 = vmatprep.subr.bf16.mxu0 %v5812
  %5876 = vmatpush1.bf16.msra.mxu0 %v5811
  %5877 = vmatprep.subr.bf16.mxu0 %v5814
  %5878 = vmatpush1.bf16.msra.mxu0 %v5813
  %5879 = vmatprep.subr.bf16.mxu0 %v5816
  %5880 = vmatpush1.bf16.msra.mxu0 %v5815
  %5881 = vmatprep.subr.bf16.mxu0 %v5818
  %5882 = vmatpush1.bf16.msra.mxu0 %v5817
  %5883 = vmatprep.subr.bf16.mxu0 %v5820
  %5884 = vmatpush1.bf16.msra.mxu0 %v5819
  %5885 = vmatprep.subr.bf16.mxu0 %v5822
  %5886 = vmatpush1.bf16.msra.mxu0 %v5821
  %5887 = vmatprep.subr.bf16.mxu0 %v5824
  %5888 = vmatpush1.bf16.msra.mxu0 %v5823
  %5889 = vmatprep.subr.bf16.mxu0 %v5826
  %5890 = vmatpush1.bf16.msra.mxu0 %v5825
  %5891 = vmatprep.subr.bf16.mxu0 %v5828
  %5892 = vmatpush1.bf16.msra.mxu0 %v5827
  %5893 = vmatprep.subr.bf16.mxu0 %v5830
  %5894 = vmatpush1.bf16.msra.mxu0 %v5829
  %5895 = vmatprep.subr.bf16.mxu0 %v5832
  %5896 = vmatpush1.bf16.msra.mxu0 %v5831
  %5897 = vmatprep.subr.bf16.mxu0 %v5834
  %5898 = vmatpush1.bf16.msra.mxu0 %v5833
  %5899 = vmatprep.mubr.bf16.mxu0 %v5662
  %5900 = vmatmul.mubr.bf16.gmra.mrb[0].mxu0 %v5650
  %v5901 = vpop.f32.mrb[0].mxu0
  %v5902 = vadd.f32 0.0, %v5901
  %v5903 = vpop.f32.mrb[0].mxu0
  %v5904 = vadd.f32 0.0, %v5903
  %v5905 = vpop.f32.mrb[0].mxu0
  %v5906 = vadd.f32 0.0, %v5905
  %v5907 = vpop.f32.mrb[0].mxu0
  %v5908 = vadd.f32 0.0, %v5907
  %5909 = vmatprep.mubr.bf16.mxu0 %v5670
  %5910 = vmatmul.mubr.bf16.gmra.mrb[0].mxu0 %v5666
  %v5911 = vpop.f32.mrb[0].mxu0
  %v5912 = vadd.f32 0.0, %v5911
  %v5913 = vpop.f32.mrb[0].mxu0
  %v5914 = vadd.f32 0.0, %v5913
  %v5915 = vpop.f32.mrb[0].mxu0
  %v5916 = vadd.f32 0.0, %v5915
  %v5917 = vpop.f32.mrb[0].mxu0
  %v5918 = vadd.f32 0.0, %v5917
  %5919 = vmatprep.mubr.bf16.mxu0 %v5678
  %5920 = vmatmul.mubr.bf16.gmra.mrb[0].mxu0 %v5674
  %v5921 = vpop.f32.mrb[0].mxu0
  %v5922 = vadd.f32 0.0, %v5921
  %v5923 = vpop.f32.mrb[0].mxu0
  %v5924 = vadd.f32 0.0, %v5923
  %v5925 = vpop.f32.mrb[0].mxu0
  %v5926 = vadd.f32 0.0, %v5925
  %v5927 = vpop.f32.mrb[0].mxu0
  %v5928 = vadd.f32 0.0, %v5927
  %5929 = vmatprep.mubr.bf16.mxu0 %v5696
  %5930 = vmatmul.mubr.bf16.gmra.mrb[0].mxu0 %v5687
  %v5931 = vpop.f32.mrb[0].mxu0
  %v5932 = vadd.f32 0.0, %v5931
  %v5933 = vpop.f32.mrb[0].mxu0
  %v5934 = vadd.f32 0.0, %v5933
  %v5935 = vpop.f32.mrb[0].mxu0
  %v5936 = vadd.f32 0.0, %v5935
  %v5937 = vpop.f32.mrb[0].mxu0
  %v5938 = vadd.f32 0.0, %v5937
  %5939 = vmatprep.mubr.bf16.mxu0 %v5695
  %5940 = vmatmul.mubr.bf16.gmra.mrb[0].mxu0 %v5686
  %v5941 = vpop.f32.mrb[0].mxu0
  %v5942 = vadd.f32 0.0, %v5941
  %v5943 = vpop.f32.mrb[0].mxu0
  %v5944 = vadd.f32 0.0, %v5943
  %v5945 = vpop.f32.mrb[0].mxu0
  %v5946 = vpop.f32.mrb[0].mxu0
  %5947 = vdwg.mxu0
  %v5948 = vadd.f32 %v5551, %v5902
  %v5949 = vadd.f32 %v5553, %v5904
  %v5950 = vadd.f32 %v5555, %v5906
  %v5951 = vadd.f32 %v5557, %v5908
  %v5952 = vadd.f32 %v5561, %v5912
  %v5953 = vadd.f32 %v5563, %v5914
  %v5954 = vadd.f32 %v5565, %v5916
  %v5955 = vadd.f32 %v5567, %v5918
  %v5956 = vadd.f32 %v5571, %v5922
  %v5957 = vadd.f32 %v5573, %v5924
  %v5958 = vadd.f32 %v5575, %v5926
  %v5959 = vadd.f32 %v5577, %v5928
  %v5960 = vadd.f32 %v5581, %v5932
  %v5961 = vadd.f32 %v5583, %v5934
  %v5962 = vadd.f32 %v5585, %v5936
  %v5963 = vadd.f32 %v5587, %v5938
  %v5964 = vadd.f32 %v5591, %v5942
  %v5965 = vadd.f32 %v5593, %v5944
  %v5966 = vld [vmem:[#allocation4] sm:$0x80]
  %v5967 = vld [vmem:[#allocation4 + $0x8] sm:$0x80]
  %v5968 = vld [vmem:[#allocation4 + $0x90] sm:$0x7f]
  %v5969 = vld [vmem:[#allocation4 + $0x98] sm:$0x7f]
  %v5970 = vpack.c.bf16 %v4886, %v5966
  %v5971 = vpack.c.bf16 %v4887, %v5967
  %v5972 = vpack.c.bf16 %v5968, %v4900
  %v5973 = vpack.c.bf16 %v5969, %v4901
  %s5974 = scalar_lea.vmem %s4, 768
  %v5975 = vld [vmem:[%s5974] sm:$0xff]
  %v5976 = vld [vmem:[%s5974 + $0x8] sm:$0xff]
  %v5977 = vld [vmem:[%s5974 + $0x10] sm:$0xff]
  %v5978 = vld [vmem:[%s5974 + $0x18] sm:$0xff]
  %v5979 = vld [vmem:[%s5974 + $0x20] sm:$0xff]
  %v5980 = vld [vmem:[%s5974 + $0x28] sm:$0xff]
  %v5981 = vld [vmem:[%s5974 + $0x30] sm:$0xff]
  %v5982 = vld [vmem:[%s5974 + $0x38] sm:$0xff]
  %v5983 = vld [vmem:[%s5974 + $0x40] sm:$0xff]
  %v5984 = vld [vmem:[%s5974 + $0x48] sm:$0xff]
  %v5985 = vld [vmem:[%s5974 + $0x50] sm:$0xff]
  %v5986 = vld [vmem:[%s5974 + $0x58] sm:$0xff]
  %v5987 = vld [vmem:[%s5974 + $0x60] sm:$0xff]
  %v5988 = vld [vmem:[%s5974 + $0x68] sm:$0xff]
  %v5989 = vld [vmem:[%s5974 + $0x70] sm:$0xff]
  %v5990 = vld [vmem:[%s5974 + $0x78] sm:$0xff]
  %v5991 = vld [vmem:[%s5974 + $0x80] sm:$0xff]
  %v5992 = vld [vmem:[%s5974 + $0x88] sm:$0xff]
  %v5993 = vld [vmem:[%s5974 + $0x90] sm:$0xff]
  %v5994 = vld [vmem:[%s5974 + $0x98] sm:$0xff]
  %v5995 = vld [vmem:[%s5974 + $0xa0] sm:$0xff]
  %v5996 = vld [vmem:[%s5974 + $0xa8] sm:$0xff]
  %v5997 = vld [vmem:[%s5974 + $0xb0] sm:$0xff]
  %v5998 = vld [vmem:[%s5974 + $0xb8] sm:$0xff]
  %v5999 = vld [vmem:[%s5974 + $0xc0] sm:$0xff]
  %v6000 = vld [vmem:[%s5974 + $0xc8] sm:$0xff]
  %v6001 = vld [vmem:[%s5974 + $0xd0] sm:$0xff]
  %v6002 = vld [vmem:[%s5974 + $0xd8] sm:$0xff]
  %v6003 = vld [vmem:[%s5974 + $0xe0] sm:$0xff]
  %v6004 = vld [vmem:[%s5974 + $0xe8] sm:$0xff]
  %v6005 = vld [vmem:[%s5974 + $0xf0] sm:$0xff]
  %v6006 = vld [vmem:[%s5974 + $0xf8] sm:$0xff]
  %vm6007 = vsmask.f32 4352
  %v6009 = vshrl.u32 %v5970, 16
  %v6011 = vrot.slane %v6009, 3
  %v6012 = vshll.u32 %v5970, 16
  %v6014 = vrot.slane %v6012, 4
  %v6015 = vor.u32 %v6011, %v6014
  %v6016 = vrot.slane %v5292, 3
  %v6017 = vrot.slane %v5276, 4
  %v6018 = vor.u32 %v6016, %v6017
  %v6019 = vsel %vm6007, %v6015, %v6018
  %v6021 = vshrl.u32 %v5971, 16
  %v6023 = vrot.slane %v6021, 3
  %v6024 = vshll.u32 %v5971, 16
  %v6026 = vrot.slane %v6024, 4
  %v6027 = vor.u32 %v6023, %v6026
  %v6028 = vrot.slane %v5300, 3
  %v6029 = vrot.slane %v5288, 4
  %v6030 = vor.u32 %v6028, %v6029
  %v6031 = vsel %vm6007, %v6027, %v6030
  %v6032 = vrot.slane %v5308, 3
  %v6033 = vrot.slane %v5296, 4
  %v6034 = vor.u32 %v6032, %v6033
  %v6035 = vsel %vm6007, %v6018, %v6034
  %v6036 = vrot.slane %v5316, 3
  %v6037 = vrot.slane %v5304, 4
  %v6038 = vor.u32 %v6036, %v6037
  %v6039 = vsel %vm6007, %v6030, %v6038
  %v6040 = vrot.slane %v5324, 3
  %v6041 = vrot.slane %v5312, 4
  %v6042 = vor.u32 %v6040, %v6041
  %v6043 = vsel %vm6007, %v6034, %v6042
  %v6044 = vrot.slane %v5332, 3
  %v6045 = vrot.slane %v5320, 4
  %v6046 = vor.u32 %v6044, %v6045
  %v6047 = vsel %vm6007, %v6038, %v6046
  %v6049 = vshrl.u32 %v5972, 16
  %v6051 = vrot.slane %v6049, 3
  %v6052 = vshll.u32 %v5972, 16
  %v6054 = vrot.slane %v6052, 4
  %v6055 = vor.u32 %v6051, %v6054
  %v6056 = vsel %vm6007, %v6042, %v6055
  %v6058 = vshrl.u32 %v5973, 16
  %v6060 = vrot.slane %v6058, 3
  %v6061 = vshll.u32 %v5973, 16
  %v6063 = vrot.slane %v6061, 4
  %v6064 = vor.u32 %v6060, %v6063
  %v6065 = vsel %vm6007, %v6046, %v6064
  %v6108 = vunpack.c.l.b16 %v5975
  %v6109 = vunpack.c.h.b16 %v5975
  %v6110 = vunpack.c.l.b16 %v5976
  %v6111 = vunpack.c.h.b16 %v5976
  %v6112 = vunpack.c.l.b16 %v5977
  %v6113 = vunpack.c.h.b16 %v5977
  %v6114 = vunpack.c.l.b16 %v5978
  %v6115 = vunpack.c.h.b16 %v5978
  %v6116 = vunpack.c.l.b16 %v5979
  %v6117 = vunpack.c.h.b16 %v5979
  %v6118 = vunpack.c.l.b16 %v5980
  %v6119 = vunpack.c.h.b16 %v5980
  %v6120 = vunpack.c.l.b16 %v5981
  %v6121 = vunpack.c.h.b16 %v5981
  %v6122 = vunpack.c.l.b16 %v5982
  %v6123 = vunpack.c.h.b16 %v5982
  %v6124 = vunpack.c.l.b16 %v5983
  %v6125 = vunpack.c.h.b16 %v5983
  %v6126 = vunpack.c.l.b16 %v5984
  %v6127 = vunpack.c.h.b16 %v5984
  %v6128 = vunpack.c.l.b16 %v5985
  %v6129 = vunpack.c.h.b16 %v5985
  %v6130 = vunpack.c.l.b16 %v5986
  %v6131 = vunpack.c.h.b16 %v5986
  %v6132 = vunpack.c.l.b16 %v5987
  %v6133 = vunpack.c.h.b16 %v5987
  %v6134 = vunpack.c.l.b16 %v5988
  %v6135 = vunpack.c.h.b16 %v5988
  %v6136 = vunpack.c.l.b16 %v5989
  %v6137 = vunpack.c.h.b16 %v5989
  %v6138 = vunpack.c.l.b16 %v5990
  %v6139 = vunpack.c.h.b16 %v5990
  %v6140 = vunpack.c.l.b16 %v5991
  %v6141 = vunpack.c.h.b16 %v5991
  %v6142 = vunpack.c.l.b16 %v5992
  %v6143 = vunpack.c.h.b16 %v5992
  %v6144 = vunpack.c.l.b16 %v5993
  %v6145 = vunpack.c.h.b16 %v5993
  %v6146 = vunpack.c.l.b16 %v5994
  %v6147 = vunpack.c.h.b16 %v5994
  %v6148 = vunpack.c.l.b16 %v5995
  %v6149 = vunpack.c.h.b16 %v5995
  %v6150 = vunpack.c.l.b16 %v5996
  %v6151 = vunpack.c.h.b16 %v5996
  %v6152 = vunpack.c.l.b16 %v5997
  %v6153 = vunpack.c.h.b16 %v5997
  %v6154 = vunpack.c.l.b16 %v5998
  %v6155 = vunpack.c.h.b16 %v5998
  %v6156 = vunpack.c.l.b16 %v5999
  %v6157 = vunpack.c.h.b16 %v5999
  %v6158 = vunpack.c.l.b16 %v6000
  %v6159 = vunpack.c.h.b16 %v6000
  %v6160 = vunpack.c.l.b16 %v6001
  %v6161 = vunpack.c.h.b16 %v6001
  %v6162 = vunpack.c.l.b16 %v6002
  %v6163 = vunpack.c.h.b16 %v6002
  %v6164 = vunpack.c.l.b16 %v6003
  %v6165 = vunpack.c.h.b16 %v6003
  %v6166 = vunpack.c.l.b16 %v6004
  %v6167 = vunpack.c.h.b16 %v6004
  %v6168 = vunpack.c.l.b16 %v6005
  %v6169 = vunpack.c.h.b16 %v6005
  %v6170 = vunpack.c.l.b16 %v6006
  %v6171 = vunpack.c.h.b16 %v6006
  %v6172 = vpack.c.b16 %v6110, %v6108
  %v6173 = vpack.c.b16 %v6111, %v6109
  %v6174 = vpack.c.b16 %v6114, %v6112
  %v6175 = vpack.c.b16 %v6115, %v6113
  %v6176 = vpack.c.b16 %v6118, %v6116
  %v6177 = vpack.c.b16 %v6119, %v6117
  %v6178 = vpack.c.b16 %v6122, %v6120
  %v6179 = vpack.c.b16 %v6123, %v6121
  %v6180 = vpack.c.b16 %v6126, %v6124
  %v6181 = vpack.c.b16 %v6127, %v6125
  %v6182 = vpack.c.b16 %v6130, %v6128
  %v6183 = vpack.c.b16 %v6131, %v6129
  %v6184 = vpack.c.b16 %v6134, %v6132
  %v6185 = vpack.c.b16 %v6135, %v6133
  %v6186 = vpack.c.b16 %v6138, %v6136
  %v6187 = vpack.c.b16 %v6139, %v6137
  %v6188 = vpack.c.b16 %v6142, %v6140
  %v6189 = vpack.c.b16 %v6143, %v6141
  %v6190 = vpack.c.b16 %v6146, %v6144
  %v6191 = vpack.c.b16 %v6147, %v6145
  %v6192 = vpack.c.b16 %v6150, %v6148
  %v6193 = vpack.c.b16 %v6151, %v6149
  %v6194 = vpack.c.b16 %v6154, %v6152
  %v6195 = vpack.c.b16 %v6155, %v6153
  %v6196 = vpack.c.b16 %v6158, %v6156
  %v6197 = vpack.c.b16 %v6159, %v6157
  %v6198 = vpack.c.b16 %v6162, %v6160
  %v6199 = vpack.c.b16 %v6163, %v6161
  %v6200 = vpack.c.b16 %v6166, %v6164
  %v6201 = vpack.c.b16 %v6167, %v6165
  %v6202 = vpack.c.b16 %v6170, %v6168
  %v6203 = vpack.c.b16 %v6171, %v6169
  %6236 = vmatprep.subr.bf16.mxu0 %v6173
  %6237 = vmatpush1.bf16.msra.mxu0 %v6172
  %6238 = vmatprep.subr.bf16.mxu0 %v6175
  %6239 = vmatpush1.bf16.msra.mxu0 %v6174
  %6240 = vmatprep.subr.bf16.mxu0 %v6177
  %6241 = vmatpush1.bf16.msra.mxu0 %v6176
  %6242 = vmatprep.subr.bf16.mxu0 %v6179
  %6243 = vmatpush1.bf16.msra.mxu0 %v6178
  %6244 = vmatprep.subr.bf16.mxu0 %v6181
  %6245 = vmatpush1.bf16.msra.mxu0 %v6180
  %6246 = vmatprep.subr.bf16.mxu0 %v6183
  %6247 = vmatpush1.bf16.msra.mxu0 %v6182
  %6248 = vmatprep.subr.bf16.mxu0 %v6185
  %6249 = vmatpush1.bf16.msra.mxu0 %v6184
  %6250 = vmatprep.subr.bf16.mxu0 %v6187
  %6251 = vmatpush1.bf16.msra.mxu0 %v6186
  %6252 = vmatprep.subr.bf16.mxu0 %v6189
  %6253 = vmatpush1.bf16.msra.mxu0 %v6188
  %6254 = vmatprep.subr.bf16.mxu0 %v6191
  %6255 = vmatpush1.bf16.msra.mxu0 %v6190
  %6256 = vmatprep.subr.bf16.mxu0 %v6193
  %6257 = vmatpush1.bf16.msra.mxu0 %v6192
  %6258 = vmatprep.subr.bf16.mxu0 %v6195
  %6259 = vmatpush1.bf16.msra.mxu0 %v6194
  %6260 = vmatprep.subr.bf16.mxu0 %v6197
  %6261 = vmatpush1.bf16.msra.mxu0 %v6196
  %6262 = vmatprep.subr.bf16.mxu0 %v6199
  %6263 = vmatpush1.bf16.msra.mxu0 %v6198
  %6264 = vmatprep.subr.bf16.mxu0 %v6201
  %6265 = vmatpush1.bf16.msra.mxu0 %v6200
  %6266 = vmatprep.subr.bf16.mxu0 %v6203
  %6267 = vmatpush1.bf16.msra.mxu0 %v6202
  %6268 = vmatprep.mubr.bf16.mxu0 %v6031
  %6269 = vmatmul.mubr.bf16.gmra.mrb[0].mxu0 %v6019
  %v6270 = vpop.f32.mrb[0].mxu0
  %v6271 = vadd.f32 0.0, %v6270
  %v6272 = vpop.f32.mrb[0].mxu0
  %v6273 = vadd.f32 0.0, %v6272
  %v6274 = vpop.f32.mrb[0].mxu0
  %v6275 = vadd.f32 0.0, %v6274
  %v6276 = vpop.f32.mrb[0].mxu0
  %v6277 = vadd.f32 0.0, %v6276
  %6278 = vmatprep.mubr.bf16.mxu0 %v6039
  %6279 = vmatmul.mubr.bf16.gmra.mrb[0].mxu0 %v6035
  %v6280 = vpop.f32.mrb[0].mxu0
  %v6281 = vadd.f32 0.0, %v6280
  %v6282 = vpop.f32.mrb[0].mxu0
  %v6283 = vadd.f32 0.0, %v6282
  %v6284 = vpop.f32.mrb[0].mxu0
  %v6285 = vadd.f32 0.0, %v6284
  %v6286 = vpop.f32.mrb[0].mxu0
  %v6287 = vadd.f32 0.0, %v6286
  %6288 = vmatprep.mubr.bf16.mxu0 %v6047
  %6289 = vmatmul.mubr.bf16.gmra.mrb[0].mxu0 %v6043
  %v6290 = vpop.f32.mrb[0].mxu0
  %v6291 = vadd.f32 0.0, %v6290
  %v6292 = vpop.f32.mrb[0].mxu0
  %v6293 = vadd.f32 0.0, %v6292
  %v6294 = vpop.f32.mrb[0].mxu0
  %v6295 = vadd.f32 0.0, %v6294
  %v6296 = vpop.f32.mrb[0].mxu0
  %v6297 = vadd.f32 0.0, %v6296
  %6298 = vmatprep.mubr.bf16.mxu0 %v6065
  %6299 = vmatmul.mubr.bf16.gmra.mrb[0].mxu0 %v6056
  %v6300 = vpop.f32.mrb[0].mxu0
  %v6301 = vadd.f32 0.0, %v6300
  %v6302 = vpop.f32.mrb[0].mxu0
  %v6303 = vadd.f32 0.0, %v6302
  %v6304 = vpop.f32.mrb[0].mxu0
  %v6305 = vadd.f32 0.0, %v6304
  %v6306 = vpop.f32.mrb[0].mxu0
  %v6307 = vadd.f32 0.0, %v6306
  %6308 = vmatprep.mubr.bf16.mxu0 %v6064
  %6309 = vmatmul.mubr.bf16.gmra.mrb[0].mxu0 %v6055
  %v6310 = vpop.f32.mrb[0].mxu0
  %v6311 = vadd.f32 0.0, %v6310
  %v6312 = vpop.f32.mrb[0].mxu0
  %v6313 = vadd.f32 0.0, %v6312
  %v6314 = vpop.f32.mrb[0].mxu0
  %v6315 = vpop.f32.mrb[0].mxu0
  %6316 = vdwg.mxu0
  %v6317 = vadd.f32 %v5948, %v6271
  %v6318 = vadd.f32 %v5949, %v6273
  %v6319 = vadd.f32 %v5950, %v6275
  %v6320 = vadd.f32 %v5951, %v6277
  %v6321 = vadd.f32 %v5952, %v6281
  %v6322 = vadd.f32 %v5953, %v6283
  %v6323 = vadd.f32 %v5954, %v6285
  %v6324 = vadd.f32 %v5955, %v6287
  %v6325 = vadd.f32 %v5956, %v6291
  %v6326 = vadd.f32 %v5957, %v6293
  %v6327 = vadd.f32 %v5958, %v6295
  %v6328 = vadd.f32 %v5959, %v6297
  %v6329 = vadd.f32 %v5960, %v6301
  %v6330 = vadd.f32 %v5961, %v6303
  %v6331 = vadd.f32 %v5962, %v6305
  %v6332 = vadd.f32 %v5963, %v6307
  %v6333 = vadd.f32 %v5964, %v6311
  %v6334 = vadd.f32 %v5965, %v6313
  %v6335 = vld [vmem:[#allocation4 + $0x90] sm:$0xff]
  %v6336 = vld [vmem:[#allocation4 + $0x98] sm:$0xff]
  %v6337 = vpack.c.bf16 %v4888, %v4886
  %v6338 = vpack.c.bf16 %v4889, %v4887
  %v6339 = vpack.c.bf16 %v4892, %v4890
  %v6340 = vpack.c.bf16 %v4893, %v4891
  %v6341 = vpack.c.bf16 %v4896, %v4894
  %v6342 = vpack.c.bf16 %v4897, %v4895
  %v6343 = vpack.c.bf16 %v4900, %v4898
  %v6344 = vpack.c.bf16 %v4901, %v4899
  %v6345 = vpack.c.bf16 %v6335, %v6335
  %v6346 = vpack.c.bf16 %v6336, %v6336
  %s6347 = scalar_lea.vmem %s4, 1024
  %v6348 = vld [vmem:[%s6347] sm:$0xff]
  %v6349 = vld [vmem:[%s6347 + $0x8] sm:$0xff]
  %v6350 = vld [vmem:[%s6347 + $0x10] sm:$0xff]
  %v6351 = vld [vmem:[%s6347 + $0x18] sm:$0xff]
  %v6352 = vld [vmem:[%s6347 + $0x20] sm:$0xff]
  %v6353 = vld [vmem:[%s6347 + $0x28] sm:$0xff]
  %v6354 = vld [vmem:[%s6347 + $0x30] sm:$0xff]
  %v6355 = vld [vmem:[%s6347 + $0x38] sm:$0xff]
  %v6356 = vld [vmem:[%s6347 + $0x40] sm:$0xff]
  %v6357 = vld [vmem:[%s6347 + $0x48] sm:$0xff]
  %v6358 = vld [vmem:[%s6347 + $0x50] sm:$0xff]
  %v6359 = vld [vmem:[%s6347 + $0x58] sm:$0xff]
  %v6360 = vld [vmem:[%s6347 + $0x60] sm:$0xff]
  %v6361 = vld [vmem:[%s6347 + $0x68] sm:$0xff]
  %v6362 = vld [vmem:[%s6347 + $0x70] sm:$0xff]
  %v6363 = vld [vmem:[%s6347 + $0x78] sm:$0xff]
  %v6364 = vld [vmem:[%s6347 + $0x80] sm:$0xff]
  %v6365 = vld [vmem:[%s6347 + $0x88] sm:$0xff]
  %v6366 = vld [vmem:[%s6347 + $0x90] sm:$0xff]
  %v6367 = vld [vmem:[%s6347 + $0x98] sm:$0xff]
  %v6368 = vld [vmem:[%s6347 + $0xa0] sm:$0xff]
  %v6369 = vld [vmem:[%s6347 + $0xa8] sm:$0xff]
  %v6370 = vld [vmem:[%s6347 + $0xb0] sm:$0xff]
  %v6371 = vld [vmem:[%s6347 + $0xb8] sm:$0xff]
  %v6372 = vld [vmem:[%s6347 + $0xc0] sm:$0xff]
  %v6373 = vld [vmem:[%s6347 + $0xc8] sm:$0xff]
  %v6374 = vld [vmem:[%s6347 + $0xd0] sm:$0xff]
  %v6375 = vld [vmem:[%s6347 + $0xd8] sm:$0xff]
  %v6376 = vld [vmem:[%s6347 + $0xe0] sm:$0xff]
  %v6377 = vld [vmem:[%s6347 + $0xe8] sm:$0xff]
  %v6378 = vld [vmem:[%s6347 + $0xf0] sm:$0xff]
  %v6379 = vld [vmem:[%s6347 + $0xf8] sm:$0xff]
  %v6412 = vunpack.c.l.b16 %v6348
  %v6413 = vunpack.c.h.b16 %v6348
  %v6414 = vunpack.c.l.b16 %v6349
  %v6415 = vunpack.c.h.b16 %v6349
  %v6416 = vunpack.c.l.b16 %v6350
  %v6417 = vunpack.c.h.b16 %v6350
  %v6418 = vunpack.c.l.b16 %v6351
  %v6419 = vunpack.c.h.b16 %v6351
  %v6420 = vunpack.c.l.b16 %v6352
  %v6421 = vunpack.c.h.b16 %v6352
  %v6422 = vunpack.c.l.b16 %v6353
  %v6423 = vunpack.c.h.b16 %v6353
  %v6424 = vunpack.c.l.b16 %v6354
  %v6425 = vunpack.c.h.b16 %v6354
  %v6426 = vunpack.c.l.b16 %v6355
  %v6427 = vunpack.c.h.b16 %v6355
  %v6428 = vunpack.c.l.b16 %v6356
  %v6429 = vunpack.c.h.b16 %v6356
  %v6430 = vunpack.c.l.b16 %v6357
  %v6431 = vunpack.c.h.b16 %v6357
  %v6432 = vunpack.c.l.b16 %v6358
  %v6433 = vunpack.c.h.b16 %v6358
  %v6434 = vunpack.c.l.b16 %v6359
  %v6435 = vunpack.c.h.b16 %v6359
  %v6436 = vunpack.c.l.b16 %v6360
  %v6437 = vunpack.c.h.b16 %v6360
  %v6438 = vunpack.c.l.b16 %v6361
  %v6439 = vunpack.c.h.b16 %v6361
  %v6440 = vunpack.c.l.b16 %v6362
  %v6441 = vunpack.c.h.b16 %v6362
  %v6442 = vunpack.c.l.b16 %v6363
  %v6443 = vunpack.c.h.b16 %v6363
  %v6444 = vunpack.c.l.b16 %v6364
  %v6445 = vunpack.c.h.b16 %v6364
  %v6446 = vunpack.c.l.b16 %v6365
  %v6447 = vunpack.c.h.b16 %v6365
  %v6448 = vunpack.c.l.b16 %v6366
  %v6449 = vunpack.c.h.b16 %v6366
  %v6450 = vunpack.c.l.b16 %v6367
  %v6451 = vunpack.c.h.b16 %v6367
  %v6452 = vunpack.c.l.b16 %v6368
  %v6453 = vunpack.c.h.b16 %v6368
  %v6454 = vunpack.c.l.b16 %v6369
  %v6455 = vunpack.c.h.b16 %v6369
  %v6456 = vunpack.c.l.b16 %v6370
  %v6457 = vunpack.c.h.b16 %v6370
  %v6458 = vunpack.c.l.b16 %v6371
  %v6459 = vunpack.c.h.b16 %v6371
  %v6460 = vunpack.c.l.b16 %v6372
  %v6461 = vunpack.c.h.b16 %v6372
  %v6462 = vunpack.c.l.b16 %v6373
  %v6463 = vunpack.c.h.b16 %v6373
  %v6464 = vunpack.c.l.b16 %v6374
  %v6465 = vunpack.c.h.b16 %v6374
  %v6466 = vunpack.c.l.b16 %v6375
  %v6467 = vunpack.c.h.b16 %v6375
  %v6468 = vunpack.c.l.b16 %v6376
  %v6469 = vunpack.c.h.b16 %v6376
  %v6470 = vunpack.c.l.b16 %v6377
  %v6471 = vunpack.c.h.b16 %v6377
  %v6472 = vunpack.c.l.b16 %v6378
  %v6473 = vunpack.c.h.b16 %v6378
  %v6474 = vunpack.c.l.b16 %v6379
  %v6475 = vunpack.c.h.b16 %v6379
  %v6476 = vpack.c.b16 %v6414, %v6412
  %v6477 = vpack.c.b16 %v6415, %v6413
  %v6478 = vpack.c.b16 %v6418, %v6416
  %v6479 = vpack.c.b16 %v6419, %v6417
  %v6480 = vpack.c.b16 %v6422, %v6420
  %v6481 = vpack.c.b16 %v6423, %v6421
  %v6482 = vpack.c.b16 %v6426, %v6424
  %v6483 = vpack.c.b16 %v6427, %v6425
  %v6484 = vpack.c.b16 %v6430, %v6428
  %v6485 = vpack.c.b16 %v6431, %v6429
  %v6486 = vpack.c.b16 %v6434, %v6432
  %v6487 = vpack.c.b16 %v6435, %v6433
  %v6488 = vpack.c.b16 %v6438, %v6436
  %v6489 = vpack.c.b16 %v6439, %v6437
  %v6490 = vpack.c.b16 %v6442, %v6440
  %v6491 = vpack.c.b16 %v6443, %v6441
  %v6492 = vpack.c.b16 %v6446, %v6444
  %v6493 = vpack.c.b16 %v6447, %v6445
  %v6494 = vpack.c.b16 %v6450, %v6448
  %v6495 = vpack.c.b16 %v6451, %v6449
  %v6496 = vpack.c.b16 %v6454, %v6452
  %v6497 = vpack.c.b16 %v6455, %v6453
  %v6498 = vpack.c.b16 %v6458, %v6456
  %v6499 = vpack.c.b16 %v6459, %v6457
  %v6500 = vpack.c.b16 %v6462, %v6460
  %v6501 = vpack.c.b16 %v6463, %v6461
  %v6502 = vpack.c.b16 %v6466, %v6464
  %v6503 = vpack.c.b16 %v6467, %v6465
  %v6504 = vpack.c.b16 %v6470, %v6468
  %v6505 = vpack.c.b16 %v6471, %v6469
  %v6506 = vpack.c.b16 %v6474, %v6472
  %v6507 = vpack.c.b16 %v6475, %v6473
  %6540 = vmatprep.subr.bf16.mxu0 %v6477
  %6541 = vmatpush1.bf16.msra.mxu0 %v6476
  %6542 = vmatprep.subr.bf16.mxu0 %v6479
  %6543 = vmatpush1.bf16.msra.mxu0 %v6478
  %6544 = vmatprep.subr.bf16.mxu0 %v6481
  %6545 = vmatpush1.bf16.msra.mxu0 %v6480
  %6546 = vmatprep.subr.bf16.mxu0 %v6483
  %6547 = vmatpush1.bf16.msra.mxu0 %v6482
  %6548 = vmatprep.subr.bf16.mxu0 %v6485
  %6549 = vmatpush1.bf16.msra.mxu0 %v6484
  %6550 = vmatprep.subr.bf16.mxu0 %v6487
  %6551 = vmatpush1.bf16.msra.mxu0 %v6486
  %6552 = vmatprep.subr.bf16.mxu0 %v6489
  %6553 = vmatpush1.bf16.msra.mxu0 %v6488
  %6554 = vmatprep.subr.bf16.mxu0 %v6491
  %6555 = vmatpush1.bf16.msra.mxu0 %v6490
  %6556 = vmatprep.subr.bf16.mxu0 %v6493
  %6557 = vmatpush1.bf16.msra.mxu0 %v6492
  %6558 = vmatprep.subr.bf16.mxu0 %v6495
  %6559 = vmatpush1.bf16.msra.mxu0 %v6494
  %6560 = vmatprep.subr.bf16.mxu0 %v6497
  %6561 = vmatpush1.bf16.msra.mxu0 %v6496
  %6562 = vmatprep.subr.bf16.mxu0 %v6499
  %6563 = vmatpush1.bf16.msra.mxu0 %v6498
  %6564 = vmatprep.subr.bf16.mxu0 %v6501
  %6565 = vmatpush1.bf16.msra.mxu0 %v6500
  %6566 = vmatprep.subr.bf16.mxu0 %v6503
  %6567 = vmatpush1.bf16.msra.mxu0 %v6502
  %6568 = vmatprep.subr.bf16.mxu0 %v6505
  %6569 = vmatpush1.bf16.msra.mxu0 %v6504
  %6570 = vmatprep.subr.bf16.mxu0 %v6507
  %6571 = vmatpush1.bf16.msra.mxu0 %v6506
  %6572 = vmatprep.mubr.bf16.mxu0 %v6338
  %6573 = vmatmul.mubr.bf16.gmra.mrb[0].mxu0 %v6337
  %v6574 = vpop.f32.mrb[0].mxu0
  %v6575 = vadd.f32 0.0, %v6574
  %v6576 = vpop.f32.mrb[0].mxu0
  %v6577 = vadd.f32 0.0, %v6576
  %v6578 = vpop.f32.mrb[0].mxu0
  %v6579 = vadd.f32 0.0, %v6578
  %v6580 = vpop.f32.mrb[0].mxu0
  %v6581 = vadd.f32 0.0, %v6580
  %6582 = vmatprep.mubr.bf16.mxu0 %v6340
  %6583 = vmatmul.mubr.bf16.gmra.mrb[0].mxu0 %v6339
  %v6584 = vpop.f32.mrb[0].mxu0
  %v6585 = vadd.f32 0.0, %v6584
  %v6586 = vpop.f32.mrb[0].mxu0
  %v6587 = vadd.f32 0.0, %v6586
  %v6588 = vpop.f32.mrb[0].mxu0
  %v6589 = vadd.f32 0.0, %v6588
  %v6590 = vpop.f32.mrb[0].mxu0
  %v6591 = vadd.f32 0.0, %v6590
  %6592 = vmatprep.mubr.bf16.mxu0 %v6342
  %6593 = vmatmul.mubr.bf16.gmra.mrb[0].mxu0 %v6341
  %v6594 = vpop.f32.mrb[0].mxu0
  %v6595 = vadd.f32 0.0, %v6594
  %v6596 = vpop.f32.mrb[0].mxu0
  %v6597 = vadd.f32 0.0, %v6596
  %v6598 = vpop.f32.mrb[0].mxu0
  %v6599 = vadd.f32 0.0, %v6598
  %v6600 = vpop.f32.mrb[0].mxu0
  %v6601 = vadd.f32 0.0, %v6600
  %6602 = vmatprep.mubr.bf16.mxu0 %v6344
  %6603 = vmatmul.mubr.bf16.gmra.mrb[0].mxu0 %v6343
  %v6604 = vpop.f32.mrb[0].mxu0
  %v6605 = vadd.f32 0.0, %v6604
  %v6606 = vpop.f32.mrb[0].mxu0
  %v6607 = vadd.f32 0.0, %v6606
  %v6608 = vpop.f32.mrb[0].mxu0
  %v6609 = vadd.f32 0.0, %v6608
  %v6610 = vpop.f32.mrb[0].mxu0
  %v6611 = vadd.f32 0.0, %v6610
  %6612 = vmatprep.mubr.bf16.mxu0 %v6346
  %6613 = vmatmul.mubr.bf16.gmra.mrb[0].mxu0 %v6345
  %v6614 = vpop.f32.mrb[0].mxu0
  %v6615 = vadd.f32 0.0, %v6614
  %v6616 = vpop.f32.mrb[0].mxu0
  %v6617 = vadd.f32 0.0, %v6616
  %v6618 = vpop.f32.mrb[0].mxu0
  %v6619 = vpop.f32.mrb[0].mxu0
  %6620 = vdwg.mxu0
  %v6621 = vadd.f32 %v6317, %v6575
  %v6622 = vadd.f32 %v6318, %v6577
  %v6623 = vadd.f32 %v6319, %v6579
  %v6624 = vadd.f32 %v6320, %v6581
  %v6625 = vadd.f32 %v6321, %v6585
  %v6626 = vadd.f32 %v6322, %v6587
  %v6627 = vadd.f32 %v6323, %v6589
  %v6628 = vadd.f32 %v6324, %v6591
  %v6629 = vadd.f32 %v6325, %v6595
  %v6630 = vadd.f32 %v6326, %v6597
  %v6631 = vadd.f32 %v6327, %v6599
  %v6632 = vadd.f32 %v6328, %v6601
  %v6633 = vadd.f32 %v6329, %v6605
  %v6634 = vadd.f32 %v6330, %v6607
  %v6635 = vadd.f32 %v6331, %v6609
  %v6636 = vadd.f32 %v6332, %v6611
  %v6637 = vadd.f32 %v6333, %v6615
  %v6638 = vadd.f32 %v6334, %v6617
  %v6639 = vld [vmem:[#allocation4 + $0x10] sm:$0xfe]
  %v6640 = vld [vmem:[#allocation4 + $0x18] sm:$0xfe]
  %v6641 = vld [vmem:[#allocation4 + $0x20] sm:$0xff]
  %v6642 = vld [vmem:[#allocation4 + $0x28] sm:$0xff]
  %v6643 = vld [vmem:[#allocation4 + $0x30] sm:$0xff]
  %v6644 = vld [vmem:[#allocation4 + $0x38] sm:$0xff]
  %v6645 = vld [vmem:[#allocation4 + $0x40] sm:$0xff]
  %v6646 = vld [vmem:[#allocation4 + $0x48] sm:$0xff]
  %v6647 = vld [vmem:[#allocation4 + $0x50] sm:$0xff]
  %v6648 = vld [vmem:[#allocation4 + $0x58] sm:$0xff]
  %v6649 = vld [vmem:[#allocation4 + $0x60] sm:$0xff]
  %v6650 = vld [vmem:[#allocation4 + $0x68] sm:$0xff]
  %v6651 = vld [vmem:[#allocation4 + $0x70] sm:$0xff]
  %v6652 = vld [vmem:[#allocation4 + $0x78] sm:$0xff]
  %v6653 = vld [vmem:[#allocation4 + $0x80] sm:$0xff]
  %v6654 = vld [vmem:[#allocation4 + $0x88] sm:$0xff]
  %v6655 = vld [vmem:[#allocation4 + $0x90] sm:$0xff]
  %v6656 = vld [vmem:[#allocation4 + $0x98] sm:$0xff]
  %v6657 = vld [vmem:[#allocation4 + $0xa0] sm:$0x1]
  %v6658 = vld [vmem:[#allocation4 + $0xa8] sm:$0x1]
  %v6659 = vpack.c.bf16 %v6641, %v6639
  %v6660 = vpack.c.bf16 %v6642, %v6640
  %v6661 = vpack.c.bf16 %v6645, %v6643
  %v6662 = vpack.c.bf16 %v6646, %v6644
  %v6663 = vpack.c.bf16 %v6649, %v6647
  %v6664 = vpack.c.bf16 %v6650, %v6648
  %v6665 = vpack.c.bf16 %v6653, %v6651
  %v6666 = vpack.c.bf16 %v6654, %v6652
  %v6667 = vpack.c.bf16 %v6657, %v6655
  %v6668 = vpack.c.bf16 %v6658, %v6656
  %s6669 = scalar_lea.vmem %s4, 1280
  %v6670 = vld [vmem:[%s6669] sm:$0xff]
  %v6671 = vld [vmem:[%s6669 + $0x8] sm:$0xff]
  %v6672 = vld [vmem:[%s6669 + $0x10] sm:$0xff]
  %v6673 = vld [vmem:[%s6669 + $0x18] sm:$0xff]
  %v6674 = vld [vmem:[%s6669 + $0x20] sm:$0xff]
  %v6675 = vld [vmem:[%s6669 + $0x28] sm:$0xff]
  %v6676 = vld [vmem:[%s6669 + $0x30] sm:$0xff]
  %v6677 = vld [vmem:[%s6669 + $0x38] sm:$0xff]
  %v6678 = vld [vmem:[%s6669 + $0x40] sm:$0xff]
  %v6679 = vld [vmem:[%s6669 + $0x48] sm:$0xff]
  %v6680 = vld [vmem:[%s6669 + $0x50] sm:$0xff]
  %v6681 = vld [vmem:[%s6669 + $0x58] sm:$0xff]
  %v6682 = vld [vmem:[%s6669 + $0x60] sm:$0xff]
  %v6683 = vld [vmem:[%s6669 + $0x68] sm:$0xff]
  %v6684 = vld [vmem:[%s6669 + $0x70] sm:$0xff]
  %v6685 = vld [vmem:[%s6669 + $0x78] sm:$0xff]
  %v6686 = vld [vmem:[%s6669 + $0x80] sm:$0xff]
  %v6687 = vld [vmem:[%s6669 + $0x88] sm:$0xff]
  %v6688 = vld [vmem:[%s6669 + $0x90] sm:$0xff]
  %v6689 = vld [vmem:[%s6669 + $0x98] sm:$0xff]
  %v6690 = vld [vmem:[%s6669 + $0xa0] sm:$0xff]
  %v6691 = vld [vmem:[%s6669 + $0xa8] sm:$0xff]
  %v6692 = vld [vmem:[%s6669 + $0xb0] sm:$0xff]
  %v6693 = vld [vmem:[%s6669 + $0xb8] sm:$0xff]
  %v6694 = vld [vmem:[%s6669 + $0xc0] sm:$0xff]
  %v6695 = vld [vmem:[%s6669 + $0xc8] sm:$0xff]
  %v6696 = vld [vmem:[%s6669 + $0xd0] sm:$0xff]
  %v6697 = vld [vmem:[%s6669 + $0xd8] sm:$0xff]
  %v6698 = vld [vmem:[%s6669 + $0xe0] sm:$0xff]
  %v6699 = vld [vmem:[%s6669 + $0xe8] sm:$0xff]
  %v6700 = vld [vmem:[%s6669 + $0xf0] sm:$0xff]
  %v6701 = vld [vmem:[%s6669 + $0xf8] sm:$0xff]
  %v6703 = vshrl.u32 %v6659, 16
  %v6705 = vshll.u32 %v6659, 16
  %v6707 = vrot.slane %v6705, 1
  %v6708 = vor.u32 %v6703, %v6707
  %v6710 = vshll.u32 %v6661, 16
  %v6712 = vrot.slane %v6710, 1
  %v6713 = vsel %vm5267, %v6708, %v6712
  %v6715 = vshrl.u32 %v6660, 16
  %v6717 = vshll.u32 %v6660, 16
  %v6719 = vrot.slane %v6717, 1
  %v6720 = vor.u32 %v6715, %v6719
  %v6722 = vshll.u32 %v6662, 16
  %v6724 = vrot.slane %v6722, 1
  %v6725 = vsel %vm5267, %v6720, %v6724
  %v6726 = vshrl.u32 %v6661, 16
  %v6728 = vor.u32 %v6726, %v6712
  %v6730 = vshll.u32 %v6663, 16
  %v6732 = vrot.slane %v6730, 1
  %v6733 = vsel %vm5267, %v6728, %v6732
  %v6734 = vshrl.u32 %v6662, 16
  %v6736 = vor.u32 %v6734, %v6724
  %v6738 = vshll.u32 %v6664, 16
  %v6740 = vrot.slane %v6738, 1
  %v6741 = vsel %vm5267, %v6736, %v6740
  %v6742 = vshrl.u32 %v6663, 16
  %v6744 = vor.u32 %v6742, %v6732
  %v6746 = vshll.u32 %v6665, 16
  %v6748 = vrot.slane %v6746, 1
  %v6749 = vsel %vm5267, %v6744, %v6748
  %v6750 = vshrl.u32 %v6664, 16
  %v6752 = vor.u32 %v6750, %v6740
  %v6754 = vshll.u32 %v6666, 16
  %v6756 = vrot.slane %v6754, 1
  %v6757 = vsel %vm5267, %v6752, %v6756
  %v6758 = vshrl.u32 %v6665, 16
  %v6760 = vor.u32 %v6758, %v6748
  %v6762 = vshll.u32 %v6667, 16
  %v6764 = vrot.slane %v6762, 1
  %v6765 = vsel %vm5267, %v6760, %v6764
  %v6766 = vshrl.u32 %v6666, 16
  %v6768 = vor.u32 %v6766, %v6756
  %v6770 = vshll.u32 %v6668, 16
  %v6772 = vrot.slane %v6770, 1
  %v6773 = vsel %vm5267, %v6768, %v6772
  %v6774 = vshrl.u32 %v6667, 16
  %v6776 = vor.u32 %v6774, %v6764
  %v6777 = vshrl.u32 %v6668, 16
  %v6779 = vor.u32 %v6777, %v6772
  %v6822 = vunpack.c.l.b16 %v6670
  %v6823 = vunpack.c.h.b16 %v6670
  %v6824 = vunpack.c.l.b16 %v6671
  %v6825 = vunpack.c.h.b16 %v6671
  %v6826 = vunpack.c.l.b16 %v6672
  %v6827 = vunpack.c.h.b16 %v6672
  %v6828 = vunpack.c.l.b16 %v6673
  %v6829 = vunpack.c.h.b16 %v6673
  %v6830 = vunpack.c.l.b16 %v6674
  %v6831 = vunpack.c.h.b16 %v6674
  %v6832 = vunpack.c.l.b16 %v6675
  %v6833 = vunpack.c.h.b16 %v6675
  %v6834 = vunpack.c.l.b16 %v6676
  %v6835 = vunpack.c.h.b16 %v6676
  %v6836 = vunpack.c.l.b16 %v6677
  %v6837 = vunpack.c.h.b16 %v6677
  %v6838 = vunpack.c.l.b16 %v6678
  %v6839 = vunpack.c.h.b16 %v6678
  %v6840 = vunpack.c.l.b16 %v6679
  %v6841 = vunpack.c.h.b16 %v6679
  %v6842 = vunpack.c.l.b16 %v6680
  %v6843 = vunpack.c.h.b16 %v6680
  %v6844 = vunpack.c.l.b16 %v6681
  %v6845 = vunpack.c.h.b16 %v6681
  %v6846 = vunpack.c.l.b16 %v6682
  %v6847 = vunpack.c.h.b16 %v6682
  %v6848 = vunpack.c.l.b16 %v6683
  %v6849 = vunpack.c.h.b16 %v6683
  %v6850 = vunpack.c.l.b16 %v6684
  %v6851 = vunpack.c.h.b16 %v6684
  %v6852 = vunpack.c.l.b16 %v6685
  %v6853 = vunpack.c.h.b16 %v6685
  %v6854 = vunpack.c.l.b16 %v6686
  %v6855 = vunpack.c.h.b16 %v6686
  %v6856 = vunpack.c.l.b16 %v6687
  %v6857 = vunpack.c.h.b16 %v6687
  %v6858 = vunpack.c.l.b16 %v6688
  %v6859 = vunpack.c.h.b16 %v6688
  %v6860 = vunpack.c.l.b16 %v6689
  %v6861 = vunpack.c.h.b16 %v6689
  %v6862 = vunpack.c.l.b16 %v6690
  %v6863 = vunpack.c.h.b16 %v6690
  %v6864 = vunpack.c.l.b16 %v6691
  %v6865 = vunpack.c.h.b16 %v6691
  %v6866 = vunpack.c.l.b16 %v6692
  %v6867 = vunpack.c.h.b16 %v6692
  %v6868 = vunpack.c.l.b16 %v6693
  %v6869 = vunpack.c.h.b16 %v6693
  %v6870 = vunpack.c.l.b16 %v6694
  %v6871 = vunpack.c.h.b16 %v6694
  %v6872 = vunpack.c.l.b16 %v6695
  %v6873 = vunpack.c.h.b16 %v6695
  %v6874 = vunpack.c.l.b16 %v6696
  %v6875 = vunpack.c.h.b16 %v6696
  %v6876 = vunpack.c.l.b16 %v6697
  %v6877 = vunpack.c.h.b16 %v6697
  %v6878 = vunpack.c.l.b16 %v6698
  %v6879 = vunpack.c.h.b16 %v6698
  %v6880 = vunpack.c.l.b16 %v6699
  %v6881 = vunpack.c.h.b16 %v6699
  %v6882 = vunpack.c.l.b16 %v6700
  %v6883 = vunpack.c.h.b16 %v6700
  %v6884 = vunpack.c.l.b16 %v6701
  %v6885 = vunpack.c.h.b16 %v6701
  %v6886 = vpack.c.b16 %v6824, %v6822
  %v6887 = vpack.c.b16 %v6825, %v6823
  %v6888 = vpack.c.b16 %v6828, %v6826
  %v6889 = vpack.c.b16 %v6829, %v6827
  %v6890 = vpack.c.b16 %v6832, %v6830
  %v6891 = vpack.c.b16 %v6833, %v6831
  %v6892 = vpack.c.b16 %v6836, %v6834
  %v6893 = vpack.c.b16 %v6837, %v6835
  %v6894 = vpack.c.b16 %v6840, %v6838
  %v6895 = vpack.c.b16 %v6841, %v6839
  %v6896 = vpack.c.b16 %v6844, %v6842
  %v6897 = vpack.c.b16 %v6845, %v6843
  %v6898 = vpack.c.b16 %v6848, %v6846
  %v6899 = vpack.c.b16 %v6849, %v6847
  %v6900 = vpack.c.b16 %v6852, %v6850
  %v6901 = vpack.c.b16 %v6853, %v6851
  %v6902 = vpack.c.b16 %v6856, %v6854
  %v6903 = vpack.c.b16 %v6857, %v6855
  %v6904 = vpack.c.b16 %v6860, %v6858
  %v6905 = vpack.c.b16 %v6861, %v6859
  %v6906 = vpack.c.b16 %v6864, %v6862
  %v6907 = vpack.c.b16 %v6865, %v6863
  %v6908 = vpack.c.b16 %v6868, %v6866
  %v6909 = vpack.c.b16 %v6869, %v6867
  %v6910 = vpack.c.b16 %v6872, %v6870
  %v6911 = vpack.c.b16 %v6873, %v6871
  %v6912 = vpack.c.b16 %v6876, %v6874
  %v6913 = vpack.c.b16 %v6877, %v6875
  %v6914 = vpack.c.b16 %v6880, %v6878
  %v6915 = vpack.c.b16 %v6881, %v6879
  %v6916 = vpack.c.b16 %v6884, %v6882
  %v6917 = vpack.c.b16 %v6885, %v6883
  %6950 = vmatprep.subr.bf16.mxu0 %v6887
  %6951 = vmatpush1.bf16.msra.mxu0 %v6886
  %6952 = vmatprep.subr.bf16.mxu0 %v6889
  %6953 = vmatpush1.bf16.msra.mxu0 %v6888
  %6954 = vmatprep.subr.bf16.mxu0 %v6891
  %6955 = vmatpush1.bf16.msra.mxu0 %v6890
  %6956 = vmatprep.subr.bf16.mxu0 %v6893
  %6957 = vmatpush1.bf16.msra.mxu0 %v6892
  %6958 = vmatprep.subr.bf16.mxu0 %v6895
  %6959 = vmatpush1.bf16.msra.mxu0 %v6894
  %6960 = vmatprep.subr.bf16.mxu0 %v6897
  %6961 = vmatpush1.bf16.msra.mxu0 %v6896
  %6962 = vmatprep.subr.bf16.mxu0 %v6899
  %6963 = vmatpush1.bf16.msra.mxu0 %v6898
  %6964 = vmatprep.subr.bf16.mxu0 %v6901
  %6965 = vmatpush1.bf16.msra.mxu0 %v6900
  %6966 = vmatprep.subr.bf16.mxu0 %v6903
  %6967 = vmatpush1.bf16.msra.mxu0 %v6902
  %6968 = vmatprep.subr.bf16.mxu0 %v6905
  %6969 = vmatpush1.bf16.msra.mxu0 %v6904
  %6970 = vmatprep.subr.bf16.mxu0 %v6907
  %6971 = vmatpush1.bf16.msra.mxu0 %v6906
  %6972 = vmatprep.subr.bf16.mxu0 %v6909
  %6973 = vmatpush1.bf16.msra.mxu0 %v6908
  %6974 = vmatprep.subr.bf16.mxu0 %v6911
  %6975 = vmatpush1.bf16.msra.mxu0 %v6910
  %6976 = vmatprep.subr.bf16.mxu0 %v6913
  %6977 = vmatpush1.bf16.msra.mxu0 %v6912
  %6978 = vmatprep.subr.bf16.mxu0 %v6915
  %6979 = vmatpush1.bf16.msra.mxu0 %v6914
  %6980 = vmatprep.subr.bf16.mxu0 %v6917
  %6981 = vmatpush1.bf16.msra.mxu0 %v6916
  %6982 = vmatprep.mubr.bf16.mxu0 %v6725
  %6983 = vmatmul.mubr.bf16.gmra.mrb[0].mxu0 %v6713
  %v6984 = vpop.f32.mrb[0].mxu0
  %v6985 = vadd.f32 0.0, %v6984
  %v6986 = vpop.f32.mrb[0].mxu0
  %v6987 = vadd.f32 0.0, %v6986
  %v6988 = vpop.f32.mrb[0].mxu0
  %v6989 = vadd.f32 0.0, %v6988
  %v6990 = vpop.f32.mrb[0].mxu0
  %v6991 = vadd.f32 0.0, %v6990
  %6992 = vmatprep.mubr.bf16.mxu0 %v6741
  %6993 = vmatmul.mubr.bf16.gmra.mrb[0].mxu0 %v6733
  %v6994 = vpop.f32.mrb[0].mxu0
  %v6995 = vadd.f32 0.0, %v6994
  %v6996 = vpop.f32.mrb[0].mxu0
  %v6997 = vadd.f32 0.0, %v6996
  %v6998 = vpop.f32.mrb[0].mxu0
  %v6999 = vadd.f32 0.0, %v6998
  %v7000 = vpop.f32.mrb[0].mxu0
  %v7001 = vadd.f32 0.0, %v7000
  %7002 = vmatprep.mubr.bf16.mxu0 %v6757
  %7003 = vmatmul.mubr.bf16.gmra.mrb[0].mxu0 %v6749
  %v7004 = vpop.f32.mrb[0].mxu0
  %v7005 = vadd.f32 0.0, %v7004
  %v7006 = vpop.f32.mrb[0].mxu0
  %v7007 = vadd.f32 0.0, %v7006
  %v7008 = vpop.f32.mrb[0].mxu0
  %v7009 = vadd.f32 0.0, %v7008
  %v7010 = vpop.f32.mrb[0].mxu0
  %v7011 = vadd.f32 0.0, %v7010
  %7012 = vmatprep.mubr.bf16.mxu0 %v6773
  %7013 = vmatmul.mubr.bf16.gmra.mrb[0].mxu0 %v6765
  %v7014 = vpop.f32.mrb[0].mxu0
  %v7015 = vadd.f32 0.0, %v7014
  %v7016 = vpop.f32.mrb[0].mxu0
  %v7017 = vadd.f32 0.0, %v7016
  %v7018 = vpop.f32.mrb[0].mxu0
  %v7019 = vadd.f32 0.0, %v7018
  %v7020 = vpop.f32.mrb[0].mxu0
  %v7021 = vadd.f32 0.0, %v7020
  %7022 = vmatprep.mubr.bf16.mxu0 %v6779
  %7023 = vmatmul.mubr.bf16.gmra.mrb[0].mxu0 %v6776
  %v7024 = vpop.f32.mrb[0].mxu0
  %v7025 = vadd.f32 0.0, %v7024
  %v7026 = vpop.f32.mrb[0].mxu0
  %v7027 = vadd.f32 0.0, %v7026
  %v7028 = vpop.f32.mrb[0].mxu0
  %v7029 = vpop.f32.mrb[0].mxu0
  %7030 = vdwg.mxu0
  %v7031 = vadd.f32 %v6621, %v6985
  %v7032 = vadd.f32 %v6622, %v6987
  %v7033 = vadd.f32 %v6623, %v6989
  %v7034 = vadd.f32 %v6624, %v6991
  %v7035 = vadd.f32 %v6625, %v6995
  %v7036 = vadd.f32 %v6626, %v6997
  %v7037 = vadd.f32 %v6627, %v6999
  %v7038 = vadd.f32 %v6628, %v7001
  %v7039 = vadd.f32 %v6629, %v7005
  %v7040 = vadd.f32 %v6630, %v7007
  %v7041 = vadd.f32 %v6631, %v7009
  %v7042 = vadd.f32 %v6632, %v7011
  %v7043 = vadd.f32 %v6633, %v7015
  %v7044 = vadd.f32 %v6634, %v7017
  %v7045 = vadd.f32 %v6635, %v7019
  %v7046 = vadd.f32 %v6636, %v7021
  %v7047 = vadd.f32 %v6637, %v7025
  %v7048 = vadd.f32 %v6638, %v7027
  %v7049 = vld [vmem:[#allocation4 + $0x10] sm:$0xe0]
  %v7050 = vld [vmem:[#allocation4 + $0x18] sm:$0xe0]
  %v7051 = vld [vmem:[#allocation4 + $0xa0] sm:$0x1f]
  %v7052 = vld [vmem:[#allocation4 + $0xa8] sm:$0x1f]
  %v7053 = vpack.c.bf16 %v6641, %v7049
  %v7054 = vpack.c.bf16 %v6642, %v7050
  %v7055 = vpack.c.bf16 %v7051, %v6655
  %v7056 = vpack.c.bf16 %v7052, %v6656
  %s7057 = scalar_lea.vmem %s4, 1536
  %v7058 = vld [vmem:[%s7057] sm:$0xff]
  %v7059 = vld [vmem:[%s7057 + $0x8] sm:$0xff]
  %v7060 = vld [vmem:[%s7057 + $0x10] sm:$0xff]
  %v7061 = vld [vmem:[%s7057 + $0x18] sm:$0xff]
  %v7062 = vld [vmem:[%s7057 + $0x20] sm:$0xff]
  %v7063 = vld [vmem:[%s7057 + $0x28] sm:$0xff]
  %v7064 = vld [vmem:[%s7057 + $0x30] sm:$0xff]
  %v7065 = vld [vmem:[%s7057 + $0x38] sm:$0xff]
  %v7066 = vld [vmem:[%s7057 + $0x40] sm:$0xff]
  %v7067 = vld [vmem:[%s7057 + $0x48] sm:$0xff]
  %v7068 = vld [vmem:[%s7057 + $0x50] sm:$0xff]
  %v7069 = vld [vmem:[%s7057 + $0x58] sm:$0xff]
  %v7070 = vld [vmem:[%s7057 + $0x60] sm:$0xff]
  %v7071 = vld [vmem:[%s7057 + $0x68] sm:$0xff]
  %v7072 = vld [vmem:[%s7057 + $0x70] sm:$0xff]
  %v7073 = vld [vmem:[%s7057 + $0x78] sm:$0xff]
  %v7074 = vld [vmem:[%s7057 + $0x80] sm:$0xff]
  %v7075 = vld [vmem:[%s7057 + $0x88] sm:$0xff]
  %v7076 = vld [vmem:[%s7057 + $0x90] sm:$0xff]
  %v7077 = vld [vmem:[%s7057 + $0x98] sm:$0xff]
  %v7078 = vld [vmem:[%s7057 + $0xa0] sm:$0xff]
  %v7079 = vld [vmem:[%s7057 + $0xa8] sm:$0xff]
  %v7080 = vld [vmem:[%s7057 + $0xb0] sm:$0xff]
  %v7081 = vld [vmem:[%s7057 + $0xb8] sm:$0xff]
  %v7082 = vld [vmem:[%s7057 + $0xc0] sm:$0xff]
  %v7083 = vld [vmem:[%s7057 + $0xc8] sm:$0xff]
  %v7084 = vld [vmem:[%s7057 + $0xd0] sm:$0xff]
  %v7085 = vld [vmem:[%s7057 + $0xd8] sm:$0xff]
  %v7086 = vld [vmem:[%s7057 + $0xe0] sm:$0xff]
  %v7087 = vld [vmem:[%s7057 + $0xe8] sm:$0xff]
  %v7088 = vld [vmem:[%s7057 + $0xf0] sm:$0xff]
  %v7089 = vld [vmem:[%s7057 + $0xf8] sm:$0xff]
  %vm7090 = vsmask.f32 5376
  %v7092 = vshrl.u32 %v7053, 16
  %v7094 = vrot.slane %v7092, 2
  %v7095 = vshll.u32 %v7053, 16
  %v7097 = vrot.slane %v7095, 3
  %v7098 = vor.u32 %v7094, %v7097
  %v7099 = vrot.slane %v6726, 2
  %v7100 = vrot.slane %v6710, 3
  %v7101 = vor.u32 %v7099, %v7100
  %v7102 = vsel %vm7090, %v7098, %v7101
  %v7104 = vshrl.u32 %v7054, 16
  %v7106 = vrot.slane %v7104, 2
  %v7107 = vshll.u32 %v7054, 16
  %v7109 = vrot.slane %v7107, 3
  %v7110 = vor.u32 %v7106, %v7109
  %v7111 = vrot.slane %v6734, 2
  %v7112 = vrot.slane %v6722, 3
  %v7113 = vor.u32 %v7111, %v7112
  %v7114 = vsel %vm7090, %v7110, %v7113
  %v7115 = vrot.slane %v6742, 2
  %v7116 = vrot.slane %v6730, 3
  %v7117 = vor.u32 %v7115, %v7116
  %v7118 = vsel %vm7090, %v7101, %v7117
  %v7119 = vrot.slane %v6750, 2
  %v7120 = vrot.slane %v6738, 3
  %v7121 = vor.u32 %v7119, %v7120
  %v7122 = vsel %vm7090, %v7113, %v7121
  %v7123 = vrot.slane %v6758, 2
  %v7124 = vrot.slane %v6746, 3
  %v7125 = vor.u32 %v7123, %v7124
  %v7126 = vsel %vm7090, %v7117, %v7125
  %v7127 = vrot.slane %v6766, 2
  %v7128 = vrot.slane %v6754, 3
  %v7129 = vor.u32 %v7127, %v7128
  %v7130 = vsel %vm7090, %v7121, %v7129
  %v7132 = vshrl.u32 %v7055, 16
  %v7134 = vrot.slane %v7132, 2
  %v7135 = vshll.u32 %v7055, 16
  %v7137 = vrot.slane %v7135, 3
  %v7138 = vor.u32 %v7134, %v7137
  %v7139 = vsel %vm7090, %v7125, %v7138
  %v7141 = vshrl.u32 %v7056, 16
  %v7143 = vrot.slane %v7141, 2
  %v7144 = vshll.u32 %v7056, 16
  %v7146 = vrot.slane %v7144, 3
  %v7147 = vor.u32 %v7143, %v7146
  %v7148 = vsel %vm7090, %v7129, %v7147
  %v7191 = vunpack.c.l.b16 %v7058
  %v7192 = vunpack.c.h.b16 %v7058
  %v7193 = vunpack.c.l.b16 %v7059
  %v7194 = vunpack.c.h.b16 %v7059
  %v7195 = vunpack.c.l.b16 %v7060
  %v7196 = vunpack.c.h.b16 %v7060
  %v7197 = vunpack.c.l.b16 %v7061
  %v7198 = vunpack.c.h.b16 %v7061
  %v7199 = vunpack.c.l.b16 %v7062
  %v7200 = vunpack.c.h.b16 %v7062
  %v7201 = vunpack.c.l.b16 %v7063
  %v7202 = vunpack.c.h.b16 %v7063
  %v7203 = vunpack.c.l.b16 %v7064
  %v7204 = vunpack.c.h.b16 %v7064
  %v7205 = vunpack.c.l.b16 %v7065
  %v7206 = vunpack.c.h.b16 %v7065
  %v7207 = vunpack.c.l.b16 %v7066
  %v7208 = vunpack.c.h.b16 %v7066
  %v7209 = vunpack.c.l.b16 %v7067
  %v7210 = vunpack.c.h.b16 %v7067
  %v7211 = vunpack.c.l.b16 %v7068
  %v7212 = vunpack.c.h.b16 %v7068
  %v7213 = vunpack.c.l.b16 %v7069
  %v7214 = vunpack.c.h.b16 %v7069
  %v7215 = vunpack.c.l.b16 %v7070
  %v7216 = vunpack.c.h.b16 %v7070
  %v7217 = vunpack.c.l.b16 %v7071
  %v7218 = vunpack.c.h.b16 %v7071
  %v7219 = vunpack.c.l.b16 %v7072
  %v7220 = vunpack.c.h.b16 %v7072
  %v7221 = vunpack.c.l.b16 %v7073
  %v7222 = vunpack.c.h.b16 %v7073
  %v7223 = vunpack.c.l.b16 %v7074
  %v7224 = vunpack.c.h.b16 %v7074
  %v7225 = vunpack.c.l.b16 %v7075
  %v7226 = vunpack.c.h.b16 %v7075
  %v7227 = vunpack.c.l.b16 %v7076
  %v7228 = vunpack.c.h.b16 %v7076
  %v7229 = vunpack.c.l.b16 %v7077
  %v7230 = vunpack.c.h.b16 %v7077
  %v7231 = vunpack.c.l.b16 %v7078
  %v7232 = vunpack.c.h.b16 %v7078
  %v7233 = vunpack.c.l.b16 %v7079
  %v7234 = vunpack.c.h.b16 %v7079
  %v7235 = vunpack.c.l.b16 %v7080
  %v7236 = vunpack.c.h.b16 %v7080
  %v7237 = vunpack.c.l.b16 %v7081
  %v7238 = vunpack.c.h.b16 %v7081
  %v7239 = vunpack.c.l.b16 %v7082
  %v7240 = vunpack.c.h.b16 %v7082
  %v7241 = vunpack.c.l.b16 %v7083
  %v7242 = vunpack.c.h.b16 %v7083
  %v7243 = vunpack.c.l.b16 %v7084
  %v7244 = vunpack.c.h.b16 %v7084
  %v7245 = vunpack.c.l.b16 %v7085
  %v7246 = vunpack.c.h.b16 %v7085
  %v7247 = vunpack.c.l.b16 %v7086
  %v7248 = vunpack.c.h.b16 %v7086
  %v7249 = vunpack.c.l.b16 %v7087
  %v7250 = vunpack.c.h.b16 %v7087
  %v7251 = vunpack.c.l.b16 %v7088
  %v7252 = vunpack.c.h.b16 %v7088
  %v7253 = vunpack.c.l.b16 %v7089
  %v7254 = vunpack.c.h.b16 %v7089
  %v7255 = vpack.c.b16 %v7193, %v7191
  %v7256 = vpack.c.b16 %v7194, %v7192
  %v7257 = vpack.c.b16 %v7197, %v7195
  %v7258 = vpack.c.b16 %v7198, %v7196
  %v7259 = vpack.c.b16 %v7201, %v7199
  %v7260 = vpack.c.b16 %v7202, %v7200
  %v7261 = vpack.c.b16 %v7205, %v7203
  %v7262 = vpack.c.b16 %v7206, %v7204
  %v7263 = vpack.c.b16 %v7209, %v7207
  %v7264 = vpack.c.b16 %v7210, %v7208
  %v7265 = vpack.c.b16 %v7213, %v7211
  %v7266 = vpack.c.b16 %v7214, %v7212
  %v7267 = vpack.c.b16 %v7217, %v7215
  %v7268 = vpack.c.b16 %v7218, %v7216
  %v7269 = vpack.c.b16 %v7221, %v7219
  %v7270 = vpack.c.b16 %v7222, %v7220
  %v7271 = vpack.c.b16 %v7225, %v7223
  %v7272 = vpack.c.b16 %v7226, %v7224
  %v7273 = vpack.c.b16 %v7229, %v7227
  %v7274 = vpack.c.b16 %v7230, %v7228
  %v7275 = vpack.c.b16 %v7233, %v7231
  %v7276 = vpack.c.b16 %v7234, %v7232
  %v7277 = vpack.c.b16 %v7237, %v7235
  %v7278 = vpack.c.b16 %v7238, %v7236
  %v7279 = vpack.c.b16 %v7241, %v7239
  %v7280 = vpack.c.b16 %v7242, %v7240
  %v7281 = vpack.c.b16 %v7245, %v7243
  %v7282 = vpack.c.b16 %v7246, %v7244
  %v7283 = vpack.c.b16 %v7249, %v7247
  %v7284 = vpack.c.b16 %v7250, %v7248
  %v7285 = vpack.c.b16 %v7253, %v7251
  %v7286 = vpack.c.b16 %v7254, %v7252
  %7319 = vmatprep.subr.bf16.mxu0 %v7256
  %7320 = vmatpush1.bf16.msra.mxu0 %v7255
  %7321 = vmatprep.subr.bf16.mxu0 %v7258
  %7322 = vmatpush1.bf16.msra.mxu0 %v7257
  %7323 = vmatprep.subr.bf16.mxu0 %v7260
  %7324 = vmatpush1.bf16.msra.mxu0 %v7259
  %7325 = vmatprep.subr.bf16.mxu0 %v7262
  %7326 = vmatpush1.bf16.msra.mxu0 %v7261
  %7327 = vmatprep.subr.bf16.mxu0 %v7264
  %7328 = vmatpush1.bf16.msra.mxu0 %v7263
  %7329 = vmatprep.subr.bf16.mxu0 %v7266
  %7330 = vmatpush1.bf16.msra.mxu0 %v7265
  %7331 = vmatprep.subr.bf16.mxu0 %v7268
  %7332 = vmatpush1.bf16.msra.mxu0 %v7267
  %7333 = vmatprep.subr.bf16.mxu0 %v7270
  %7334 = vmatpush1.bf16.msra.mxu0 %v7269
  %7335 = vmatprep.subr.bf16.mxu0 %v7272
  %7336 = vmatpush1.bf16.msra.mxu0 %v7271
  %7337 = vmatprep.subr.bf16.mxu0 %v7274
  %7338 = vmatpush1.bf16.msra.mxu0 %v7273
  %7339 = vmatprep.subr.bf16.mxu0 %v7276
  %7340 = vmatpush1.bf16.msra.mxu0 %v7275
  %7341 = vmatprep.subr.bf16.mxu0 %v7278
  %7342 = vmatpush1.bf16.msra.mxu0 %v7277
  %7343 = vmatprep.subr.bf16.mxu0 %v7280
  %7344 = vmatpush1.bf16.msra.mxu0 %v7279
  %7345 = vmatprep.subr.bf16.mxu0 %v7282
  %7346 = vmatpush1.bf16.msra.mxu0 %v7281
  %7347 = vmatprep.subr.bf16.mxu0 %v7284
  %7348 = vmatpush1.bf16.msra.mxu0 %v7283
  %7349 = vmatprep.subr.bf16.mxu0 %v7286
  %7350 = vmatpush1.bf16.msra.mxu0 %v7285
  %7351 = vmatprep.mubr.bf16.mxu0 %v7114
  %7352 = vmatmul.mubr.bf16.gmra.mrb[0].mxu0 %v7102
  %v7353 = vpop.f32.mrb[0].mxu0
  %v7354 = vadd.f32 0.0, %v7353
  %v7355 = vpop.f32.mrb[0].mxu0
  %v7356 = vadd.f32 0.0, %v7355
  %v7357 = vpop.f32.mrb[0].mxu0
  %v7358 = vadd.f32 0.0, %v7357
  %v7359 = vpop.f32.mrb[0].mxu0
  %v7360 = vadd.f32 0.0, %v7359
  %7361 = vmatprep.mubr.bf16.mxu0 %v7122
  %7362 = vmatmul.mubr.bf16.gmra.mrb[0].mxu0 %v7118
  %v7363 = vpop.f32.mrb[0].mxu0
  %v7364 = vadd.f32 0.0, %v7363
  %v7365 = vpop.f32.mrb[0].mxu0
  %v7366 = vadd.f32 0.0, %v7365
  %v7367 = vpop.f32.mrb[0].mxu0
  %v7368 = vadd.f32 0.0, %v7367
  %v7369 = vpop.f32.mrb[0].mxu0
  %v7370 = vadd.f32 0.0, %v7369
  %7371 = vmatprep.mubr.bf16.mxu0 %v7130
  %7372 = vmatmul.mubr.bf16.gmra.mrb[0].mxu0 %v7126
  %v7373 = vpop.f32.mrb[0].mxu0
  %v7374 = vadd.f32 0.0, %v7373
  %v7375 = vpop.f32.mrb[0].mxu0
  %v7376 = vadd.f32 0.0, %v7375
  %v7377 = vpop.f32.mrb[0].mxu0
  %v7378 = vadd.f32 0.0, %v7377
  %v7379 = vpop.f32.mrb[0].mxu0
  %v7380 = vadd.f32 0.0, %v7379
  %7381 = vmatprep.mubr.bf16.mxu0 %v7148
  %7382 = vmatmul.mubr.bf16.gmra.mrb[0].mxu0 %v7139
  %v7383 = vpop.f32.mrb[0].mxu0
  %v7384 = vadd.f32 0.0, %v7383
  %v7385 = vpop.f32.mrb[0].mxu0
  %v7386 = vadd.f32 0.0, %v7385
  %v7387 = vpop.f32.mrb[0].mxu0
  %v7388 = vadd.f32 0.0, %v7387
  %v7389 = vpop.f32.mrb[0].mxu0
  %v7390 = vadd.f32 0.0, %v7389
  %7391 = vmatprep.mubr.bf16.mxu0 %v7147
  %7392 = vmatmul.mubr.bf16.gmra.mrb[0].mxu0 %v7138
  %v7393 = vpop.f32.mrb[0].mxu0
  %v7394 = vadd.f32 0.0, %v7393
  %v7395 = vpop.f32.mrb[0].mxu0
  %v7396 = vadd.f32 0.0, %v7395
  %v7397 = vpop.f32.mrb[0].mxu0
  %v7398 = vpop.f32.mrb[0].mxu0
  %7399 = vdwg.mxu0
  %v7400 = vadd.f32 %v7031, %v7354
  %v7401 = vadd.f32 %v7032, %v7356
  %v7402 = vadd.f32 %v7033, %v7358
  %v7403 = vadd.f32 %v7034, %v7360
  %v7404 = vadd.f32 %v7035, %v7364
  %v7405 = vadd.f32 %v7036, %v7366
  %v7406 = vadd.f32 %v7037, %v7368
  %v7407 = vadd.f32 %v7038, %v7370
  %v7408 = vadd.f32 %v7039, %v7374
  %v7409 = vadd.f32 %v7040, %v7376
  %v7410 = vadd.f32 %v7041, %v7378
  %v7411 = vadd.f32 %v7042, %v7380
  %v7412 = vadd.f32 %v7043, %v7384
  %v7413 = vadd.f32 %v7044, %v7386
  %v7414 = vadd.f32 %v7045, %v7388
  %v7415 = vadd.f32 %v7046, %v7390
  %v7416 = vadd.f32 %v7047, %v7394
  %v7417 = vadd.f32 %v7048, %v7396
  %v7418 = vld [vmem:[#allocation4 + $0x10] sm:$0xc0]
  %v7419 = vld [vmem:[#allocation4 + $0x18] sm:$0xc0]
  %v7420 = vld [vmem:[#allocation4 + $0xa0] sm:$0x3f]
  %v7421 = vld [vmem:[#allocation4 + $0xa8] sm:$0x3f]
  %v7422 = vpack.c.bf16 %v6641, %v7418
  %v7423 = vpack.c.bf16 %v6642, %v7419
  %v7424 = vpack.c.bf16 %v7420, %v6655
  %v7425 = vpack.c.bf16 %v7421, %v6656
  %s7426 = scalar_lea.vmem %s4, 1792
  %v7427 = vld [vmem:[%s7426] sm:$0xff]
  %v7428 = vld [vmem:[%s7426 + $0x8] sm:$0xff]
  %v7429 = vld [vmem:[%s7426 + $0x10] sm:$0xff]
  %v7430 = vld [vmem:[%s7426 + $0x18] sm:$0xff]
  %v7431 = vld [vmem:[%s7426 + $0x20] sm:$0xff]
  %v7432 = vld [vmem:[%s7426 + $0x28] sm:$0xff]
  %v7433 = vld [vmem:[%s7426 + $0x30] sm:$0xff]
  %v7434 = vld [vmem:[%s7426 + $0x38] sm:$0xff]
  %v7435 = vld [vmem:[%s7426 + $0x40] sm:$0xff]
  %v7436 = vld [vmem:[%s7426 + $0x48] sm:$0xff]
  %v7437 = vld [vmem:[%s7426 + $0x50] sm:$0xff]
  %v7438 = vld [vmem:[%s7426 + $0x58] sm:$0xff]
  %v7439 = vld [vmem:[%s7426 + $0x60] sm:$0xff]
  %v7440 = vld [vmem:[%s7426 + $0x68] sm:$0xff]
  %v7441 = vld [vmem:[%s7426 + $0x70] sm:$0xff]
  %v7442 = vld [vmem:[%s7426 + $0x78] sm:$0xff]
  %v7443 = vld [vmem:[%s7426 + $0x80] sm:$0xff]
  %v7444 = vld [vmem:[%s7426 + $0x88] sm:$0xff]
  %v7445 = vld [vmem:[%s7426 + $0x90] sm:$0xff]
  %v7446 = vld [vmem:[%s7426 + $0x98] sm:$0xff]
  %v7447 = vld [vmem:[%s7426 + $0xa0] sm:$0xff]
  %v7448 = vld [vmem:[%s7426 + $0xa8] sm:$0xff]
  %v7449 = vld [vmem:[%s7426 + $0xb0] sm:$0xff]
  %v7450 = vld [vmem:[%s7426 + $0xb8] sm:$0xff]
  %v7451 = vld [vmem:[%s7426 + $0xc0] sm:$0xff]
  %v7452 = vld [vmem:[%s7426 + $0xc8] sm:$0xff]
  %v7453 = vld [vmem:[%s7426 + $0xd0] sm:$0xff]
  %v7454 = vld [vmem:[%s7426 + $0xd8] sm:$0xff]
  %v7455 = vld [vmem:[%s7426 + $0xe0] sm:$0xff]
  %v7456 = vld [vmem:[%s7426 + $0xe8] sm:$0xff]
  %v7457 = vld [vmem:[%s7426 + $0xf0] sm:$0xff]
  %v7458 = vld [vmem:[%s7426 + $0xf8] sm:$0xff]
  %vm7469 = vcmask 1044480
  %v7470 = vrot.slane %v7422, 3
  %v7471 = vrot.slane %v6661, 3
  %v7472 = vsel %vm7469, %v7470, %v7471
  %v7473 = vrot.slane %v7423, 3
  %v7474 = vrot.slane %v6662, 3
  %v7475 = vsel %vm7469, %v7473, %v7474
  %v7476 = vrot.slane %v6663, 3
  %v7477 = vsel %vm7469, %v7471, %v7476
  %v7478 = vrot.slane %v6664, 3
  %v7479 = vsel %vm7469, %v7474, %v7478
  %v7480 = vrot.slane %v6665, 3
  %v7481 = vsel %vm7469, %v7476, %v7480
  %v7482 = vrot.slane %v6666, 3
  %v7483 = vsel %vm7469, %v7478, %v7482
  %v7484 = vrot.slane %v7424, 3
  %v7485 = vsel %vm7469, %v7480, %v7484
  %v7486 = vrot.slane %v7425, 3
  %v7487 = vsel %vm7469, %v7482, %v7486
  %v7530 = vunpack.c.l.b16 %v7427
  %v7531 = vunpack.c.h.b16 %v7427
  %v7532 = vunpack.c.l.b16 %v7428
  %v7533 = vunpack.c.h.b16 %v7428
  %v7534 = vunpack.c.l.b16 %v7429
  %v7535 = vunpack.c.h.b16 %v7429
  %v7536 = vunpack.c.l.b16 %v7430
  %v7537 = vunpack.c.h.b16 %v7430
  %v7538 = vunpack.c.l.b16 %v7431
  %v7539 = vunpack.c.h.b16 %v7431
  %v7540 = vunpack.c.l.b16 %v7432
  %v7541 = vunpack.c.h.b16 %v7432
  %v7542 = vunpack.c.l.b16 %v7433
  %v7543 = vunpack.c.h.b16 %v7433
  %v7544 = vunpack.c.l.b16 %v7434
  %v7545 = vunpack.c.h.b16 %v7434
  %v7546 = vunpack.c.l.b16 %v7435
  %v7547 = vunpack.c.h.b16 %v7435
  %v7548 = vunpack.c.l.b16 %v7436
  %v7549 = vunpack.c.h.b16 %v7436
  %v7550 = vunpack.c.l.b16 %v7437
  %v7551 = vunpack.c.h.b16 %v7437
  %v7552 = vunpack.c.l.b16 %v7438
  %v7553 = vunpack.c.h.b16 %v7438
  %v7554 = vunpack.c.l.b16 %v7439
  %v7555 = vunpack.c.h.b16 %v7439
  %v7556 = vunpack.c.l.b16 %v7440
  %v7557 = vunpack.c.h.b16 %v7440
  %v7558 = vunpack.c.l.b16 %v7441
  %v7559 = vunpack.c.h.b16 %v7441
  %v7560 = vunpack.c.l.b16 %v7442
  %v7561 = vunpack.c.h.b16 %v7442
  %v7562 = vunpack.c.l.b16 %v7443
  %v7563 = vunpack.c.h.b16 %v7443
  %v7564 = vunpack.c.l.b16 %v7444
  %v7565 = vunpack.c.h.b16 %v7444
  %v7566 = vunpack.c.l.b16 %v7445
  %v7567 = vunpack.c.h.b16 %v7445
  %v7568 = vunpack.c.l.b16 %v7446
  %v7569 = vunpack.c.h.b16 %v7446
  %v7570 = vunpack.c.l.b16 %v7447
  %v7571 = vunpack.c.h.b16 %v7447
  %v7572 = vunpack.c.l.b16 %v7448
  %v7573 = vunpack.c.h.b16 %v7448
  %v7574 = vunpack.c.l.b16 %v7449
  %v7575 = vunpack.c.h.b16 %v7449
  %v7576 = vunpack.c.l.b16 %v7450
  %v7577 = vunpack.c.h.b16 %v7450
  %v7578 = vunpack.c.l.b16 %v7451
  %v7579 = vunpack.c.h.b16 %v7451
  %v7580 = vunpack.c.l.b16 %v7452
  %v7581 = vunpack.c.h.b16 %v7452
  %v7582 = vunpack.c.l.b16 %v7453
  %v7583 = vunpack.c.h.b16 %v7453
  %v7584 = vunpack.c.l.b16 %v7454
  %v7585 = vunpack.c.h.b16 %v7454
  %v7586 = vunpack.c.l.b16 %v7455
  %v7587 = vunpack.c.h.b16 %v7455
  %v7588 = vunpack.c.l.b16 %v7456
  %v7589 = vunpack.c.h.b16 %v7456
  %v7590 = vunpack.c.l.b16 %v7457
  %v7591 = vunpack.c.h.b16 %v7457
  %v7592 = vunpack.c.l.b16 %v7458
  %v7593 = vunpack.c.h.b16 %v7458
  %v7594 = vpack.c.b16 %v7532, %v7530
  %v7595 = vpack.c.b16 %v7533, %v7531
  %v7596 = vpack.c.b16 %v7536, %v7534
  %v7597 = vpack.c.b16 %v7537, %v7535
  %v7598 = vpack.c.b16 %v7540, %v7538
  %v7599 = vpack.c.b16 %v7541, %v7539
  %v7600 = vpack.c.b16 %v7544, %v7542
  %v7601 = vpack.c.b16 %v7545, %v7543
  %v7602 = vpack.c.b16 %v7548, %v7546
  %v7603 = vpack.c.b16 %v7549, %v7547
  %v7604 = vpack.c.b16 %v7552, %v7550
  %v7605 = vpack.c.b16 %v7553, %v7551
  %v7606 = vpack.c.b16 %v7556, %v7554
  %v7607 = vpack.c.b16 %v7557, %v7555
  %v7608 = vpack.c.b16 %v7560, %v7558
  %v7609 = vpack.c.b16 %v7561, %v7559
  %v7610 = vpack.c.b16 %v7564, %v7562
  %v7611 = vpack.c.b16 %v7565, %v7563
  %v7612 = vpack.c.b16 %v7568, %v7566
  %v7613 = vpack.c.b16 %v7569, %v7567
  %v7614 = vpack.c.b16 %v7572, %v7570
  %v7615 = vpack.c.b16 %v7573, %v7571
  %v7616 = vpack.c.b16 %v7576, %v7574
  %v7617 = vpack.c.b16 %v7577, %v7575
  %v7618 = vpack.c.b16 %v7580, %v7578
  %v7619 = vpack.c.b16 %v7581, %v7579
  %v7620 = vpack.c.b16 %v7584, %v7582
  %v7621 = vpack.c.b16 %v7585, %v7583
  %v7622 = vpack.c.b16 %v7588, %v7586
  %v7623 = vpack.c.b16 %v7589, %v7587
  %v7624 = vpack.c.b16 %v7592, %v7590
  %v7625 = vpack.c.b16 %v7593, %v7591
  %7658 = vmatprep.subr.bf16.mxu0 %v7595
  %7659 = vmatpush1.bf16.msra.mxu0 %v7594
  %7660 = vmatprep.subr.bf16.mxu0 %v7597
  %7661 = vmatpush1.bf16.msra.mxu0 %v7596
  %7662 = vmatprep.subr.bf16.mxu0 %v7599
  %7663 = vmatpush1.bf16.msra.mxu0 %v7598
  %7664 = vmatprep.subr.bf16.mxu0 %v7601
  %7665 = vmatpush1.bf16.msra.mxu0 %v7600
  %7666 = vmatprep.subr.bf16.mxu0 %v7603
  %7667 = vmatpush1.bf16.msra.mxu0 %v7602
  %7668 = vmatprep.subr.bf16.mxu0 %v7605
  %7669 = vmatpush1.bf16.msra.mxu0 %v7604
  %7670 = vmatprep.subr.bf16.mxu0 %v7607
  %7671 = vmatpush1.bf16.msra.mxu0 %v7606
  %7672 = vmatprep.subr.bf16.mxu0 %v7609
  %7673 = vmatpush1.bf16.msra.mxu0 %v7608
  %7674 = vmatprep.subr.bf16.mxu0 %v7611
  %7675 = vmatpush1.bf16.msra.mxu0 %v7610
  %7676 = vmatprep.subr.bf16.mxu0 %v7613
  %7677 = vmatpush1.bf16.msra.mxu0 %v7612
  %7678 = vmatprep.subr.bf16.mxu0 %v7615
  %7679 = vmatpush1.bf16.msra.mxu0 %v7614
  %7680 = vmatprep.subr.bf16.mxu0 %v7617
  %7681 = vmatpush1.bf16.msra.mxu0 %v7616
  %7682 = vmatprep.subr.bf16.mxu0 %v7619
  %7683 = vmatpush1.bf16.msra.mxu0 %v7618
  %7684 = vmatprep.subr.bf16.mxu0 %v7621
  %7685 = vmatpush1.bf16.msra.mxu0 %v7620
  %7686 = vmatprep.subr.bf16.mxu0 %v7623
  %7687 = vmatpush1.bf16.msra.mxu0 %v7622
  %7688 = vmatprep.subr.bf16.mxu0 %v7625
  %7689 = vmatpush1.bf16.msra.mxu0 %v7624
  %7690 = vmatprep.mubr.bf16.mxu0 %v7475
  %7691 = vmatmul.mubr.bf16.gmra.mrb[0].mxu0 %v7472
  %v7692 = vpop.f32.mrb[0].mxu0
  %v7693 = vadd.f32 0.0, %v7692
  %v7694 = vpop.f32.mrb[0].mxu0
  %v7695 = vadd.f32 0.0, %v7694
  %v7696 = vpop.f32.mrb[0].mxu0
  %v7697 = vadd.f32 0.0, %v7696
  %v7698 = vpop.f32.mrb[0].mxu0
  %v7699 = vadd.f32 0.0, %v7698
  %7700 = vmatprep.mubr.bf16.mxu0 %v7479
  %7701 = vmatmul.mubr.bf16.gmra.mrb[0].mxu0 %v7477
  %v7702 = vpop.f32.mrb[0].mxu0
  %v7703 = vadd.f32 0.0, %v7702
  %v7704 = vpop.f32.mrb[0].mxu0
  %v7705 = vadd.f32 0.0, %v7704
  %v7706 = vpop.f32.mrb[0].mxu0
  %v7707 = vadd.f32 0.0, %v7706
  %v7708 = vpop.f32.mrb[0].mxu0
  %v7709 = vadd.f32 0.0, %v7708
  %7710 = vmatprep.mubr.bf16.mxu0 %v7483
  %7711 = vmatmul.mubr.bf16.gmra.mrb[0].mxu0 %v7481
  %v7712 = vpop.f32.mrb[0].mxu0
  %v7713 = vadd.f32 0.0, %v7712
  %v7714 = vpop.f32.mrb[0].mxu0
  %v7715 = vadd.f32 0.0, %v7714
  %v7716 = vpop.f32.mrb[0].mxu0
  %v7717 = vadd.f32 0.0, %v7716
  %v7718 = vpop.f32.mrb[0].mxu0
  %v7719 = vadd.f32 0.0, %v7718
  %7720 = vmatprep.mubr.bf16.mxu0 %v7487
  %7721 = vmatmul.mubr.bf16.gmra.mrb[0].mxu0 %v7485
  %v7722 = vpop.f32.mrb[0].mxu0
  %v7723 = vadd.f32 0.0, %v7722
  %v7724 = vpop.f32.mrb[0].mxu0
  %v7725 = vadd.f32 0.0, %v7724
  %v7726 = vpop.f32.mrb[0].mxu0
  %v7727 = vadd.f32 0.0, %v7726
  %v7728 = vpop.f32.mrb[0].mxu0
  %v7729 = vadd.f32 0.0, %v7728
  %7730 = vmatprep.mubr.bf16.mxu0 %v7486
  %7731 = vmatmul.mubr.bf16.gmra.mrb[0].mxu0 %v7484
  %v7732 = vpop.f32.mrb[0].mxu0
  %v7733 = vadd.f32 0.0, %v7732
  %v7734 = vpop.f32.mrb[0].mxu0
  %v7735 = vadd.f32 0.0, %v7734
  %v7736 = vpop.f32.mrb[0].mxu0
  %v7737 = vpop.f32.mrb[0].mxu0
  %7738 = vdwg.mxu0
  %v7739 = vadd.f32 %v7400, %v7693
  %v7740 = vadd.f32 %v7401, %v7695
  %v7741 = vadd.f32 %v7402, %v7697
  %v7742 = vadd.f32 %v7403, %v7699
  %v7743 = vadd.f32 %v7404, %v7703
  %v7744 = vadd.f32 %v7405, %v7705
  %v7745 = vadd.f32 %v7406, %v7707
  %v7746 = vadd.f32 %v7407, %v7709
  %v7747 = vadd.f32 %v7408, %v7713
  %v7748 = vadd.f32 %v7409, %v7715
  %v7749 = vadd.f32 %v7410, %v7717
  %v7750 = vadd.f32 %v7411, %v7719
  %v7751 = vadd.f32 %v7412, %v7723
  %v7752 = vadd.f32 %v7413, %v7725
  %v7753 = vadd.f32 %v7414, %v7727
  %v7754 = vadd.f32 %v7415, %v7729
  %v7755 = vadd.f32 %v7416, %v7733
  %v7756 = vadd.f32 %v7417, %v7735
  %v7757 = vld [vmem:[#allocation4 + $0x10] sm:$0x80]
  %v7758 = vld [vmem:[#allocation4 + $0x18] sm:$0x80]
  %v7759 = vld [vmem:[#allocation4 + $0xa0] sm:$0x7f]
  %v7760 = vld [vmem:[#allocation4 + $0xa8] sm:$0x7f]
  %v7761 = vpack.c.bf16 %v6641, %v7757
  %v7762 = vpack.c.bf16 %v6642, %v7758
  %v7763 = vpack.c.bf16 %v7759, %v6655
  %v7764 = vpack.c.bf16 %v7760, %v6656
  %s7765 = scalar_lea.vmem %s4, 2048
  %v7766 = vld [vmem:[%s7765] sm:$0xff]
  %v7767 = vld [vmem:[%s7765 + $0x8] sm:$0xff]
  %v7768 = vld [vmem:[%s7765 + $0x10] sm:$0xff]
  %v7769 = vld [vmem:[%s7765 + $0x18] sm:$0xff]
  %v7770 = vld [vmem:[%s7765 + $0x20] sm:$0xff]
  %v7771 = vld [vmem:[%s7765 + $0x28] sm:$0xff]
  %v7772 = vld [vmem:[%s7765 + $0x30] sm:$0xff]
  %v7773 = vld [vmem:[%s7765 + $0x38] sm:$0xff]
  %v7774 = vld [vmem:[%s7765 + $0x40] sm:$0xff]
  %v7775 = vld [vmem:[%s7765 + $0x48] sm:$0xff]
  %v7776 = vld [vmem:[%s7765 + $0x50] sm:$0xff]
  %v7777 = vld [vmem:[%s7765 + $0x58] sm:$0xff]
  %v7778 = vld [vmem:[%s7765 + $0x60] sm:$0xff]
  %v7779 = vld [vmem:[%s7765 + $0x68] sm:$0xff]
  %v7780 = vld [vmem:[%s7765 + $0x70] sm:$0xff]
  %v7781 = vld [vmem:[%s7765 + $0x78] sm:$0xff]
  %v7782 = vld [vmem:[%s7765 + $0x80] sm:$0xff]
  %v7783 = vld [vmem:[%s7765 + $0x88] sm:$0xff]
  %v7784 = vld [vmem:[%s7765 + $0x90] sm:$0xff]
  %v7785 = vld [vmem:[%s7765 + $0x98] sm:$0xff]
  %v7786 = vld [vmem:[%s7765 + $0xa0] sm:$0xff]
  %v7787 = vld [vmem:[%s7765 + $0xa8] sm:$0xff]
  %v7788 = vld [vmem:[%s7765 + $0xb0] sm:$0xff]
  %v7789 = vld [vmem:[%s7765 + $0xb8] sm:$0xff]
  %v7790 = vld [vmem:[%s7765 + $0xc0] sm:$0xff]
  %v7791 = vld [vmem:[%s7765 + $0xc8] sm:$0xff]
  %v7792 = vld [vmem:[%s7765 + $0xd0] sm:$0xff]
  %v7793 = vld [vmem:[%s7765 + $0xd8] sm:$0xff]
  %v7794 = vld [vmem:[%s7765 + $0xe0] sm:$0xff]
  %v7795 = vld [vmem:[%s7765 + $0xe8] sm:$0xff]
  %v7796 = vld [vmem:[%s7765 + $0xf0] sm:$0xff]
  %v7797 = vld [vmem:[%s7765 + $0xf8] sm:$0xff]
  %v7799 = vshrl.u32 %v7761, 16
  %v7801 = vrot.slane %v7799, 3
  %v7802 = vshll.u32 %v7761, 16
  %v7804 = vrot.slane %v7802, 4
  %v7805 = vor.u32 %v7801, %v7804
  %v7806 = vrot.slane %v6726, 3
  %v7807 = vrot.slane %v6710, 4
  %v7808 = vor.u32 %v7806, %v7807
  %v7809 = vsel %vm6007, %v7805, %v7808
  %v7811 = vshrl.u32 %v7762, 16
  %v7813 = vrot.slane %v7811, 3
  %v7814 = vshll.u32 %v7762, 16
  %v7816 = vrot.slane %v7814, 4
  %v7817 = vor.u32 %v7813, %v7816
  %v7818 = vrot.slane %v6734, 3
  %v7819 = vrot.slane %v6722, 4
  %v7820 = vor.u32 %v7818, %v7819
  %v7821 = vsel %vm6007, %v7817, %v7820
  %v7822 = vrot.slane %v6742, 3
  %v7823 = vrot.slane %v6730, 4
  %v7824 = vor.u32 %v7822, %v7823
  %v7825 = vsel %vm6007, %v7808, %v7824
  %v7826 = vrot.slane %v6750, 3
  %v7827 = vrot.slane %v6738, 4
  %v7828 = vor.u32 %v7826, %v7827
  %v7829 = vsel %vm6007, %v7820, %v7828
  %v7830 = vrot.slane %v6758, 3
  %v7831 = vrot.slane %v6746, 4
  %v7832 = vor.u32 %v7830, %v7831
  %v7833 = vsel %vm6007, %v7824, %v7832
  %v7834 = vrot.slane %v6766, 3
  %v7835 = vrot.slane %v6754, 4
  %v7836 = vor.u32 %v7834, %v7835
  %v7837 = vsel %vm6007, %v7828, %v7836
  %v7839 = vshrl.u32 %v7763, 16
  %v7841 = vrot.slane %v7839, 3
  %v7842 = vshll.u32 %v7763, 16
  %v7844 = vrot.slane %v7842, 4
  %v7845 = vor.u32 %v7841, %v7844
  %v7846 = vsel %vm6007, %v7832, %v7845
  %v7848 = vshrl.u32 %v7764, 16
  %v7850 = vrot.slane %v7848, 3
  %v7851 = vshll.u32 %v7764, 16
  %v7853 = vrot.slane %v7851, 4
  %v7854 = vor.u32 %v7850, %v7853
  %v7855 = vsel %vm6007, %v7836, %v7854
  %v7898 = vunpack.c.l.b16 %v7766
  %v7899 = vunpack.c.h.b16 %v7766
  %v7900 = vunpack.c.l.b16 %v7767
  %v7901 = vunpack.c.h.b16 %v7767
  %v7902 = vunpack.c.l.b16 %v7768
  %v7903 = vunpack.c.h.b16 %v7768
  %v7904 = vunpack.c.l.b16 %v7769
  %v7905 = vunpack.c.h.b16 %v7769
  %v7906 = vunpack.c.l.b16 %v7770
  %v7907 = vunpack.c.h.b16 %v7770
  %v7908 = vunpack.c.l.b16 %v7771
  %v7909 = vunpack.c.h.b16 %v7771
  %v7910 = vunpack.c.l.b16 %v7772
  %v7911 = vunpack.c.h.b16 %v7772
  %v7912 = vunpack.c.l.b16 %v7773
  %v7913 = vunpack.c.h.b16 %v7773
  %v7914 = vunpack.c.l.b16 %v7774
  %v7915 = vunpack.c.h.b16 %v7774
  %v7916 = vunpack.c.l.b16 %v7775
  %v7917 = vunpack.c.h.b16 %v7775
  %v7918 = vunpack.c.l.b16 %v7776
  %v7919 = vunpack.c.h.b16 %v7776
  %v7920 = vunpack.c.l.b16 %v7777
  %v7921 = vunpack.c.h.b16 %v7777
  %v7922 = vunpack.c.l.b16 %v7778
  %v7923 = vunpack.c.h.b16 %v7778
  %v7924 = vunpack.c.l.b16 %v7779
  %v7925 = vunpack.c.h.b16 %v7779
  %v7926 = vunpack.c.l.b16 %v7780
  %v7927 = vunpack.c.h.b16 %v7780
  %v7928 = vunpack.c.l.b16 %v7781
  %v7929 = vunpack.c.h.b16 %v7781
  %v7930 = vunpack.c.l.b16 %v7782
  %v7931 = vunpack.c.h.b16 %v7782
  %v7932 = vunpack.c.l.b16 %v7783
  %v7933 = vunpack.c.h.b16 %v7783
  %v7934 = vunpack.c.l.b16 %v7784
  %v7935 = vunpack.c.h.b16 %v7784
  %v7936 = vunpack.c.l.b16 %v7785
  %v7937 = vunpack.c.h.b16 %v7785
  %v7938 = vunpack.c.l.b16 %v7786
  %v7939 = vunpack.c.h.b16 %v7786
  %v7940 = vunpack.c.l.b16 %v7787
  %v7941 = vunpack.c.h.b16 %v7787
  %v7942 = vunpack.c.l.b16 %v7788
  %v7943 = vunpack.c.h.b16 %v7788
  %v7944 = vunpack.c.l.b16 %v7789
  %v7945 = vunpack.c.h.b16 %v7789
  %v7946 = vunpack.c.l.b16 %v7790
  %v7947 = vunpack.c.h.b16 %v7790
  %v7948 = vunpack.c.l.b16 %v7791
  %v7949 = vunpack.c.h.b16 %v7791
  %v7950 = vunpack.c.l.b16 %v7792
  %v7951 = vunpack.c.h.b16 %v7792
  %v7952 = vunpack.c.l.b16 %v7793
  %v7953 = vunpack.c.h.b16 %v7793
  %v7954 = vunpack.c.l.b16 %v7794
  %v7955 = vunpack.c.h.b16 %v7794
  %v7956 = vunpack.c.l.b16 %v7795
  %v7957 = vunpack.c.h.b16 %v7795
  %v7958 = vunpack.c.l.b16 %v7796
  %v7959 = vunpack.c.h.b16 %v7796
  %v7960 = vunpack.c.l.b16 %v7797
  %v7961 = vunpack.c.h.b16 %v7797
  %v7962 = vpack.c.b16 %v7900, %v7898
  %v7963 = vpack.c.b16 %v7901, %v7899
  %v7964 = vpack.c.b16 %v7904, %v7902
  %v7965 = vpack.c.b16 %v7905, %v7903
  %v7966 = vpack.c.b16 %v7908, %v7906
  %v7967 = vpack.c.b16 %v7909, %v7907
  %v7968 = vpack.c.b16 %v7912, %v7910
  %v7969 = vpack.c.b16 %v7913, %v7911
  %v7970 = vpack.c.b16 %v7916, %v7914
  %v7971 = vpack.c.b16 %v7917, %v7915
  %v7972 = vpack.c.b16 %v7920, %v7918
  %v7973 = vpack.c.b16 %v7921, %v7919
  %v7974 = vpack.c.b16 %v7924, %v7922
  %v7975 = vpack.c.b16 %v7925, %v7923
  %v7976 = vpack.c.b16 %v7928, %v7926
  %v7977 = vpack.c.b16 %v7929, %v7927
  %v7978 = vpack.c.b16 %v7932, %v7930
  %v7979 = vpack.c.b16 %v7933, %v7931
  %v7980 = vpack.c.b16 %v7936, %v7934
  %v7981 = vpack.c.b16 %v7937, %v7935
  %v7982 = vpack.c.b16 %v7940, %v7938
  %v7983 = vpack.c.b16 %v7941, %v7939
  %v7984 = vpack.c.b16 %v7944, %v7942
  %v7985 = vpack.c.b16 %v7945, %v7943
  %v7986 = vpack.c.b16 %v7948, %v7946
  %v7987 = vpack.c.b16 %v7949, %v7947
  %v7988 = vpack.c.b16 %v7952, %v7950
  %v7989 = vpack.c.b16 %v7953, %v7951
  %v7990 = vpack.c.b16 %v7956, %v7954
  %v7991 = vpack.c.b16 %v7957, %v7955
  %v7992 = vpack.c.b16 %v7960, %v7958
  %v7993 = vpack.c.b16 %v7961, %v7959
  %8026 = vmatprep.subr.bf16.mxu0 %v7963
  %8027 = vmatpush1.bf16.msra.mxu0 %v7962
  %8028 = vmatprep.subr.bf16.mxu0 %v7965
  %8029 = vmatpush1.bf16.msra.mxu0 %v7964
  %8030 = vmatprep.subr.bf16.mxu0 %v7967
  %8031 = vmatpush1.bf16.msra.mxu0 %v7966
  %8032 = vmatprep.subr.bf16.mxu0 %v7969
  %8033 = vmatpush1.bf16.msra.mxu0 %v7968
  %8034 = vmatprep.subr.bf16.mxu0 %v7971
  %8035 = vmatpush1.bf16.msra.mxu0 %v7970
  %8036 = vmatprep.subr.bf16.mxu0 %v7973
  %8037 = vmatpush1.bf16.msra.mxu0 %v7972
  %8038 = vmatprep.subr.bf16.mxu0 %v7975
  %8039 = vmatpush1.bf16.msra.mxu0 %v7974
  %8040 = vmatprep.subr.bf16.mxu0 %v7977
  %8041 = vmatpush1.bf16.msra.mxu0 %v7976
  %8042 = vmatprep.subr.bf16.mxu0 %v7979
  %8043 = vmatpush1.bf16.msra.mxu0 %v7978
  %8044 = vmatprep.subr.bf16.mxu0 %v7981
  %8045 = vmatpush1.bf16.msra.mxu0 %v7980
  %8046 = vmatprep.subr.bf16.mxu0 %v7983
  %8047 = vmatpush1.bf16.msra.mxu0 %v7982
  %8048 = vmatprep.subr.bf16.mxu0 %v7985
  %8049 = vmatpush1.bf16.msra.mxu0 %v7984
  %8050 = vmatprep.subr.bf16.mxu0 %v7987
  %8051 = vmatpush1.bf16.msra.mxu0 %v7986
  %8052 = vmatprep.subr.bf16.mxu0 %v7989
  %8053 = vmatpush1.bf16.msra.mxu0 %v7988
  %8054 = vmatprep.subr.bf16.mxu0 %v7991
  %8055 = vmatpush1.bf16.msra.mxu0 %v7990
  %8056 = vmatprep.subr.bf16.mxu0 %v7993
  %8057 = vmatpush1.bf16.msra.mxu0 %v7992
  %8058 = vmatprep.mubr.bf16.mxu0 %v7821
  %8059 = vmatmul.mubr.bf16.gmra.mrb[0].mxu0 %v7809
  %v8060 = vpop.f32.mrb[0].mxu0
  %v8061 = vadd.f32 0.0, %v8060
  %v8062 = vpop.f32.mrb[0].mxu0
  %v8063 = vadd.f32 0.0, %v8062
  %v8064 = vpop.f32.mrb[0].mxu0
  %v8065 = vadd.f32 0.0, %v8064
  %v8066 = vpop.f32.mrb[0].mxu0
  %v8067 = vadd.f32 0.0, %v8066
  %8068 = vmatprep.mubr.bf16.mxu0 %v7829
  %8069 = vmatmul.mubr.bf16.gmra.mrb[0].mxu0 %v7825
  %v8070 = vpop.f32.mrb[0].mxu0
  %v8071 = vadd.f32 0.0, %v8070
  %v8072 = vpop.f32.mrb[0].mxu0
  %v8073 = vadd.f32 0.0, %v8072
  %v8074 = vpop.f32.mrb[0].mxu0
  %v8075 = vadd.f32 0.0, %v8074
  %v8076 = vpop.f32.mrb[0].mxu0
  %v8077 = vadd.f32 0.0, %v8076
  %8078 = vmatprep.mubr.bf16.mxu0 %v7837
  %8079 = vmatmul.mubr.bf16.gmra.mrb[0].mxu0 %v7833
  %v8080 = vpop.f32.mrb[0].mxu0
  %v8081 = vadd.f32 0.0, %v8080
  %v8082 = vpop.f32.mrb[0].mxu0
  %v8083 = vadd.f32 0.0, %v8082
  %v8084 = vpop.f32.mrb[0].mxu0
  %v8085 = vadd.f32 0.0, %v8084
  %v8086 = vpop.f32.mrb[0].mxu0
  %v8087 = vadd.f32 0.0, %v8086
  %8088 = vmatprep.mubr.bf16.mxu0 %v7855
  %8089 = vmatmul.mubr.bf16.gmra.mrb[0].mxu0 %v7846
  %v8090 = vpop.f32.mrb[0].mxu0
  %v8091 = vadd.f32 0.0, %v8090
  %v8092 = vpop.f32.mrb[0].mxu0
  %v8093 = vadd.f32 0.0, %v8092
  %v8094 = vpop.f32.mrb[0].mxu0
  %v8095 = vadd.f32 0.0, %v8094
  %v8096 = vpop.f32.mrb[0].mxu0
  %v8097 = vadd.f32 0.0, %v8096
  %8098 = vmatprep.mubr.bf16.mxu0 %v7854
  %8099 = vmatmul.mubr.bf16.gmra.mrb[0].mxu0 %v7845
  %v8100 = vpop.f32.mrb[0].mxu0
  %v8101 = vadd.f32 0.0, %v8100
  %v8102 = vpop.f32.mrb[0].mxu0
  %v8103 = vadd.f32 0.0, %v8102
  %v8104 = vpop.f32.mrb[0].mxu0
  %v8105 = vpop.f32.mrb[0].mxu0
  %8106 = vdwg.mxu0
  %v8107 = vadd.f32 %v7739, %v8061
  %v8108 = vadd.f32 %v7740, %v8063
  %v8109 = vadd.f32 %v7741, %v8065
  %v8110 = vadd.f32 %v7742, %v8067
  %v8111 = vadd.f32 %v7743, %v8071
  %v8112 = vadd.f32 %v7744, %v8073
  %v8113 = vadd.f32 %v7745, %v8075
  %v8114 = vadd.f32 %v7746, %v8077
  %v8115 = vadd.f32 %v7747, %v8081
  %v8116 = vadd.f32 %v7748, %v8083
  %v8117 = vadd.f32 %v7749, %v8085
  %v8118 = vadd.f32 %v7750, %v8087
  %v8119 = vadd.f32 %v7751, %v8091
  %v8120 = vadd.f32 %v7752, %v8093
  %v8121 = vadd.f32 %v7753, %v8095
  %v8122 = vadd.f32 %v7754, %v8097
  %v8123 = vadd.f32 %v7755, %v8101
  %v8124 = vadd.f32 %v7756, %v8103
  %v8125 = vtanh.pop %v8107
  %v8126 = vtanh.pop %v8108
  %v8127 = vtanh.pop %v8109
  %v8128 = vtanh.pop %v8110
  %v8129 = vtanh.pop %v8111
  %v8130 = vtanh.pop %v8112
  %v8131 = vtanh.pop %v8113
  %v8132 = vtanh.pop %v8114
  %v8133 = vtanh.pop %v8115
  %v8134 = vtanh.pop %v8116
  %v8135 = vtanh.pop %v8117
  %v8136 = vtanh.pop %v8118
  %v8137 = vtanh.pop %v8119
  %v8138 = vtanh.pop %v8120
  %v8139 = vtanh.pop %v8121
  %v8140 = vtanh.pop %v8122
  %v8141 = vtanh.pop %v8123
  %v8142 = vtanh.pop %v8124
  %8143 = vst [vmem:[%s16] sm:$0xff] %v8125
  %8144 = vst [vmem:[%s16 + $0x8] sm:$0xff] %v8126
  %8145 = vst [vmem:[%s16 + $0x10] sm:$0xff] %v8127
  %8146 = vst [vmem:[%s16 + $0x18] sm:$0xff] %v8128
  %8147 = vst [vmem:[%s16 + $0x20] sm:$0xff] %v8129
  %8148 = vst [vmem:[%s16 + $0x28] sm:$0xff] %v8130
  %8149 = vst [vmem:[%s16 + $0x30] sm:$0xff] %v8131
  %8150 = vst [vmem:[%s16 + $0x38] sm:$0xff] %v8132
  %8151 = vst [vmem:[%s16 + $0x40] sm:$0xff] %v8133
  %8152 = vst [vmem:[%s16 + $0x48] sm:$0xff] %v8134
  %8153 = vst [vmem:[%s16 + $0x50] sm:$0xff] %v8135
  %8154 = vst [vmem:[%s16 + $0x58] sm:$0xff] %v8136
  %8155 = vst [vmem:[%s16 + $0x60] sm:$0xff] %v8137
  %8156 = vst [vmem:[%s16 + $0x68] sm:$0xff] %v8138
  %8157 = vst [vmem:[%s16 + $0x70] sm:$0xff] %v8139
  %8158 = vst [vmem:[%s16 + $0x78] sm:$0xff] %v8140
  %8159 = vst [vmem:[%s16 + $0x80] sm:$0xff] %v8141
  %8160 = vst [vmem:[%s16 + $0x88] sm:$0xff] %v8142
  // Predicated region
  $region66: #{combined_model_forward.1} parent=0 // pred_check
    _
  $region67: #{combined_model_forward.1} parent=0 // pred_check_branch
    %8162 = sbr.rel (0) target = $region69
  $region68: #{combined_model_forward.1} parent=0 // pred_region
    _
  $region69: #{combined_model_forward.1} parent=0 // pred_fallthru
    _
  // Predicated region
  $region70: #{combined_model_forward.1} parent=0 // pred_check
    _
  $region71: #{combined_model_forward.1} parent=0 // pred_check_branch
    %8164 = sbr.rel (0) target = $region73
  $region72: #{combined_model_forward.1} parent=0 // pred_region
    _
  $region73: #{combined_model_forward.1} parent=0 // pred_fallthru
    _

</llo_original>
